<compile_context>
chip_gen: v6e
topology: v6e:2x2x1
jax: 0.10.0
libtpu: 0.0.40
codegen_flags: <defaults>
</compile_context>

<pallas_src>
import jax
import jax.numpy as jnp
from jax.experimental import pallas as pl
from jax.experimental.pallas import tpu as pltpu


# --------------------------- static geometry --------------------------------
H0 = W0 = 28          # input spatial
HP1 = WP1 = 12        # pool1 output spatial
HP2 = WP2 = 4         # pool2 output spatial

XPAD = 1024           # zero-padded flat input length (>= 784 + max shift 116)
L1 = H0 * W0          # 784: conv1 flat accumulator length (valid at oi*28+oj)
LP1 = 640             # pool1 window length (max anchor 56*11 + 2*11 = 638)
NP1 = HP1 * WP1       # 144: dense pool1 layout (pi*12 + pj)
L2 = 92               # conv2 flat accumulator length (max valid r = 7*12+7 = 91)
LP2 = 79              # pool2 window length (max anchor 24*3 + 2*3 = 78)
NF = HP2 * WP2        # 16: per-channel flattened pool2 features (pi*4 + pj)


def _sigmoid(y):
    # exact logistic; exp runs on the EUP.  (pl.reciprocal(..., approx=True)
    # would be marginally cheaper but perturbs numerics, so keep exact.)
    return 1.0 / (1.0 + jnp.exp(-y))


# ------------------------------ the kernel ----------------------------------
def _lenet_kernel(x_ref, w1_ref, b1_ref, w2_ref, b2_ref, s1_ref, s2_ref,
                  fc1w_ref, fc1b_ref, fc2w_ref, fc2b_ref, fc3w_ref, fc3b_ref,
                  o_ref):
    f32 = jnp.float32
    x = x_ref[0]                                        # (1, XPAD) padded flat image

    # ---- conv1: 1 -> 6, 5x5 valid (Cin=1 -> 25 shifted VPU FMAs) ------------
    acc1 = jnp.zeros((6, L1), f32)
    for kh in range(5):
        for kw in range(5):
            sh = kh * W0 + kw
            acc1 = acc1 + w1_ref[kh * 5 + kw] * x[:, sh:sh + L1]   # (6,1)*(1,784)
    a1 = _sigmoid(acc1 + b1_ref[...])                   # (6, 784), valid at oi*28+oj

    # ---- maxpool1 2x2: 4-way max + constant selection matmul (repack) ------
    p1r = jnp.maximum(
        jnp.maximum(a1[:, 0:LP1], a1[:, 1:1 + LP1]),
        jnp.maximum(a1[:, W0:W0 + LP1], a1[:, W0 + 1:W0 + 1 + LP1]))
    p1 = jnp.dot(p1r, s1_ref[...], preferred_element_type=f32)     # (6, 144) dense

    # ---- conv2: 6 -> 16, 5x5 valid (25 shifted MXU matmuls over Cin) --------
    acc2 = jnp.zeros((16, L2), f32)
    for kh in range(5):
        for kw in range(5):
            sh = kh * WP1 + kw
            acc2 = acc2 + jnp.dot(w2_ref[kh * 5 + kw], p1[:, sh:sh + L2],
                                  preferred_element_type=f32)
    a2 = _sigmoid(acc2 + b2_ref[...])                   # (16, 92), valid at oi*12+oj

    # ---- maxpool2 2x2 + flatten to PyTorch (c, pi, pj) order ----------------
    p2r = jnp.maximum(
        jnp.maximum(a2[:, 0:LP2], a2[:, 1:1 + LP2]),
        jnp.maximum(a2[:, WP1:WP1 + LP2], a2[:, WP1 + 1:WP1 + 1 + LP2]))
    feat = jnp.dot(p2r, s2_ref[...], preferred_element_type=f32)   # (16, 16)=(c, s)

    # ---- fc1: 256 -> 120 (per-channel matmuls against re-laid-out weights) --
    h = fc1b_ref[...]                                   # (1, 120)
    for c in range(16):
        h = h + jnp.dot(feat[c:c + 1, :], fc1w_ref[c],
                        preferred_element_type=f32)
    h = _sigmoid(h)

    # ---- fc2: 120 -> 84 -----------------------------------------------------
    h = _sigmoid(jnp.dot(h, fc2w_ref[...], preferred_element_type=f32)
                 + fc2b_ref[...])

    # ---- fc3: 84 -> 10 (no activation) --------------------------------------
    o_ref[0] = (jnp.dot(h, fc3w_ref[...], preferred_element_type=f32)
                + fc3b_ref[...])


# --------------------------- host-side wrapper -------------------------------
def _selection_matrices():
    # 0/1 matrices that pick the 2x2-pool anchor positions out of the flat
    # conv-output layout and repack them densely for the next stage.
    p = jnp.arange(NP1)
    q1 = 2 * W0 * (p // WP1) + 2 * (p % WP1)                 # 56*pi + 2*pj
    s1 = (jnp.arange(LP1)[:, None] == q1[None, :]).astype(jnp.float32)
    s = jnp.arange(NF)
    q2 = 2 * WP1 * (s // WP2) + 2 * (s % WP2)                # 24*pi + 2*pj
    s2 = (jnp.arange(LP2)[:, None] == q2[None, :]).astype(jnp.float32)
    return s1, s2


def lenet_forward(params, img):
    B = img.shape[0]
    assert img.shape[1:] == (1, H0, W0)

    # Only wrapper glue: flatten + zero-pad the raw input (no duplication).
    x = img.reshape(B, H0 * W0)
    x = jnp.pad(x, ((0, 0), (0, XPAD - H0 * W0))).reshape(B, 1, XPAD)

    # One-time tiny weight re-layouts (match PyTorch parameter conventions).
    w1 = params["conv1_w"].reshape(6, 25).T.reshape(25, 6, 1)             # [k, co, 1]
    b1 = params["conv1_b"].reshape(6, 1)
    w2 = jnp.transpose(params["conv2_w"].reshape(16, 6, 25), (2, 0, 1))   # [k, co, ci]
    b2 = params["conv2_b"].reshape(16, 1)
    fc1w = jnp.transpose(params["fc1_w"].reshape(120, 16, NF), (1, 2, 0)) # [c, s, o]
    fc1b = params["fc1_b"].reshape(1, 120)
    fc2w = params["fc2_w"].T                                              # (120, 84)
    fc2b = params["fc2_b"].reshape(1, 84)
    fc3w = params["fc3_w"].T                                              # (84, 10)
    fc3b = params["fc3_b"].reshape(1, 10)
    s1, s2 = _selection_matrices()

    def const_spec(*shape):
        return pl.BlockSpec(shape, lambda i: (0,) * len(shape))

    out = pl.pallas_call(
        _lenet_kernel,
        out_shape=jax.ShapeDtypeStruct((B, 1, 10), jnp.float32),
        grid=(B,),
        in_specs=[
            pl.BlockSpec((1, 1, XPAD), lambda i: (i, 0, 0)),
            const_spec(25, 6, 1), const_spec(6, 1),
            const_spec(25, 16, 6), const_spec(16, 1),
            const_spec(LP1, NP1), const_spec(LP2, NF),
            const_spec(16, NF, 120), const_spec(1, 120),
            const_spec(120, 84), const_spec(1, 84),
            const_spec(84, 10), const_spec(1, 10),
        ],
        out_specs=pl.BlockSpec((1, 1, 10), lambda i: (i, 0, 0)),
        compiler_params=pltpu.CompilerParams(
            dimension_semantics=("parallel",)),
    )(x, w1, b1, w2, b2, s1, s2, fc1w, fc1b, fc2w, fc2b, fc3w, fc3b)
    return out.reshape(B, 10)


# ------------------------- params / reference / main -------------------------
def init_params(key):
    # PyTorch-style uniform(-1/sqrt(fan_in), 1/sqrt(fan_in)), PyTorch shapes.
    def uni(k, shape, fan_in):
        bound = 1.0 / float(fan_in) ** 0.5
        return jax.random.uniform(k, shape, jnp.float32, -bound, bound)

    ks = jax.random.split(key, 10)
    return {
        "conv1_w": uni(ks[0], (6, 1, 5, 5), 25),
        "conv1_b": uni(ks[1], (6,), 25),
        "conv2_w": uni(ks[2], (16, 6, 5, 5), 150),
        "conv2_b": uni(ks[3], (16,), 150),
        "fc1_w": uni(ks[4], (120, 256), 256),
        "fc1_b": uni(ks[5], (120,), 256),
        "fc2_w": uni(ks[6], (84, 120), 120),
        "fc2_b": uni(ks[7], (84,), 120),
        "fc3_w": uni(ks[8], (10, 84), 84),
        "fc3_b": uni(ks[9], (10,), 84),
    }


def reference_forward(params, img):
    # Pure-JAX (XLA) LeNet used only as a numerical sanity check.
    def conv_sig(x, w, b):
        cout, cin, k, _ = w.shape
        B, C, H, W = x.shape
        Ho, Wo = H - k + 1, W - k + 1
        cols = []
        for di in range(k):
            for dj in range(k):
                cols.append(x[:, :, di:di + Ho, dj:dj + Wo])
        p = jnp.stack(cols, 0).reshape(k, k, B, C, Ho, Wo)
        p = jnp.transpose(p, (2, 4, 5, 3, 0, 1)).reshape(B * Ho * Wo, C * k * k)
        y = _sigmoid(p @ w.reshape(cout, -1).T + b).reshape(B, Ho, Wo, cout)
        return jnp.transpose(y, (0, 3, 1, 2))

    def pool(x):
        return jnp.maximum(
            jnp.maximum(x[:, :, 0::2, 0::2], x[:, :, 0::2, 1::2]),
            jnp.maximum(x[:, :, 1::2, 0::2], x[:, :, 1::2, 1::2]))

    x = pool(conv_sig(img, params["conv1_w"], params["conv1_b"]))
    x = pool(conv_sig(x, params["conv2_w"], params["conv2_b"]))
    f = x.reshape(img.shape[0], -1)
    h = _sigmoid(f @ params["fc1_w"].T + params["fc1_b"])
    h = _sigmoid(h @ params["fc2_w"].T + params["fc2_b"])
    return h @ params["fc3_w"].T + params["fc3_b"]


if __name__ == "__main__":
    key = jax.random.PRNGKey(0)
    pkey, xkey = jax.random.split(key)
    params = init_params(pkey)
    # LeNet's fc stage (16*4*4 inputs) pins the input to (B, 1, 28, 28).
    img = jax.random.normal(xkey, (2, 1, 28, 28), jnp.float32)

    out = jax.jit(lenet_forward)(params, img)
    out = jax.block_until_ready(out)
    assert out.shape == (2, 10) and out.dtype == jnp.float32

    ref = reference_forward(params, img)
    err = float(jnp.max(jnp.abs(out - ref)))
    assert err < 2e-2, f"kernel/reference mismatch: max abs err = {err}"
    print("KERNEL_OK")
</pallas_src>

<mosaic_0001>
module attributes {stable_mosaic.version = 11 : i64} {
  func.func @_lenet_kernel(%arg0: i32, %arg1: memref<1x1x1024xf32, #tpu.memory_space<vmem>>, %arg2: memref<25x6x1xf32, #tpu.memory_space<vmem>>, %arg3: memref<6x1xf32, #tpu.memory_space<vmem>>, %arg4: memref<25x16x6xf32, #tpu.memory_space<vmem>>, %arg5: memref<16x1xf32, #tpu.memory_space<vmem>>, %arg6: memref<640x144xf32, #tpu.memory_space<vmem>>, %arg7: memref<79x16xf32, #tpu.memory_space<vmem>>, %arg8: memref<16x16x120xf32, #tpu.memory_space<vmem>>, %arg9: memref<1x120xf32, #tpu.memory_space<vmem>>, %arg10: memref<120x84xf32, #tpu.memory_space<vmem>>, %arg11: memref<1x84xf32, #tpu.memory_space<vmem>>, %arg12: memref<84x10xf32, #tpu.memory_space<vmem>>, %arg13: memref<1x10xf32, #tpu.memory_space<vmem>>, %arg14: memref<1x1x10xf32, #tpu.memory_space<vmem>>) attributes {dimension_semantics = [#tpu.dimension_semantics<parallel>], iteration_bounds = array<i64: 2>, scalar_prefetch = 0 : i64, scratch_operands = 0 : i64, tpu.core_type = #tpu.core_type<tc>, window_params = [{transform_indices = @transform_0, window_bounds = array<i64: 1, 1, 1024>}, {pipeline_mode = #tpu.pipeline_mode<synchronous>, transform_indices = @transform_1, window_bounds = array<i64: 25, 6, 1>}, {pipeline_mode = #tpu.pipeline_mode<synchronous>, transform_indices = @transform_2, window_bounds = array<i64: 6, 1>}, {pipeline_mode = #tpu.pipeline_mode<synchronous>, transform_indices = @transform_3, window_bounds = array<i64: 25, 16, 6>}, {pipeline_mode = #tpu.pipeline_mode<synchronous>, transform_indices = @transform_4, window_bounds = array<i64: 16, 1>}, {pipeline_mode = #tpu.pipeline_mode<synchronous>, transform_indices = @transform_5, window_bounds = array<i64: 640, 144>}, {pipeline_mode = #tpu.pipeline_mode<synchronous>, transform_indices = @transform_6, window_bounds = array<i64: 79, 16>}, {pipeline_mode = #tpu.pipeline_mode<synchronous>, transform_indices = @transform_7, window_bounds = array<i64: 16, 16, 120>}, {pipeline_mode = #tpu.pipeline_mode<synchronous>, transform_indices = @transform_8, window_bounds = array<i64: 1, 120>}, {pipeline_mode = #tpu.pipeline_mode<synchronous>, transform_indices = @transform_9, window_bounds = array<i64: 120, 84>}, {pipeline_mode = #tpu.pipeline_mode<synchronous>, transform_indices = @transform_10, window_bounds = array<i64: 1, 84>}, {pipeline_mode = #tpu.pipeline_mode<synchronous>, transform_indices = @transform_11, window_bounds = array<i64: 84, 10>}, {pipeline_mode = #tpu.pipeline_mode<synchronous>, transform_indices = @transform_12, window_bounds = array<i64: 1, 10>}, {transform_indices = @transform_13, window_bounds = array<i64: 1, 1, 10>}]} {
    %c0 = arith.constant 0 : index
    %c0_0 = arith.constant 0 : index
    %c0_1 = arith.constant 0 : index
    %0 = vector.load %arg1[%c0, %c0_0, %c0_1] : memref<1x1x1024xf32, #tpu.memory_space<vmem>>, vector<1x1x1024xf32>
    %1 = vector.shape_cast %0 : vector<1x1x1024xf32> to vector<1x1024xf32>
    %cst = arith.constant 0.000000e+00 : f32
    %2 = vector.broadcast %cst : f32 to vector<6x784xf32>
    %c0_2 = arith.constant 0 : index
    %c0_3 = arith.constant 0 : index
    %c0_4 = arith.constant 0 : index
    %3 = vector.load %arg2[%c0_2, %c0_3, %c0_4] : memref<25x6x1xf32, #tpu.memory_space<vmem>>, vector<1x6x1xf32>
    %4 = vector.shape_cast %3 : vector<1x6x1xf32> to vector<6x1xf32>
    %5 = vector.extract_strided_slice %1 {offsets = [0, 0], sizes = [1, 784], strides = [1, 1]} : vector<1x1024xf32> to vector<1x784xf32>
    %6 = vector.broadcast %4 : vector<6x1xf32> to vector<6x784xf32>
    %7 = vector.broadcast %5 : vector<1x784xf32> to vector<6x784xf32>
    %8 = arith.mulf %6, %7 : vector<6x784xf32>
    %9 = arith.addf %2, %8 : vector<6x784xf32>
    %c1 = arith.constant 1 : index
    %c0_5 = arith.constant 0 : index
    %c0_6 = arith.constant 0 : index
    %10 = vector.load %arg2[%c1, %c0_5, %c0_6] : memref<25x6x1xf32, #tpu.memory_space<vmem>>, vector<1x6x1xf32>
    %11 = vector.shape_cast %10 : vector<1x6x1xf32> to vector<6x1xf32>
    %12 = vector.extract_strided_slice %1 {offsets = [0, 1], sizes = [1, 784], strides = [1, 1]} : vector<1x1024xf32> to vector<1x784xf32>
    %13 = vector.broadcast %11 : vector<6x1xf32> to vector<6x784xf32>
    %14 = vector.broadcast %12 : vector<1x784xf32> to vector<6x784xf32>
    %15 = arith.mulf %13, %14 : vector<6x784xf32>
    %16 = arith.addf %9, %15 : vector<6x784xf32>
    %c2 = arith.constant 2 : index
    %c0_7 = arith.constant 0 : index
    %c0_8 = arith.constant 0 : index
    %17 = vector.load %arg2[%c2, %c0_7, %c0_8] : memref<25x6x1xf32, #tpu.memory_space<vmem>>, vector<1x6x1xf32>
    %18 = vector.shape_cast %17 : vector<1x6x1xf32> to vector<6x1xf32>
    %19 = vector.extract_strided_slice %1 {offsets = [0, 2], sizes = [1, 784], strides = [1, 1]} : vector<1x1024xf32> to vector<1x784xf32>
    %20 = vector.broadcast %18 : vector<6x1xf32> to vector<6x784xf32>
    %21 = vector.broadcast %19 : vector<1x784xf32> to vector<6x784xf32>
    %22 = arith.mulf %20, %21 : vector<6x784xf32>
    %23 = arith.addf %16, %22 : vector<6x784xf32>
    %c3 = arith.constant 3 : index
    %c0_9 = arith.constant 0 : index
    %c0_10 = arith.constant 0 : index
    %24 = vector.load %arg2[%c3, %c0_9, %c0_10] : memref<25x6x1xf32, #tpu.memory_space<vmem>>, vector<1x6x1xf32>
    %25 = vector.shape_cast %24 : vector<1x6x1xf32> to vector<6x1xf32>
    %26 = vector.extract_strided_slice %1 {offsets = [0, 3], sizes = [1, 784], strides = [1, 1]} : vector<1x1024xf32> to vector<1x784xf32>
    %27 = vector.broadcast %25 : vector<6x1xf32> to vector<6x784xf32>
    %28 = vector.broadcast %26 : vector<1x784xf32> to vector<6x784xf32>
    %29 = arith.mulf %27, %28 : vector<6x784xf32>
    %30 = arith.addf %23, %29 : vector<6x784xf32>
    %c4 = arith.constant 4 : index
    %c0_11 = arith.constant 0 : index
    %c0_12 = arith.constant 0 : index
    %31 = vector.load %arg2[%c4, %c0_11, %c0_12] : memref<25x6x1xf32, #tpu.memory_space<vmem>>, vector<1x6x1xf32>
    %32 = vector.shape_cast %31 : vector<1x6x1xf32> to vector<6x1xf32>
    %33 = vector.extract_strided_slice %1 {offsets = [0, 4], sizes = [1, 784], strides = [1, 1]} : vector<1x1024xf32> to vector<1x784xf32>
    %34 = vector.broadcast %32 : vector<6x1xf32> to vector<6x784xf32>
    %35 = vector.broadcast %33 : vector<1x784xf32> to vector<6x784xf32>
    %36 = arith.mulf %34, %35 : vector<6x784xf32>
    %37 = arith.addf %30, %36 : vector<6x784xf32>
    %c5 = arith.constant 5 : index
    %c0_13 = arith.constant 0 : index
    %c0_14 = arith.constant 0 : index
    %38 = vector.load %arg2[%c5, %c0_13, %c0_14] : memref<25x6x1xf32, #tpu.memory_space<vmem>>, vector<1x6x1xf32>
    %39 = vector.shape_cast %38 : vector<1x6x1xf32> to vector<6x1xf32>
    %40 = vector.extract_strided_slice %1 {offsets = [0, 28], sizes = [1, 784], strides = [1, 1]} : vector<1x1024xf32> to vector<1x784xf32>
    %41 = vector.broadcast %39 : vector<6x1xf32> to vector<6x784xf32>
    %42 = vector.broadcast %40 : vector<1x784xf32> to vector<6x784xf32>
    %43 = arith.mulf %41, %42 : vector<6x784xf32>
    %44 = arith.addf %37, %43 : vector<6x784xf32>
    %c6 = arith.constant 6 : index
    %c0_15 = arith.constant 0 : index
    %c0_16 = arith.constant 0 : index
    %45 = vector.load %arg2[%c6, %c0_15, %c0_16] : memref<25x6x1xf32, #tpu.memory_space<vmem>>, vector<1x6x1xf32>
    %46 = vector.shape_cast %45 : vector<1x6x1xf32> to vector<6x1xf32>
    %47 = vector.extract_strided_slice %1 {offsets = [0, 29], sizes = [1, 784], strides = [1, 1]} : vector<1x1024xf32> to vector<1x784xf32>
    %48 = vector.broadcast %46 : vector<6x1xf32> to vector<6x784xf32>
    %49 = vector.broadcast %47 : vector<1x784xf32> to vector<6x784xf32>
    %50 = arith.mulf %48, %49 : vector<6x784xf32>
    %51 = arith.addf %44, %50 : vector<6x784xf32>
    %c7 = arith.constant 7 : index
    %c0_17 = arith.constant 0 : index
    %c0_18 = arith.constant 0 : index
    %52 = vector.load %arg2[%c7, %c0_17, %c0_18] : memref<25x6x1xf32, #tpu.memory_space<vmem>>, vector<1x6x1xf32>
    %53 = vector.shape_cast %52 : vector<1x6x1xf32> to vector<6x1xf32>
    %54 = vector.extract_strided_slice %1 {offsets = [0, 30], sizes = [1, 784], strides = [1, 1]} : vector<1x1024xf32> to vector<1x784xf32>
    %55 = vector.broadcast %53 : vector<6x1xf32> to vector<6x784xf32>
    %56 = vector.broadcast %54 : vector<1x784xf32> to vector<6x784xf32>
    %57 = arith.mulf %55, %56 : vector<6x784xf32>
    %58 = arith.addf %51, %57 : vector<6x784xf32>
    %c8 = arith.constant 8 : index
    %c0_19 = arith.constant 0 : index
    %c0_20 = arith.constant 0 : index
    %59 = vector.load %arg2[%c8, %c0_19, %c0_20] : memref<25x6x1xf32, #tpu.memory_space<vmem>>, vector<1x6x1xf32>
    %60 = vector.shape_cast %59 : vector<1x6x1xf32> to vector<6x1xf32>
    %61 = vector.extract_strided_slice %1 {offsets = [0, 31], sizes = [1, 784], strides = [1, 1]} : vector<1x1024xf32> to vector<1x784xf32>
    %62 = vector.broadcast %60 : vector<6x1xf32> to vector<6x784xf32>
    %63 = vector.broadcast %61 : vector<1x784xf32> to vector<6x784xf32>
    %64 = arith.mulf %62, %63 : vector<6x784xf32>
    %65 = arith.addf %58, %64 : vector<6x784xf32>
    %c9 = arith.constant 9 : index
    %c0_21 = arith.constant 0 : index
    %c0_22 = arith.constant 0 : index
    %66 = vector.load %arg2[%c9, %c0_21, %c0_22] : memref<25x6x1xf32, #tpu.memory_space<vmem>>, vector<1x6x1xf32>
    %67 = vector.shape_cast %66 : vector<1x6x1xf32> to vector<6x1xf32>
    %68 = vector.extract_strided_slice %1 {offsets = [0, 32], sizes = [1, 784], strides = [1, 1]} : vector<1x1024xf32> to vector<1x784xf32>
    %69 = vector.broadcast %67 : vector<6x1xf32> to vector<6x784xf32>
    %70 = vector.broadcast %68 : vector<1x784xf32> to vector<6x784xf32>
    %71 = arith.mulf %69, %70 : vector<6x784xf32>
    %72 = arith.addf %65, %71 : vector<6x784xf32>
    %c10 = arith.constant 10 : index
    %c0_23 = arith.constant 0 : index
    %c0_24 = arith.constant 0 : index
    %73 = vector.load %arg2[%c10, %c0_23, %c0_24] : memref<25x6x1xf32, #tpu.memory_space<vmem>>, vector<1x6x1xf32>
    %74 = vector.shape_cast %73 : vector<1x6x1xf32> to vector<6x1xf32>
    %75 = vector.extract_strided_slice %1 {offsets = [0, 56], sizes = [1, 784], strides = [1, 1]} : vector<1x1024xf32> to vector<1x784xf32>
    %76 = vector.broadcast %74 : vector<6x1xf32> to vector<6x784xf32>
    %77 = vector.broadcast %75 : vector<1x784xf32> to vector<6x784xf32>
    %78 = arith.mulf %76, %77 : vector<6x784xf32>
    %79 = arith.addf %72, %78 : vector<6x784xf32>
    %c11 = arith.constant 11 : index
    %c0_25 = arith.constant 0 : index
    %c0_26 = arith.constant 0 : index
    %80 = vector.load %arg2[%c11, %c0_25, %c0_26] : memref<25x6x1xf32, #tpu.memory_space<vmem>>, vector<1x6x1xf32>
    %81 = vector.shape_cast %80 : vector<1x6x1xf32> to vector<6x1xf32>
    %82 = vector.extract_strided_slice %1 {offsets = [0, 57], sizes = [1, 784], strides = [1, 1]} : vector<1x1024xf32> to vector<1x784xf32>
    %83 = vector.broadcast %81 : vector<6x1xf32> to vector<6x784xf32>
    %84 = vector.broadcast %82 : vector<1x784xf32> to vector<6x784xf32>
    %85 = arith.mulf %83, %84 : vector<6x784xf32>
    %86 = arith.addf %79, %85 : vector<6x784xf32>
    %c12 = arith.constant 12 : index
    %c0_27 = arith.constant 0 : index
    %c0_28 = arith.constant 0 : index
    %87 = vector.load %arg2[%c12, %c0_27, %c0_28] : memref<25x6x1xf32, #tpu.memory_space<vmem>>, vector<1x6x1xf32>
    %88 = vector.shape_cast %87 : vector<1x6x1xf32> to vector<6x1xf32>
    %89 = vector.extract_strided_slice %1 {offsets = [0, 58], sizes = [1, 784], strides = [1, 1]} : vector<1x1024xf32> to vector<1x784xf32>
    %90 = vector.broadcast %88 : vector<6x1xf32> to vector<6x784xf32>
    %91 = vector.broadcast %89 : vector<1x784xf32> to vector<6x784xf32>
    %92 = arith.mulf %90, %91 : vector<6x784xf32>
    %93 = arith.addf %86, %92 : vector<6x784xf32>
    %c13 = arith.constant 13 : index
    %c0_29 = arith.constant 0 : index
    %c0_30 = arith.constant 0 : index
    %94 = vector.load %arg2[%c13, %c0_29, %c0_30] : memref<25x6x1xf32, #tpu.memory_space<vmem>>, vector<1x6x1xf32>
    %95 = vector.shape_cast %94 : vector<1x6x1xf32> to vector<6x1xf32>
    %96 = vector.extract_strided_slice %1 {offsets = [0, 59], sizes = [1, 784], strides = [1, 1]} : vector<1x1024xf32> to vector<1x784xf32>
    %97 = vector.broadcast %95 : vector<6x1xf32> to vector<6x784xf32>
    %98 = vector.broadcast %96 : vector<1x784xf32> to vector<6x784xf32>
    %99 = arith.mulf %97, %98 : vector<6x784xf32>
    %100 = arith.addf %93, %99 : vector<6x784xf32>
    %c14 = arith.constant 14 : index
    %c0_31 = arith.constant 0 : index
    %c0_32 = arith.constant 0 : index
    %101 = vector.load %arg2[%c14, %c0_31, %c0_32] : memref<25x6x1xf32, #tpu.memory_space<vmem>>, vector<1x6x1xf32>
    %102 = vector.shape_cast %101 : vector<1x6x1xf32> to vector<6x1xf32>
    %103 = vector.extract_strided_slice %1 {offsets = [0, 60], sizes = [1, 784], strides = [1, 1]} : vector<1x1024xf32> to vector<1x784xf32>
    %104 = vector.broadcast %102 : vector<6x1xf32> to vector<6x784xf32>
    %105 = vector.broadcast %103 : vector<1x784xf32> to vector<6x784xf32>
    %106 = arith.mulf %104, %105 : vector<6x784xf32>
    %107 = arith.addf %100, %106 : vector<6x784xf32>
    %c15 = arith.constant 15 : index
    %c0_33 = arith.constant 0 : index
    %c0_34 = arith.constant 0 : index
    %108 = vector.load %arg2[%c15, %c0_33, %c0_34] : memref<25x6x1xf32, #tpu.memory_space<vmem>>, vector<1x6x1xf32>
    %109 = vector.shape_cast %108 : vector<1x6x1xf32> to vector<6x1xf32>
    %110 = vector.extract_strided_slice %1 {offsets = [0, 84], sizes = [1, 784], strides = [1, 1]} : vector<1x1024xf32> to vector<1x784xf32>
    %111 = vector.broadcast %109 : vector<6x1xf32> to vector<6x784xf32>
    %112 = vector.broadcast %110 : vector<1x784xf32> to vector<6x784xf32>
    %113 = arith.mulf %111, %112 : vector<6x784xf32>
    %114 = arith.addf %107, %113 : vector<6x784xf32>
    %c16 = arith.constant 16 : index
    %c0_35 = arith.constant 0 : index
    %c0_36 = arith.constant 0 : index
    %115 = vector.load %arg2[%c16, %c0_35, %c0_36] : memref<25x6x1xf32, #tpu.memory_space<vmem>>, vector<1x6x1xf32>
    %116 = vector.shape_cast %115 : vector<1x6x1xf32> to vector<6x1xf32>
    %117 = vector.extract_strided_slice %1 {offsets = [0, 85], sizes = [1, 784], strides = [1, 1]} : vector<1x1024xf32> to vector<1x784xf32>
    %118 = vector.broadcast %116 : vector<6x1xf32> to vector<6x784xf32>
    %119 = vector.broadcast %117 : vector<1x784xf32> to vector<6x784xf32>
    %120 = arith.mulf %118, %119 : vector<6x784xf32>
    %121 = arith.addf %114, %120 : vector<6x784xf32>
    %c17 = arith.constant 17 : index
    %c0_37 = arith.constant 0 : index
    %c0_38 = arith.constant 0 : index
    %122 = vector.load %arg2[%c17, %c0_37, %c0_38] : memref<25x6x1xf32, #tpu.memory_space<vmem>>, vector<1x6x1xf32>
    %123 = vector.shape_cast %122 : vector<1x6x1xf32> to vector<6x1xf32>
    %124 = vector.extract_strided_slice %1 {offsets = [0, 86], sizes = [1, 784], strides = [1, 1]} : vector<1x1024xf32> to vector<1x784xf32>
    %125 = vector.broadcast %123 : vector<6x1xf32> to vector<6x784xf32>
    %126 = vector.broadcast %124 : vector<1x784xf32> to vector<6x784xf32>
    %127 = arith.mulf %125, %126 : vector<6x784xf32>
    %128 = arith.addf %121, %127 : vector<6x784xf32>
    %c18 = arith.constant 18 : index
    %c0_39 = arith.constant 0 : index
    %c0_40 = arith.constant 0 : index
    %129 = vector.load %arg2[%c18, %c0_39, %c0_40] : memref<25x6x1xf32, #tpu.memory_space<vmem>>, vector<1x6x1xf32>
    %130 = vector.shape_cast %129 : vector<1x6x1xf32> to vector<6x1xf32>
    %131 = vector.extract_strided_slice %1 {offsets = [0, 87], sizes = [1, 784], strides = [1, 1]} : vector<1x1024xf32> to vector<1x784xf32>
    %132 = vector.broadcast %130 : vector<6x1xf32> to vector<6x784xf32>
    %133 = vector.broadcast %131 : vector<1x784xf32> to vector<6x784xf32>
    %134 = arith.mulf %132, %133 : vector<6x784xf32>
    %135 = arith.addf %128, %134 : vector<6x784xf32>
    %c19 = arith.constant 19 : index
    %c0_41 = arith.constant 0 : index
    %c0_42 = arith.constant 0 : index
    %136 = vector.load %arg2[%c19, %c0_41, %c0_42] : memref<25x6x1xf32, #tpu.memory_space<vmem>>, vector<1x6x1xf32>
    %137 = vector.shape_cast %136 : vector<1x6x1xf32> to vector<6x1xf32>
    %138 = vector.extract_strided_slice %1 {offsets = [0, 88], sizes = [1, 784], strides = [1, 1]} : vector<1x1024xf32> to vector<1x784xf32>
    %139 = vector.broadcast %137 : vector<6x1xf32> to vector<6x784xf32>
    %140 = vector.broadcast %138 : vector<1x784xf32> to vector<6x784xf32>
    %141 = arith.mulf %139, %140 : vector<6x784xf32>
    %142 = arith.addf %135, %141 : vector<6x784xf32>
    %c20 = arith.constant 20 : index
    %c0_43 = arith.constant 0 : index
    %c0_44 = arith.constant 0 : index
    %143 = vector.load %arg2[%c20, %c0_43, %c0_44] : memref<25x6x1xf32, #tpu.memory_space<vmem>>, vector<1x6x1xf32>
    %144 = vector.shape_cast %143 : vector<1x6x1xf32> to vector<6x1xf32>
    %145 = vector.extract_strided_slice %1 {offsets = [0, 112], sizes = [1, 784], strides = [1, 1]} : vector<1x1024xf32> to vector<1x784xf32>
    %146 = vector.broadcast %144 : vector<6x1xf32> to vector<6x784xf32>
    %147 = vector.broadcast %145 : vector<1x784xf32> to vector<6x784xf32>
    %148 = arith.mulf %146, %147 : vector<6x784xf32>
    %149 = arith.addf %142, %148 : vector<6x784xf32>
    %c21 = arith.constant 21 : index
    %c0_45 = arith.constant 0 : index
    %c0_46 = arith.constant 0 : index
    %150 = vector.load %arg2[%c21, %c0_45, %c0_46] : memref<25x6x1xf32, #tpu.memory_space<vmem>>, vector<1x6x1xf32>
    %151 = vector.shape_cast %150 : vector<1x6x1xf32> to vector<6x1xf32>
    %152 = vector.extract_strided_slice %1 {offsets = [0, 113], sizes = [1, 784], strides = [1, 1]} : vector<1x1024xf32> to vector<1x784xf32>
    %153 = vector.broadcast %151 : vector<6x1xf32> to vector<6x784xf32>
    %154 = vector.broadcast %152 : vector<1x784xf32> to vector<6x784xf32>
    %155 = arith.mulf %153, %154 : vector<6x784xf32>
    %156 = arith.addf %149, %155 : vector<6x784xf32>
    %c22 = arith.constant 22 : index
    %c0_47 = arith.constant 0 : index
    %c0_48 = arith.constant 0 : index
    %157 = vector.load %arg2[%c22, %c0_47, %c0_48] : memref<25x6x1xf32, #tpu.memory_space<vmem>>, vector<1x6x1xf32>
    %158 = vector.shape_cast %157 : vector<1x6x1xf32> to vector<6x1xf32>
    %159 = vector.extract_strided_slice %1 {offsets = [0, 114], sizes = [1, 784], strides = [1, 1]} : vector<1x1024xf32> to vector<1x784xf32>
    %160 = vector.broadcast %158 : vector<6x1xf32> to vector<6x784xf32>
    %161 = vector.broadcast %159 : vector<1x784xf32> to vector<6x784xf32>
    %162 = arith.mulf %160, %161 : vector<6x784xf32>
    %163 = arith.addf %156, %162 : vector<6x784xf32>
    %c23 = arith.constant 23 : index
    %c0_49 = arith.constant 0 : index
    %c0_50 = arith.constant 0 : index
    %164 = vector.load %arg2[%c23, %c0_49, %c0_50] : memref<25x6x1xf32, #tpu.memory_space<vmem>>, vector<1x6x1xf32>
    %165 = vector.shape_cast %164 : vector<1x6x1xf32> to vector<6x1xf32>
    %166 = vector.extract_strided_slice %1 {offsets = [0, 115], sizes = [1, 784], strides = [1, 1]} : vector<1x1024xf32> to vector<1x784xf32>
    %167 = vector.broadcast %165 : vector<6x1xf32> to vector<6x784xf32>
    %168 = vector.broadcast %166 : vector<1x784xf32> to vector<6x784xf32>
    %169 = arith.mulf %167, %168 : vector<6x784xf32>
    %170 = arith.addf %163, %169 : vector<6x784xf32>
    %c24 = arith.constant 24 : index
    %c0_51 = arith.constant 0 : index
    %c0_52 = arith.constant 0 : index
    %171 = vector.load %arg2[%c24, %c0_51, %c0_52] : memref<25x6x1xf32, #tpu.memory_space<vmem>>, vector<1x6x1xf32>
    %172 = vector.shape_cast %171 : vector<1x6x1xf32> to vector<6x1xf32>
    %173 = vector.extract_strided_slice %1 {offsets = [0, 116], sizes = [1, 784], strides = [1, 1]} : vector<1x1024xf32> to vector<1x784xf32>
    %174 = vector.broadcast %172 : vector<6x1xf32> to vector<6x784xf32>
    %175 = vector.broadcast %173 : vector<1x784xf32> to vector<6x784xf32>
    %176 = arith.mulf %174, %175 : vector<6x784xf32>
    %177 = arith.addf %170, %176 : vector<6x784xf32>
    %c0_53 = arith.constant 0 : index
    %c0_54 = arith.constant 0 : index
    %178 = vector.load %arg3[%c0_53, %c0_54] : memref<6x1xf32, #tpu.memory_space<vmem>>, vector<6x1xf32>
    %179 = vector.broadcast %178 : vector<6x1xf32> to vector<6x784xf32>
    %180 = arith.addf %177, %179 : vector<6x784xf32>
    %cst_55 = arith.constant 0.000000e+00 : f32
    %181 = vector.broadcast %cst_55 : f32 to vector<6x784xf32>
    %182 = arith.subf %181, %180 : vector<6x784xf32>
    %183 = math.exp %182 : vector<6x784xf32>
    %cst_56 = arith.constant 1.000000e+00 : f32
    %184 = vector.broadcast %cst_56 : f32 to vector<6x784xf32>
    %185 = arith.addf %184, %183 : vector<6x784xf32>
    %cst_57 = arith.constant 1.000000e+00 : f32
    %186 = vector.broadcast %cst_57 : f32 to vector<6x784xf32>
    %187 = arith.divf %186, %185 : vector<6x784xf32>
    %188 = vector.extract_strided_slice %187 {offsets = [0, 0], sizes = [6, 640], strides = [1, 1]} : vector<6x784xf32> to vector<6x640xf32>
    %189 = vector.extract_strided_slice %187 {offsets = [0, 1], sizes = [6, 640], strides = [1, 1]} : vector<6x784xf32> to vector<6x640xf32>
    %190 = arith.maximumf %188, %189 : vector<6x640xf32>
    %191 = vector.extract_strided_slice %187 {offsets = [0, 28], sizes = [6, 640], strides = [1, 1]} : vector<6x784xf32> to vector<6x640xf32>
    %192 = vector.extract_strided_slice %187 {offsets = [0, 29], sizes = [6, 640], strides = [1, 1]} : vector<6x784xf32> to vector<6x640xf32>
    %193 = arith.maximumf %191, %192 : vector<6x640xf32>
    %194 = arith.maximumf %190, %193 : vector<6x640xf32>
    %c0_58 = arith.constant 0 : index
    %c0_59 = arith.constant 0 : index
    %195 = vector.load %arg6[%c0_58, %c0_59] : memref<640x144xf32, #tpu.memory_space<vmem>>, vector<640x144xf32>
    %cst_60 = arith.constant dense<0.000000e+00> : vector<6x144xf32>
    %196 = tpu.matmul %194, %195, %cst_60 {dimension_numbers = #tpu.dot_dimension_numbers<[1], [0], [0], [1], [0, 0, 1, 1], [], []>} : vector<6x640xf32>, vector<640x144xf32>, vector<6x144xf32> -> vector<6x144xf32>
    %cst_61 = arith.constant 0.000000e+00 : f32
    %197 = vector.broadcast %cst_61 : f32 to vector<16x92xf32>
    %c0_62 = arith.constant 0 : index
    %c0_63 = arith.constant 0 : index
    %c0_64 = arith.constant 0 : index
    %198 = vector.load %arg4[%c0_62, %c0_63, %c0_64] : memref<25x16x6xf32, #tpu.memory_space<vmem>>, vector<1x16x6xf32>
    %199 = vector.shape_cast %198 : vector<1x16x6xf32> to vector<16x6xf32>
    %200 = vector.extract_strided_slice %196 {offsets = [0, 0], sizes = [6, 92], strides = [1, 1]} : vector<6x144xf32> to vector<6x92xf32>
    %cst_65 = arith.constant dense<0.000000e+00> : vector<16x92xf32>
    %201 = tpu.matmul %199, %200, %cst_65 {dimension_numbers = #tpu.dot_dimension_numbers<[1], [0], [0], [1], [0, 0, 1, 1], [], []>} : vector<16x6xf32>, vector<6x92xf32>, vector<16x92xf32> -> vector<16x92xf32>
    %202 = arith.addf %197, %201 : vector<16x92xf32>
    %c1_66 = arith.constant 1 : index
    %c0_67 = arith.constant 0 : index
    %c0_68 = arith.constant 0 : index
    %203 = vector.load %arg4[%c1_66, %c0_67, %c0_68] : memref<25x16x6xf32, #tpu.memory_space<vmem>>, vector<1x16x6xf32>
    %204 = vector.shape_cast %203 : vector<1x16x6xf32> to vector<16x6xf32>
    %205 = vector.extract_strided_slice %196 {offsets = [0, 1], sizes = [6, 92], strides = [1, 1]} : vector<6x144xf32> to vector<6x92xf32>
    %cst_69 = arith.constant dense<0.000000e+00> : vector<16x92xf32>
    %206 = tpu.matmul %204, %205, %cst_69 {dimension_numbers = #tpu.dot_dimension_numbers<[1], [0], [0], [1], [0, 0, 1, 1], [], []>} : vector<16x6xf32>, vector<6x92xf32>, vector<16x92xf32> -> vector<16x92xf32>
    %207 = arith.addf %202, %206 : vector<16x92xf32>
    %c2_70 = arith.constant 2 : index
    %c0_71 = arith.constant 0 : index
    %c0_72 = arith.constant 0 : index
    %208 = vector.load %arg4[%c2_70, %c0_71, %c0_72] : memref<25x16x6xf32, #tpu.memory_space<vmem>>, vector<1x16x6xf32>
    %209 = vector.shape_cast %208 : vector<1x16x6xf32> to vector<16x6xf32>
    %210 = vector.extract_strided_slice %196 {offsets = [0, 2], sizes = [6, 92], strides = [1, 1]} : vector<6x144xf32> to vector<6x92xf32>
    %cst_73 = arith.constant dense<0.000000e+00> : vector<16x92xf32>
    %211 = tpu.matmul %209, %210, %cst_73 {dimension_numbers = #tpu.dot_dimension_numbers<[1], [0], [0], [1], [0, 0, 1, 1], [], []>} : vector<16x6xf32>, vector<6x92xf32>, vector<16x92xf32> -> vector<16x92xf32>
    %212 = arith.addf %207, %211 : vector<16x92xf32>
    %c3_74 = arith.constant 3 : index
    %c0_75 = arith.constant 0 : index
    %c0_76 = arith.constant 0 : index
    %213 = vector.load %arg4[%c3_74, %c0_75, %c0_76] : memref<25x16x6xf32, #tpu.memory_space<vmem>>, vector<1x16x6xf32>
    %214 = vector.shape_cast %213 : vector<1x16x6xf32> to vector<16x6xf32>
    %215 = vector.extract_strided_slice %196 {offsets = [0, 3], sizes = [6, 92], strides = [1, 1]} : vector<6x144xf32> to vector<6x92xf32>
    %cst_77 = arith.constant dense<0.000000e+00> : vector<16x92xf32>
    %216 = tpu.matmul %214, %215, %cst_77 {dimension_numbers = #tpu.dot_dimension_numbers<[1], [0], [0], [1], [0, 0, 1, 1], [], []>} : vector<16x6xf32>, vector<6x92xf32>, vector<16x92xf32> -> vector<16x92xf32>
    %217 = arith.addf %212, %216 : vector<16x92xf32>
    %c4_78 = arith.constant 4 : index
    %c0_79 = arith.constant 0 : index
    %c0_80 = arith.constant 0 : index
    %218 = vector.load %arg4[%c4_78, %c0_79, %c0_80] : memref<25x16x6xf32, #tpu.memory_space<vmem>>, vector<1x16x6xf32>
    %219 = vector.shape_cast %218 : vector<1x16x6xf32> to vector<16x6xf32>
    %220 = vector.extract_strided_slice %196 {offsets = [0, 4], sizes = [6, 92], strides = [1, 1]} : vector<6x144xf32> to vector<6x92xf32>
    %cst_81 = arith.constant dense<0.000000e+00> : vector<16x92xf32>
    %221 = tpu.matmul %219, %220, %cst_81 {dimension_numbers = #tpu.dot_dimension_numbers<[1], [0], [0], [1], [0, 0, 1, 1], [], []>} : vector<16x6xf32>, vector<6x92xf32>, vector<16x92xf32> -> vector<16x92xf32>
    %222 = arith.addf %217, %221 : vector<16x92xf32>
    %c5_82 = arith.constant 5 : index
    %c0_83 = arith.constant 0 : index
    %c0_84 = arith.constant 0 : index
    %223 = vector.load %arg4[%c5_82, %c0_83, %c0_84] : memref<25x16x6xf32, #tpu.memory_space<vmem>>, vector<1x16x6xf32>
    %224 = vector.shape_cast %223 : vector<1x16x6xf32> to vector<16x6xf32>
    %225 = vector.extract_strided_slice %196 {offsets = [0, 12], sizes = [6, 92], strides = [1, 1]} : vector<6x144xf32> to vector<6x92xf32>
    %cst_85 = arith.constant dense<0.000000e+00> : vector<16x92xf32>
    %226 = tpu.matmul %224, %225, %cst_85 {dimension_numbers = #tpu.dot_dimension_numbers<[1], [0], [0], [1], [0, 0, 1, 1], [], []>} : vector<16x6xf32>, vector<6x92xf32>, vector<16x92xf32> -> vector<16x92xf32>
    %227 = arith.addf %222, %226 : vector<16x92xf32>
    %c6_86 = arith.constant 6 : index
    %c0_87 = arith.constant 0 : index
    %c0_88 = arith.constant 0 : index
    %228 = vector.load %arg4[%c6_86, %c0_87, %c0_88] : memref<25x16x6xf32, #tpu.memory_space<vmem>>, vector<1x16x6xf32>
    %229 = vector.shape_cast %228 : vector<1x16x6xf32> to vector<16x6xf32>
    %230 = vector.extract_strided_slice %196 {offsets = [0, 13], sizes = [6, 92], strides = [1, 1]} : vector<6x144xf32> to vector<6x92xf32>
    %cst_89 = arith.constant dense<0.000000e+00> : vector<16x92xf32>
    %231 = tpu.matmul %229, %230, %cst_89 {dimension_numbers = #tpu.dot_dimension_numbers<[1], [0], [0], [1], [0, 0, 1, 1], [], []>} : vector<16x6xf32>, vector<6x92xf32>, vector<16x92xf32> -> vector<16x92xf32>
    %232 = arith.addf %227, %231 : vector<16x92xf32>
    %c7_90 = arith.constant 7 : index
    %c0_91 = arith.constant 0 : index
    %c0_92 = arith.constant 0 : index
    %233 = vector.load %arg4[%c7_90, %c0_91, %c0_92] : memref<25x16x6xf32, #tpu.memory_space<vmem>>, vector<1x16x6xf32>
    %234 = vector.shape_cast %233 : vector<1x16x6xf32> to vector<16x6xf32>
    %235 = vector.extract_strided_slice %196 {offsets = [0, 14], sizes = [6, 92], strides = [1, 1]} : vector<6x144xf32> to vector<6x92xf32>
    %cst_93 = arith.constant dense<0.000000e+00> : vector<16x92xf32>
    %236 = tpu.matmul %234, %235, %cst_93 {dimension_numbers = #tpu.dot_dimension_numbers<[1], [0], [0], [1], [0, 0, 1, 1], [], []>} : vector<16x6xf32>, vector<6x92xf32>, vector<16x92xf32> -> vector<16x92xf32>
    %237 = arith.addf %232, %236 : vector<16x92xf32>
    %c8_94 = arith.constant 8 : index
    %c0_95 = arith.constant 0 : index
    %c0_96 = arith.constant 0 : index
    %238 = vector.load %arg4[%c8_94, %c0_95, %c0_96] : memref<25x16x6xf32, #tpu.memory_space<vmem>>, vector<1x16x6xf32>
    %239 = vector.shape_cast %238 : vector<1x16x6xf32> to vector<16x6xf32>
    %240 = vector.extract_strided_slice %196 {offsets = [0, 15], sizes = [6, 92], strides = [1, 1]} : vector<6x144xf32> to vector<6x92xf32>
    %cst_97 = arith.constant dense<0.000000e+00> : vector<16x92xf32>
    %241 = tpu.matmul %239, %240, %cst_97 {dimension_numbers = #tpu.dot_dimension_numbers<[1], [0], [0], [1], [0, 0, 1, 1], [], []>} : vector<16x6xf32>, vector<6x92xf32>, vector<16x92xf32> -> vector<16x92xf32>
    %242 = arith.addf %237, %241 : vector<16x92xf32>
    %c9_98 = arith.constant 9 : index
    %c0_99 = arith.constant 0 : index
    %c0_100 = arith.constant 0 : index
    %243 = vector.load %arg4[%c9_98, %c0_99, %c0_100] : memref<25x16x6xf32, #tpu.memory_space<vmem>>, vector<1x16x6xf32>
    %244 = vector.shape_cast %243 : vector<1x16x6xf32> to vector<16x6xf32>
    %245 = vector.extract_strided_slice %196 {offsets = [0, 16], sizes = [6, 92], strides = [1, 1]} : vector<6x144xf32> to vector<6x92xf32>
    %cst_101 = arith.constant dense<0.000000e+00> : vector<16x92xf32>
    %246 = tpu.matmul %244, %245, %cst_101 {dimension_numbers = #tpu.dot_dimension_numbers<[1], [0], [0], [1], [0, 0, 1, 1], [], []>} : vector<16x6xf32>, vector<6x92xf32>, vector<16x92xf32> -> vector<16x92xf32>
    %247 = arith.addf %242, %246 : vector<16x92xf32>
    %c10_102 = arith.constant 10 : index
    %c0_103 = arith.constant 0 : index
    %c0_104 = arith.constant 0 : index
    %248 = vector.load %arg4[%c10_102, %c0_103, %c0_104] : memref<25x16x6xf32, #tpu.memory_space<vmem>>, vector<1x16x6xf32>
    %249 = vector.shape_cast %248 : vector<1x16x6xf32> to vector<16x6xf32>
    %250 = vector.extract_strided_slice %196 {offsets = [0, 24], sizes = [6, 92], strides = [1, 1]} : vector<6x144xf32> to vector<6x92xf32>
    %cst_105 = arith.constant dense<0.000000e+00> : vector<16x92xf32>
    %251 = tpu.matmul %249, %250, %cst_105 {dimension_numbers = #tpu.dot_dimension_numbers<[1], [0], [0], [1], [0, 0, 1, 1], [], []>} : vector<16x6xf32>, vector<6x92xf32>, vector<16x92xf32> -> vector<16x92xf32>
    %252 = arith.addf %247, %251 : vector<16x92xf32>
    %c11_106 = arith.constant 11 : index
    %c0_107 = arith.constant 0 : index
    %c0_108 = arith.constant 0 : index
    %253 = vector.load %arg4[%c11_106, %c0_107, %c0_108] : memref<25x16x6xf32, #tpu.memory_space<vmem>>, vector<1x16x6xf32>
    %254 = vector.shape_cast %253 : vector<1x16x6xf32> to vector<16x6xf32>
    %255 = vector.extract_strided_slice %196 {offsets = [0, 25], sizes = [6, 92], strides = [1, 1]} : vector<6x144xf32> to vector<6x92xf32>
    %cst_109 = arith.constant dense<0.000000e+00> : vector<16x92xf32>
    %256 = tpu.matmul %254, %255, %cst_109 {dimension_numbers = #tpu.dot_dimension_numbers<[1], [0], [0], [1], [0, 0, 1, 1], [], []>} : vector<16x6xf32>, vector<6x92xf32>, vector<16x92xf32> -> vector<16x92xf32>
    %257 = arith.addf %252, %256 : vector<16x92xf32>
    %c12_110 = arith.constant 12 : index
    %c0_111 = arith.constant 0 : index
    %c0_112 = arith.constant 0 : index
    %258 = vector.load %arg4[%c12_110, %c0_111, %c0_112] : memref<25x16x6xf32, #tpu.memory_space<vmem>>, vector<1x16x6xf32>
    %259 = vector.shape_cast %258 : vector<1x16x6xf32> to vector<16x6xf32>
    %260 = vector.extract_strided_slice %196 {offsets = [0, 26], sizes = [6, 92], strides = [1, 1]} : vector<6x144xf32> to vector<6x92xf32>
    %cst_113 = arith.constant dense<0.000000e+00> : vector<16x92xf32>
    %261 = tpu.matmul %259, %260, %cst_113 {dimension_numbers = #tpu.dot_dimension_numbers<[1], [0], [0], [1], [0, 0, 1, 1], [], []>} : vector<16x6xf32>, vector<6x92xf32>, vector<16x92xf32> -> vector<16x92xf32>
    %262 = arith.addf %257, %261 : vector<16x92xf32>
    %c13_114 = arith.constant 13 : index
    %c0_115 = arith.constant 0 : index
    %c0_116 = arith.constant 0 : index
    %263 = vector.load %arg4[%c13_114, %c0_115, %c0_116] : memref<25x16x6xf32, #tpu.memory_space<vmem>>, vector<1x16x6xf32>
    %264 = vector.shape_cast %263 : vector<1x16x6xf32> to vector<16x6xf32>
    %265 = vector.extract_strided_slice %196 {offsets = [0, 27], sizes = [6, 92], strides = [1, 1]} : vector<6x144xf32> to vector<6x92xf32>
    %cst_117 = arith.constant dense<0.000000e+00> : vector<16x92xf32>
    %266 = tpu.matmul %264, %265, %cst_117 {dimension_numbers = #tpu.dot_dimension_numbers<[1], [0], [0], [1], [0, 0, 1, 1], [], []>} : vector<16x6xf32>, vector<6x92xf32>, vector<16x92xf32> -> vector<16x92xf32>
    %267 = arith.addf %262, %266 : vector<16x92xf32>
    %c14_118 = arith.constant 14 : index
    %c0_119 = arith.constant 0 : index
    %c0_120 = arith.constant 0 : index
    %268 = vector.load %arg4[%c14_118, %c0_119, %c0_120] : memref<25x16x6xf32, #tpu.memory_space<vmem>>, vector<1x16x6xf32>
    %269 = vector.shape_cast %268 : vector<1x16x6xf32> to vector<16x6xf32>
    %270 = vector.extract_strided_slice %196 {offsets = [0, 28], sizes = [6, 92], strides = [1, 1]} : vector<6x144xf32> to vector<6x92xf32>
    %cst_121 = arith.constant dense<0.000000e+00> : vector<16x92xf32>
    %271 = tpu.matmul %269, %270, %cst_121 {dimension_numbers = #tpu.dot_dimension_numbers<[1], [0], [0], [1], [0, 0, 1, 1], [], []>} : vector<16x6xf32>, vector<6x92xf32>, vector<16x92xf32> -> vector<16x92xf32>
    %272 = arith.addf %267, %271 : vector<16x92xf32>
    %c15_122 = arith.constant 15 : index
    %c0_123 = arith.constant 0 : index
    %c0_124 = arith.constant 0 : index
    %273 = vector.load %arg4[%c15_122, %c0_123, %c0_124] : memref<25x16x6xf32, #tpu.memory_space<vmem>>, vector<1x16x6xf32>
    %274 = vector.shape_cast %273 : vector<1x16x6xf32> to vector<16x6xf32>
    %275 = vector.extract_strided_slice %196 {offsets = [0, 36], sizes = [6, 92], strides = [1, 1]} : vector<6x144xf32> to vector<6x92xf32>
    %cst_125 = arith.constant dense<0.000000e+00> : vector<16x92xf32>
    %276 = tpu.matmul %274, %275, %cst_125 {dimension_numbers = #tpu.dot_dimension_numbers<[1], [0], [0], [1], [0, 0, 1, 1], [], []>} : vector<16x6xf32>, vector<6x92xf32>, vector<16x92xf32> -> vector<16x92xf32>
    %277 = arith.addf %272, %276 : vector<16x92xf32>
    %c16_126 = arith.constant 16 : index
    %c0_127 = arith.constant 0 : index
    %c0_128 = arith.constant 0 : index
    %278 = vector.load %arg4[%c16_126, %c0_127, %c0_128] : memref<25x16x6xf32, #tpu.memory_space<vmem>>, vector<1x16x6xf32>
    %279 = vector.shape_cast %278 : vector<1x16x6xf32> to vector<16x6xf32>
    %280 = vector.extract_strided_slice %196 {offsets = [0, 37], sizes = [6, 92], strides = [1, 1]} : vector<6x144xf32> to vector<6x92xf32>
    %cst_129 = arith.constant dense<0.000000e+00> : vector<16x92xf32>
    %281 = tpu.matmul %279, %280, %cst_129 {dimension_numbers = #tpu.dot_dimension_numbers<[1], [0], [0], [1], [0, 0, 1, 1], [], []>} : vector<16x6xf32>, vector<6x92xf32>, vector<16x92xf32> -> vector<16x92xf32>
    %282 = arith.addf %277, %281 : vector<16x92xf32>
    %c17_130 = arith.constant 17 : index
    %c0_131 = arith.constant 0 : index
    %c0_132 = arith.constant 0 : index
    %283 = vector.load %arg4[%c17_130, %c0_131, %c0_132] : memref<25x16x6xf32, #tpu.memory_space<vmem>>, vector<1x16x6xf32>
    %284 = vector.shape_cast %283 : vector<1x16x6xf32> to vector<16x6xf32>
    %285 = vector.extract_strided_slice %196 {offsets = [0, 38], sizes = [6, 92], strides = [1, 1]} : vector<6x144xf32> to vector<6x92xf32>
    %cst_133 = arith.constant dense<0.000000e+00> : vector<16x92xf32>
    %286 = tpu.matmul %284, %285, %cst_133 {dimension_numbers = #tpu.dot_dimension_numbers<[1], [0], [0], [1], [0, 0, 1, 1], [], []>} : vector<16x6xf32>, vector<6x92xf32>, vector<16x92xf32> -> vector<16x92xf32>
    %287 = arith.addf %282, %286 : vector<16x92xf32>
    %c18_134 = arith.constant 18 : index
    %c0_135 = arith.constant 0 : index
    %c0_136 = arith.constant 0 : index
    %288 = vector.load %arg4[%c18_134, %c0_135, %c0_136] : memref<25x16x6xf32, #tpu.memory_space<vmem>>, vector<1x16x6xf32>
    %289 = vector.shape_cast %288 : vector<1x16x6xf32> to vector<16x6xf32>
    %290 = vector.extract_strided_slice %196 {offsets = [0, 39], sizes = [6, 92], strides = [1, 1]} : vector<6x144xf32> to vector<6x92xf32>
    %cst_137 = arith.constant dense<0.000000e+00> : vector<16x92xf32>
    %291 = tpu.matmul %289, %290, %cst_137 {dimension_numbers = #tpu.dot_dimension_numbers<[1], [0], [0], [1], [0, 0, 1, 1], [], []>} : vector<16x6xf32>, vector<6x92xf32>, vector<16x92xf32> -> vector<16x92xf32>
    %292 = arith.addf %287, %291 : vector<16x92xf32>
    %c19_138 = arith.constant 19 : index
    %c0_139 = arith.constant 0 : index
    %c0_140 = arith.constant 0 : index
    %293 = vector.load %arg4[%c19_138, %c0_139, %c0_140] : memref<25x16x6xf32, #tpu.memory_space<vmem>>, vector<1x16x6xf32>
    %294 = vector.shape_cast %293 : vector<1x16x6xf32> to vector<16x6xf32>
    %295 = vector.extract_strided_slice %196 {offsets = [0, 40], sizes = [6, 92], strides = [1, 1]} : vector<6x144xf32> to vector<6x92xf32>
    %cst_141 = arith.constant dense<0.000000e+00> : vector<16x92xf32>
    %296 = tpu.matmul %294, %295, %cst_141 {dimension_numbers = #tpu.dot_dimension_numbers<[1], [0], [0], [1], [0, 0, 1, 1], [], []>} : vector<16x6xf32>, vector<6x92xf32>, vector<16x92xf32> -> vector<16x92xf32>
    %297 = arith.addf %292, %296 : vector<16x92xf32>
    %c20_142 = arith.constant 20 : index
    %c0_143 = arith.constant 0 : index
    %c0_144 = arith.constant 0 : index
    %298 = vector.load %arg4[%c20_142, %c0_143, %c0_144] : memref<25x16x6xf32, #tpu.memory_space<vmem>>, vector<1x16x6xf32>
    %299 = vector.shape_cast %298 : vector<1x16x6xf32> to vector<16x6xf32>
    %300 = vector.extract_strided_slice %196 {offsets = [0, 48], sizes = [6, 92], strides = [1, 1]} : vector<6x144xf32> to vector<6x92xf32>
    %cst_145 = arith.constant dense<0.000000e+00> : vector<16x92xf32>
    %301 = tpu.matmul %299, %300, %cst_145 {dimension_numbers = #tpu.dot_dimension_numbers<[1], [0], [0], [1], [0, 0, 1, 1], [], []>} : vector<16x6xf32>, vector<6x92xf32>, vector<16x92xf32> -> vector<16x92xf32>
    %302 = arith.addf %297, %301 : vector<16x92xf32>
    %c21_146 = arith.constant 21 : index
    %c0_147 = arith.constant 0 : index
    %c0_148 = arith.constant 0 : index
    %303 = vector.load %arg4[%c21_146, %c0_147, %c0_148] : memref<25x16x6xf32, #tpu.memory_space<vmem>>, vector<1x16x6xf32>
    %304 = vector.shape_cast %303 : vector<1x16x6xf32> to vector<16x6xf32>
    %305 = vector.extract_strided_slice %196 {offsets = [0, 49], sizes = [6, 92], strides = [1, 1]} : vector<6x144xf32> to vector<6x92xf32>
    %cst_149 = arith.constant dense<0.000000e+00> : vector<16x92xf32>
    %306 = tpu.matmul %304, %305, %cst_149 {dimension_numbers = #tpu.dot_dimension_numbers<[1], [0], [0], [1], [0, 0, 1, 1], [], []>} : vector<16x6xf32>, vector<6x92xf32>, vector<16x92xf32> -> vector<16x92xf32>
    %307 = arith.addf %302, %306 : vector<16x92xf32>
    %c22_150 = arith.constant 22 : index
    %c0_151 = arith.constant 0 : index
    %c0_152 = arith.constant 0 : index
    %308 = vector.load %arg4[%c22_150, %c0_151, %c0_152] : memref<25x16x6xf32, #tpu.memory_space<vmem>>, vector<1x16x6xf32>
    %309 = vector.shape_cast %308 : vector<1x16x6xf32> to vector<16x6xf32>
    %310 = vector.extract_strided_slice %196 {offsets = [0, 50], sizes = [6, 92], strides = [1, 1]} : vector<6x144xf32> to vector<6x92xf32>
    %cst_153 = arith.constant dense<0.000000e+00> : vector<16x92xf32>
    %311 = tpu.matmul %309, %310, %cst_153 {dimension_numbers = #tpu.dot_dimension_numbers<[1], [0], [0], [1], [0, 0, 1, 1], [], []>} : vector<16x6xf32>, vector<6x92xf32>, vector<16x92xf32> -> vector<16x92xf32>
    %312 = arith.addf %307, %311 : vector<16x92xf32>
    %c23_154 = arith.constant 23 : index
    %c0_155 = arith.constant 0 : index
    %c0_156 = arith.constant 0 : index
    %313 = vector.load %arg4[%c23_154, %c0_155, %c0_156] : memref<25x16x6xf32, #tpu.memory_space<vmem>>, vector<1x16x6xf32>
    %314 = vector.shape_cast %313 : vector<1x16x6xf32> to vector<16x6xf32>
    %315 = vector.extract_strided_slice %196 {offsets = [0, 51], sizes = [6, 92], strides = [1, 1]} : vector<6x144xf32> to vector<6x92xf32>
    %cst_157 = arith.constant dense<0.000000e+00> : vector<16x92xf32>
    %316 = tpu.matmul %314, %315, %cst_157 {dimension_numbers = #tpu.dot_dimension_numbers<[1], [0], [0], [1], [0, 0, 1, 1], [], []>} : vector<16x6xf32>, vector<6x92xf32>, vector<16x92xf32> -> vector<16x92xf32>
    %317 = arith.addf %312, %316 : vector<16x92xf32>
    %c24_158 = arith.constant 24 : index
    %c0_159 = arith.constant 0 : index
    %c0_160 = arith.constant 0 : index
    %318 = vector.load %arg4[%c24_158, %c0_159, %c0_160] : memref<25x16x6xf32, #tpu.memory_space<vmem>>, vector<1x16x6xf32>
    %319 = vector.shape_cast %318 : vector<1x16x6xf32> to vector<16x6xf32>
    %320 = vector.extract_strided_slice %196 {offsets = [0, 52], sizes = [6, 92], strides = [1, 1]} : vector<6x144xf32> to vector<6x92xf32>
    %cst_161 = arith.constant dense<0.000000e+00> : vector<16x92xf32>
    %321 = tpu.matmul %319, %320, %cst_161 {dimension_numbers = #tpu.dot_dimension_numbers<[1], [0], [0], [1], [0, 0, 1, 1], [], []>} : vector<16x6xf32>, vector<6x92xf32>, vector<16x92xf32> -> vector<16x92xf32>
    %322 = arith.addf %317, %321 : vector<16x92xf32>
    %c0_162 = arith.constant 0 : index
    %c0_163 = arith.constant 0 : index
    %323 = vector.load %arg5[%c0_162, %c0_163] : memref<16x1xf32, #tpu.memory_space<vmem>>, vector<16x1xf32>
    %324 = vector.broadcast %323 : vector<16x1xf32> to vector<16x92xf32>
    %325 = arith.addf %322, %324 : vector<16x92xf32>
    %cst_164 = arith.constant 0.000000e+00 : f32
    %326 = vector.broadcast %cst_164 : f32 to vector<16x92xf32>
    %327 = arith.subf %326, %325 : vector<16x92xf32>
    %328 = math.exp %327 : vector<16x92xf32>
    %cst_165 = arith.constant 1.000000e+00 : f32
    %329 = vector.broadcast %cst_165 : f32 to vector<16x92xf32>
    %330 = arith.addf %329, %328 : vector<16x92xf32>
    %cst_166 = arith.constant 1.000000e+00 : f32
    %331 = vector.broadcast %cst_166 : f32 to vector<16x92xf32>
    %332 = arith.divf %331, %330 : vector<16x92xf32>
    %333 = vector.extract_strided_slice %332 {offsets = [0, 0], sizes = [16, 79], strides = [1, 1]} : vector<16x92xf32> to vector<16x79xf32>
    %334 = vector.extract_strided_slice %332 {offsets = [0, 1], sizes = [16, 79], strides = [1, 1]} : vector<16x92xf32> to vector<16x79xf32>
    %335 = arith.maximumf %333, %334 : vector<16x79xf32>
    %336 = vector.extract_strided_slice %332 {offsets = [0, 12], sizes = [16, 79], strides = [1, 1]} : vector<16x92xf32> to vector<16x79xf32>
    %337 = vector.extract_strided_slice %332 {offsets = [0, 13], sizes = [16, 79], strides = [1, 1]} : vector<16x92xf32> to vector<16x79xf32>
    %338 = arith.maximumf %336, %337 : vector<16x79xf32>
    %339 = arith.maximumf %335, %338 : vector<16x79xf32>
    %c0_167 = arith.constant 0 : index
    %c0_168 = arith.constant 0 : index
    %340 = vector.load %arg7[%c0_167, %c0_168] : memref<79x16xf32, #tpu.memory_space<vmem>>, vector<79x16xf32>
    %cst_169 = arith.constant dense<0.000000e+00> : vector<16x16xf32>
    %341 = tpu.matmul %339, %340, %cst_169 {dimension_numbers = #tpu.dot_dimension_numbers<[1], [0], [0], [1], [0, 0, 1, 1], [], []>} : vector<16x79xf32>, vector<79x16xf32>, vector<16x16xf32> -> vector<16x16xf32>
    %c0_170 = arith.constant 0 : index
    %c0_171 = arith.constant 0 : index
    %342 = vector.load %arg9[%c0_170, %c0_171] : memref<1x120xf32, #tpu.memory_space<vmem>>, vector<1x120xf32>
    %343 = vector.extract_strided_slice %341 {offsets = [0, 0], sizes = [1, 16], strides = [1, 1]} : vector<16x16xf32> to vector<1x16xf32>
    %c0_172 = arith.constant 0 : index
    %c0_173 = arith.constant 0 : index
    %c0_174 = arith.constant 0 : index
    %344 = vector.load %arg8[%c0_172, %c0_173, %c0_174] : memref<16x16x120xf32, #tpu.memory_space<vmem>>, vector<1x16x120xf32>
    %345 = vector.shape_cast %344 : vector<1x16x120xf32> to vector<16x120xf32>
    %cst_175 = arith.constant dense<0.000000e+00> : vector<1x120xf32>
    %346 = tpu.matmul %343, %345, %cst_175 {dimension_numbers = #tpu.dot_dimension_numbers<[1], [0], [0], [1], [0, 0, 1, 1], [], []>} : vector<1x16xf32>, vector<16x120xf32>, vector<1x120xf32> -> vector<1x120xf32>
    %347 = arith.addf %342, %346 : vector<1x120xf32>
    %348 = vector.extract_strided_slice %341 {offsets = [1, 0], sizes = [1, 16], strides = [1, 1]} : vector<16x16xf32> to vector<1x16xf32>
    %c1_176 = arith.constant 1 : index
    %c0_177 = arith.constant 0 : index
    %c0_178 = arith.constant 0 : index
    %349 = vector.load %arg8[%c1_176, %c0_177, %c0_178] : memref<16x16x120xf32, #tpu.memory_space<vmem>>, vector<1x16x120xf32>
    %350 = vector.shape_cast %349 : vector<1x16x120xf32> to vector<16x120xf32>
    %cst_179 = arith.constant dense<0.000000e+00> : vector<1x120xf32>
    %351 = tpu.matmul %348, %350, %cst_179 {dimension_numbers = #tpu.dot_dimension_numbers<[1], [0], [0], [1], [0, 0, 1, 1], [], []>} : vector<1x16xf32>, vector<16x120xf32>, vector<1x120xf32> -> vector<1x120xf32>
    %352 = arith.addf %347, %351 : vector<1x120xf32>
    %353 = vector.extract_strided_slice %341 {offsets = [2, 0], sizes = [1, 16], strides = [1, 1]} : vector<16x16xf32> to vector<1x16xf32>
    %c2_180 = arith.constant 2 : index
    %c0_181 = arith.constant 0 : index
    %c0_182 = arith.constant 0 : index
    %354 = vector.load %arg8[%c2_180, %c0_181, %c0_182] : memref<16x16x120xf32, #tpu.memory_space<vmem>>, vector<1x16x120xf32>
    %355 = vector.shape_cast %354 : vector<1x16x120xf32> to vector<16x120xf32>
    %cst_183 = arith.constant dense<0.000000e+00> : vector<1x120xf32>
    %356 = tpu.matmul %353, %355, %cst_183 {dimension_numbers = #tpu.dot_dimension_numbers<[1], [0], [0], [1], [0, 0, 1, 1], [], []>} : vector<1x16xf32>, vector<16x120xf32>, vector<1x120xf32> -> vector<1x120xf32>
    %357 = arith.addf %352, %356 : vector<1x120xf32>
    %358 = vector.extract_strided_slice %341 {offsets = [3, 0], sizes = [1, 16], strides = [1, 1]} : vector<16x16xf32> to vector<1x16xf32>
    %c3_184 = arith.constant 3 : index
    %c0_185 = arith.constant 0 : index
    %c0_186 = arith.constant 0 : index
    %359 = vector.load %arg8[%c3_184, %c0_185, %c0_186] : memref<16x16x120xf32, #tpu.memory_space<vmem>>, vector<1x16x120xf32>
    %360 = vector.shape_cast %359 : vector<1x16x120xf32> to vector<16x120xf32>
    %cst_187 = arith.constant dense<0.000000e+00> : vector<1x120xf32>
    %361 = tpu.matmul %358, %360, %cst_187 {dimension_numbers = #tpu.dot_dimension_numbers<[1], [0], [0], [1], [0, 0, 1, 1], [], []>} : vector<1x16xf32>, vector<16x120xf32>, vector<1x120xf32> -> vector<1x120xf32>
    %362 = arith.addf %357, %361 : vector<1x120xf32>
    %363 = vector.extract_strided_slice %341 {offsets = [4, 0], sizes = [1, 16], strides = [1, 1]} : vector<16x16xf32> to vector<1x16xf32>
    %c4_188 = arith.constant 4 : index
    %c0_189 = arith.constant 0 : index
    %c0_190 = arith.constant 0 : index
    %364 = vector.load %arg8[%c4_188, %c0_189, %c0_190] : memref<16x16x120xf32, #tpu.memory_space<vmem>>, vector<1x16x120xf32>
    %365 = vector.shape_cast %364 : vector<1x16x120xf32> to vector<16x120xf32>
    %cst_191 = arith.constant dense<0.000000e+00> : vector<1x120xf32>
    %366 = tpu.matmul %363, %365, %cst_191 {dimension_numbers = #tpu.dot_dimension_numbers<[1], [0], [0], [1], [0, 0, 1, 1], [], []>} : vector<1x16xf32>, vector<16x120xf32>, vector<1x120xf32> -> vector<1x120xf32>
    %367 = arith.addf %362, %366 : vector<1x120xf32>
    %368 = vector.extract_strided_slice %341 {offsets = [5, 0], sizes = [1, 16], strides = [1, 1]} : vector<16x16xf32> to vector<1x16xf32>
    %c5_192 = arith.constant 5 : index
    %c0_193 = arith.constant 0 : index
    %c0_194 = arith.constant 0 : index
    %369 = vector.load %arg8[%c5_192, %c0_193, %c0_194] : memref<16x16x120xf32, #tpu.memory_space<vmem>>, vector<1x16x120xf32>
    %370 = vector.shape_cast %369 : vector<1x16x120xf32> to vector<16x120xf32>
    %cst_195 = arith.constant dense<0.000000e+00> : vector<1x120xf32>
    %371 = tpu.matmul %368, %370, %cst_195 {dimension_numbers = #tpu.dot_dimension_numbers<[1], [0], [0], [1], [0, 0, 1, 1], [], []>} : vector<1x16xf32>, vector<16x120xf32>, vector<1x120xf32> -> vector<1x120xf32>
    %372 = arith.addf %367, %371 : vector<1x120xf32>
    %373 = vector.extract_strided_slice %341 {offsets = [6, 0], sizes = [1, 16], strides = [1, 1]} : vector<16x16xf32> to vector<1x16xf32>
    %c6_196 = arith.constant 6 : index
    %c0_197 = arith.constant 0 : index
    %c0_198 = arith.constant 0 : index
    %374 = vector.load %arg8[%c6_196, %c0_197, %c0_198] : memref<16x16x120xf32, #tpu.memory_space<vmem>>, vector<1x16x120xf32>
    %375 = vector.shape_cast %374 : vector<1x16x120xf32> to vector<16x120xf32>
    %cst_199 = arith.constant dense<0.000000e+00> : vector<1x120xf32>
    %376 = tpu.matmul %373, %375, %cst_199 {dimension_numbers = #tpu.dot_dimension_numbers<[1], [0], [0], [1], [0, 0, 1, 1], [], []>} : vector<1x16xf32>, vector<16x120xf32>, vector<1x120xf32> -> vector<1x120xf32>
    %377 = arith.addf %372, %376 : vector<1x120xf32>
    %378 = vector.extract_strided_slice %341 {offsets = [7, 0], sizes = [1, 16], strides = [1, 1]} : vector<16x16xf32> to vector<1x16xf32>
    %c7_200 = arith.constant 7 : index
    %c0_201 = arith.constant 0 : index
    %c0_202 = arith.constant 0 : index
    %379 = vector.load %arg8[%c7_200, %c0_201, %c0_202] : memref<16x16x120xf32, #tpu.memory_space<vmem>>, vector<1x16x120xf32>
    %380 = vector.shape_cast %379 : vector<1x16x120xf32> to vector<16x120xf32>
    %cst_203 = arith.constant dense<0.000000e+00> : vector<1x120xf32>
    %381 = tpu.matmul %378, %380, %cst_203 {dimension_numbers = #tpu.dot_dimension_numbers<[1], [0], [0], [1], [0, 0, 1, 1], [], []>} : vector<1x16xf32>, vector<16x120xf32>, vector<1x120xf32> -> vector<1x120xf32>
    %382 = arith.addf %377, %381 : vector<1x120xf32>
    %383 = vector.extract_strided_slice %341 {offsets = [8, 0], sizes = [1, 16], strides = [1, 1]} : vector<16x16xf32> to vector<1x16xf32>
    %c8_204 = arith.constant 8 : index
    %c0_205 = arith.constant 0 : index
    %c0_206 = arith.constant 0 : index
    %384 = vector.load %arg8[%c8_204, %c0_205, %c0_206] : memref<16x16x120xf32, #tpu.memory_space<vmem>>, vector<1x16x120xf32>
    %385 = vector.shape_cast %384 : vector<1x16x120xf32> to vector<16x120xf32>
    %cst_207 = arith.constant dense<0.000000e+00> : vector<1x120xf32>
    %386 = tpu.matmul %383, %385, %cst_207 {dimension_numbers = #tpu.dot_dimension_numbers<[1], [0], [0], [1], [0, 0, 1, 1], [], []>} : vector<1x16xf32>, vector<16x120xf32>, vector<1x120xf32> -> vector<1x120xf32>
    %387 = arith.addf %382, %386 : vector<1x120xf32>
    %388 = vector.extract_strided_slice %341 {offsets = [9, 0], sizes = [1, 16], strides = [1, 1]} : vector<16x16xf32> to vector<1x16xf32>
    %c9_208 = arith.constant 9 : index
    %c0_209 = arith.constant 0 : index
    %c0_210 = arith.constant 0 : index
    %389 = vector.load %arg8[%c9_208, %c0_209, %c0_210] : memref<16x16x120xf32, #tpu.memory_space<vmem>>, vector<1x16x120xf32>
    %390 = vector.shape_cast %389 : vector<1x16x120xf32> to vector<16x120xf32>
    %cst_211 = arith.constant dense<0.000000e+00> : vector<1x120xf32>
    %391 = tpu.matmul %388, %390, %cst_211 {dimension_numbers = #tpu.dot_dimension_numbers<[1], [0], [0], [1], [0, 0, 1, 1], [], []>} : vector<1x16xf32>, vector<16x120xf32>, vector<1x120xf32> -> vector<1x120xf32>
    %392 = arith.addf %387, %391 : vector<1x120xf32>
    %393 = vector.extract_strided_slice %341 {offsets = [10, 0], sizes = [1, 16], strides = [1, 1]} : vector<16x16xf32> to vector<1x16xf32>
    %c10_212 = arith.constant 10 : index
    %c0_213 = arith.constant 0 : index
    %c0_214 = arith.constant 0 : index
    %394 = vector.load %arg8[%c10_212, %c0_213, %c0_214] : memref<16x16x120xf32, #tpu.memory_space<vmem>>, vector<1x16x120xf32>
    %395 = vector.shape_cast %394 : vector<1x16x120xf32> to vector<16x120xf32>
    %cst_215 = arith.constant dense<0.000000e+00> : vector<1x120xf32>
    %396 = tpu.matmul %393, %395, %cst_215 {dimension_numbers = #tpu.dot_dimension_numbers<[1], [0], [0], [1], [0, 0, 1, 1], [], []>} : vector<1x16xf32>, vector<16x120xf32>, vector<1x120xf32> -> vector<1x120xf32>
    %397 = arith.addf %392, %396 : vector<1x120xf32>
    %398 = vector.extract_strided_slice %341 {offsets = [11, 0], sizes = [1, 16], strides = [1, 1]} : vector<16x16xf32> to vector<1x16xf32>
    %c11_216 = arith.constant 11 : index
    %c0_217 = arith.constant 0 : index
    %c0_218 = arith.constant 0 : index
    %399 = vector.load %arg8[%c11_216, %c0_217, %c0_218] : memref<16x16x120xf32, #tpu.memory_space<vmem>>, vector<1x16x120xf32>
    %400 = vector.shape_cast %399 : vector<1x16x120xf32> to vector<16x120xf32>
    %cst_219 = arith.constant dense<0.000000e+00> : vector<1x120xf32>
    %401 = tpu.matmul %398, %400, %cst_219 {dimension_numbers = #tpu.dot_dimension_numbers<[1], [0], [0], [1], [0, 0, 1, 1], [], []>} : vector<1x16xf32>, vector<16x120xf32>, vector<1x120xf32> -> vector<1x120xf32>
    %402 = arith.addf %397, %401 : vector<1x120xf32>
    %403 = vector.extract_strided_slice %341 {offsets = [12, 0], sizes = [1, 16], strides = [1, 1]} : vector<16x16xf32> to vector<1x16xf32>
    %c12_220 = arith.constant 12 : index
    %c0_221 = arith.constant 0 : index
    %c0_222 = arith.constant 0 : index
    %404 = vector.load %arg8[%c12_220, %c0_221, %c0_222] : memref<16x16x120xf32, #tpu.memory_space<vmem>>, vector<1x16x120xf32>
    %405 = vector.shape_cast %404 : vector<1x16x120xf32> to vector<16x120xf32>
    %cst_223 = arith.constant dense<0.000000e+00> : vector<1x120xf32>
    %406 = tpu.matmul %403, %405, %cst_223 {dimension_numbers = #tpu.dot_dimension_numbers<[1], [0], [0], [1], [0, 0, 1, 1], [], []>} : vector<1x16xf32>, vector<16x120xf32>, vector<1x120xf32> -> vector<1x120xf32>
    %407 = arith.addf %402, %406 : vector<1x120xf32>
    %408 = vector.extract_strided_slice %341 {offsets = [13, 0], sizes = [1, 16], strides = [1, 1]} : vector<16x16xf32> to vector<1x16xf32>
    %c13_224 = arith.constant 13 : index
    %c0_225 = arith.constant 0 : index
    %c0_226 = arith.constant 0 : index
    %409 = vector.load %arg8[%c13_224, %c0_225, %c0_226] : memref<16x16x120xf32, #tpu.memory_space<vmem>>, vector<1x16x120xf32>
    %410 = vector.shape_cast %409 : vector<1x16x120xf32> to vector<16x120xf32>
    %cst_227 = arith.constant dense<0.000000e+00> : vector<1x120xf32>
    %411 = tpu.matmul %408, %410, %cst_227 {dimension_numbers = #tpu.dot_dimension_numbers<[1], [0], [0], [1], [0, 0, 1, 1], [], []>} : vector<1x16xf32>, vector<16x120xf32>, vector<1x120xf32> -> vector<1x120xf32>
    %412 = arith.addf %407, %411 : vector<1x120xf32>
    %413 = vector.extract_strided_slice %341 {offsets = [14, 0], sizes = [1, 16], strides = [1, 1]} : vector<16x16xf32> to vector<1x16xf32>
    %c14_228 = arith.constant 14 : index
    %c0_229 = arith.constant 0 : index
    %c0_230 = arith.constant 0 : index
    %414 = vector.load %arg8[%c14_228, %c0_229, %c0_230] : memref<16x16x120xf32, #tpu.memory_space<vmem>>, vector<1x16x120xf32>
    %415 = vector.shape_cast %414 : vector<1x16x120xf32> to vector<16x120xf32>
    %cst_231 = arith.constant dense<0.000000e+00> : vector<1x120xf32>
    %416 = tpu.matmul %413, %415, %cst_231 {dimension_numbers = #tpu.dot_dimension_numbers<[1], [0], [0], [1], [0, 0, 1, 1], [], []>} : vector<1x16xf32>, vector<16x120xf32>, vector<1x120xf32> -> vector<1x120xf32>
    %417 = arith.addf %412, %416 : vector<1x120xf32>
    %418 = vector.extract_strided_slice %341 {offsets = [15, 0], sizes = [1, 16], strides = [1, 1]} : vector<16x16xf32> to vector<1x16xf32>
    %c15_232 = arith.constant 15 : index
    %c0_233 = arith.constant 0 : index
    %c0_234 = arith.constant 0 : index
    %419 = vector.load %arg8[%c15_232, %c0_233, %c0_234] : memref<16x16x120xf32, #tpu.memory_space<vmem>>, vector<1x16x120xf32>
    %420 = vector.shape_cast %419 : vector<1x16x120xf32> to vector<16x120xf32>
    %cst_235 = arith.constant dense<0.000000e+00> : vector<1x120xf32>
    %421 = tpu.matmul %418, %420, %cst_235 {dimension_numbers = #tpu.dot_dimension_numbers<[1], [0], [0], [1], [0, 0, 1, 1], [], []>} : vector<1x16xf32>, vector<16x120xf32>, vector<1x120xf32> -> vector<1x120xf32>
    %422 = arith.addf %417, %421 : vector<1x120xf32>
    %cst_236 = arith.constant 0.000000e+00 : f32
    %423 = vector.broadcast %cst_236 : f32 to vector<1x120xf32>
    %424 = arith.subf %423, %422 : vector<1x120xf32>
    %425 = math.exp %424 : vector<1x120xf32>
    %cst_237 = arith.constant 1.000000e+00 : f32
    %426 = vector.broadcast %cst_237 : f32 to vector<1x120xf32>
    %427 = arith.addf %426, %425 : vector<1x120xf32>
    %cst_238 = arith.constant 1.000000e+00 : f32
    %428 = vector.broadcast %cst_238 : f32 to vector<1x120xf32>
    %429 = arith.divf %428, %427 : vector<1x120xf32>
    %c0_239 = arith.constant 0 : index
    %c0_240 = arith.constant 0 : index
    %430 = vector.load %arg10[%c0_239, %c0_240] : memref<120x84xf32, #tpu.memory_space<vmem>>, vector<120x84xf32>
    %cst_241 = arith.constant dense<0.000000e+00> : vector<1x84xf32>
    %431 = tpu.matmul %429, %430, %cst_241 {dimension_numbers = #tpu.dot_dimension_numbers<[1], [0], [0], [1], [0, 0, 1, 1], [], []>} : vector<1x120xf32>, vector<120x84xf32>, vector<1x84xf32> -> vector<1x84xf32>
    %c0_242 = arith.constant 0 : index
    %c0_243 = arith.constant 0 : index
    %432 = vector.load %arg11[%c0_242, %c0_243] : memref<1x84xf32, #tpu.memory_space<vmem>>, vector<1x84xf32>
    %433 = arith.addf %431, %432 : vector<1x84xf32>
    %cst_244 = arith.constant 0.000000e+00 : f32
    %434 = vector.broadcast %cst_244 : f32 to vector<1x84xf32>
    %435 = arith.subf %434, %433 : vector<1x84xf32>
    %436 = math.exp %435 : vector<1x84xf32>
    %cst_245 = arith.constant 1.000000e+00 : f32
    %437 = vector.broadcast %cst_245 : f32 to vector<1x84xf32>
    %438 = arith.addf %437, %436 : vector<1x84xf32>
    %cst_246 = arith.constant 1.000000e+00 : f32
    %439 = vector.broadcast %cst_246 : f32 to vector<1x84xf32>
    %440 = arith.divf %439, %438 : vector<1x84xf32>
    %c0_247 = arith.constant 0 : index
    %c0_248 = arith.constant 0 : index
    %441 = vector.load %arg12[%c0_247, %c0_248] : memref<84x10xf32, #tpu.memory_space<vmem>>, vector<84x10xf32>
    %cst_249 = arith.constant dense<0.000000e+00> : vector<1x10xf32>
    %442 = tpu.matmul %440, %441, %cst_249 {dimension_numbers = #tpu.dot_dimension_numbers<[1], [0], [0], [1], [0, 0, 1, 1], [], []>} : vector<1x84xf32>, vector<84x10xf32>, vector<1x10xf32> -> vector<1x10xf32>
    %c0_250 = arith.constant 0 : index
    %c0_251 = arith.constant 0 : index
    %443 = vector.load %arg13[%c0_250, %c0_251] : memref<1x10xf32, #tpu.memory_space<vmem>>, vector<1x10xf32>
    %444 = arith.addf %442, %443 : vector<1x10xf32>
    %c0_252 = arith.constant 0 : index
    %c0_253 = arith.constant 0 : index
    %c0_254 = arith.constant 0 : index
    %445 = vector.load %arg14[%c0_252, %c0_253, %c0_254] : memref<1x1x10xf32, #tpu.memory_space<vmem>>, vector<1x1x10xf32>
    %446 = vector.shape_cast %445 : vector<1x1x10xf32> to vector<1x10xf32>
    %447 = vector.shape_cast %444 : vector<1x10xf32> to vector<1x1x10xf32>
    tpu.vector_store %arg14[%c0_252, %c0_253, %c0_254], %447 {strides = array<i32>} : memref<1x1x10xf32, #tpu.memory_space<vmem>>, vector<1x1x10xf32>,
    return
  }
  func.func @transform_0(%arg0: i32) -> (i32, i32, i32) {
    %c0_i32 = arith.constant 0 : i32
    %c0_i32_0 = arith.constant 0 : i32
    %c0_i32_1 = arith.constant 0 : i32
    return %arg0, %c0_i32, %c0_i32_0 : i32, i32, i32
  }
  func.func @transform_1(%arg0: i32) -> (i32, i32, i32) {
    %c0_i32 = arith.constant 0 : i32
    %c0_i32_0 = arith.constant 0 : i32
    %c0_i32_1 = arith.constant 0 : i32
    %c0_i32_2 = arith.constant 0 : i32
    return %c0_i32, %c0_i32_0, %c0_i32_1 : i32, i32, i32
  }
  func.func @transform_2(%arg0: i32) -> (i32, i32) {
    %c0_i32 = arith.constant 0 : i32
    %c0_i32_0 = arith.constant 0 : i32
    %c0_i32_1 = arith.constant 0 : i32
    return %c0_i32, %c0_i32_0 : i32, i32
  }
  func.func @transform_3(%arg0: i32) -> (i32, i32, i32) {
    %c0_i32 = arith.constant 0 : i32
    %c0_i32_0 = arith.constant 0 : i32
    %c0_i32_1 = arith.constant 0 : i32
    %c0_i32_2 = arith.constant 0 : i32
    return %c0_i32, %c0_i32_0, %c0_i32_1 : i32, i32, i32
  }
  func.func @transform_4(%arg0: i32) -> (i32, i32) {
    %c0_i32 = arith.constant 0 : i32
    %c0_i32_0 = arith.constant 0 : i32
    %c0_i32_1 = arith.constant 0 : i32
    return %c0_i32, %c0_i32_0 : i32, i32
  }
  func.func @transform_5(%arg0: i32) -> (i32, i32) {
    %c0_i32 = arith.constant 0 : i32
    %c0_i32_0 = arith.constant 0 : i32
    %c0_i32_1 = arith.constant 0 : i32
    return %c0_i32, %c0_i32_0 : i32, i32
  }
  func.func @transform_6(%arg0: i32) -> (i32, i32) {
    %c0_i32 = arith.constant 0 : i32
    %c0_i32_0 = arith.constant 0 : i32
    %c0_i32_1 = arith.constant 0 : i32
    return %c0_i32, %c0_i32_0 : i32, i32
  }
  func.func @transform_7(%arg0: i32) -> (i32, i32, i32) {
    %c0_i32 = arith.constant 0 : i32
    %c0_i32_0 = arith.constant 0 : i32
    %c0_i32_1 = arith.constant 0 : i32
    %c0_i32_2 = arith.constant 0 : i32
    return %c0_i32, %c0_i32_0, %c0_i32_1 : i32, i32, i32
  }
  func.func @transform_8(%arg0: i32) -> (i32, i32) {
    %c0_i32 = arith.constant 0 : i32
    %c0_i32_0 = arith.constant 0 : i32
    %c0_i32_1 = arith.constant 0 : i32
    return %c0_i32, %c0_i32_0 : i32, i32
  }
  func.func @transform_9(%arg0: i32) -> (i32, i32) {
    %c0_i32 = arith.constant 0 : i32
    %c0_i32_0 = arith.constant 0 : i32
    %c0_i32_1 = arith.constant 0 : i32
    return %c0_i32, %c0_i32_0 : i32, i32
  }
  func.func @transform_10(%arg0: i32) -> (i32, i32) {
    %c0_i32 = arith.constant 0 : i32
    %c0_i32_0 = arith.constant 0 : i32
    %c0_i32_1 = arith.constant 0 : i32
    return %c0_i32, %c0_i32_0 : i32, i32
  }
  func.func @transform_11(%arg0: i32) -> (i32, i32) {
    %c0_i32 = arith.constant 0 : i32
    %c0_i32_0 = arith.constant 0 : i32
    %c0_i32_1 = arith.constant 0 : i32
    return %c0_i32, %c0_i32_0 : i32, i32
  }
  func.func @transform_12(%arg0: i32) -> (i32, i32) {
    %c0_i32 = arith.constant 0 : i32
    %c0_i32_0 = arith.constant 0 : i32
    %c0_i32_1 = arith.constant 0 : i32
    return %c0_i32, %c0_i32_0 : i32, i32
  }
  func.func @transform_13(%arg0: i32) -> (i32, i32, i32) {
    %c0_i32 = arith.constant 0 : i32
    %c0_i32_0 = arith.constant 0 : i32
    %c0_i32_1 = arith.constant 0 : i32
    return %arg0, %c0_i32, %c0_i32_0 : i32, i32, i32
  }
}

</mosaic_0001>

<llo_original>
// kernel: lenet_forward.1
$region0: #{lenet_forward.1}
  #allocation0 [shape = 'u32[]', space=smem, size = 0x4, offset = 0x4, fixed_abs, tag = 'smem constant byte address 0x4 - core index']
  #allocation1 [shape = 'u32[144,128]{1,0:T(1,128)}', space=vmem, size = 0x12000, scoped, tag = 'internal scratch']
  %s0 = inlined_call_operand.vmem [shape: f32[2,1,1024], index: 0, kind: input, shape index: {}]
  %s1 = inlined_call_operand.vmem [shape: f32[25,6,1], index: 1, kind: input, shape index: {}]
  %s2 = inlined_call_operand.vmem [shape: f32[6,1], index: 2, kind: input, shape index: {}]
  %s3 = inlined_call_operand.vmem [shape: f32[25,16,6], index: 3, kind: input, shape index: {}]
  %s4 = inlined_call_operand.vmem [shape: f32[16,1], index: 4, kind: input, shape index: {}]
  %s5 = inlined_call_operand.vmem [shape: f32[640,144], index: 5, kind: input, shape index: {}]
  %s6 = inlined_call_operand.vmem [shape: f32[79,16], index: 6, kind: input, shape index: {}]
  %s7 = inlined_call_operand.vmem [shape: f32[16,16,120], index: 7, kind: input, shape index: {}]
  %s8 = inlined_call_operand.vmem [shape: f32[1,120], index: 8, kind: input, shape index: {}]
  %s9 = inlined_call_operand.vmem [shape: f32[120,84], index: 9, kind: input, shape index: {}]
  %s10 = inlined_call_operand.vmem [shape: f32[1,84], index: 10, kind: input, shape index: {}]
  %s11 = inlined_call_operand.vmem [shape: f32[84,10], index: 11, kind: input, shape index: {}]
  %s12 = inlined_call_operand.vmem [shape: f32[1,10], index: 12, kind: input, shape index: {}]
  %s13 = inlined_call_operand.hbm [shape: f32[2,1,10], index: 13, kind: output, shape index: {}]
  %s14 = sld [smem:[#allocation0]]
  $region85: #{lenet_forward.1} parent=0
    _
  %s16 = ssub.s32 1, %s14
  %s17 = scalar_select 0, %s16, %s14
  $region1: #{lenet_forward.1} parent=0
    #allocation2 [shape = 'u8[1024]{0}', space=vmem, size = 0x400, scoped, tag = 'output window, operand 0']
    #allocation3 [shape = 's32[2]{0}', space=sflag, size = 0x8, scoped, tag = 'scoped memory for lenet_forward.1']
    %18 = vsyncpa [#allocation3], 0
    %s19 = scalar_lea.sflag [#allocation3], 1
    %20 = vsyncpa %s19, 0
    loop: start=0, step=1, limit=4
    $region2: #{lenet_forward.1} parent=1 // loop_pre_header
      _
    $region3: #{lenet_forward.1} parent=1 // loop_header
      %s22 = sphi 0, %s26
      %p23 = scmp.ge.s32.totalorder %s22, 4
      %s32 = sphi 0, %s34
      %s35 = sphi 0, %s32
      %s36 = sphi 0, %s35
      %s52 = sphi 0, %s36
      %s56 = sphi 0, %s56
      %s58 = sphi 0, %s56
      %s59 = sphi 0, %s58
      %s73 = sphi 0, %s59
      %s77 = sphi 0, %s77
      %s79 = sphi 0, %s77
      %s80 = sphi 0, %s79
      %s94 = sphi 0, %s80
      %s98 = sphi 0, %s98
      %s100 = sphi 0, %s98
      %s101 = sphi 0, %s100
      %s115 = sphi 0, %s101
      %s119 = sphi 0, %s119
      %s121 = sphi 0, %s119
      %s122 = sphi 0, %s121
      %s136 = sphi 0, %s122
      %s140 = sphi 0, %s140
      %s142 = sphi 0, %s140
      %s143 = sphi 0, %s142
      %s157 = sphi 0, %s143
      %s161 = sphi 0, %s161
      %s163 = sphi 0, %s161
      %s164 = sphi 0, %s163
      %s178 = sphi 0, %s164
      %s182 = sphi 0, %s182
      %s184 = sphi 0, %s182
      %s185 = sphi 0, %s184
      %s199 = sphi 0, %s185
      %s203 = sphi 0, %s203
      %s205 = sphi 0, %s203
      %s206 = sphi 0, %s205
      %s220 = sphi 0, %s206
      %s224 = sphi 0, %s224
      %s226 = sphi 0, %s224
      %s227 = sphi 0, %s226
      %s241 = sphi 0, %s227
      %s245 = sphi 0, %s245
      %s247 = sphi 0, %s245
      %s248 = sphi 0, %s247
      %s262 = sphi 0, %s248
      %s266 = sphi 0, %s266
      %s268 = sphi 0, %s266
      %s269 = sphi 0, %s268
      %s283 = sphi 0, %s269
      %s287 = sphi 0, %s287
      %s289 = sphi 0, %s287
      %s290 = sphi 0, %s289
      %s304 = sphi 0, %s290
      %s310 = sphi 0, %s312
      %s313 = sphi 0, %s310
      %s314 = sphi 0, %s313
      %s330 = sphi 0, %s314
    $region4: #{lenet_forward.1} parent=1 // loop_header_branch
      %25 = sbr.rel (%p23) target = $region8
    $region5: #{lenet_forward.1} parent=1 // loop_body
      %s27 = ssub.s32 %s22, 1
      %s28 = ssub.s32 %s22, 2
      %s29 = sadd.s32 %s22, 1
      %s30 = ssub.s32 %s22, %s29
      %p31 = scmp.eq.s32.totalorder %s30, 0
      %s33 = sadd.s32 %s32, 1
      %s34 = scalar_select %p31, %s32, %s33
      %p37 = pneg %p31
      %p38 = scmp.eq.s32.totalorder %s22, 1
      %p39 = por %p37, %p38
      %p40 = scmp.ne.s32.totalorder %s32, %s35
      %p41 = scmp.eq.s32.totalorder %s22, 0
      %p42 = por %p40, %p41
      %p43 = scmp.ne.s32.totalorder %s32, %s35
      %p44 = scmp.eq.s32.totalorder %s27, 1
      %p45 = por %p43, %p44
      %p46 = scmp.ne.s32.totalorder %s35, %s36
      %p47 = scmp.eq.s32.totalorder %s27, 0
      %p48 = por %p46, %p47
      %p49 = scmp.ne.s32.totalorder %s35, %s36
      %p50 = scmp.eq.s32.totalorder %s28, 1
      %p51 = por %p49, %p50
      %p53 = scmp.ne.s32.totalorder %s36, %s52
      %p54 = scmp.eq.s32.totalorder %s28, 0
      %p55 = por %p53, %p54
      %s57 = sadd.s32 %s56, 1
      %p60 = scmp.eq.s32.totalorder %s22, 1
      %p61 = scmp.ne.s32.totalorder %s56, %s58
      %p62 = scmp.eq.s32.totalorder %s22, 0
      %p63 = por %p61, %p62
      %p64 = scmp.ne.s32.totalorder %s56, %s58
      %p65 = scmp.eq.s32.totalorder %s27, 1
      %p66 = por %p64, %p65
      %p67 = scmp.ne.s32.totalorder %s58, %s59
      %p68 = scmp.eq.s32.totalorder %s27, 0
      %p69 = por %p67, %p68
      %p70 = scmp.ne.s32.totalorder %s58, %s59
      %p71 = scmp.eq.s32.totalorder %s28, 1
      %p72 = por %p70, %p71
      %p74 = scmp.ne.s32.totalorder %s59, %s73
      %p75 = scmp.eq.s32.totalorder %s28, 0
      %p76 = por %p74, %p75
      %s78 = sadd.s32 %s77, 1
      %p81 = scmp.eq.s32.totalorder %s22, 1
      %p82 = scmp.ne.s32.totalorder %s77, %s79
      %p83 = scmp.eq.s32.totalorder %s22, 0
      %p84 = por %p82, %p83
      %p85 = scmp.ne.s32.totalorder %s77, %s79
      %p86 = scmp.eq.s32.totalorder %s27, 1
      %p87 = por %p85, %p86
      %p88 = scmp.ne.s32.totalorder %s79, %s80
      %p89 = scmp.eq.s32.totalorder %s27, 0
      %p90 = por %p88, %p89
      %p91 = scmp.ne.s32.totalorder %s79, %s80
      %p92 = scmp.eq.s32.totalorder %s28, 1
      %p93 = por %p91, %p92
      %p95 = scmp.ne.s32.totalorder %s80, %s94
      %p96 = scmp.eq.s32.totalorder %s28, 0
      %p97 = por %p95, %p96
      %s99 = sadd.s32 %s98, 1
      %p102 = scmp.eq.s32.totalorder %s22, 1
      %p103 = scmp.ne.s32.totalorder %s98, %s100
      %p104 = scmp.eq.s32.totalorder %s22, 0
      %p105 = por %p103, %p104
      %p106 = scmp.ne.s32.totalorder %s98, %s100
      %p107 = scmp.eq.s32.totalorder %s27, 1
      %p108 = por %p106, %p107
      %p109 = scmp.ne.s32.totalorder %s100, %s101
      %p110 = scmp.eq.s32.totalorder %s27, 0
      %p111 = por %p109, %p110
      %p112 = scmp.ne.s32.totalorder %s100, %s101
      %p113 = scmp.eq.s32.totalorder %s28, 1
      %p114 = por %p112, %p113
      %p116 = scmp.ne.s32.totalorder %s101, %s115
      %p117 = scmp.eq.s32.totalorder %s28, 0
      %p118 = por %p116, %p117
      %s120 = sadd.s32 %s119, 1
      %p123 = scmp.eq.s32.totalorder %s22, 1
      %p124 = scmp.ne.s32.totalorder %s119, %s121
      %p125 = scmp.eq.s32.totalorder %s22, 0
      %p126 = por %p124, %p125
      %p127 = scmp.ne.s32.totalorder %s119, %s121
      %p128 = scmp.eq.s32.totalorder %s27, 1
      %p129 = por %p127, %p128
      %p130 = scmp.ne.s32.totalorder %s121, %s122
      %p131 = scmp.eq.s32.totalorder %s27, 0
      %p132 = por %p130, %p131
      %p133 = scmp.ne.s32.totalorder %s121, %s122
      %p134 = scmp.eq.s32.totalorder %s28, 1
      %p135 = por %p133, %p134
      %p137 = scmp.ne.s32.totalorder %s122, %s136
      %p138 = scmp.eq.s32.totalorder %s28, 0
      %p139 = por %p137, %p138
      %s141 = sadd.s32 %s140, 1
      %p144 = scmp.eq.s32.totalorder %s22, 1
      %p145 = scmp.ne.s32.totalorder %s140, %s142
      %p146 = scmp.eq.s32.totalorder %s22, 0
      %p147 = por %p145, %p146
      %p148 = scmp.ne.s32.totalorder %s140, %s142
      %p149 = scmp.eq.s32.totalorder %s27, 1
      %p150 = por %p148, %p149
      %p151 = scmp.ne.s32.totalorder %s142, %s143
      %p152 = scmp.eq.s32.totalorder %s27, 0
      %p153 = por %p151, %p152
      %p154 = scmp.ne.s32.totalorder %s142, %s143
      %p155 = scmp.eq.s32.totalorder %s28, 1
      %p156 = por %p154, %p155
      %p158 = scmp.ne.s32.totalorder %s143, %s157
      %p159 = scmp.eq.s32.totalorder %s28, 0
      %p160 = por %p158, %p159
      %s162 = sadd.s32 %s161, 1
      %p165 = scmp.eq.s32.totalorder %s22, 1
      %p166 = scmp.ne.s32.totalorder %s161, %s163
      %p167 = scmp.eq.s32.totalorder %s22, 0
      %p168 = por %p166, %p167
      %p169 = scmp.ne.s32.totalorder %s161, %s163
      %p170 = scmp.eq.s32.totalorder %s27, 1
      %p171 = por %p169, %p170
      %p172 = scmp.ne.s32.totalorder %s163, %s164
      %p173 = scmp.eq.s32.totalorder %s27, 0
      %p174 = por %p172, %p173
      %p175 = scmp.ne.s32.totalorder %s163, %s164
      %p176 = scmp.eq.s32.totalorder %s28, 1
      %p177 = por %p175, %p176
      %p179 = scmp.ne.s32.totalorder %s164, %s178
      %p180 = scmp.eq.s32.totalorder %s28, 0
      %p181 = por %p179, %p180
      %s183 = sadd.s32 %s182, 1
      %p186 = scmp.eq.s32.totalorder %s22, 1
      %p187 = scmp.ne.s32.totalorder %s182, %s184
      %p188 = scmp.eq.s32.totalorder %s22, 0
      %p189 = por %p187, %p188
      %p190 = scmp.ne.s32.totalorder %s182, %s184
      %p191 = scmp.eq.s32.totalorder %s27, 1
      %p192 = por %p190, %p191
      %p193 = scmp.ne.s32.totalorder %s184, %s185
      %p194 = scmp.eq.s32.totalorder %s27, 0
      %p195 = por %p193, %p194
      %p196 = scmp.ne.s32.totalorder %s184, %s185
      %p197 = scmp.eq.s32.totalorder %s28, 1
      %p198 = por %p196, %p197
      %p200 = scmp.ne.s32.totalorder %s185, %s199
      %p201 = scmp.eq.s32.totalorder %s28, 0
      %p202 = por %p200, %p201
      %s204 = sadd.s32 %s203, 1
      %p207 = scmp.eq.s32.totalorder %s22, 1
      %p208 = scmp.ne.s32.totalorder %s203, %s205
      %p209 = scmp.eq.s32.totalorder %s22, 0
      %p210 = por %p208, %p209
      %p211 = scmp.ne.s32.totalorder %s203, %s205
      %p212 = scmp.eq.s32.totalorder %s27, 1
      %p213 = por %p211, %p212
      %p214 = scmp.ne.s32.totalorder %s205, %s206
      %p215 = scmp.eq.s32.totalorder %s27, 0
      %p216 = por %p214, %p215
      %p217 = scmp.ne.s32.totalorder %s205, %s206
      %p218 = scmp.eq.s32.totalorder %s28, 1
      %p219 = por %p217, %p218
      %p221 = scmp.ne.s32.totalorder %s206, %s220
      %p222 = scmp.eq.s32.totalorder %s28, 0
      %p223 = por %p221, %p222
      %s225 = sadd.s32 %s224, 1
      %p228 = scmp.eq.s32.totalorder %s22, 1
      %p229 = scmp.ne.s32.totalorder %s224, %s226
      %p230 = scmp.eq.s32.totalorder %s22, 0
      %p231 = por %p229, %p230
      %p232 = scmp.ne.s32.totalorder %s224, %s226
      %p233 = scmp.eq.s32.totalorder %s27, 1
      %p234 = por %p232, %p233
      %p235 = scmp.ne.s32.totalorder %s226, %s227
      %p236 = scmp.eq.s32.totalorder %s27, 0
      %p237 = por %p235, %p236
      %p238 = scmp.ne.s32.totalorder %s226, %s227
      %p239 = scmp.eq.s32.totalorder %s28, 1
      %p240 = por %p238, %p239
      %p242 = scmp.ne.s32.totalorder %s227, %s241
      %p243 = scmp.eq.s32.totalorder %s28, 0
      %p244 = por %p242, %p243
      %s246 = sadd.s32 %s245, 1
      %p249 = scmp.eq.s32.totalorder %s22, 1
      %p250 = scmp.ne.s32.totalorder %s245, %s247
      %p251 = scmp.eq.s32.totalorder %s22, 0
      %p252 = por %p250, %p251
      %p253 = scmp.ne.s32.totalorder %s245, %s247
      %p254 = scmp.eq.s32.totalorder %s27, 1
      %p255 = por %p253, %p254
      %p256 = scmp.ne.s32.totalorder %s247, %s248
      %p257 = scmp.eq.s32.totalorder %s27, 0
      %p258 = por %p256, %p257
      %p259 = scmp.ne.s32.totalorder %s247, %s248
      %p260 = scmp.eq.s32.totalorder %s28, 1
      %p261 = por %p259, %p260
      %p263 = scmp.ne.s32.totalorder %s248, %s262
      %p264 = scmp.eq.s32.totalorder %s28, 0
      %p265 = por %p263, %p264
      %s267 = sadd.s32 %s266, 1
      %p270 = scmp.eq.s32.totalorder %s22, 1
      %p271 = scmp.ne.s32.totalorder %s266, %s268
      %p272 = scmp.eq.s32.totalorder %s22, 0
      %p273 = por %p271, %p272
      %p274 = scmp.ne.s32.totalorder %s266, %s268
      %p275 = scmp.eq.s32.totalorder %s27, 1
      %p276 = por %p274, %p275
      %p277 = scmp.ne.s32.totalorder %s268, %s269
      %p278 = scmp.eq.s32.totalorder %s27, 0
      %p279 = por %p277, %p278
      %p280 = scmp.ne.s32.totalorder %s268, %s269
      %p281 = scmp.eq.s32.totalorder %s28, 1
      %p282 = por %p280, %p281
      %p284 = scmp.ne.s32.totalorder %s269, %s283
      %p285 = scmp.eq.s32.totalorder %s28, 0
      %p286 = por %p284, %p285
      %s288 = sadd.s32 %s287, 1
      %p291 = scmp.eq.s32.totalorder %s22, 1
      %p292 = scmp.ne.s32.totalorder %s287, %s289
      %p293 = scmp.eq.s32.totalorder %s22, 0
      %p294 = por %p292, %p293
      %p295 = scmp.ne.s32.totalorder %s287, %s289
      %p296 = scmp.eq.s32.totalorder %s27, 1
      %p297 = por %p295, %p296
      %p298 = scmp.ne.s32.totalorder %s289, %s290
      %p299 = scmp.eq.s32.totalorder %s27, 0
      %p300 = por %p298, %p299
      %p301 = scmp.ne.s32.totalorder %s289, %s290
      %p302 = scmp.eq.s32.totalorder %s28, 1
      %p303 = por %p301, %p302
      %p305 = scmp.ne.s32.totalorder %s290, %s304
      %p306 = scmp.eq.s32.totalorder %s28, 0
      %p307 = por %p305, %p306
      %s308 = ssub.s32 %s22, %s29
      %p309 = scmp.eq.s32.totalorder %s308, 0
      %s311 = sadd.s32 %s310, 1
      %s312 = scalar_select %p309, %s310, %s311
      %p315 = pneg %p309
      %p316 = scmp.eq.s32.totalorder %s22, 1
      %p317 = por %p315, %p316
      %p318 = scmp.ne.s32.totalorder %s310, %s313
      %p319 = scmp.eq.s32.totalorder %s22, 0
      %p320 = por %p318, %p319
      %p321 = scmp.ne.s32.totalorder %s310, %s313
      %p322 = scmp.eq.s32.totalorder %s27, 1
      %p323 = por %p321, %p322
      %p324 = scmp.ne.s32.totalorder %s313, %s314
      %p325 = scmp.eq.s32.totalorder %s27, 0
      %p326 = por %p324, %p325
      %p327 = scmp.ne.s32.totalorder %s313, %s314
      %p328 = scmp.eq.s32.totalorder %s28, 1
      %p329 = por %p327, %p328
      %p331 = scmp.ne.s32.totalorder %s314, %s330
      %p332 = scmp.eq.s32.totalorder %s28, 0
      %p333 = por %p331, %p332
      %p334 = scmp.le.s32.totalorder 1, %s22
      %p335 = scmp.lt.s32.totalorder %s22, 3
      %p336 = pnand %p334, %p335
      %p337 = pneg %p336
      // Predicated region
      $region9: #{lenet_forward.1} parent=5 // pred_check
        _
      $region10: #{lenet_forward.1} parent=5 // pred_check_branch
        %339 = sbr.rel (%p336) target = $region12
      $region11: #{lenet_forward.1} parent=5 // pred_region
        %s340 = ssub.s32 %s22, 1
        // Predicated region
        $region13: #{lenet_forward.1} parent=11 // pred_check
          %p341 = pneg %p69
        $region14: #{lenet_forward.1} parent=11 // pred_check_branch
          %343 = sbr.rel (%p341) target = $region16
        $region15: #{lenet_forward.1} parent=11 // pred_region
          _
        $region16: #{lenet_forward.1} parent=11 // pred_fallthru
          _
        // Predicated region
        $region17: #{lenet_forward.1} parent=11 // pred_check
          %p344 = pneg %p90
        $region18: #{lenet_forward.1} parent=11 // pred_check_branch
          %346 = sbr.rel (%p344) target = $region20
        $region19: #{lenet_forward.1} parent=11 // pred_region
          _
        $region20: #{lenet_forward.1} parent=11 // pred_fallthru
          _
        // Predicated region
        $region21: #{lenet_forward.1} parent=11 // pred_check
          %p347 = pneg %p111
        $region22: #{lenet_forward.1} parent=11 // pred_check_branch
          %349 = sbr.rel (%p347) target = $region24
        $region23: #{lenet_forward.1} parent=11 // pred_region
          _
        $region24: #{lenet_forward.1} parent=11 // pred_fallthru
          _
        // Predicated region
        $region25: #{lenet_forward.1} parent=11 // pred_check
          %p350 = pneg %p132
        $region26: #{lenet_forward.1} parent=11 // pred_check_branch
          %352 = sbr.rel (%p350) target = $region28
        $region27: #{lenet_forward.1} parent=11 // pred_region
          _
        $region28: #{lenet_forward.1} parent=11 // pred_fallthru
          _
        // Predicated region
        $region29: #{lenet_forward.1} parent=11 // pred_check
          %p353 = pneg %p153
        $region30: #{lenet_forward.1} parent=11 // pred_check_branch
          %355 = sbr.rel (%p353) target = $region32
        $region31: #{lenet_forward.1} parent=11 // pred_region
          _
        $region32: #{lenet_forward.1} parent=11 // pred_fallthru
          _
        // Predicated region
        $region33: #{lenet_forward.1} parent=11 // pred_check
          %p356 = pneg %p174
        $region34: #{lenet_forward.1} parent=11 // pred_check_branch
          %358 = sbr.rel (%p356) target = $region36
        $region35: #{lenet_forward.1} parent=11 // pred_region
          _
        $region36: #{lenet_forward.1} parent=11 // pred_fallthru
          _
        // Predicated region
        $region37: #{lenet_forward.1} parent=11 // pred_check
          %p359 = pneg %p195
        $region38: #{lenet_forward.1} parent=11 // pred_check_branch
          %361 = sbr.rel (%p359) target = $region40
        $region39: #{lenet_forward.1} parent=11 // pred_region
          _
        $region40: #{lenet_forward.1} parent=11 // pred_fallthru
          _
        // Predicated region
        $region41: #{lenet_forward.1} parent=11 // pred_check
          %p362 = pneg %p216
        $region42: #{lenet_forward.1} parent=11 // pred_check_branch
          %364 = sbr.rel (%p362) target = $region44
        $region43: #{lenet_forward.1} parent=11 // pred_region
          _
        $region44: #{lenet_forward.1} parent=11 // pred_fallthru
          _
        // Predicated region
        $region45: #{lenet_forward.1} parent=11 // pred_check
          %p365 = pneg %p237
        $region46: #{lenet_forward.1} parent=11 // pred_check_branch
          %367 = sbr.rel (%p365) target = $region48
        $region47: #{lenet_forward.1} parent=11 // pred_region
          _
        $region48: #{lenet_forward.1} parent=11 // pred_fallthru
          _
        // Predicated region
        $region49: #{lenet_forward.1} parent=11 // pred_check
          %p368 = pneg %p258
        $region50: #{lenet_forward.1} parent=11 // pred_check_branch
          %370 = sbr.rel (%p368) target = $region52
        $region51: #{lenet_forward.1} parent=11 // pred_region
          _
        $region52: #{lenet_forward.1} parent=11 // pred_fallthru
          _
        // Predicated region
        $region53: #{lenet_forward.1} parent=11 // pred_check
          %p371 = pneg %p279
        $region54: #{lenet_forward.1} parent=11 // pred_check_branch
          %373 = sbr.rel (%p371) target = $region56
        $region55: #{lenet_forward.1} parent=11 // pred_region
          _
        $region56: #{lenet_forward.1} parent=11 // pred_fallthru
          _
        // Predicated region
        $region57: #{lenet_forward.1} parent=11 // pred_check
          %p374 = pneg %p300
        $region58: #{lenet_forward.1} parent=11 // pred_check_branch
          %376 = sbr.rel (%p374) target = $region60
        $region59: #{lenet_forward.1} parent=11 // pred_region
          _
        $region60: #{lenet_forward.1} parent=11 // pred_fallthru
          _
      $region12: #{lenet_forward.1} parent=5 // pred_fallthru
        _
      %p377 = scmp.lt.s32.totalorder %s22, 2
      // Predicated region
      $region61: #{lenet_forward.1} parent=5 // pred_check
        %p378 = pneg %p377
      $region62: #{lenet_forward.1} parent=5 // pred_check_branch
        %380 = sbr.rel (%p378) target = $region64
      $region63: #{lenet_forward.1} parent=5 // pred_region
        // Predicated region
        $region65: #{lenet_forward.1} parent=63 // pred_check
          %p381 = pneg %p42
        $region66: #{lenet_forward.1} parent=63 // pred_check_branch
          %383 = sbr.rel (%p381) target = $region68
        $region67: #{lenet_forward.1} parent=63 // pred_region
          %p384 = scmp.lt.s32.totalorder %s22, 1
          %s385 = scalar_select %p384, %s22, 1
          %s386 = smul.addr %s385, 8
          %s387 = scalar_lea.vmem %s0, %s386
        $region68: #{lenet_forward.1} parent=63 // pred_fallthru
          _
      $region64: #{lenet_forward.1} parent=5 // pred_fallthru
        _
      %p388 = scmp.le.s32.totalorder 1, %s22
      %p389 = scmp.lt.s32.totalorder %s22, 3
      %p390 = pnand %p388, %p389
      %p391 = pneg %p390
      // Predicated region
      $region69: #{lenet_forward.1} parent=5 // pred_check
        _
      $region70: #{lenet_forward.1} parent=5 // pred_check_branch
        %393 = sbr.rel (%p390) target = $region72
      $region71: #{lenet_forward.1} parent=5 // pred_region
        %s394 = ssub.s32 %s22, 1
        %p395 = scmp.lt.s32.totalorder %s27, 1
        %s396 = scalar_select %p395, %s27, 1
        %s397 = smul.addr %s396, 8
        %s398 = scalar_lea.vmem %s0, %s397
        %p399 = pneg %p48
        %p400 = pneg %p45
        %p401 = pneg %p69
        %p402 = pneg %p66
        %p403 = pneg %p90
        %p404 = pneg %p87
        %p405 = pneg %p111
        %p406 = pneg %p108
        %p407 = pneg %p132
        %p408 = pneg %p129
        %p409 = pneg %p153
        %p410 = pneg %p150
        %p411 = pneg %p174
        %p412 = pneg %p171
        %p413 = pneg %p195
        %p414 = pneg %p192
        %p415 = pneg %p216
        %p416 = pneg %p213
        %p417 = pneg %p237
        %p418 = pneg %p234
        %p419 = pneg %p258
        %p420 = pneg %p255
        %p421 = pneg %p279
        %p422 = pneg %p276
        %p423 = pneg %p300
        %p424 = pneg %p297
        %p425 = pneg %p326
        %p426 = pneg %p323
        %s427 = sand.u32 %s313, 1
        %s428 = scalar_lea.sflag [#allocation3], %s427
        %s429 = sand.u32 %s313, 1
        %s430 = scalar_lea.vmem [#allocation2], %s429
        %p431 = scmp.lt.s32.totalorder %s27, 1
        %s432 = scalar_select %p431, %s27, 1
        %s433 = smul.addr %s432, 8
        %s434 = scalar_lea.vmem %s0, %s433
        %v435 = vld [vmem:[%s434] sm:$0xff]
        %v436 = vld [vmem:[%s1] sm:$0x3f]
        %438 = vset.pattern.permute.xlu0 0
        %439 = vperm.xlu0 %438, %v436
        %v440 = vpop.permute.xlu0 %439
        %v443 = vlaneseq
        %v444 = vshrl.u32 %v443, 7
        %v445 = vsub.s32 0, %v444
        %v446 = vrot.slane %v435, %v445
        %v447 = vlaneseq
        %v448 = vshrl.u32 %v447, 7
        %v449 = vsub.s32 1, %v448
        %v450 = vrot.slane %v435, %v449
        %v451 = vlaneseq
        %v452 = vshrl.u32 %v451, 7
        %v453 = vsub.s32 2, %v452
        %v454 = vrot.slane %v435, %v453
        %v455 = vlaneseq
        %v456 = vshrl.u32 %v455, 7
        %v457 = vsub.s32 3, %v456
        %v458 = vrot.slane %v435, %v457
        %v459 = vlaneseq
        %v460 = vshrl.u32 %v459, 7
        %v461 = vsub.s32 4, %v460
        %v462 = vrot.slane %v435, %v461
        %v463 = vlaneseq
        %v464 = vshrl.u32 %v463, 7
        %v465 = vsub.s32 5, %v464
        %v466 = vrot.slane %v435, %v465
        %v473 = vmul.f32 %v440, %v446
        %v474 = vmul.f32 %v440, %v450
        %v475 = vmul.f32 %v440, %v454
        %v476 = vmul.f32 %v440, %v458
        %v477 = vmul.f32 %v440, %v462
        %v478 = vmul.f32 %v440, %v466
        %v479 = vadd.f32 %v473, 0.0
        %v480 = vadd.f32 %v474, 0.0
        %v481 = vadd.f32 %v475, 0.0
        %v482 = vadd.f32 %v476, 0.0
        %v483 = vadd.f32 %v477, 0.0
        %v484 = vadd.f32 %v478, 0.0
        %s485 = scalar_lea.vmem %s1, 8
        %v486 = vld [vmem:[%s485] sm:$0x3f]
        %488 = vset.pattern.permute.xlu0 0
        %489 = vperm.xlu0 %488, %v486
        %v490 = vpop.permute.xlu0 %489
        %v492 = vlaneseq
        %v493 = vshrl.u32 %v492, 7
        %v494 = vsub.s32 6, %v493
        %v495 = vrot.slane %v435, %v494
        %v497 = vmul.f32 %v490, %v446
        %v498 = vmul.f32 %v490, %v450
        %v499 = vmul.f32 %v490, %v454
        %v500 = vmul.f32 %v490, %v458
        %v501 = vmul.f32 %v490, %v462
        %v502 = vmul.f32 %v490, %v466
        %v503 = vmul.f32 %v490, %v495
        %511 = vrot.lane.b32.xlu0 %v497, 127
        %v512 = vpop.permute.xlu0 %511
        %513 = vrot.lane.b32.xlu0 %v498, 127
        %v514 = vpop.permute.xlu0 %513
        %515 = vrot.lane.b32.xlu0 %v499, 127
        %v516 = vpop.permute.xlu0 %515
        %517 = vrot.lane.b32.xlu0 %v500, 127
        %v518 = vpop.permute.xlu0 %517
        %519 = vrot.lane.b32.xlu0 %v501, 127
        %v520 = vpop.permute.xlu0 %519
        %521 = vrot.lane.b32.xlu0 %v502, 127
        %v522 = vpop.permute.xlu0 %521
        %523 = vrot.lane.b32.xlu0 %v503, 127
        %v524 = vpop.permute.xlu0 %523
        %vm525 = vcmask 1039360
        %v526 = vsel %vm525, %v512, %v514
        %v527 = vsel %vm525, %v514, %v516
        %v528 = vsel %vm525, %v516, %v518
        %v529 = vsel %vm525, %v518, %v520
        %v530 = vsel %vm525, %v520, %v522
        %v531 = vsel %vm525, %v522, %v524
        %v538 = vadd.f32 %v479, %v526
        %v539 = vadd.f32 %v480, %v527
        %v540 = vadd.f32 %v481, %v528
        %v541 = vadd.f32 %v482, %v529
        %v542 = vadd.f32 %v483, %v530
        %v543 = vadd.f32 %v484, %v531
        %s544 = scalar_lea.vmem %s1, 16
        %v545 = vld [vmem:[%s544] sm:$0x3f]
        %547 = vset.pattern.permute.xlu0 0
        %548 = vperm.xlu0 %547, %v545
        %v549 = vpop.permute.xlu0 %548
        %v551 = vmul.f32 %v549, %v446
        %v552 = vmul.f32 %v549, %v450
        %v553 = vmul.f32 %v549, %v454
        %v554 = vmul.f32 %v549, %v458
        %v555 = vmul.f32 %v549, %v462
        %v556 = vmul.f32 %v549, %v466
        %v557 = vmul.f32 %v549, %v495
        %565 = vrot.lane.b32.xlu0 %v551, 126
        %v566 = vpop.permute.xlu0 %565
        %567 = vrot.lane.b32.xlu0 %v552, 126
        %v568 = vpop.permute.xlu0 %567
        %569 = vrot.lane.b32.xlu0 %v553, 126
        %v570 = vpop.permute.xlu0 %569
        %571 = vrot.lane.b32.xlu0 %v554, 126
        %v572 = vpop.permute.xlu0 %571
        %573 = vrot.lane.b32.xlu0 %v555, 126
        %v574 = vpop.permute.xlu0 %573
        %575 = vrot.lane.b32.xlu0 %v556, 126
        %v576 = vpop.permute.xlu0 %575
        %577 = vrot.lane.b32.xlu0 %v557, 126
        %v578 = vpop.permute.xlu0 %577
        %vm579 = vcmask 1031168
        %v580 = vsel %vm579, %v566, %v568
        %v581 = vsel %vm579, %v568, %v570
        %v582 = vsel %vm579, %v570, %v572
        %v583 = vsel %vm579, %v572, %v574
        %v584 = vsel %vm579, %v574, %v576
        %v585 = vsel %vm579, %v576, %v578
        %v592 = vadd.f32 %v538, %v580
        %v593 = vadd.f32 %v539, %v581
        %v594 = vadd.f32 %v540, %v582
        %v595 = vadd.f32 %v541, %v583
        %v596 = vadd.f32 %v542, %v584
        %v597 = vadd.f32 %v543, %v585
        %s598 = scalar_lea.vmem %s1, 24
        %v599 = vld [vmem:[%s598] sm:$0x3f]
        %601 = vset.pattern.permute.xlu0 0
        %602 = vperm.xlu0 %601, %v599
        %v603 = vpop.permute.xlu0 %602
        %v605 = vmul.f32 %v603, %v446
        %v606 = vmul.f32 %v603, %v450
        %v607 = vmul.f32 %v603, %v454
        %v608 = vmul.f32 %v603, %v458
        %v609 = vmul.f32 %v603, %v462
        %v610 = vmul.f32 %v603, %v466
        %v611 = vmul.f32 %v603, %v495
        %619 = vrot.lane.b32.xlu0 %v605, 125
        %v620 = vpop.permute.xlu0 %619
        %621 = vrot.lane.b32.xlu0 %v606, 125
        %v622 = vpop.permute.xlu0 %621
        %623 = vrot.lane.b32.xlu0 %v607, 125
        %v624 = vpop.permute.xlu0 %623
        %625 = vrot.lane.b32.xlu0 %v608, 125
        %v626 = vpop.permute.xlu0 %625
        %627 = vrot.lane.b32.xlu0 %v609, 125
        %v628 = vpop.permute.xlu0 %627
        %629 = vrot.lane.b32.xlu0 %v610, 125
        %v630 = vpop.permute.xlu0 %629
        %631 = vrot.lane.b32.xlu0 %v611, 125
        %v632 = vpop.permute.xlu0 %631
        %vm633 = vcmask 1022976
        %v634 = vsel %vm633, %v620, %v622
        %v635 = vsel %vm633, %v622, %v624
        %v636 = vsel %vm633, %v624, %v626
        %v637 = vsel %vm633, %v626, %v628
        %v638 = vsel %vm633, %v628, %v630
        %v639 = vsel %vm633, %v630, %v632
        %v646 = vadd.f32 %v592, %v634
        %v647 = vadd.f32 %v593, %v635
        %v648 = vadd.f32 %v594, %v636
        %v649 = vadd.f32 %v595, %v637
        %v650 = vadd.f32 %v596, %v638
        %v651 = vadd.f32 %v597, %v639
        %s652 = scalar_lea.vmem %s1, 32
        %v653 = vld [vmem:[%s652] sm:$0x3f]
        %655 = vset.pattern.permute.xlu0 0
        %656 = vperm.xlu0 %655, %v653
        %v657 = vpop.permute.xlu0 %656
        %v659 = vmul.f32 %v657, %v446
        %v660 = vmul.f32 %v657, %v450
        %v661 = vmul.f32 %v657, %v454
        %v662 = vmul.f32 %v657, %v458
        %v663 = vmul.f32 %v657, %v462
        %v664 = vmul.f32 %v657, %v466
        %v665 = vmul.f32 %v657, %v495
        %673 = vrot.lane.b32.xlu0 %v659, 124
        %v674 = vpop.permute.xlu0 %673
        %675 = vrot.lane.b32.xlu0 %v660, 124
        %v676 = vpop.permute.xlu0 %675
        %677 = vrot.lane.b32.xlu0 %v661, 124
        %v678 = vpop.permute.xlu0 %677
        %679 = vrot.lane.b32.xlu0 %v662, 124
        %v680 = vpop.permute.xlu0 %679
        %681 = vrot.lane.b32.xlu0 %v663, 124
        %v682 = vpop.permute.xlu0 %681
        %683 = vrot.lane.b32.xlu0 %v664, 124
        %v684 = vpop.permute.xlu0 %683
        %685 = vrot.lane.b32.xlu0 %v665, 124
        %v686 = vpop.permute.xlu0 %685
        %vm687 = vcmask 1014784
        %v688 = vsel %vm687, %v674, %v676
        %v689 = vsel %vm687, %v676, %v678
        %v690 = vsel %vm687, %v678, %v680
        %v691 = vsel %vm687, %v680, %v682
        %v692 = vsel %vm687, %v682, %v684
        %v693 = vsel %vm687, %v684, %v686
        %v700 = vadd.f32 %v646, %v688
        %v701 = vadd.f32 %v647, %v689
        %v702 = vadd.f32 %v648, %v690
        %v703 = vadd.f32 %v649, %v691
        %v704 = vadd.f32 %v650, %v692
        %v705 = vadd.f32 %v651, %v693
        %s706 = scalar_lea.vmem %s1, 40
        %v707 = vld [vmem:[%s706] sm:$0x3f]
        %709 = vset.pattern.permute.xlu0 0
        %710 = vperm.xlu0 %709, %v707
        %v711 = vpop.permute.xlu0 %710
        %v713 = vmul.f32 %v711, %v446
        %v714 = vmul.f32 %v711, %v450
        %v715 = vmul.f32 %v711, %v454
        %v716 = vmul.f32 %v711, %v458
        %v717 = vmul.f32 %v711, %v462
        %v718 = vmul.f32 %v711, %v466
        %v719 = vmul.f32 %v711, %v495
        %727 = vrot.lane.b32.xlu0 %v713, 100
        %v728 = vpop.permute.xlu0 %727
        %729 = vrot.lane.b32.xlu0 %v714, 100
        %v730 = vpop.permute.xlu0 %729
        %731 = vrot.lane.b32.xlu0 %v715, 100
        %v732 = vpop.permute.xlu0 %731
        %733 = vrot.lane.b32.xlu0 %v716, 100
        %v734 = vpop.permute.xlu0 %733
        %735 = vrot.lane.b32.xlu0 %v717, 100
        %v736 = vpop.permute.xlu0 %735
        %737 = vrot.lane.b32.xlu0 %v718, 100
        %v738 = vpop.permute.xlu0 %737
        %739 = vrot.lane.b32.xlu0 %v719, 100
        %v740 = vpop.permute.xlu0 %739
        %vm741 = vcmask 818176
        %v742 = vsel %vm741, %v728, %v730
        %v743 = vsel %vm741, %v730, %v732
        %v744 = vsel %vm741, %v732, %v734
        %v745 = vsel %vm741, %v734, %v736
        %v746 = vsel %vm741, %v736, %v738
        %v747 = vsel %vm741, %v738, %v740
        %v754 = vadd.f32 %v700, %v742
        %v755 = vadd.f32 %v701, %v743
        %v756 = vadd.f32 %v702, %v744
        %v757 = vadd.f32 %v703, %v745
        %v758 = vadd.f32 %v704, %v746
        %v759 = vadd.f32 %v705, %v747
        %s760 = scalar_lea.vmem %s1, 48
        %v761 = vld [vmem:[%s760] sm:$0x3f]
        %763 = vset.pattern.permute.xlu0 0
        %764 = vperm.xlu0 %763, %v761
        %v765 = vpop.permute.xlu0 %764
        %v767 = vmul.f32 %v765, %v446
        %v768 = vmul.f32 %v765, %v450
        %v769 = vmul.f32 %v765, %v454
        %v770 = vmul.f32 %v765, %v458
        %v771 = vmul.f32 %v765, %v462
        %v772 = vmul.f32 %v765, %v466
        %v773 = vmul.f32 %v765, %v495
        %781 = vrot.lane.b32.xlu0 %v767, 99
        %v782 = vpop.permute.xlu0 %781
        %783 = vrot.lane.b32.xlu0 %v768, 99
        %v784 = vpop.permute.xlu0 %783
        %785 = vrot.lane.b32.xlu0 %v769, 99
        %v786 = vpop.permute.xlu0 %785
        %787 = vrot.lane.b32.xlu0 %v770, 99
        %v788 = vpop.permute.xlu0 %787
        %789 = vrot.lane.b32.xlu0 %v771, 99
        %v790 = vpop.permute.xlu0 %789
        %791 = vrot.lane.b32.xlu0 %v772, 99
        %v792 = vpop.permute.xlu0 %791
        %793 = vrot.lane.b32.xlu0 %v773, 99
        %v794 = vpop.permute.xlu0 %793
        %vm795 = vcmask 809984
        %v796 = vsel %vm795, %v782, %v784
        %v797 = vsel %vm795, %v784, %v786
        %v798 = vsel %vm795, %v786, %v788
        %v799 = vsel %vm795, %v788, %v790
        %v800 = vsel %vm795, %v790, %v792
        %v801 = vsel %vm795, %v792, %v794
        %v808 = vadd.f32 %v754, %v796
        %v809 = vadd.f32 %v755, %v797
        %v810 = vadd.f32 %v756, %v798
        %v811 = vadd.f32 %v757, %v799
        %v812 = vadd.f32 %v758, %v800
        %v813 = vadd.f32 %v759, %v801
        %s814 = scalar_lea.vmem %s1, 56
        %v815 = vld [vmem:[%s814] sm:$0x3f]
        %817 = vset.pattern.permute.xlu0 0
        %818 = vperm.xlu0 %817, %v815
        %v819 = vpop.permute.xlu0 %818
        %v821 = vmul.f32 %v819, %v446
        %v822 = vmul.f32 %v819, %v450
        %v823 = vmul.f32 %v819, %v454
        %v824 = vmul.f32 %v819, %v458
        %v825 = vmul.f32 %v819, %v462
        %v826 = vmul.f32 %v819, %v466
        %v827 = vmul.f32 %v819, %v495
        %835 = vrot.lane.b32.xlu0 %v821, 98
        %v836 = vpop.permute.xlu0 %835
        %837 = vrot.lane.b32.xlu0 %v822, 98
        %v838 = vpop.permute.xlu0 %837
        %839 = vrot.lane.b32.xlu0 %v823, 98
        %v840 = vpop.permute.xlu0 %839
        %841 = vrot.lane.b32.xlu0 %v824, 98
        %v842 = vpop.permute.xlu0 %841
        %843 = vrot.lane.b32.xlu0 %v825, 98
        %v844 = vpop.permute.xlu0 %843
        %845 = vrot.lane.b32.xlu0 %v826, 98
        %v846 = vpop.permute.xlu0 %845
        %847 = vrot.lane.b32.xlu0 %v827, 98
        %v848 = vpop.permute.xlu0 %847
        %vm849 = vcmask 801792
        %v850 = vsel %vm849, %v836, %v838
        %v851 = vsel %vm849, %v838, %v840
        %v852 = vsel %vm849, %v840, %v842
        %v853 = vsel %vm849, %v842, %v844
        %v854 = vsel %vm849, %v844, %v846
        %v855 = vsel %vm849, %v846, %v848
        %v862 = vadd.f32 %v808, %v850
        %v863 = vadd.f32 %v809, %v851
        %v864 = vadd.f32 %v810, %v852
        %v865 = vadd.f32 %v811, %v853
        %v866 = vadd.f32 %v812, %v854
        %v867 = vadd.f32 %v813, %v855
        %s868 = scalar_lea.vmem %s1, 64
        %v869 = vld [vmem:[%s868] sm:$0x3f]
        %871 = vset.pattern.permute.xlu0 0
        %872 = vperm.xlu0 %871, %v869
        %v873 = vpop.permute.xlu0 %872
        %v875 = vmul.f32 %v873, %v446
        %v876 = vmul.f32 %v873, %v450
        %v877 = vmul.f32 %v873, %v454
        %v878 = vmul.f32 %v873, %v458
        %v879 = vmul.f32 %v873, %v462
        %v880 = vmul.f32 %v873, %v466
        %v881 = vmul.f32 %v873, %v495
        %889 = vrot.lane.b32.xlu0 %v875, 97
        %v890 = vpop.permute.xlu0 %889
        %891 = vrot.lane.b32.xlu0 %v876, 97
        %v892 = vpop.permute.xlu0 %891
        %893 = vrot.lane.b32.xlu0 %v877, 97
        %v894 = vpop.permute.xlu0 %893
        %895 = vrot.lane.b32.xlu0 %v878, 97
        %v896 = vpop.permute.xlu0 %895
        %897 = vrot.lane.b32.xlu0 %v879, 97
        %v898 = vpop.permute.xlu0 %897
        %899 = vrot.lane.b32.xlu0 %v880, 97
        %v900 = vpop.permute.xlu0 %899
        %901 = vrot.lane.b32.xlu0 %v881, 97
        %v902 = vpop.permute.xlu0 %901
        %vm903 = vcmask 793600
        %v904 = vsel %vm903, %v890, %v892
        %v905 = vsel %vm903, %v892, %v894
        %v906 = vsel %vm903, %v894, %v896
        %v907 = vsel %vm903, %v896, %v898
        %v908 = vsel %vm903, %v898, %v900
        %v909 = vsel %vm903, %v900, %v902
        %v916 = vadd.f32 %v862, %v904
        %v917 = vadd.f32 %v863, %v905
        %v918 = vadd.f32 %v864, %v906
        %v919 = vadd.f32 %v865, %v907
        %v920 = vadd.f32 %v866, %v908
        %v921 = vadd.f32 %v867, %v909
        %s922 = scalar_lea.vmem %s1, 72
        %v923 = vld [vmem:[%s922] sm:$0x3f]
        %925 = vset.pattern.permute.xlu0 0
        %926 = vperm.xlu0 %925, %v923
        %v927 = vpop.permute.xlu0 %926
        %v929 = vmul.f32 %v927, %v446
        %v930 = vmul.f32 %v927, %v450
        %v931 = vmul.f32 %v927, %v454
        %v932 = vmul.f32 %v927, %v458
        %v933 = vmul.f32 %v927, %v462
        %v934 = vmul.f32 %v927, %v466
        %v935 = vmul.f32 %v927, %v495
        %943 = vrot.lane.b32.xlu0 %v929, 96
        %v944 = vpop.permute.xlu0 %943
        %945 = vrot.lane.b32.xlu0 %v930, 96
        %v946 = vpop.permute.xlu0 %945
        %947 = vrot.lane.b32.xlu0 %v931, 96
        %v948 = vpop.permute.xlu0 %947
        %949 = vrot.lane.b32.xlu0 %v932, 96
        %v950 = vpop.permute.xlu0 %949
        %951 = vrot.lane.b32.xlu0 %v933, 96
        %v952 = vpop.permute.xlu0 %951
        %953 = vrot.lane.b32.xlu0 %v934, 96
        %v954 = vpop.permute.xlu0 %953
        %955 = vrot.lane.b32.xlu0 %v935, 96
        %v956 = vpop.permute.xlu0 %955
        %vm957 = vcmask 785408
        %v958 = vsel %vm957, %v944, %v946
        %v959 = vsel %vm957, %v946, %v948
        %v960 = vsel %vm957, %v948, %v950
        %v961 = vsel %vm957, %v950, %v952
        %v962 = vsel %vm957, %v952, %v954
        %v963 = vsel %vm957, %v954, %v956
        %v970 = vadd.f32 %v916, %v958
        %v971 = vadd.f32 %v917, %v959
        %v972 = vadd.f32 %v918, %v960
        %v973 = vadd.f32 %v919, %v961
        %v974 = vadd.f32 %v920, %v962
        %v975 = vadd.f32 %v921, %v963
        %s976 = scalar_lea.vmem %s1, 80
        %v977 = vld [vmem:[%s976] sm:$0x3f]
        %979 = vset.pattern.permute.xlu0 0
        %980 = vperm.xlu0 %979, %v977
        %v981 = vpop.permute.xlu0 %980
        %v983 = vmul.f32 %v981, %v446
        %v984 = vmul.f32 %v981, %v450
        %v985 = vmul.f32 %v981, %v454
        %v986 = vmul.f32 %v981, %v458
        %v987 = vmul.f32 %v981, %v462
        %v988 = vmul.f32 %v981, %v466
        %v989 = vmul.f32 %v981, %v495
        %997 = vrot.lane.b32.xlu0 %v983, 72
        %v998 = vpop.permute.xlu0 %997
        %999 = vrot.lane.b32.xlu0 %v984, 72
        %v1000 = vpop.permute.xlu0 %999
        %1001 = vrot.lane.b32.xlu0 %v985, 72
        %v1002 = vpop.permute.xlu0 %1001
        %1003 = vrot.lane.b32.xlu0 %v986, 72
        %v1004 = vpop.permute.xlu0 %1003
        %1005 = vrot.lane.b32.xlu0 %v987, 72
        %v1006 = vpop.permute.xlu0 %1005
        %1007 = vrot.lane.b32.xlu0 %v988, 72
        %v1008 = vpop.permute.xlu0 %1007
        %1009 = vrot.lane.b32.xlu0 %v989, 72
        %v1010 = vpop.permute.xlu0 %1009
        %vm1011 = vcmask 588800
        %v1012 = vsel %vm1011, %v998, %v1000
        %v1013 = vsel %vm1011, %v1000, %v1002
        %v1014 = vsel %vm1011, %v1002, %v1004
        %v1015 = vsel %vm1011, %v1004, %v1006
        %v1016 = vsel %vm1011, %v1006, %v1008
        %v1017 = vsel %vm1011, %v1008, %v1010
        %v1024 = vadd.f32 %v970, %v1012
        %v1025 = vadd.f32 %v971, %v1013
        %v1026 = vadd.f32 %v972, %v1014
        %v1027 = vadd.f32 %v973, %v1015
        %v1028 = vadd.f32 %v974, %v1016
        %v1029 = vadd.f32 %v975, %v1017
        %s1030 = scalar_lea.vmem %s1, 88
        %v1031 = vld [vmem:[%s1030] sm:$0x3f]
        %1033 = vset.pattern.permute.xlu0 0
        %1034 = vperm.xlu0 %1033, %v1031
        %v1035 = vpop.permute.xlu0 %1034
        %v1037 = vmul.f32 %v1035, %v446
        %v1038 = vmul.f32 %v1035, %v450
        %v1039 = vmul.f32 %v1035, %v454
        %v1040 = vmul.f32 %v1035, %v458
        %v1041 = vmul.f32 %v1035, %v462
        %v1042 = vmul.f32 %v1035, %v466
        %v1043 = vmul.f32 %v1035, %v495
        %1051 = vrot.lane.b32.xlu0 %v1037, 71
        %v1052 = vpop.permute.xlu0 %1051
        %1053 = vrot.lane.b32.xlu0 %v1038, 71
        %v1054 = vpop.permute.xlu0 %1053
        %1055 = vrot.lane.b32.xlu0 %v1039, 71
        %v1056 = vpop.permute.xlu0 %1055
        %1057 = vrot.lane.b32.xlu0 %v1040, 71
        %v1058 = vpop.permute.xlu0 %1057
        %1059 = vrot.lane.b32.xlu0 %v1041, 71
        %v1060 = vpop.permute.xlu0 %1059
        %1061 = vrot.lane.b32.xlu0 %v1042, 71
        %v1062 = vpop.permute.xlu0 %1061
        %1063 = vrot.lane.b32.xlu0 %v1043, 71
        %v1064 = vpop.permute.xlu0 %1063
        %vm1065 = vcmask 580608
        %v1066 = vsel %vm1065, %v1052, %v1054
        %v1067 = vsel %vm1065, %v1054, %v1056
        %v1068 = vsel %vm1065, %v1056, %v1058
        %v1069 = vsel %vm1065, %v1058, %v1060
        %v1070 = vsel %vm1065, %v1060, %v1062
        %v1071 = vsel %vm1065, %v1062, %v1064
        %v1078 = vadd.f32 %v1024, %v1066
        %v1079 = vadd.f32 %v1025, %v1067
        %v1080 = vadd.f32 %v1026, %v1068
        %v1081 = vadd.f32 %v1027, %v1069
        %v1082 = vadd.f32 %v1028, %v1070
        %v1083 = vadd.f32 %v1029, %v1071
        %s1084 = scalar_lea.vmem %s1, 96
        %v1085 = vld [vmem:[%s1084] sm:$0x3f]
        %1087 = vset.pattern.permute.xlu0 0
        %1088 = vperm.xlu0 %1087, %v1085
        %v1089 = vpop.permute.xlu0 %1088
        %v1091 = vmul.f32 %v1089, %v446
        %v1092 = vmul.f32 %v1089, %v450
        %v1093 = vmul.f32 %v1089, %v454
        %v1094 = vmul.f32 %v1089, %v458
        %v1095 = vmul.f32 %v1089, %v462
        %v1096 = vmul.f32 %v1089, %v466
        %v1097 = vmul.f32 %v1089, %v495
        %1105 = vrot.lane.b32.xlu0 %v1091, 70
        %v1106 = vpop.permute.xlu0 %1105
        %1107 = vrot.lane.b32.xlu0 %v1092, 70
        %v1108 = vpop.permute.xlu0 %1107
        %1109 = vrot.lane.b32.xlu0 %v1093, 70
        %v1110 = vpop.permute.xlu0 %1109
        %1111 = vrot.lane.b32.xlu0 %v1094, 70
        %v1112 = vpop.permute.xlu0 %1111
        %1113 = vrot.lane.b32.xlu0 %v1095, 70
        %v1114 = vpop.permute.xlu0 %1113
        %1115 = vrot.lane.b32.xlu0 %v1096, 70
        %v1116 = vpop.permute.xlu0 %1115
        %1117 = vrot.lane.b32.xlu0 %v1097, 70
        %v1118 = vpop.permute.xlu0 %1117
        %vm1119 = vcmask 572416
        %v1120 = vsel %vm1119, %v1106, %v1108
        %v1121 = vsel %vm1119, %v1108, %v1110
        %v1122 = vsel %vm1119, %v1110, %v1112
        %v1123 = vsel %vm1119, %v1112, %v1114
        %v1124 = vsel %vm1119, %v1114, %v1116
        %v1125 = vsel %vm1119, %v1116, %v1118
        %v1132 = vadd.f32 %v1078, %v1120
        %v1133 = vadd.f32 %v1079, %v1121
        %v1134 = vadd.f32 %v1080, %v1122
        %v1135 = vadd.f32 %v1081, %v1123
        %v1136 = vadd.f32 %v1082, %v1124
        %v1137 = vadd.f32 %v1083, %v1125
        %s1138 = scalar_lea.vmem %s1, 104
        %v1139 = vld [vmem:[%s1138] sm:$0x3f]
        %1141 = vset.pattern.permute.xlu0 0
        %1142 = vperm.xlu0 %1141, %v1139
        %v1143 = vpop.permute.xlu0 %1142
        %v1145 = vmul.f32 %v1143, %v446
        %v1146 = vmul.f32 %v1143, %v450
        %v1147 = vmul.f32 %v1143, %v454
        %v1148 = vmul.f32 %v1143, %v458
        %v1149 = vmul.f32 %v1143, %v462
        %v1150 = vmul.f32 %v1143, %v466
        %v1151 = vmul.f32 %v1143, %v495
        %1159 = vrot.lane.b32.xlu0 %v1145, 69
        %v1160 = vpop.permute.xlu0 %1159
        %1161 = vrot.lane.b32.xlu0 %v1146, 69
        %v1162 = vpop.permute.xlu0 %1161
        %1163 = vrot.lane.b32.xlu0 %v1147, 69
        %v1164 = vpop.permute.xlu0 %1163
        %1165 = vrot.lane.b32.xlu0 %v1148, 69
        %v1166 = vpop.permute.xlu0 %1165
        %1167 = vrot.lane.b32.xlu0 %v1149, 69
        %v1168 = vpop.permute.xlu0 %1167
        %1169 = vrot.lane.b32.xlu0 %v1150, 69
        %v1170 = vpop.permute.xlu0 %1169
        %1171 = vrot.lane.b32.xlu0 %v1151, 69
        %v1172 = vpop.permute.xlu0 %1171
        %vm1173 = vcmask 564224
        %v1174 = vsel %vm1173, %v1160, %v1162
        %v1175 = vsel %vm1173, %v1162, %v1164
        %v1176 = vsel %vm1173, %v1164, %v1166
        %v1177 = vsel %vm1173, %v1166, %v1168
        %v1178 = vsel %vm1173, %v1168, %v1170
        %v1179 = vsel %vm1173, %v1170, %v1172
        %v1186 = vadd.f32 %v1132, %v1174
        %v1187 = vadd.f32 %v1133, %v1175
        %v1188 = vadd.f32 %v1134, %v1176
        %v1189 = vadd.f32 %v1135, %v1177
        %v1190 = vadd.f32 %v1136, %v1178
        %v1191 = vadd.f32 %v1137, %v1179
        %s1192 = scalar_lea.vmem %s1, 112
        %v1193 = vld [vmem:[%s1192] sm:$0x3f]
        %1195 = vset.pattern.permute.xlu0 0
        %1196 = vperm.xlu0 %1195, %v1193
        %v1197 = vpop.permute.xlu0 %1196
        %v1199 = vmul.f32 %v1197, %v446
        %v1200 = vmul.f32 %v1197, %v450
        %v1201 = vmul.f32 %v1197, %v454
        %v1202 = vmul.f32 %v1197, %v458
        %v1203 = vmul.f32 %v1197, %v462
        %v1204 = vmul.f32 %v1197, %v466
        %v1205 = vmul.f32 %v1197, %v495
        %1213 = vrot.lane.b32.xlu0 %v1199, 68
        %v1214 = vpop.permute.xlu0 %1213
        %1215 = vrot.lane.b32.xlu0 %v1200, 68
        %v1216 = vpop.permute.xlu0 %1215
        %1217 = vrot.lane.b32.xlu0 %v1201, 68
        %v1218 = vpop.permute.xlu0 %1217
        %1219 = vrot.lane.b32.xlu0 %v1202, 68
        %v1220 = vpop.permute.xlu0 %1219
        %1221 = vrot.lane.b32.xlu0 %v1203, 68
        %v1222 = vpop.permute.xlu0 %1221
        %1223 = vrot.lane.b32.xlu0 %v1204, 68
        %v1224 = vpop.permute.xlu0 %1223
        %1225 = vrot.lane.b32.xlu0 %v1205, 68
        %v1226 = vpop.permute.xlu0 %1225
        %vm1227 = vcmask 556032
        %v1228 = vsel %vm1227, %v1214, %v1216
        %v1229 = vsel %vm1227, %v1216, %v1218
        %v1230 = vsel %vm1227, %v1218, %v1220
        %v1231 = vsel %vm1227, %v1220, %v1222
        %v1232 = vsel %vm1227, %v1222, %v1224
        %v1233 = vsel %vm1227, %v1224, %v1226
        %v1240 = vadd.f32 %v1186, %v1228
        %v1241 = vadd.f32 %v1187, %v1229
        %v1242 = vadd.f32 %v1188, %v1230
        %v1243 = vadd.f32 %v1189, %v1231
        %v1244 = vadd.f32 %v1190, %v1232
        %v1245 = vadd.f32 %v1191, %v1233
        %s1246 = scalar_lea.vmem %s1, 120
        %v1247 = vld [vmem:[%s1246] sm:$0x3f]
        %1249 = vset.pattern.permute.xlu0 0
        %1250 = vperm.xlu0 %1249, %v1247
        %v1251 = vpop.permute.xlu0 %1250
        %v1253 = vmul.f32 %v1251, %v446
        %v1254 = vmul.f32 %v1251, %v450
        %v1255 = vmul.f32 %v1251, %v454
        %v1256 = vmul.f32 %v1251, %v458
        %v1257 = vmul.f32 %v1251, %v462
        %v1258 = vmul.f32 %v1251, %v466
        %v1259 = vmul.f32 %v1251, %v495
        %1267 = vrot.lane.b32.xlu0 %v1253, 44
        %v1268 = vpop.permute.xlu0 %1267
        %1269 = vrot.lane.b32.xlu0 %v1254, 44
        %v1270 = vpop.permute.xlu0 %1269
        %1271 = vrot.lane.b32.xlu0 %v1255, 44
        %v1272 = vpop.permute.xlu0 %1271
        %1273 = vrot.lane.b32.xlu0 %v1256, 44
        %v1274 = vpop.permute.xlu0 %1273
        %1275 = vrot.lane.b32.xlu0 %v1257, 44
        %v1276 = vpop.permute.xlu0 %1275
        %1277 = vrot.lane.b32.xlu0 %v1258, 44
        %v1278 = vpop.permute.xlu0 %1277
        %1279 = vrot.lane.b32.xlu0 %v1259, 44
        %v1280 = vpop.permute.xlu0 %1279
        %vm1281 = vcmask 359424
        %v1282 = vsel %vm1281, %v1268, %v1270
        %v1283 = vsel %vm1281, %v1270, %v1272
        %v1284 = vsel %vm1281, %v1272, %v1274
        %v1285 = vsel %vm1281, %v1274, %v1276
        %v1286 = vsel %vm1281, %v1276, %v1278
        %v1287 = vsel %vm1281, %v1278, %v1280
        %v1294 = vadd.f32 %v1240, %v1282
        %v1295 = vadd.f32 %v1241, %v1283
        %v1296 = vadd.f32 %v1242, %v1284
        %v1297 = vadd.f32 %v1243, %v1285
        %v1298 = vadd.f32 %v1244, %v1286
        %v1299 = vadd.f32 %v1245, %v1287
        %s1300 = scalar_lea.vmem %s1, 128
        %v1301 = vld [vmem:[%s1300] sm:$0x3f]
        %1303 = vset.pattern.permute.xlu0 0
        %1304 = vperm.xlu0 %1303, %v1301
        %v1305 = vpop.permute.xlu0 %1304
        %v1307 = vmul.f32 %v1305, %v446
        %v1308 = vmul.f32 %v1305, %v450
        %v1309 = vmul.f32 %v1305, %v454
        %v1310 = vmul.f32 %v1305, %v458
        %v1311 = vmul.f32 %v1305, %v462
        %v1312 = vmul.f32 %v1305, %v466
        %v1313 = vmul.f32 %v1305, %v495
        %1321 = vrot.lane.b32.xlu0 %v1307, 43
        %v1322 = vpop.permute.xlu0 %1321
        %1323 = vrot.lane.b32.xlu0 %v1308, 43
        %v1324 = vpop.permute.xlu0 %1323
        %1325 = vrot.lane.b32.xlu0 %v1309, 43
        %v1326 = vpop.permute.xlu0 %1325
        %1327 = vrot.lane.b32.xlu0 %v1310, 43
        %v1328 = vpop.permute.xlu0 %1327
        %1329 = vrot.lane.b32.xlu0 %v1311, 43
        %v1330 = vpop.permute.xlu0 %1329
        %1331 = vrot.lane.b32.xlu0 %v1312, 43
        %v1332 = vpop.permute.xlu0 %1331
        %1333 = vrot.lane.b32.xlu0 %v1313, 43
        %v1334 = vpop.permute.xlu0 %1333
        %vm1335 = vcmask 351232
        %v1336 = vsel %vm1335, %v1322, %v1324
        %v1337 = vsel %vm1335, %v1324, %v1326
        %v1338 = vsel %vm1335, %v1326, %v1328
        %v1339 = vsel %vm1335, %v1328, %v1330
        %v1340 = vsel %vm1335, %v1330, %v1332
        %v1341 = vsel %vm1335, %v1332, %v1334
        %v1348 = vadd.f32 %v1294, %v1336
        %v1349 = vadd.f32 %v1295, %v1337
        %v1350 = vadd.f32 %v1296, %v1338
        %v1351 = vadd.f32 %v1297, %v1339
        %v1352 = vadd.f32 %v1298, %v1340
        %v1353 = vadd.f32 %v1299, %v1341
        %s1354 = scalar_lea.vmem %s1, 136
        %v1355 = vld [vmem:[%s1354] sm:$0x3f]
        %1357 = vset.pattern.permute.xlu0 0
        %1358 = vperm.xlu0 %1357, %v1355
        %v1359 = vpop.permute.xlu0 %1358
        %v1361 = vmul.f32 %v1359, %v446
        %v1362 = vmul.f32 %v1359, %v450
        %v1363 = vmul.f32 %v1359, %v454
        %v1364 = vmul.f32 %v1359, %v458
        %v1365 = vmul.f32 %v1359, %v462
        %v1366 = vmul.f32 %v1359, %v466
        %v1367 = vmul.f32 %v1359, %v495
        %1375 = vrot.lane.b32.xlu0 %v1361, 42
        %v1376 = vpop.permute.xlu0 %1375
        %1377 = vrot.lane.b32.xlu0 %v1362, 42
        %v1378 = vpop.permute.xlu0 %1377
        %1379 = vrot.lane.b32.xlu0 %v1363, 42
        %v1380 = vpop.permute.xlu0 %1379
        %1381 = vrot.lane.b32.xlu0 %v1364, 42
        %v1382 = vpop.permute.xlu0 %1381
        %1383 = vrot.lane.b32.xlu0 %v1365, 42
        %v1384 = vpop.permute.xlu0 %1383
        %1385 = vrot.lane.b32.xlu0 %v1366, 42
        %v1386 = vpop.permute.xlu0 %1385
        %1387 = vrot.lane.b32.xlu0 %v1367, 42
        %v1388 = vpop.permute.xlu0 %1387
        %vm1389 = vcmask 343040
        %v1390 = vsel %vm1389, %v1376, %v1378
        %v1391 = vsel %vm1389, %v1378, %v1380
        %v1392 = vsel %vm1389, %v1380, %v1382
        %v1393 = vsel %vm1389, %v1382, %v1384
        %v1394 = vsel %vm1389, %v1384, %v1386
        %v1395 = vsel %vm1389, %v1386, %v1388
        %v1402 = vadd.f32 %v1348, %v1390
        %v1403 = vadd.f32 %v1349, %v1391
        %v1404 = vadd.f32 %v1350, %v1392
        %v1405 = vadd.f32 %v1351, %v1393
        %v1406 = vadd.f32 %v1352, %v1394
        %v1407 = vadd.f32 %v1353, %v1395
        %s1408 = scalar_lea.vmem %s1, 144
        %v1409 = vld [vmem:[%s1408] sm:$0x3f]
        %1411 = vset.pattern.permute.xlu0 0
        %1412 = vperm.xlu0 %1411, %v1409
        %v1413 = vpop.permute.xlu0 %1412
        %v1415 = vmul.f32 %v1413, %v446
        %v1416 = vmul.f32 %v1413, %v450
        %v1417 = vmul.f32 %v1413, %v454
        %v1418 = vmul.f32 %v1413, %v458
        %v1419 = vmul.f32 %v1413, %v462
        %v1420 = vmul.f32 %v1413, %v466
        %v1421 = vmul.f32 %v1413, %v495
        %1429 = vrot.lane.b32.xlu0 %v1415, 41
        %v1430 = vpop.permute.xlu0 %1429
        %1431 = vrot.lane.b32.xlu0 %v1416, 41
        %v1432 = vpop.permute.xlu0 %1431
        %1433 = vrot.lane.b32.xlu0 %v1417, 41
        %v1434 = vpop.permute.xlu0 %1433
        %1435 = vrot.lane.b32.xlu0 %v1418, 41
        %v1436 = vpop.permute.xlu0 %1435
        %1437 = vrot.lane.b32.xlu0 %v1419, 41
        %v1438 = vpop.permute.xlu0 %1437
        %1439 = vrot.lane.b32.xlu0 %v1420, 41
        %v1440 = vpop.permute.xlu0 %1439
        %1441 = vrot.lane.b32.xlu0 %v1421, 41
        %v1442 = vpop.permute.xlu0 %1441
        %vm1443 = vcmask 334848
        %v1444 = vsel %vm1443, %v1430, %v1432
        %v1445 = vsel %vm1443, %v1432, %v1434
        %v1446 = vsel %vm1443, %v1434, %v1436
        %v1447 = vsel %vm1443, %v1436, %v1438
        %v1448 = vsel %vm1443, %v1438, %v1440
        %v1449 = vsel %vm1443, %v1440, %v1442
        %v1456 = vadd.f32 %v1402, %v1444
        %v1457 = vadd.f32 %v1403, %v1445
        %v1458 = vadd.f32 %v1404, %v1446
        %v1459 = vadd.f32 %v1405, %v1447
        %v1460 = vadd.f32 %v1406, %v1448
        %v1461 = vadd.f32 %v1407, %v1449
        %s1462 = scalar_lea.vmem %s1, 152
        %v1463 = vld [vmem:[%s1462] sm:$0x3f]
        %1465 = vset.pattern.permute.xlu0 0
        %1466 = vperm.xlu0 %1465, %v1463
        %v1467 = vpop.permute.xlu0 %1466
        %v1469 = vmul.f32 %v1467, %v446
        %v1470 = vmul.f32 %v1467, %v450
        %v1471 = vmul.f32 %v1467, %v454
        %v1472 = vmul.f32 %v1467, %v458
        %v1473 = vmul.f32 %v1467, %v462
        %v1474 = vmul.f32 %v1467, %v466
        %v1475 = vmul.f32 %v1467, %v495
        %1483 = vrot.lane.b32.xlu0 %v1469, 40
        %v1484 = vpop.permute.xlu0 %1483
        %1485 = vrot.lane.b32.xlu0 %v1470, 40
        %v1486 = vpop.permute.xlu0 %1485
        %1487 = vrot.lane.b32.xlu0 %v1471, 40
        %v1488 = vpop.permute.xlu0 %1487
        %1489 = vrot.lane.b32.xlu0 %v1472, 40
        %v1490 = vpop.permute.xlu0 %1489
        %1491 = vrot.lane.b32.xlu0 %v1473, 40
        %v1492 = vpop.permute.xlu0 %1491
        %1493 = vrot.lane.b32.xlu0 %v1474, 40
        %v1494 = vpop.permute.xlu0 %1493
        %1495 = vrot.lane.b32.xlu0 %v1475, 40
        %v1496 = vpop.permute.xlu0 %1495
        %vm1497 = vcmask 326656
        %v1498 = vsel %vm1497, %v1484, %v1486
        %v1499 = vsel %vm1497, %v1486, %v1488
        %v1500 = vsel %vm1497, %v1488, %v1490
        %v1501 = vsel %vm1497, %v1490, %v1492
        %v1502 = vsel %vm1497, %v1492, %v1494
        %v1503 = vsel %vm1497, %v1494, %v1496
        %v1510 = vadd.f32 %v1456, %v1498
        %v1511 = vadd.f32 %v1457, %v1499
        %v1512 = vadd.f32 %v1458, %v1500
        %v1513 = vadd.f32 %v1459, %v1501
        %v1514 = vadd.f32 %v1460, %v1502
        %v1515 = vadd.f32 %v1461, %v1503
        %s1516 = scalar_lea.vmem %s1, 160
        %v1517 = vld [vmem:[%s1516] sm:$0x3f]
        %1519 = vset.pattern.permute.xlu0 0
        %1520 = vperm.xlu0 %1519, %v1517
        %v1521 = vpop.permute.xlu0 %1520
        %v1523 = vmul.f32 %v1521, %v446
        %v1524 = vmul.f32 %v1521, %v450
        %v1525 = vmul.f32 %v1521, %v454
        %v1526 = vmul.f32 %v1521, %v458
        %v1527 = vmul.f32 %v1521, %v462
        %v1528 = vmul.f32 %v1521, %v466
        %v1529 = vmul.f32 %v1521, %v495
        %1537 = vrot.lane.b32.xlu0 %v1523, 16
        %v1538 = vpop.permute.xlu0 %1537
        %1539 = vrot.lane.b32.xlu0 %v1524, 16
        %v1540 = vpop.permute.xlu0 %1539
        %1541 = vrot.lane.b32.xlu0 %v1525, 16
        %v1542 = vpop.permute.xlu0 %1541
        %1543 = vrot.lane.b32.xlu0 %v1526, 16
        %v1544 = vpop.permute.xlu0 %1543
        %1545 = vrot.lane.b32.xlu0 %v1527, 16
        %v1546 = vpop.permute.xlu0 %1545
        %1547 = vrot.lane.b32.xlu0 %v1528, 16
        %v1548 = vpop.permute.xlu0 %1547
        %1549 = vrot.lane.b32.xlu0 %v1529, 16
        %v1550 = vpop.permute.xlu0 %1549
        %vm1551 = vcmask 130048
        %v1552 = vsel %vm1551, %v1538, %v1540
        %v1553 = vsel %vm1551, %v1540, %v1542
        %v1554 = vsel %vm1551, %v1542, %v1544
        %v1555 = vsel %vm1551, %v1544, %v1546
        %v1556 = vsel %vm1551, %v1546, %v1548
        %v1557 = vsel %vm1551, %v1548, %v1550
        %v1564 = vadd.f32 %v1510, %v1552
        %v1565 = vadd.f32 %v1511, %v1553
        %v1566 = vadd.f32 %v1512, %v1554
        %v1567 = vadd.f32 %v1513, %v1555
        %v1568 = vadd.f32 %v1514, %v1556
        %v1569 = vadd.f32 %v1515, %v1557
        %s1570 = scalar_lea.vmem %s1, 168
        %v1571 = vld [vmem:[%s1570] sm:$0x3f]
        %1573 = vset.pattern.permute.xlu0 0
        %1574 = vperm.xlu0 %1573, %v1571
        %v1575 = vpop.permute.xlu0 %1574
        %v1577 = vmul.f32 %v1575, %v446
        %v1578 = vmul.f32 %v1575, %v450
        %v1579 = vmul.f32 %v1575, %v454
        %v1580 = vmul.f32 %v1575, %v458
        %v1581 = vmul.f32 %v1575, %v462
        %v1582 = vmul.f32 %v1575, %v466
        %v1583 = vmul.f32 %v1575, %v495
        %1591 = vrot.lane.b32.xlu0 %v1577, 15
        %v1592 = vpop.permute.xlu0 %1591
        %1593 = vrot.lane.b32.xlu0 %v1578, 15
        %v1594 = vpop.permute.xlu0 %1593
        %1595 = vrot.lane.b32.xlu0 %v1579, 15
        %v1596 = vpop.permute.xlu0 %1595
        %1597 = vrot.lane.b32.xlu0 %v1580, 15
        %v1598 = vpop.permute.xlu0 %1597
        %1599 = vrot.lane.b32.xlu0 %v1581, 15
        %v1600 = vpop.permute.xlu0 %1599
        %1601 = vrot.lane.b32.xlu0 %v1582, 15
        %v1602 = vpop.permute.xlu0 %1601
        %1603 = vrot.lane.b32.xlu0 %v1583, 15
        %v1604 = vpop.permute.xlu0 %1603
        %vm1605 = vcmask 121856
        %v1606 = vsel %vm1605, %v1592, %v1594
        %v1607 = vsel %vm1605, %v1594, %v1596
        %v1608 = vsel %vm1605, %v1596, %v1598
        %v1609 = vsel %vm1605, %v1598, %v1600
        %v1610 = vsel %vm1605, %v1600, %v1602
        %v1611 = vsel %vm1605, %v1602, %v1604
        %v1618 = vadd.f32 %v1564, %v1606
        %v1619 = vadd.f32 %v1565, %v1607
        %v1620 = vadd.f32 %v1566, %v1608
        %v1621 = vadd.f32 %v1567, %v1609
        %v1622 = vadd.f32 %v1568, %v1610
        %v1623 = vadd.f32 %v1569, %v1611
        %s1624 = scalar_lea.vmem %s1, 176
        %v1625 = vld [vmem:[%s1624] sm:$0x3f]
        %1627 = vset.pattern.permute.xlu0 0
        %1628 = vperm.xlu0 %1627, %v1625
        %v1629 = vpop.permute.xlu0 %1628
        %v1631 = vmul.f32 %v1629, %v446
        %v1632 = vmul.f32 %v1629, %v450
        %v1633 = vmul.f32 %v1629, %v454
        %v1634 = vmul.f32 %v1629, %v458
        %v1635 = vmul.f32 %v1629, %v462
        %v1636 = vmul.f32 %v1629, %v466
        %v1637 = vmul.f32 %v1629, %v495
        %1645 = vrot.lane.b32.xlu0 %v1631, 14
        %v1646 = vpop.permute.xlu0 %1645
        %1647 = vrot.lane.b32.xlu0 %v1632, 14
        %v1648 = vpop.permute.xlu0 %1647
        %1649 = vrot.lane.b32.xlu0 %v1633, 14
        %v1650 = vpop.permute.xlu0 %1649
        %1651 = vrot.lane.b32.xlu0 %v1634, 14
        %v1652 = vpop.permute.xlu0 %1651
        %1653 = vrot.lane.b32.xlu0 %v1635, 14
        %v1654 = vpop.permute.xlu0 %1653
        %1655 = vrot.lane.b32.xlu0 %v1636, 14
        %v1656 = vpop.permute.xlu0 %1655
        %1657 = vrot.lane.b32.xlu0 %v1637, 14
        %v1658 = vpop.permute.xlu0 %1657
        %vm1659 = vcmask 113664
        %v1660 = vsel %vm1659, %v1646, %v1648
        %v1661 = vsel %vm1659, %v1648, %v1650
        %v1662 = vsel %vm1659, %v1650, %v1652
        %v1663 = vsel %vm1659, %v1652, %v1654
        %v1664 = vsel %vm1659, %v1654, %v1656
        %v1665 = vsel %vm1659, %v1656, %v1658
        %v1672 = vadd.f32 %v1618, %v1660
        %v1673 = vadd.f32 %v1619, %v1661
        %v1674 = vadd.f32 %v1620, %v1662
        %v1675 = vadd.f32 %v1621, %v1663
        %v1676 = vadd.f32 %v1622, %v1664
        %v1677 = vadd.f32 %v1623, %v1665
        %s1678 = scalar_lea.vmem %s1, 184
        %v1679 = vld [vmem:[%s1678] sm:$0x3f]
        %1681 = vset.pattern.permute.xlu0 0
        %1682 = vperm.xlu0 %1681, %v1679
        %v1683 = vpop.permute.xlu0 %1682
        %v1685 = vmul.f32 %v1683, %v446
        %v1686 = vmul.f32 %v1683, %v450
        %v1687 = vmul.f32 %v1683, %v454
        %v1688 = vmul.f32 %v1683, %v458
        %v1689 = vmul.f32 %v1683, %v462
        %v1690 = vmul.f32 %v1683, %v466
        %v1691 = vmul.f32 %v1683, %v495
        %1699 = vrot.lane.b32.xlu0 %v1685, 13
        %v1700 = vpop.permute.xlu0 %1699
        %1701 = vrot.lane.b32.xlu0 %v1686, 13
        %v1702 = vpop.permute.xlu0 %1701
        %1703 = vrot.lane.b32.xlu0 %v1687, 13
        %v1704 = vpop.permute.xlu0 %1703
        %1705 = vrot.lane.b32.xlu0 %v1688, 13
        %v1706 = vpop.permute.xlu0 %1705
        %1707 = vrot.lane.b32.xlu0 %v1689, 13
        %v1708 = vpop.permute.xlu0 %1707
        %1709 = vrot.lane.b32.xlu0 %v1690, 13
        %v1710 = vpop.permute.xlu0 %1709
        %1711 = vrot.lane.b32.xlu0 %v1691, 13
        %v1712 = vpop.permute.xlu0 %1711
        %vm1713 = vcmask 105472
        %v1714 = vsel %vm1713, %v1700, %v1702
        %v1715 = vsel %vm1713, %v1702, %v1704
        %v1716 = vsel %vm1713, %v1704, %v1706
        %v1717 = vsel %vm1713, %v1706, %v1708
        %v1718 = vsel %vm1713, %v1708, %v1710
        %v1719 = vsel %vm1713, %v1710, %v1712
        %v1726 = vadd.f32 %v1672, %v1714
        %v1727 = vadd.f32 %v1673, %v1715
        %v1728 = vadd.f32 %v1674, %v1716
        %v1729 = vadd.f32 %v1675, %v1717
        %v1730 = vadd.f32 %v1676, %v1718
        %v1731 = vadd.f32 %v1677, %v1719
        %s1732 = scalar_lea.vmem %s1, 192
        %v1733 = vld [vmem:[%s1732] sm:$0x3f]
        %1735 = vset.pattern.permute.xlu0 0
        %1736 = vperm.xlu0 %1735, %v1733
        %v1737 = vpop.permute.xlu0 %1736
        %v1739 = vmul.f32 %v1737, %v446
        %v1740 = vmul.f32 %v1737, %v450
        %v1741 = vmul.f32 %v1737, %v454
        %v1742 = vmul.f32 %v1737, %v458
        %v1743 = vmul.f32 %v1737, %v462
        %v1744 = vmul.f32 %v1737, %v466
        %v1745 = vmul.f32 %v1737, %v495
        %1753 = vrot.lane.b32.xlu0 %v1739, 12
        %v1754 = vpop.permute.xlu0 %1753
        %1755 = vrot.lane.b32.xlu0 %v1740, 12
        %v1756 = vpop.permute.xlu0 %1755
        %1757 = vrot.lane.b32.xlu0 %v1741, 12
        %v1758 = vpop.permute.xlu0 %1757
        %1759 = vrot.lane.b32.xlu0 %v1742, 12
        %v1760 = vpop.permute.xlu0 %1759
        %1761 = vrot.lane.b32.xlu0 %v1743, 12
        %v1762 = vpop.permute.xlu0 %1761
        %1763 = vrot.lane.b32.xlu0 %v1744, 12
        %v1764 = vpop.permute.xlu0 %1763
        %1765 = vrot.lane.b32.xlu0 %v1745, 12
        %v1766 = vpop.permute.xlu0 %1765
        %vm1767 = vcmask 97280
        %v1768 = vsel %vm1767, %v1754, %v1756
        %v1769 = vsel %vm1767, %v1756, %v1758
        %v1770 = vsel %vm1767, %v1758, %v1760
        %v1771 = vsel %vm1767, %v1760, %v1762
        %v1772 = vsel %vm1767, %v1762, %v1764
        %v1773 = vsel %vm1767, %v1764, %v1766
        %v1780 = vadd.f32 %v1726, %v1768
        %v1781 = vadd.f32 %v1727, %v1769
        %v1782 = vadd.f32 %v1728, %v1770
        %v1783 = vadd.f32 %v1729, %v1771
        %v1784 = vadd.f32 %v1730, %v1772
        %v1785 = vadd.f32 %v1731, %v1773
        %v1786 = vld [vmem:[%s2] sm:$0x3f]
        %1788 = vset.pattern.permute.xlu0 0
        %1789 = vperm.xlu0 %1788, %v1786
        %v1790 = vpop.permute.xlu0 %1789
        %v1792 = vadd.f32 %v1780, %v1790
        %v1793 = vadd.f32 %v1781, %v1790
        %v1794 = vadd.f32 %v1782, %v1790
        %v1795 = vadd.f32 %v1783, %v1790
        %v1796 = vadd.f32 %v1784, %v1790
        %v1797 = vadd.f32 %v1785, %v1790
        %v1798 = vsub.f32 0.0, %v1792
        %v1799 = vsub.f32 0.0, %v1793
        %v1800 = vsub.f32 0.0, %v1794
        %v1801 = vsub.f32 0.0, %v1795
        %v1802 = vsub.f32 0.0, %v1796
        %v1803 = vsub.f32 0.0, %v1797
        %v1804 = vmul.f32 %v1798, 1.442695
        %v1805 = vpow.pop %v1804
        %v1806 = vmul.f32 %v1799, 1.442695
        %v1807 = vpow.pop %v1806
        %v1808 = vmul.f32 %v1800, 1.442695
        %v1809 = vpow.pop %v1808
        %v1810 = vmul.f32 %v1801, 1.442695
        %v1811 = vpow.pop %v1810
        %v1812 = vmul.f32 %v1802, 1.442695
        %v1813 = vpow.pop %v1812
        %v1814 = vmul.f32 %v1803, 1.442695
        %v1815 = vpow.pop %v1814
        %v1816 = vadd.f32 %v1805, 1.0
        %v1817 = vadd.f32 %v1807, 1.0
        %v1818 = vadd.f32 %v1809, 1.0
        %v1819 = vadd.f32 %v1811, 1.0
        %v1820 = vadd.f32 %v1813, 1.0
        %v1821 = vadd.f32 %v1815, 1.0
        %v1822 = vrcp.pop %v1816
        %v1823 = vmul.f32 1.0, %v1822
        %v1824 = vrcp.pop %v1817
        %v1825 = vmul.f32 1.0, %v1824
        %v1826 = vrcp.pop %v1818
        %v1827 = vmul.f32 1.0, %v1826
        %v1828 = vrcp.pop %v1819
        %v1829 = vmul.f32 1.0, %v1828
        %v1830 = vrcp.pop %v1820
        %v1831 = vmul.f32 1.0, %v1830
        %v1832 = vrcp.pop %v1821
        %v1833 = vmul.f32 1.0, %v1832
        %1840 = vrot.lane.b32.xlu0 %v1823, 127
        %v1841 = vpop.permute.xlu0 %1840
        %1842 = vrot.lane.b32.xlu0 %v1825, 127
        %v1843 = vpop.permute.xlu0 %1842
        %1844 = vrot.lane.b32.xlu0 %v1827, 127
        %v1845 = vpop.permute.xlu0 %1844
        %1846 = vrot.lane.b32.xlu0 %v1829, 127
        %v1847 = vpop.permute.xlu0 %1846
        %1848 = vrot.lane.b32.xlu0 %v1831, 127
        %v1849 = vpop.permute.xlu0 %1848
        %1850 = vrot.lane.b32.xlu0 %v1833, 127
        %v1851 = vpop.permute.xlu0 %1850
        %v1852 = vsel %vm525, %v1841, %v1843
        %v1853 = vsel %vm525, %v1843, %v1845
        %v1854 = vsel %vm525, %v1845, %v1847
        %v1855 = vsel %vm525, %v1847, %v1849
        %v1856 = vsel %vm525, %v1849, %v1851
        %v1862 = vmax.f32 %v1823, %v1852
        %v1863 = vmax.f32 %v1825, %v1853
        %v1864 = vmax.f32 %v1827, %v1854
        %v1865 = vmax.f32 %v1829, %v1855
        %v1866 = vmax.f32 %v1831, %v1856
        %v1868 = vmax.f32 %v1833, %v1851
        %1875 = vrot.lane.b32.xlu0 %v1862, 100
        %v1876 = vpop.permute.xlu0 %1875
        %1877 = vrot.lane.b32.xlu0 %v1863, 100
        %v1878 = vpop.permute.xlu0 %1877
        %1879 = vrot.lane.b32.xlu0 %v1864, 100
        %v1880 = vpop.permute.xlu0 %1879
        %1881 = vrot.lane.b32.xlu0 %v1865, 100
        %v1882 = vpop.permute.xlu0 %1881
        %1883 = vrot.lane.b32.xlu0 %v1866, 100
        %v1884 = vpop.permute.xlu0 %1883
        %1885 = vrot.lane.b32.xlu0 %v1868, 100
        %v1886 = vpop.permute.xlu0 %1885
        %v1887 = vsel %vm741, %v1876, %v1878
        %v1888 = vsel %vm741, %v1878, %v1880
        %v1889 = vsel %vm741, %v1880, %v1882
        %v1890 = vsel %vm741, %v1882, %v1884
        %v1891 = vsel %vm741, %v1884, %v1886
        %v1897 = vmax.f32 %v1862, %v1887
        %v1898 = vmax.f32 %v1863, %v1888
        %v1899 = vmax.f32 %v1864, %v1889
        %v1900 = vmax.f32 %v1865, %v1890
        %v1901 = vmax.f32 %v1866, %v1891
        %v1902 = vld [vmem:[%s5] sm:$0xff]
        %v1903 = vld [vmem:[%s5 + $0x8] sm:$0xff]
        %v1904 = vld [vmem:[%s5 + $0x10] sm:$0xff]
        %v1905 = vld [vmem:[%s5 + $0x18] sm:$0xff]
        %v1906 = vld [vmem:[%s5 + $0x20] sm:$0xff]
        %v1907 = vld [vmem:[%s5 + $0x28] sm:$0xff]
        %v1908 = vld [vmem:[%s5 + $0x30] sm:$0xff]
        %v1909 = vld [vmem:[%s5 + $0x38] sm:$0xff]
        %v1910 = vld [vmem:[%s5 + $0x40] sm:$0xff]
        %v1911 = vld [vmem:[%s5 + $0x48] sm:$0xff]
        %v1912 = vld [vmem:[%s5 + $0x50] sm:$0xff]
        %v1913 = vld [vmem:[%s5 + $0x58] sm:$0xff]
        %v1914 = vld [vmem:[%s5 + $0x60] sm:$0xff]
        %v1915 = vld [vmem:[%s5 + $0x68] sm:$0xff]
        %v1916 = vld [vmem:[%s5 + $0x70] sm:$0xff]
        %v1917 = vld [vmem:[%s5 + $0x78] sm:$0xff]
        %v1918 = vld [vmem:[%s5 + $0x80] sm:$0xff]
        %v1919 = vld [vmem:[%s5 + $0x88] sm:$0xff]
        %v1920 = vld [vmem:[%s5 + $0x90] sm:$0xff]
        %v1921 = vld [vmem:[%s5 + $0x98] sm:$0xff]
        %v1922 = vld [vmem:[%s5 + $0xa0] sm:$0xff]
        %v1923 = vld [vmem:[%s5 + $0xa8] sm:$0xff]
        %v1924 = vld [vmem:[%s5 + $0xb0] sm:$0xff]
        %v1925 = vld [vmem:[%s5 + $0xb8] sm:$0xff]
        %v1926 = vld [vmem:[%s5 + $0xc0] sm:$0xff]
        %v1927 = vld [vmem:[%s5 + $0xc8] sm:$0xff]
        %v1928 = vld [vmem:[%s5 + $0xd0] sm:$0xff]
        %v1929 = vld [vmem:[%s5 + $0xd8] sm:$0xff]
        %v1930 = vld [vmem:[%s5 + $0xe0] sm:$0xff]
        %v1931 = vld [vmem:[%s5 + $0xe8] sm:$0xff]
        %v1932 = vld [vmem:[%s5 + $0xf0] sm:$0xff]
        %v1933 = vld [vmem:[%s5 + $0xf8] sm:$0xff]
        %v1934 = vld [vmem:[%s5 + $0x100] sm:$0xff]
        %v1935 = vld [vmem:[%s5 + $0x108] sm:$0xff]
        %v1936 = vld [vmem:[%s5 + $0x110] sm:$0xff]
        %v1937 = vld [vmem:[%s5 + $0x118] sm:$0xff]
        %v1938 = vld [vmem:[%s5 + $0x120] sm:$0xff]
        %v1939 = vld [vmem:[%s5 + $0x128] sm:$0xff]
        %v1940 = vld [vmem:[%s5 + $0x130] sm:$0xff]
        %v1941 = vld [vmem:[%s5 + $0x138] sm:$0xff]
        %v1942 = vld [vmem:[%s5 + $0x140] sm:$0xff]
        %v1943 = vld [vmem:[%s5 + $0x148] sm:$0xff]
        %v1944 = vld [vmem:[%s5 + $0x150] sm:$0xff]
        %v1945 = vld [vmem:[%s5 + $0x158] sm:$0xff]
        %v1946 = vld [vmem:[%s5 + $0x160] sm:$0xff]
        %v1947 = vld [vmem:[%s5 + $0x168] sm:$0xff]
        %v1948 = vld [vmem:[%s5 + $0x170] sm:$0xff]
        %v1949 = vld [vmem:[%s5 + $0x178] sm:$0xff]
        %v1950 = vld [vmem:[%s5 + $0x180] sm:$0xff]
        %v1951 = vld [vmem:[%s5 + $0x188] sm:$0xff]
        %v1952 = vld [vmem:[%s5 + $0x190] sm:$0xff]
        %v1953 = vld [vmem:[%s5 + $0x198] sm:$0xff]
        %v1954 = vld [vmem:[%s5 + $0x1a0] sm:$0xff]
        %v1955 = vld [vmem:[%s5 + $0x1a8] sm:$0xff]
        %v1956 = vld [vmem:[%s5 + $0x1b0] sm:$0xff]
        %v1957 = vld [vmem:[%s5 + $0x1b8] sm:$0xff]
        %v1958 = vld [vmem:[%s5 + $0x1c0] sm:$0xff]
        %v1959 = vld [vmem:[%s5 + $0x1c8] sm:$0xff]
        %v1960 = vld [vmem:[%s5 + $0x1d0] sm:$0xff]
        %v1961 = vld [vmem:[%s5 + $0x1d8] sm:$0xff]
        %v1962 = vld [vmem:[%s5 + $0x1e0] sm:$0xff]
        %v1963 = vld [vmem:[%s5 + $0x1e8] sm:$0xff]
        %v1964 = vld [vmem:[%s5 + $0x1f0] sm:$0xff]
        %v1965 = vld [vmem:[%s5 + $0x1f8] sm:$0xff]
        %v1966 = vld [vmem:[%s5 + $0x200] sm:$0xff]
        %v1967 = vld [vmem:[%s5 + $0x208] sm:$0xff]
        %v1968 = vld [vmem:[%s5 + $0x210] sm:$0xff]
        %v1969 = vld [vmem:[%s5 + $0x218] sm:$0xff]
        %v1970 = vld [vmem:[%s5 + $0x220] sm:$0xff]
        %v1971 = vld [vmem:[%s5 + $0x228] sm:$0xff]
        %v1972 = vld [vmem:[%s5 + $0x230] sm:$0xff]
        %v1973 = vld [vmem:[%s5 + $0x238] sm:$0xff]
        %v1974 = vld [vmem:[%s5 + $0x240] sm:$0xff]
        %v1975 = vld [vmem:[%s5 + $0x248] sm:$0xff]
        %v1976 = vld [vmem:[%s5 + $0x250] sm:$0xff]
        %v1977 = vld [vmem:[%s5 + $0x258] sm:$0xff]
        %v1978 = vld [vmem:[%s5 + $0x260] sm:$0xff]
        %v1979 = vld [vmem:[%s5 + $0x268] sm:$0xff]
        %v1980 = vld [vmem:[%s5 + $0x270] sm:$0xff]
        %v1981 = vld [vmem:[%s5 + $0x278] sm:$0xff]
        %v1982 = vld [vmem:[%s5 + $0x280] sm:$0xff]
        %v1983 = vld [vmem:[%s5 + $0x288] sm:$0xff]
        %v1984 = vld [vmem:[%s5 + $0x290] sm:$0xff]
        %v1985 = vld [vmem:[%s5 + $0x298] sm:$0xff]
        %v1986 = vld [vmem:[%s5 + $0x2a0] sm:$0xff]
        %v1987 = vld [vmem:[%s5 + $0x2a8] sm:$0xff]
        %v1988 = vld [vmem:[%s5 + $0x2b0] sm:$0xff]
        %v1989 = vld [vmem:[%s5 + $0x2b8] sm:$0xff]
        %v1990 = vld [vmem:[%s5 + $0x2c0] sm:$0xff]
        %v1991 = vld [vmem:[%s5 + $0x2c8] sm:$0xff]
        %v1992 = vld [vmem:[%s5 + $0x2d0] sm:$0xff]
        %v1993 = vld [vmem:[%s5 + $0x2d8] sm:$0xff]
        %v1994 = vld [vmem:[%s5 + $0x2e0] sm:$0xff]
        %v1995 = vld [vmem:[%s5 + $0x2e8] sm:$0xff]
        %v1996 = vld [vmem:[%s5 + $0x2f0] sm:$0xff]
        %v1997 = vld [vmem:[%s5 + $0x2f8] sm:$0xff]
        %v1998 = vld [vmem:[%s5 + $0x300] sm:$0xff]
        %v1999 = vld [vmem:[%s5 + $0x308] sm:$0xff]
        %v2000 = vld [vmem:[%s5 + $0x310] sm:$0xff]
        %v2001 = vld [vmem:[%s5 + $0x318] sm:$0xff]
        %v2002 = vld [vmem:[%s5 + $0x320] sm:$0xff]
        %v2003 = vld [vmem:[%s5 + $0x328] sm:$0xff]
        %v2004 = vld [vmem:[%s5 + $0x330] sm:$0xff]
        %v2005 = vld [vmem:[%s5 + $0x338] sm:$0xff]
        %v2006 = vld [vmem:[%s5 + $0x340] sm:$0xff]
        %v2007 = vld [vmem:[%s5 + $0x348] sm:$0xff]
        %v2008 = vld [vmem:[%s5 + $0x350] sm:$0xff]
        %v2009 = vld [vmem:[%s5 + $0x358] sm:$0xff]
        %v2010 = vld [vmem:[%s5 + $0x360] sm:$0xff]
        %v2011 = vld [vmem:[%s5 + $0x368] sm:$0xff]
        %v2012 = vld [vmem:[%s5 + $0x370] sm:$0xff]
        %v2013 = vld [vmem:[%s5 + $0x378] sm:$0xff]
        %v2014 = vld [vmem:[%s5 + $0x380] sm:$0xff]
        %v2015 = vld [vmem:[%s5 + $0x388] sm:$0xff]
        %v2016 = vld [vmem:[%s5 + $0x390] sm:$0xff]
        %v2017 = vld [vmem:[%s5 + $0x398] sm:$0xff]
        %v2018 = vld [vmem:[%s5 + $0x3a0] sm:$0xff]
        %v2019 = vld [vmem:[%s5 + $0x3a8] sm:$0xff]
        %v2020 = vld [vmem:[%s5 + $0x3b0] sm:$0xff]
        %v2021 = vld [vmem:[%s5 + $0x3b8] sm:$0xff]
        %v2022 = vld [vmem:[%s5 + $0x3c0] sm:$0xff]
        %v2023 = vld [vmem:[%s5 + $0x3c8] sm:$0xff]
        %v2024 = vld [vmem:[%s5 + $0x3d0] sm:$0xff]
        %v2025 = vld [vmem:[%s5 + $0x3d8] sm:$0xff]
        %v2026 = vld [vmem:[%s5 + $0x3e0] sm:$0xff]
        %v2027 = vld [vmem:[%s5 + $0x3e8] sm:$0xff]
        %v2028 = vld [vmem:[%s5 + $0x3f0] sm:$0xff]
        %v2029 = vld [vmem:[%s5 + $0x3f8] sm:$0xff]
        %v2030 = vld [vmem:[%s5 + $0x400] sm:$0xff]
        %v2031 = vld [vmem:[%s5 + $0x408] sm:$0xff]
        %v2032 = vld [vmem:[%s5 + $0x410] sm:$0xff]
        %v2033 = vld [vmem:[%s5 + $0x418] sm:$0xff]
        %v2034 = vld [vmem:[%s5 + $0x420] sm:$0xff]
        %v2035 = vld [vmem:[%s5 + $0x428] sm:$0xff]
        %v2036 = vld [vmem:[%s5 + $0x430] sm:$0xff]
        %v2037 = vld [vmem:[%s5 + $0x438] sm:$0xff]
        %v2038 = vld [vmem:[%s5 + $0x440] sm:$0xff]
        %v2039 = vld [vmem:[%s5 + $0x448] sm:$0xff]
        %v2040 = vld [vmem:[%s5 + $0x450] sm:$0xff]
        %v2041 = vld [vmem:[%s5 + $0x458] sm:$0xff]
        %v2042 = vld [vmem:[%s5 + $0x460] sm:$0xff]
        %v2043 = vld [vmem:[%s5 + $0x468] sm:$0xff]
        %v2044 = vld [vmem:[%s5 + $0x470] sm:$0xff]
        %v2045 = vld [vmem:[%s5 + $0x478] sm:$0xff]
        %v2046 = vld [vmem:[%s5 + $0x480] sm:$0xff]
        %v2047 = vld [vmem:[%s5 + $0x488] sm:$0xff]
        %v2048 = vld [vmem:[%s5 + $0x490] sm:$0xff]
        %v2049 = vld [vmem:[%s5 + $0x498] sm:$0xff]
        %v2050 = vld [vmem:[%s5 + $0x4a0] sm:$0xff]
        %v2051 = vld [vmem:[%s5 + $0x4a8] sm:$0xff]
        %v2052 = vld [vmem:[%s5 + $0x4b0] sm:$0xff]
        %v2053 = vld [vmem:[%s5 + $0x4b8] sm:$0xff]
        %v2054 = vld [vmem:[%s5 + $0x4c0] sm:$0xff]
        %v2055 = vld [vmem:[%s5 + $0x4c8] sm:$0xff]
        %v2056 = vld [vmem:[%s5 + $0x4d0] sm:$0xff]
        %v2057 = vld [vmem:[%s5 + $0x4d8] sm:$0xff]
        %v2058 = vld [vmem:[%s5 + $0x4e0] sm:$0xff]
        %v2059 = vld [vmem:[%s5 + $0x4e8] sm:$0xff]
        %v2060 = vld [vmem:[%s5 + $0x4f0] sm:$0xff]
        %v2061 = vld [vmem:[%s5 + $0x4f8] sm:$0xff]
        %2062 = vmatprep.subr.mxu0 %v1933
        %2063 = vmatpush1.msra.mxu0 %v1932
        %2064 = vmatprep.subr.mxu0 %v1931
        %2065 = vmatpush1.msra.mxu0 %v1930
        %2066 = vmatprep.subr.mxu0 %v1929
        %2067 = vmatpush1.msra.mxu0 %v1928
        %2068 = vmatprep.subr.mxu0 %v1927
        %2069 = vmatpush1.msra.mxu0 %v1926
        %2070 = vmatprep.subr.mxu0 %v1925
        %2071 = vmatpush1.msra.mxu0 %v1924
        %2072 = vmatprep.subr.mxu0 %v1923
        %2073 = vmatpush1.msra.mxu0 %v1922
        %2074 = vmatprep.subr.mxu0 %v1921
        %2075 = vmatpush1.msra.mxu0 %v1920
        %2076 = vmatprep.subr.mxu0 %v1919
        %2077 = vmatpush1.msra.mxu0 %v1918
        %2078 = vmatprep.subr.mxu0 %v1917
        %2079 = vmatpush1.msra.mxu0 %v1916
        %2080 = vmatprep.subr.mxu0 %v1915
        %2081 = vmatpush1.msra.mxu0 %v1914
        %2082 = vmatprep.subr.mxu0 %v1913
        %2083 = vmatpush1.msra.mxu0 %v1912
        %2084 = vmatprep.subr.mxu0 %v1911
        %2085 = vmatpush1.msra.mxu0 %v1910
        %2086 = vmatprep.subr.mxu0 %v1909
        %2087 = vmatpush1.msra.mxu0 %v1908
        %2088 = vmatprep.subr.mxu0 %v1907
        %2089 = vmatpush1.msra.mxu0 %v1906
        %2090 = vmatprep.subr.mxu0 %v1905
        %2091 = vmatpush1.msra.mxu0 %v1904
        %2092 = vmatprep.subr.mxu0 %v1903
        %2093 = vmatpush1.msra.mxu0 %v1902
        %2094 = vmatprep.subr.mxu0 %v1965
        %2095 = vmatpush2.msra.mxu0 %v1964
        %2096 = vmatprep.subr.mxu0 %v1963
        %2097 = vmatpush2.msra.mxu0 %v1962
        %2098 = vmatprep.subr.mxu0 %v1961
        %2099 = vmatpush2.msra.mxu0 %v1960
        %2100 = vmatprep.subr.mxu0 %v1959
        %2101 = vmatpush2.msra.mxu0 %v1958
        %2102 = vmatprep.subr.mxu0 %v1957
        %2103 = vmatpush2.msra.mxu0 %v1956
        %2104 = vmatprep.subr.mxu0 %v1955
        %2105 = vmatpush2.msra.mxu0 %v1954
        %2106 = vmatprep.subr.mxu0 %v1953
        %2107 = vmatpush2.msra.mxu0 %v1952
        %2108 = vmatprep.subr.mxu0 %v1951
        %2109 = vmatpush2.msra.mxu0 %v1950
        %2110 = vmatprep.subr.mxu0 %v1949
        %2111 = vmatpush2.msra.mxu0 %v1948
        %2112 = vmatprep.subr.mxu0 %v1947
        %2113 = vmatpush2.msra.mxu0 %v1946
        %2114 = vmatprep.subr.mxu0 %v1945
        %2115 = vmatpush2.msra.mxu0 %v1944
        %2116 = vmatprep.subr.mxu0 %v1943
        %2117 = vmatpush2.msra.mxu0 %v1942
        %2118 = vmatprep.subr.mxu0 %v1941
        %2119 = vmatpush2.msra.mxu0 %v1940
        %2120 = vmatprep.subr.mxu0 %v1939
        %2121 = vmatpush2.msra.mxu0 %v1938
        %2122 = vmatprep.subr.mxu0 %v1937
        %2123 = vmatpush2.msra.mxu0 %v1936
        %2124 = vmatprep.subr.mxu0 %v1935
        %2125 = vmatpush2.msra.mxu0 %v1934
        %2126 = vmatprep.mubr.f32.mxu0 %v1898
        %2127 = vmatmul.mubr.f32.gmra.mxu0 %v1897
        %v2128 = vpop.f32.mrf.mxu0
        %v2129 = vadd.f32 0.0, %v2128
        %v2130 = vpop.f32.mrf.mxu0
        %v2131 = vadd.f32 0.0, %v2130
        %2132 = vdwg.mxu0
        %2133 = vmatprep.subr.mxu0 %v1997
        %2134 = vmatpush1.msra.mxu0 %v1996
        %2135 = vmatprep.subr.mxu0 %v1995
        %2136 = vmatpush1.msra.mxu0 %v1994
        %2137 = vmatprep.subr.mxu0 %v1993
        %2138 = vmatpush1.msra.mxu0 %v1992
        %2139 = vmatprep.subr.mxu0 %v1991
        %2140 = vmatpush1.msra.mxu0 %v1990
        %2141 = vmatprep.subr.mxu0 %v1989
        %2142 = vmatpush1.msra.mxu0 %v1988
        %2143 = vmatprep.subr.mxu0 %v1987
        %2144 = vmatpush1.msra.mxu0 %v1986
        %2145 = vmatprep.subr.mxu0 %v1985
        %2146 = vmatpush1.msra.mxu0 %v1984
        %2147 = vmatprep.subr.mxu0 %v1983
        %2148 = vmatpush1.msra.mxu0 %v1982
        %2149 = vmatprep.subr.mxu0 %v1981
        %2150 = vmatpush1.msra.mxu0 %v1980
        %2151 = vmatprep.subr.mxu0 %v1979
        %2152 = vmatpush1.msra.mxu0 %v1978
        %2153 = vmatprep.subr.mxu0 %v1977
        %2154 = vmatpush1.msra.mxu0 %v1976
        %2155 = vmatprep.subr.mxu0 %v1975
        %2156 = vmatpush1.msra.mxu0 %v1974
        %2157 = vmatprep.subr.mxu0 %v1973
        %2158 = vmatpush1.msra.mxu0 %v1972
        %2159 = vmatprep.subr.mxu0 %v1971
        %2160 = vmatpush1.msra.mxu0 %v1970
        %2161 = vmatprep.subr.mxu0 %v1969
        %2162 = vmatpush1.msra.mxu0 %v1968
        %2163 = vmatprep.subr.mxu0 %v1967
        %2164 = vmatpush1.msra.mxu0 %v1966
        %2165 = vmatprep.subr.mxu0 %v2029
        %2166 = vmatpush2.msra.mxu0 %v2028
        %2167 = vmatprep.subr.mxu0 %v2027
        %2168 = vmatpush2.msra.mxu0 %v2026
        %2169 = vmatprep.subr.mxu0 %v2025
        %2170 = vmatpush2.msra.mxu0 %v2024
        %2171 = vmatprep.subr.mxu0 %v2023
        %2172 = vmatpush2.msra.mxu0 %v2022
        %2173 = vmatprep.subr.mxu0 %v2021
        %2174 = vmatpush2.msra.mxu0 %v2020
        %2175 = vmatprep.subr.mxu0 %v2019
        %2176 = vmatpush2.msra.mxu0 %v2018
        %2177 = vmatprep.subr.mxu0 %v2017
        %2178 = vmatpush2.msra.mxu0 %v2016
        %2179 = vmatprep.subr.mxu0 %v2015
        %2180 = vmatpush2.msra.mxu0 %v2014
        %2181 = vmatprep.subr.mxu0 %v2013
        %2182 = vmatpush2.msra.mxu0 %v2012
        %2183 = vmatprep.subr.mxu0 %v2011
        %2184 = vmatpush2.msra.mxu0 %v2010
        %2185 = vmatprep.subr.mxu0 %v2009
        %2186 = vmatpush2.msra.mxu0 %v2008
        %2187 = vmatprep.subr.mxu0 %v2007
        %2188 = vmatpush2.msra.mxu0 %v2006
        %2189 = vmatprep.subr.mxu0 %v2005
        %2190 = vmatpush2.msra.mxu0 %v2004
        %2191 = vmatprep.subr.mxu0 %v2003
        %2192 = vmatpush2.msra.mxu0 %v2002
        %2193 = vmatprep.subr.mxu0 %v2001
        %2194 = vmatpush2.msra.mxu0 %v2000
        %2195 = vmatprep.subr.mxu0 %v1999
        %2196 = vmatpush2.msra.mxu0 %v1998
        %2197 = vmatprep.mubr.f32.mxu0 %v1900
        %2198 = vmatmul.mubr.f32.gmra.mxu0 %v1899
        %v2199 = vpop.f32.mrf.mxu0
        %v2200 = vadd.f32 %v2129, %v2199
        %v2201 = vpop.f32.mrf.mxu0
        %v2202 = vadd.f32 %v2131, %v2201
        %2203 = vdwg.mxu0
        %2204 = vmatprep.subr.mxu0 %v2061
        %2205 = vmatpush1.msra.mxu0 %v2060
        %2206 = vmatprep.subr.mxu0 %v2059
        %2207 = vmatpush1.msra.mxu0 %v2058
        %2208 = vmatprep.subr.mxu0 %v2057
        %2209 = vmatpush1.msra.mxu0 %v2056
        %2210 = vmatprep.subr.mxu0 %v2055
        %2211 = vmatpush1.msra.mxu0 %v2054
        %2212 = vmatprep.subr.mxu0 %v2053
        %2213 = vmatpush1.msra.mxu0 %v2052
        %2214 = vmatprep.subr.mxu0 %v2051
        %2215 = vmatpush1.msra.mxu0 %v2050
        %2216 = vmatprep.subr.mxu0 %v2049
        %2217 = vmatpush1.msra.mxu0 %v2048
        %2218 = vmatprep.subr.mxu0 %v2047
        %2219 = vmatpush1.msra.mxu0 %v2046
        %2220 = vmatprep.subr.mxu0 %v2045
        %2221 = vmatpush1.msra.mxu0 %v2044
        %2222 = vmatprep.subr.mxu0 %v2043
        %2223 = vmatpush1.msra.mxu0 %v2042
        %2224 = vmatprep.subr.mxu0 %v2041
        %2225 = vmatpush1.msra.mxu0 %v2040
        %2226 = vmatprep.subr.mxu0 %v2039
        %2227 = vmatpush1.msra.mxu0 %v2038
        %2228 = vmatprep.subr.mxu0 %v2037
        %2229 = vmatpush1.msra.mxu0 %v2036
        %2230 = vmatprep.subr.mxu0 %v2035
        %2231 = vmatpush1.msra.mxu0 %v2034
        %2232 = vmatprep.subr.mxu0 %v2033
        %2233 = vmatpush1.msra.mxu0 %v2032
        %2234 = vmatprep.subr.mxu0 %v2031
        %2235 = vmatpush1.msra.mxu0 %v2030
        %2236 = vmatprep.subr.mxu0 0.0
        %2237 = vmatpush2.msra.mxu0 0.0
        %2238 = vmatprep.subr.mxu0 0.0
        %2239 = vmatpush2.msra.mxu0 0.0
        %2240 = vmatprep.subr.mxu0 0.0
        %2241 = vmatpush2.msra.mxu0 0.0
        %2242 = vmatprep.subr.mxu0 0.0
        %2243 = vmatpush2.msra.mxu0 0.0
        %2244 = vmatprep.subr.mxu0 0.0
        %2245 = vmatpush2.msra.mxu0 0.0
        %2246 = vmatprep.subr.mxu0 0.0
        %2247 = vmatpush2.msra.mxu0 0.0
        %2248 = vmatprep.subr.mxu0 0.0
        %2249 = vmatpush2.msra.mxu0 0.0
        %2250 = vmatprep.subr.mxu0 0.0
        %2251 = vmatpush2.msra.mxu0 0.0
        %2252 = vmatprep.subr.mxu0 0.0
        %2253 = vmatpush2.msra.mxu0 0.0
        %2254 = vmatprep.subr.mxu0 0.0
        %2255 = vmatpush2.msra.mxu0 0.0
        %2256 = vmatprep.subr.mxu0 0.0
        %2257 = vmatpush2.msra.mxu0 0.0
        %2258 = vmatprep.subr.mxu0 0.0
        %2259 = vmatpush2.msra.mxu0 0.0
        %2260 = vmatprep.subr.mxu0 0.0
        %2261 = vmatpush2.msra.mxu0 0.0
        %2262 = vmatprep.subr.mxu0 0.0
        %2263 = vmatpush2.msra.mxu0 0.0
        %2264 = vmatprep.subr.mxu0 0.0
        %2265 = vmatpush2.msra.mxu0 0.0
        %2266 = vmatprep.subr.mxu0 0.0
        %2267 = vmatpush2.msra.mxu0 0.0
        %2268 = vmatprep.mubr.f32.mxu0 0.0
        %2269 = vmatmul.mubr.f32.gmra.mxu0 %v1901
        %v2270 = vpop.f32.mrf.mxu0
        %v2271 = vadd.f32 %v2200, %v2270
        %v2272 = vpop.f32.mrf.mxu0
        %v2273 = vadd.f32 %v2202, %v2272
        %2274 = vdwg.mxu0
        %v2275 = vld [vmem:[%s3] sm:$0xff]
        %v2276 = vld [vmem:[%s3 + $0x8] sm:$0xff]
        %s2277 = scalar_lea.vmem %s3, 16
        %v2278 = vld [vmem:[%s2277] sm:$0xff]
        %v2279 = vld [vmem:[%s2277 + $0x8] sm:$0xff]
        %2281 = vrot.lane.b32.xlu0 %v2271, 127
        %v2282 = vpop.permute.xlu0 %2281
        %vm2283 = vcmask 48128
        %v2285 = vsel %vm2283, %v2278, 0
        %v2288 = vsel %vm2283, %v2279, 0
        %vm2290 = vcmask 1045504
        %v2291 = vsel %vm2290, %v2282, 0
        %2293 = vmatprep.subr.mxu0 0.0
        %2294 = vmatpush1.msra.mxu0 0.0
        %2295 = vmatprep.subr.mxu0 0.0
        %2296 = vmatpush1.msra.mxu0 0.0
        %2297 = vmatprep.subr.mxu0 0.0
        %2298 = vmatpush1.msra.mxu0 0.0
        %2299 = vmatprep.subr.mxu0 0.0
        %2300 = vmatpush1.msra.mxu0 0.0
        %2301 = vmatprep.subr.mxu0 0.0
        %2302 = vmatpush1.msra.mxu0 0.0
        %2303 = vmatprep.subr.mxu0 0.0
        %2304 = vmatpush1.msra.mxu0 0.0
        %2305 = vmatprep.subr.mxu0 0.0
        %2306 = vmatpush1.msra.mxu0 0.0
        %2307 = vmatprep.subr.mxu0 0.0
        %2308 = vmatpush1.msra.mxu0 0.0
        %2309 = vmatprep.subr.mxu0 0.0
        %2310 = vmatpush1.msra.mxu0 0.0
        %2311 = vmatprep.subr.mxu0 0.0
        %2312 = vmatpush1.msra.mxu0 0.0
        %2313 = vmatprep.subr.mxu0 0.0
        %2314 = vmatpush1.msra.mxu0 0.0
        %2315 = vmatprep.subr.mxu0 0.0
        %2316 = vmatpush1.msra.mxu0 0.0
        %2317 = vmatprep.subr.mxu0 0.0
        %2318 = vmatpush1.msra.mxu0 0.0
        %2319 = vmatprep.subr.mxu0 0.0
        %2320 = vmatpush1.msra.mxu0 0.0
        %2321 = vmatprep.subr.mxu0 0.0
        %2322 = vmatpush1.msra.mxu0 0.0
        %2323 = vmatprep.subr.mxu0 0.0
        %2324 = vmatpush1.msra.mxu0 %v2291
        %2325 = vmatprep.subr.mxu0 0.0
        %2326 = vmatpush2.msra.mxu0 0.0
        %2327 = vmatprep.subr.mxu0 0.0
        %2328 = vmatpush2.msra.mxu0 0.0
        %2329 = vmatprep.subr.mxu0 0.0
        %2330 = vmatpush2.msra.mxu0 0.0
        %2331 = vmatprep.subr.mxu0 0.0
        %2332 = vmatpush2.msra.mxu0 0.0
        %2333 = vmatprep.subr.mxu0 0.0
        %2334 = vmatpush2.msra.mxu0 0.0
        %2335 = vmatprep.subr.mxu0 0.0
        %2336 = vmatpush2.msra.mxu0 0.0
        %2337 = vmatprep.subr.mxu0 0.0
        %2338 = vmatpush2.msra.mxu0 0.0
        %2339 = vmatprep.subr.mxu0 0.0
        %2340 = vmatpush2.msra.mxu0 0.0
        %2341 = vmatprep.subr.mxu0 0.0
        %2342 = vmatpush2.msra.mxu0 0.0
        %2343 = vmatprep.subr.mxu0 0.0
        %2344 = vmatpush2.msra.mxu0 0.0
        %2345 = vmatprep.subr.mxu0 0.0
        %2346 = vmatpush2.msra.mxu0 0.0
        %2347 = vmatprep.subr.mxu0 0.0
        %2348 = vmatpush2.msra.mxu0 0.0
        %2349 = vmatprep.subr.mxu0 0.0
        %2350 = vmatpush2.msra.mxu0 0.0
        %2351 = vmatprep.subr.mxu0 0.0
        %2352 = vmatpush2.msra.mxu0 0.0
        %2353 = vmatprep.subr.mxu0 0.0
        %2354 = vmatpush2.msra.mxu0 0.0
        %2355 = vmatprep.subr.mxu0 0.0
        %2356 = vmatpush2.msra.mxu0 0.0
        %2357 = vmatprep.mubr.f32.mxu0 0.0
        %2358 = vmatmul.mubr.f32.gmra.mxu0 %v2285
        %v2359 = vpop.f32.mrf.mxu0
        %v2360 = vadd.f32 0.0, %v2359
        %v2361 = vpop.f32.mrf.mxu0
        %2362 = vmatprep.mubr.f32.mxu0 0.0
        %2363 = vmatmul.mubr.f32.gmra.mxu0 %v2288
        %v2364 = vpop.f32.mrf.mxu0
        %v2365 = vadd.f32 0.0, %v2364
        %v2366 = vpop.f32.mrf.mxu0
        %2367 = vdwg.mxu0
        %v2369 = vsel %vm2283, %v2275, 0
        %v2372 = vsel %vm2283, %v2276, 0
        %v2374 = vsel %vm2290, %v2271, 0
        %2376 = vmatprep.subr.mxu0 0.0
        %2377 = vmatpush1.msra.mxu0 0.0
        %2378 = vmatprep.subr.mxu0 0.0
        %2379 = vmatpush1.msra.mxu0 0.0
        %2380 = vmatprep.subr.mxu0 0.0
        %2381 = vmatpush1.msra.mxu0 0.0
        %2382 = vmatprep.subr.mxu0 0.0
        %2383 = vmatpush1.msra.mxu0 0.0
        %2384 = vmatprep.subr.mxu0 0.0
        %2385 = vmatpush1.msra.mxu0 0.0
        %2386 = vmatprep.subr.mxu0 0.0
        %2387 = vmatpush1.msra.mxu0 0.0
        %2388 = vmatprep.subr.mxu0 0.0
        %2389 = vmatpush1.msra.mxu0 0.0
        %2390 = vmatprep.subr.mxu0 0.0
        %2391 = vmatpush1.msra.mxu0 0.0
        %2392 = vmatprep.subr.mxu0 0.0
        %2393 = vmatpush1.msra.mxu0 0.0
        %2394 = vmatprep.subr.mxu0 0.0
        %2395 = vmatpush1.msra.mxu0 0.0
        %2396 = vmatprep.subr.mxu0 0.0
        %2397 = vmatpush1.msra.mxu0 0.0
        %2398 = vmatprep.subr.mxu0 0.0
        %2399 = vmatpush1.msra.mxu0 0.0
        %2400 = vmatprep.subr.mxu0 0.0
        %2401 = vmatpush1.msra.mxu0 0.0
        %2402 = vmatprep.subr.mxu0 0.0
        %2403 = vmatpush1.msra.mxu0 0.0
        %2404 = vmatprep.subr.mxu0 0.0
        %2405 = vmatpush1.msra.mxu0 0.0
        %2406 = vmatprep.subr.mxu0 0.0
        %2407 = vmatpush1.msra.mxu0 %v2374
        %2408 = vmatprep.subr.mxu0 0.0
        %2409 = vmatpush2.msra.mxu0 0.0
        %2410 = vmatprep.subr.mxu0 0.0
        %2411 = vmatpush2.msra.mxu0 0.0
        %2412 = vmatprep.subr.mxu0 0.0
        %2413 = vmatpush2.msra.mxu0 0.0
        %2414 = vmatprep.subr.mxu0 0.0
        %2415 = vmatpush2.msra.mxu0 0.0
        %2416 = vmatprep.subr.mxu0 0.0
        %2417 = vmatpush2.msra.mxu0 0.0
        %2418 = vmatprep.subr.mxu0 0.0
        %2419 = vmatpush2.msra.mxu0 0.0
        %2420 = vmatprep.subr.mxu0 0.0
        %2421 = vmatpush2.msra.mxu0 0.0
        %2422 = vmatprep.subr.mxu0 0.0
        %2423 = vmatpush2.msra.mxu0 0.0
        %2424 = vmatprep.subr.mxu0 0.0
        %2425 = vmatpush2.msra.mxu0 0.0
        %2426 = vmatprep.subr.mxu0 0.0
        %2427 = vmatpush2.msra.mxu0 0.0
        %2428 = vmatprep.subr.mxu0 0.0
        %2429 = vmatpush2.msra.mxu0 0.0
        %2430 = vmatprep.subr.mxu0 0.0
        %2431 = vmatpush2.msra.mxu0 0.0
        %2432 = vmatprep.subr.mxu0 0.0
        %2433 = vmatpush2.msra.mxu0 0.0
        %2434 = vmatprep.subr.mxu0 0.0
        %2435 = vmatpush2.msra.mxu0 0.0
        %2436 = vmatprep.subr.mxu0 0.0
        %2437 = vmatpush2.msra.mxu0 0.0
        %2438 = vmatprep.subr.mxu0 0.0
        %2439 = vmatpush2.msra.mxu0 0.0
        %2440 = vmatprep.mubr.f32.mxu0 0.0
        %2441 = vmatmul.mubr.f32.gmra.mxu0 %v2369
        %v2442 = vpop.f32.mrf.mxu0
        %v2443 = vadd.f32 %v2360, %v2442
        %v2444 = vpop.f32.mrf.mxu0
        %2445 = vmatprep.mubr.f32.mxu0 0.0
        %2446 = vmatmul.mubr.f32.gmra.mxu0 %v2372
        %v2447 = vpop.f32.mrf.mxu0
        %v2448 = vadd.f32 %v2365, %v2447
        %v2449 = vpop.f32.mrf.mxu0
        %2450 = vdwg.mxu0
        %s2451 = scalar_lea.vmem %s3, 32
        %v2452 = vld [vmem:[%s2451] sm:$0xff]
        %v2453 = vld [vmem:[%s2451 + $0x8] sm:$0xff]
        %2454 = vrot.lane.b32.xlu0 %v2271, 126
        %v2455 = vpop.permute.xlu0 %2454
        %v2457 = vsel %vm2283, %v2452, 0
        %v2460 = vsel %vm2283, %v2453, 0
        %v2462 = vsel %vm2290, %v2455, 0
        %2464 = vmatprep.subr.mxu0 0.0
        %2465 = vmatpush1.msra.mxu0 0.0
        %2466 = vmatprep.subr.mxu0 0.0
        %2467 = vmatpush1.msra.mxu0 0.0
        %2468 = vmatprep.subr.mxu0 0.0
        %2469 = vmatpush1.msra.mxu0 0.0
        %2470 = vmatprep.subr.mxu0 0.0
        %2471 = vmatpush1.msra.mxu0 0.0
        %2472 = vmatprep.subr.mxu0 0.0
        %2473 = vmatpush1.msra.mxu0 0.0
        %2474 = vmatprep.subr.mxu0 0.0
        %2475 = vmatpush1.msra.mxu0 0.0
        %2476 = vmatprep.subr.mxu0 0.0
        %2477 = vmatpush1.msra.mxu0 0.0
        %2478 = vmatprep.subr.mxu0 0.0
        %2479 = vmatpush1.msra.mxu0 0.0
        %2480 = vmatprep.subr.mxu0 0.0
        %2481 = vmatpush1.msra.mxu0 0.0
        %2482 = vmatprep.subr.mxu0 0.0
        %2483 = vmatpush1.msra.mxu0 0.0
        %2484 = vmatprep.subr.mxu0 0.0
        %2485 = vmatpush1.msra.mxu0 0.0
        %2486 = vmatprep.subr.mxu0 0.0
        %2487 = vmatpush1.msra.mxu0 0.0
        %2488 = vmatprep.subr.mxu0 0.0
        %2489 = vmatpush1.msra.mxu0 0.0
        %2490 = vmatprep.subr.mxu0 0.0
        %2491 = vmatpush1.msra.mxu0 0.0
        %2492 = vmatprep.subr.mxu0 0.0
        %2493 = vmatpush1.msra.mxu0 0.0
        %2494 = vmatprep.subr.mxu0 0.0
        %2495 = vmatpush1.msra.mxu0 %v2462
        %2496 = vmatprep.subr.mxu0 0.0
        %2497 = vmatpush2.msra.mxu0 0.0
        %2498 = vmatprep.subr.mxu0 0.0
        %2499 = vmatpush2.msra.mxu0 0.0
        %2500 = vmatprep.subr.mxu0 0.0
        %2501 = vmatpush2.msra.mxu0 0.0
        %2502 = vmatprep.subr.mxu0 0.0
        %2503 = vmatpush2.msra.mxu0 0.0
        %2504 = vmatprep.subr.mxu0 0.0
        %2505 = vmatpush2.msra.mxu0 0.0
        %2506 = vmatprep.subr.mxu0 0.0
        %2507 = vmatpush2.msra.mxu0 0.0
        %2508 = vmatprep.subr.mxu0 0.0
        %2509 = vmatpush2.msra.mxu0 0.0
        %2510 = vmatprep.subr.mxu0 0.0
        %2511 = vmatpush2.msra.mxu0 0.0
        %2512 = vmatprep.subr.mxu0 0.0
        %2513 = vmatpush2.msra.mxu0 0.0
        %2514 = vmatprep.subr.mxu0 0.0
        %2515 = vmatpush2.msra.mxu0 0.0
        %2516 = vmatprep.subr.mxu0 0.0
        %2517 = vmatpush2.msra.mxu0 0.0
        %2518 = vmatprep.subr.mxu0 0.0
        %2519 = vmatpush2.msra.mxu0 0.0
        %2520 = vmatprep.subr.mxu0 0.0
        %2521 = vmatpush2.msra.mxu0 0.0
        %2522 = vmatprep.subr.mxu0 0.0
        %2523 = vmatpush2.msra.mxu0 0.0
        %2524 = vmatprep.subr.mxu0 0.0
        %2525 = vmatpush2.msra.mxu0 0.0
        %2526 = vmatprep.subr.mxu0 0.0
        %2527 = vmatpush2.msra.mxu0 0.0
        %2528 = vmatprep.mubr.f32.mxu0 0.0
        %2529 = vmatmul.mubr.f32.gmra.mxu0 %v2457
        %v2530 = vpop.f32.mrf.mxu0
        %v2531 = vadd.f32 0.0, %v2530
        %v2532 = vpop.f32.mrf.mxu0
        %2533 = vmatprep.mubr.f32.mxu0 0.0
        %2534 = vmatmul.mubr.f32.gmra.mxu0 %v2460
        %v2535 = vpop.f32.mrf.mxu0
        %v2536 = vadd.f32 0.0, %v2535
        %v2537 = vpop.f32.mrf.mxu0
        %2538 = vdwg.mxu0
        %v2539 = vadd.f32 %v2443, %v2531
        %v2540 = vadd.f32 %v2448, %v2536
        %s2541 = scalar_lea.vmem %s3, 48
        %v2542 = vld [vmem:[%s2541] sm:$0xff]
        %v2543 = vld [vmem:[%s2541 + $0x8] sm:$0xff]
        %2544 = vrot.lane.b32.xlu0 %v2271, 125
        %v2545 = vpop.permute.xlu0 %2544
        %v2547 = vsel %vm2283, %v2542, 0
        %v2550 = vsel %vm2283, %v2543, 0
        %v2552 = vsel %vm2290, %v2545, 0
        %2554 = vmatprep.subr.mxu0 0.0
        %2555 = vmatpush1.msra.mxu0 0.0
        %2556 = vmatprep.subr.mxu0 0.0
        %2557 = vmatpush1.msra.mxu0 0.0
        %2558 = vmatprep.subr.mxu0 0.0
        %2559 = vmatpush1.msra.mxu0 0.0
        %2560 = vmatprep.subr.mxu0 0.0
        %2561 = vmatpush1.msra.mxu0 0.0
        %2562 = vmatprep.subr.mxu0 0.0
        %2563 = vmatpush1.msra.mxu0 0.0
        %2564 = vmatprep.subr.mxu0 0.0
        %2565 = vmatpush1.msra.mxu0 0.0
        %2566 = vmatprep.subr.mxu0 0.0
        %2567 = vmatpush1.msra.mxu0 0.0
        %2568 = vmatprep.subr.mxu0 0.0
        %2569 = vmatpush1.msra.mxu0 0.0
        %2570 = vmatprep.subr.mxu0 0.0
        %2571 = vmatpush1.msra.mxu0 0.0
        %2572 = vmatprep.subr.mxu0 0.0
        %2573 = vmatpush1.msra.mxu0 0.0
        %2574 = vmatprep.subr.mxu0 0.0
        %2575 = vmatpush1.msra.mxu0 0.0
        %2576 = vmatprep.subr.mxu0 0.0
        %2577 = vmatpush1.msra.mxu0 0.0
        %2578 = vmatprep.subr.mxu0 0.0
        %2579 = vmatpush1.msra.mxu0 0.0
        %2580 = vmatprep.subr.mxu0 0.0
        %2581 = vmatpush1.msra.mxu0 0.0
        %2582 = vmatprep.subr.mxu0 0.0
        %2583 = vmatpush1.msra.mxu0 0.0
        %2584 = vmatprep.subr.mxu0 0.0
        %2585 = vmatpush1.msra.mxu0 %v2552
        %2586 = vmatprep.subr.mxu0 0.0
        %2587 = vmatpush2.msra.mxu0 0.0
        %2588 = vmatprep.subr.mxu0 0.0
        %2589 = vmatpush2.msra.mxu0 0.0
        %2590 = vmatprep.subr.mxu0 0.0
        %2591 = vmatpush2.msra.mxu0 0.0
        %2592 = vmatprep.subr.mxu0 0.0
        %2593 = vmatpush2.msra.mxu0 0.0
        %2594 = vmatprep.subr.mxu0 0.0
        %2595 = vmatpush2.msra.mxu0 0.0
        %2596 = vmatprep.subr.mxu0 0.0
        %2597 = vmatpush2.msra.mxu0 0.0
        %2598 = vmatprep.subr.mxu0 0.0
        %2599 = vmatpush2.msra.mxu0 0.0
        %2600 = vmatprep.subr.mxu0 0.0
        %2601 = vmatpush2.msra.mxu0 0.0
        %2602 = vmatprep.subr.mxu0 0.0
        %2603 = vmatpush2.msra.mxu0 0.0
        %2604 = vmatprep.subr.mxu0 0.0
        %2605 = vmatpush2.msra.mxu0 0.0
        %2606 = vmatprep.subr.mxu0 0.0
        %2607 = vmatpush2.msra.mxu0 0.0
        %2608 = vmatprep.subr.mxu0 0.0
        %2609 = vmatpush2.msra.mxu0 0.0
        %2610 = vmatprep.subr.mxu0 0.0
        %2611 = vmatpush2.msra.mxu0 0.0
        %2612 = vmatprep.subr.mxu0 0.0
        %2613 = vmatpush2.msra.mxu0 0.0
        %2614 = vmatprep.subr.mxu0 0.0
        %2615 = vmatpush2.msra.mxu0 0.0
        %2616 = vmatprep.subr.mxu0 0.0
        %2617 = vmatpush2.msra.mxu0 0.0
        %2618 = vmatprep.mubr.f32.mxu0 0.0
        %2619 = vmatmul.mubr.f32.gmra.mxu0 %v2547
        %v2620 = vpop.f32.mrf.mxu0
        %v2621 = vadd.f32 0.0, %v2620
        %v2622 = vpop.f32.mrf.mxu0
        %2623 = vmatprep.mubr.f32.mxu0 0.0
        %2624 = vmatmul.mubr.f32.gmra.mxu0 %v2550
        %v2625 = vpop.f32.mrf.mxu0
        %v2626 = vadd.f32 0.0, %v2625
        %v2627 = vpop.f32.mrf.mxu0
        %2628 = vdwg.mxu0
        %v2629 = vadd.f32 %v2539, %v2621
        %v2630 = vadd.f32 %v2540, %v2626
        %s2631 = scalar_lea.vmem %s3, 64
        %v2632 = vld [vmem:[%s2631] sm:$0xff]
        %v2633 = vld [vmem:[%s2631 + $0x8] sm:$0xff]
        %2634 = vrot.lane.b32.xlu0 %v2271, 124
        %v2635 = vpop.permute.xlu0 %2634
        %v2637 = vsel %vm2283, %v2632, 0
        %v2640 = vsel %vm2283, %v2633, 0
        %v2642 = vsel %vm2290, %v2635, 0
        %2644 = vmatprep.subr.mxu0 0.0
        %2645 = vmatpush1.msra.mxu0 0.0
        %2646 = vmatprep.subr.mxu0 0.0
        %2647 = vmatpush1.msra.mxu0 0.0
        %2648 = vmatprep.subr.mxu0 0.0
        %2649 = vmatpush1.msra.mxu0 0.0
        %2650 = vmatprep.subr.mxu0 0.0
        %2651 = vmatpush1.msra.mxu0 0.0
        %2652 = vmatprep.subr.mxu0 0.0
        %2653 = vmatpush1.msra.mxu0 0.0
        %2654 = vmatprep.subr.mxu0 0.0
        %2655 = vmatpush1.msra.mxu0 0.0
        %2656 = vmatprep.subr.mxu0 0.0
        %2657 = vmatpush1.msra.mxu0 0.0
        %2658 = vmatprep.subr.mxu0 0.0
        %2659 = vmatpush1.msra.mxu0 0.0
        %2660 = vmatprep.subr.mxu0 0.0
        %2661 = vmatpush1.msra.mxu0 0.0
        %2662 = vmatprep.subr.mxu0 0.0
        %2663 = vmatpush1.msra.mxu0 0.0
        %2664 = vmatprep.subr.mxu0 0.0
        %2665 = vmatpush1.msra.mxu0 0.0
        %2666 = vmatprep.subr.mxu0 0.0
        %2667 = vmatpush1.msra.mxu0 0.0
        %2668 = vmatprep.subr.mxu0 0.0
        %2669 = vmatpush1.msra.mxu0 0.0
        %2670 = vmatprep.subr.mxu0 0.0
        %2671 = vmatpush1.msra.mxu0 0.0
        %2672 = vmatprep.subr.mxu0 0.0
        %2673 = vmatpush1.msra.mxu0 0.0
        %2674 = vmatprep.subr.mxu0 0.0
        %2675 = vmatpush1.msra.mxu0 %v2642
        %2676 = vmatprep.subr.mxu0 0.0
        %2677 = vmatpush2.msra.mxu0 0.0
        %2678 = vmatprep.subr.mxu0 0.0
        %2679 = vmatpush2.msra.mxu0 0.0
        %2680 = vmatprep.subr.mxu0 0.0
        %2681 = vmatpush2.msra.mxu0 0.0
        %2682 = vmatprep.subr.mxu0 0.0
        %2683 = vmatpush2.msra.mxu0 0.0
        %2684 = vmatprep.subr.mxu0 0.0
        %2685 = vmatpush2.msra.mxu0 0.0
        %2686 = vmatprep.subr.mxu0 0.0
        %2687 = vmatpush2.msra.mxu0 0.0
        %2688 = vmatprep.subr.mxu0 0.0
        %2689 = vmatpush2.msra.mxu0 0.0
        %2690 = vmatprep.subr.mxu0 0.0
        %2691 = vmatpush2.msra.mxu0 0.0
        %2692 = vmatprep.subr.mxu0 0.0
        %2693 = vmatpush2.msra.mxu0 0.0
        %2694 = vmatprep.subr.mxu0 0.0
        %2695 = vmatpush2.msra.mxu0 0.0
        %2696 = vmatprep.subr.mxu0 0.0
        %2697 = vmatpush2.msra.mxu0 0.0
        %2698 = vmatprep.subr.mxu0 0.0
        %2699 = vmatpush2.msra.mxu0 0.0
        %2700 = vmatprep.subr.mxu0 0.0
        %2701 = vmatpush2.msra.mxu0 0.0
        %2702 = vmatprep.subr.mxu0 0.0
        %2703 = vmatpush2.msra.mxu0 0.0
        %2704 = vmatprep.subr.mxu0 0.0
        %2705 = vmatpush2.msra.mxu0 0.0
        %2706 = vmatprep.subr.mxu0 0.0
        %2707 = vmatpush2.msra.mxu0 0.0
        %2708 = vmatprep.mubr.f32.mxu0 0.0
        %2709 = vmatmul.mubr.f32.gmra.mxu0 %v2637
        %v2710 = vpop.f32.mrf.mxu0
        %v2711 = vadd.f32 0.0, %v2710
        %v2712 = vpop.f32.mrf.mxu0
        %2713 = vmatprep.mubr.f32.mxu0 0.0
        %2714 = vmatmul.mubr.f32.gmra.mxu0 %v2640
        %v2715 = vpop.f32.mrf.mxu0
        %v2716 = vadd.f32 0.0, %v2715
        %v2717 = vpop.f32.mrf.mxu0
        %2718 = vdwg.mxu0
        %v2719 = vadd.f32 %v2629, %v2711
        %v2720 = vadd.f32 %v2630, %v2716
        %s2721 = scalar_lea.vmem %s3, 80
        %v2722 = vld [vmem:[%s2721] sm:$0xff]
        %v2723 = vld [vmem:[%s2721 + $0x8] sm:$0xff]
        %2724 = vrot.lane.b32.xlu0 %v2271, 116
        %v2725 = vpop.permute.xlu0 %2724
        %v2727 = vsel %vm2283, %v2722, 0
        %v2730 = vsel %vm2283, %v2723, 0
        %v2732 = vsel %vm2290, %v2725, 0
        %2734 = vmatprep.subr.mxu0 0.0
        %2735 = vmatpush1.msra.mxu0 0.0
        %2736 = vmatprep.subr.mxu0 0.0
        %2737 = vmatpush1.msra.mxu0 0.0
        %2738 = vmatprep.subr.mxu0 0.0
        %2739 = vmatpush1.msra.mxu0 0.0
        %2740 = vmatprep.subr.mxu0 0.0
        %2741 = vmatpush1.msra.mxu0 0.0
        %2742 = vmatprep.subr.mxu0 0.0
        %2743 = vmatpush1.msra.mxu0 0.0
        %2744 = vmatprep.subr.mxu0 0.0
        %2745 = vmatpush1.msra.mxu0 0.0
        %2746 = vmatprep.subr.mxu0 0.0
        %2747 = vmatpush1.msra.mxu0 0.0
        %2748 = vmatprep.subr.mxu0 0.0
        %2749 = vmatpush1.msra.mxu0 0.0
        %2750 = vmatprep.subr.mxu0 0.0
        %2751 = vmatpush1.msra.mxu0 0.0
        %2752 = vmatprep.subr.mxu0 0.0
        %2753 = vmatpush1.msra.mxu0 0.0
        %2754 = vmatprep.subr.mxu0 0.0
        %2755 = vmatpush1.msra.mxu0 0.0
        %2756 = vmatprep.subr.mxu0 0.0
        %2757 = vmatpush1.msra.mxu0 0.0
        %2758 = vmatprep.subr.mxu0 0.0
        %2759 = vmatpush1.msra.mxu0 0.0
        %2760 = vmatprep.subr.mxu0 0.0
        %2761 = vmatpush1.msra.mxu0 0.0
        %2762 = vmatprep.subr.mxu0 0.0
        %2763 = vmatpush1.msra.mxu0 0.0
        %2764 = vmatprep.subr.mxu0 0.0
        %2765 = vmatpush1.msra.mxu0 %v2732
        %2766 = vmatprep.subr.mxu0 0.0
        %2767 = vmatpush2.msra.mxu0 0.0
        %2768 = vmatprep.subr.mxu0 0.0
        %2769 = vmatpush2.msra.mxu0 0.0
        %2770 = vmatprep.subr.mxu0 0.0
        %2771 = vmatpush2.msra.mxu0 0.0
        %2772 = vmatprep.subr.mxu0 0.0
        %2773 = vmatpush2.msra.mxu0 0.0
        %2774 = vmatprep.subr.mxu0 0.0
        %2775 = vmatpush2.msra.mxu0 0.0
        %2776 = vmatprep.subr.mxu0 0.0
        %2777 = vmatpush2.msra.mxu0 0.0
        %2778 = vmatprep.subr.mxu0 0.0
        %2779 = vmatpush2.msra.mxu0 0.0
        %2780 = vmatprep.subr.mxu0 0.0
        %2781 = vmatpush2.msra.mxu0 0.0
        %2782 = vmatprep.subr.mxu0 0.0
        %2783 = vmatpush2.msra.mxu0 0.0
        %2784 = vmatprep.subr.mxu0 0.0
        %2785 = vmatpush2.msra.mxu0 0.0
        %2786 = vmatprep.subr.mxu0 0.0
        %2787 = vmatpush2.msra.mxu0 0.0
        %2788 = vmatprep.subr.mxu0 0.0
        %2789 = vmatpush2.msra.mxu0 0.0
        %2790 = vmatprep.subr.mxu0 0.0
        %2791 = vmatpush2.msra.mxu0 0.0
        %2792 = vmatprep.subr.mxu0 0.0
        %2793 = vmatpush2.msra.mxu0 0.0
        %2794 = vmatprep.subr.mxu0 0.0
        %2795 = vmatpush2.msra.mxu0 0.0
        %2796 = vmatprep.subr.mxu0 0.0
        %2797 = vmatpush2.msra.mxu0 0.0
        %2798 = vmatprep.mubr.f32.mxu0 0.0
        %2799 = vmatmul.mubr.f32.gmra.mxu0 %v2727
        %v2800 = vpop.f32.mrf.mxu0
        %v2801 = vadd.f32 0.0, %v2800
        %v2802 = vpop.f32.mrf.mxu0
        %2803 = vmatprep.mubr.f32.mxu0 0.0
        %2804 = vmatmul.mubr.f32.gmra.mxu0 %v2730
        %v2805 = vpop.f32.mrf.mxu0
        %v2806 = vadd.f32 0.0, %v2805
        %v2807 = vpop.f32.mrf.mxu0
        %2808 = vdwg.mxu0
        %v2809 = vadd.f32 %v2719, %v2801
        %v2810 = vadd.f32 %v2720, %v2806
        %s2811 = scalar_lea.vmem %s3, 96
        %v2812 = vld [vmem:[%s2811] sm:$0xff]
        %v2813 = vld [vmem:[%s2811 + $0x8] sm:$0xff]
        %2814 = vrot.lane.b32.xlu0 %v2271, 115
        %v2815 = vpop.permute.xlu0 %2814
        %v2817 = vsel %vm2283, %v2812, 0
        %v2820 = vsel %vm2283, %v2813, 0
        %v2822 = vsel %vm2290, %v2815, 0
        %2824 = vmatprep.subr.mxu0 0.0
        %2825 = vmatpush1.msra.mxu0 0.0
        %2826 = vmatprep.subr.mxu0 0.0
        %2827 = vmatpush1.msra.mxu0 0.0
        %2828 = vmatprep.subr.mxu0 0.0
        %2829 = vmatpush1.msra.mxu0 0.0
        %2830 = vmatprep.subr.mxu0 0.0
        %2831 = vmatpush1.msra.mxu0 0.0
        %2832 = vmatprep.subr.mxu0 0.0
        %2833 = vmatpush1.msra.mxu0 0.0
        %2834 = vmatprep.subr.mxu0 0.0
        %2835 = vmatpush1.msra.mxu0 0.0
        %2836 = vmatprep.subr.mxu0 0.0
        %2837 = vmatpush1.msra.mxu0 0.0
        %2838 = vmatprep.subr.mxu0 0.0
        %2839 = vmatpush1.msra.mxu0 0.0
        %2840 = vmatprep.subr.mxu0 0.0
        %2841 = vmatpush1.msra.mxu0 0.0
        %2842 = vmatprep.subr.mxu0 0.0
        %2843 = vmatpush1.msra.mxu0 0.0
        %2844 = vmatprep.subr.mxu0 0.0
        %2845 = vmatpush1.msra.mxu0 0.0
        %2846 = vmatprep.subr.mxu0 0.0
        %2847 = vmatpush1.msra.mxu0 0.0
        %2848 = vmatprep.subr.mxu0 0.0
        %2849 = vmatpush1.msra.mxu0 0.0
        %2850 = vmatprep.subr.mxu0 0.0
        %2851 = vmatpush1.msra.mxu0 0.0
        %2852 = vmatprep.subr.mxu0 0.0
        %2853 = vmatpush1.msra.mxu0 0.0
        %2854 = vmatprep.subr.mxu0 0.0
        %2855 = vmatpush1.msra.mxu0 %v2822
        %2856 = vmatprep.subr.mxu0 0.0
        %2857 = vmatpush2.msra.mxu0 0.0
        %2858 = vmatprep.subr.mxu0 0.0
        %2859 = vmatpush2.msra.mxu0 0.0
        %2860 = vmatprep.subr.mxu0 0.0
        %2861 = vmatpush2.msra.mxu0 0.0
        %2862 = vmatprep.subr.mxu0 0.0
        %2863 = vmatpush2.msra.mxu0 0.0
        %2864 = vmatprep.subr.mxu0 0.0
        %2865 = vmatpush2.msra.mxu0 0.0
        %2866 = vmatprep.subr.mxu0 0.0
        %2867 = vmatpush2.msra.mxu0 0.0
        %2868 = vmatprep.subr.mxu0 0.0
        %2869 = vmatpush2.msra.mxu0 0.0
        %2870 = vmatprep.subr.mxu0 0.0
        %2871 = vmatpush2.msra.mxu0 0.0
        %2872 = vmatprep.subr.mxu0 0.0
        %2873 = vmatpush2.msra.mxu0 0.0
        %2874 = vmatprep.subr.mxu0 0.0
        %2875 = vmatpush2.msra.mxu0 0.0
        %2876 = vmatprep.subr.mxu0 0.0
        %2877 = vmatpush2.msra.mxu0 0.0
        %2878 = vmatprep.subr.mxu0 0.0
        %2879 = vmatpush2.msra.mxu0 0.0
        %2880 = vmatprep.subr.mxu0 0.0
        %2881 = vmatpush2.msra.mxu0 0.0
        %2882 = vmatprep.subr.mxu0 0.0
        %2883 = vmatpush2.msra.mxu0 0.0
        %2884 = vmatprep.subr.mxu0 0.0
        %2885 = vmatpush2.msra.mxu0 0.0
        %2886 = vmatprep.subr.mxu0 0.0
        %2887 = vmatpush2.msra.mxu0 0.0
        %2888 = vmatprep.mubr.f32.mxu0 0.0
        %2889 = vmatmul.mubr.f32.gmra.mxu0 %v2817
        %v2890 = vpop.f32.mrf.mxu0
        %v2891 = vadd.f32 0.0, %v2890
        %v2892 = vpop.f32.mrf.mxu0
        %2893 = vmatprep.mubr.f32.mxu0 0.0
        %2894 = vmatmul.mubr.f32.gmra.mxu0 %v2820
        %v2895 = vpop.f32.mrf.mxu0
        %v2896 = vadd.f32 0.0, %v2895
        %v2897 = vpop.f32.mrf.mxu0
        %2898 = vdwg.mxu0
        %v2899 = vadd.f32 %v2809, %v2891
        %v2900 = vadd.f32 %v2810, %v2896
        %s2901 = scalar_lea.vmem %s3, 112
        %v2902 = vld [vmem:[%s2901] sm:$0xff]
        %v2903 = vld [vmem:[%s2901 + $0x8] sm:$0xff]
        %2904 = vrot.lane.b32.xlu0 %v2271, 114
        %v2905 = vpop.permute.xlu0 %2904
        %v2907 = vsel %vm2283, %v2902, 0
        %v2910 = vsel %vm2283, %v2903, 0
        %v2912 = vsel %vm2290, %v2905, 0
        %2914 = vmatprep.subr.mxu0 0.0
        %2915 = vmatpush1.msra.mxu0 0.0
        %2916 = vmatprep.subr.mxu0 0.0
        %2917 = vmatpush1.msra.mxu0 0.0
        %2918 = vmatprep.subr.mxu0 0.0
        %2919 = vmatpush1.msra.mxu0 0.0
        %2920 = vmatprep.subr.mxu0 0.0
        %2921 = vmatpush1.msra.mxu0 0.0
        %2922 = vmatprep.subr.mxu0 0.0
        %2923 = vmatpush1.msra.mxu0 0.0
        %2924 = vmatprep.subr.mxu0 0.0
        %2925 = vmatpush1.msra.mxu0 0.0
        %2926 = vmatprep.subr.mxu0 0.0
        %2927 = vmatpush1.msra.mxu0 0.0
        %2928 = vmatprep.subr.mxu0 0.0
        %2929 = vmatpush1.msra.mxu0 0.0
        %2930 = vmatprep.subr.mxu0 0.0
        %2931 = vmatpush1.msra.mxu0 0.0
        %2932 = vmatprep.subr.mxu0 0.0
        %2933 = vmatpush1.msra.mxu0 0.0
        %2934 = vmatprep.subr.mxu0 0.0
        %2935 = vmatpush1.msra.mxu0 0.0
        %2936 = vmatprep.subr.mxu0 0.0
        %2937 = vmatpush1.msra.mxu0 0.0
        %2938 = vmatprep.subr.mxu0 0.0
        %2939 = vmatpush1.msra.mxu0 0.0
        %2940 = vmatprep.subr.mxu0 0.0
        %2941 = vmatpush1.msra.mxu0 0.0
        %2942 = vmatprep.subr.mxu0 0.0
        %2943 = vmatpush1.msra.mxu0 0.0
        %2944 = vmatprep.subr.mxu0 0.0
        %2945 = vmatpush1.msra.mxu0 %v2912
        %2946 = vmatprep.subr.mxu0 0.0
        %2947 = vmatpush2.msra.mxu0 0.0
        %2948 = vmatprep.subr.mxu0 0.0
        %2949 = vmatpush2.msra.mxu0 0.0
        %2950 = vmatprep.subr.mxu0 0.0
        %2951 = vmatpush2.msra.mxu0 0.0
        %2952 = vmatprep.subr.mxu0 0.0
        %2953 = vmatpush2.msra.mxu0 0.0
        %2954 = vmatprep.subr.mxu0 0.0
        %2955 = vmatpush2.msra.mxu0 0.0
        %2956 = vmatprep.subr.mxu0 0.0
        %2957 = vmatpush2.msra.mxu0 0.0
        %2958 = vmatprep.subr.mxu0 0.0
        %2959 = vmatpush2.msra.mxu0 0.0
        %2960 = vmatprep.subr.mxu0 0.0
        %2961 = vmatpush2.msra.mxu0 0.0
        %2962 = vmatprep.subr.mxu0 0.0
        %2963 = vmatpush2.msra.mxu0 0.0
        %2964 = vmatprep.subr.mxu0 0.0
        %2965 = vmatpush2.msra.mxu0 0.0
        %2966 = vmatprep.subr.mxu0 0.0
        %2967 = vmatpush2.msra.mxu0 0.0
        %2968 = vmatprep.subr.mxu0 0.0
        %2969 = vmatpush2.msra.mxu0 0.0
        %2970 = vmatprep.subr.mxu0 0.0
        %2971 = vmatpush2.msra.mxu0 0.0
        %2972 = vmatprep.subr.mxu0 0.0
        %2973 = vmatpush2.msra.mxu0 0.0
        %2974 = vmatprep.subr.mxu0 0.0
        %2975 = vmatpush2.msra.mxu0 0.0
        %2976 = vmatprep.subr.mxu0 0.0
        %2977 = vmatpush2.msra.mxu0 0.0
        %2978 = vmatprep.mubr.f32.mxu0 0.0
        %2979 = vmatmul.mubr.f32.gmra.mxu0 %v2907
        %v2980 = vpop.f32.mrf.mxu0
        %v2981 = vadd.f32 0.0, %v2980
        %v2982 = vpop.f32.mrf.mxu0
        %2983 = vmatprep.mubr.f32.mxu0 0.0
        %2984 = vmatmul.mubr.f32.gmra.mxu0 %v2910
        %v2985 = vpop.f32.mrf.mxu0
        %v2986 = vadd.f32 0.0, %v2985
        %v2987 = vpop.f32.mrf.mxu0
        %2988 = vdwg.mxu0
        %v2989 = vadd.f32 %v2899, %v2981
        %v2990 = vadd.f32 %v2900, %v2986
        %s2991 = scalar_lea.vmem %s3, 128
        %v2992 = vld [vmem:[%s2991] sm:$0xff]
        %v2993 = vld [vmem:[%s2991 + $0x8] sm:$0xff]
        %2994 = vrot.lane.b32.xlu0 %v2271, 113
        %v2995 = vpop.permute.xlu0 %2994
        %v2997 = vsel %vm2283, %v2992, 0
        %v3000 = vsel %vm2283, %v2993, 0
        %v3002 = vsel %vm2290, %v2995, 0
        %3004 = vmatprep.subr.mxu0 0.0
        %3005 = vmatpush1.msra.mxu0 0.0
        %3006 = vmatprep.subr.mxu0 0.0
        %3007 = vmatpush1.msra.mxu0 0.0
        %3008 = vmatprep.subr.mxu0 0.0
        %3009 = vmatpush1.msra.mxu0 0.0
        %3010 = vmatprep.subr.mxu0 0.0
        %3011 = vmatpush1.msra.mxu0 0.0
        %3012 = vmatprep.subr.mxu0 0.0
        %3013 = vmatpush1.msra.mxu0 0.0
        %3014 = vmatprep.subr.mxu0 0.0
        %3015 = vmatpush1.msra.mxu0 0.0
        %3016 = vmatprep.subr.mxu0 0.0
        %3017 = vmatpush1.msra.mxu0 0.0
        %3018 = vmatprep.subr.mxu0 0.0
        %3019 = vmatpush1.msra.mxu0 0.0
        %3020 = vmatprep.subr.mxu0 0.0
        %3021 = vmatpush1.msra.mxu0 0.0
        %3022 = vmatprep.subr.mxu0 0.0
        %3023 = vmatpush1.msra.mxu0 0.0
        %3024 = vmatprep.subr.mxu0 0.0
        %3025 = vmatpush1.msra.mxu0 0.0
        %3026 = vmatprep.subr.mxu0 0.0
        %3027 = vmatpush1.msra.mxu0 0.0
        %3028 = vmatprep.subr.mxu0 0.0
        %3029 = vmatpush1.msra.mxu0 0.0
        %3030 = vmatprep.subr.mxu0 0.0
        %3031 = vmatpush1.msra.mxu0 0.0
        %3032 = vmatprep.subr.mxu0 0.0
        %3033 = vmatpush1.msra.mxu0 0.0
        %3034 = vmatprep.subr.mxu0 0.0
        %3035 = vmatpush1.msra.mxu0 %v3002
        %3036 = vmatprep.subr.mxu0 0.0
        %3037 = vmatpush2.msra.mxu0 0.0
        %3038 = vmatprep.subr.mxu0 0.0
        %3039 = vmatpush2.msra.mxu0 0.0
        %3040 = vmatprep.subr.mxu0 0.0
        %3041 = vmatpush2.msra.mxu0 0.0
        %3042 = vmatprep.subr.mxu0 0.0
        %3043 = vmatpush2.msra.mxu0 0.0
        %3044 = vmatprep.subr.mxu0 0.0
        %3045 = vmatpush2.msra.mxu0 0.0
        %3046 = vmatprep.subr.mxu0 0.0
        %3047 = vmatpush2.msra.mxu0 0.0
        %3048 = vmatprep.subr.mxu0 0.0
        %3049 = vmatpush2.msra.mxu0 0.0
        %3050 = vmatprep.subr.mxu0 0.0
        %3051 = vmatpush2.msra.mxu0 0.0
        %3052 = vmatprep.subr.mxu0 0.0
        %3053 = vmatpush2.msra.mxu0 0.0
        %3054 = vmatprep.subr.mxu0 0.0
        %3055 = vmatpush2.msra.mxu0 0.0
        %3056 = vmatprep.subr.mxu0 0.0
        %3057 = vmatpush2.msra.mxu0 0.0
        %3058 = vmatprep.subr.mxu0 0.0
        %3059 = vmatpush2.msra.mxu0 0.0
        %3060 = vmatprep.subr.mxu0 0.0
        %3061 = vmatpush2.msra.mxu0 0.0
        %3062 = vmatprep.subr.mxu0 0.0
        %3063 = vmatpush2.msra.mxu0 0.0
        %3064 = vmatprep.subr.mxu0 0.0
        %3065 = vmatpush2.msra.mxu0 0.0
        %3066 = vmatprep.subr.mxu0 0.0
        %3067 = vmatpush2.msra.mxu0 0.0
        %3068 = vmatprep.mubr.f32.mxu0 0.0
        %3069 = vmatmul.mubr.f32.gmra.mxu0 %v2997
        %v3070 = vpop.f32.mrf.mxu0
        %v3071 = vadd.f32 0.0, %v3070
        %v3072 = vpop.f32.mrf.mxu0
        %3073 = vmatprep.mubr.f32.mxu0 0.0
        %3074 = vmatmul.mubr.f32.gmra.mxu0 %v3000
        %v3075 = vpop.f32.mrf.mxu0
        %v3076 = vadd.f32 0.0, %v3075
        %v3077 = vpop.f32.mrf.mxu0
        %3078 = vdwg.mxu0
        %v3079 = vadd.f32 %v2989, %v3071
        %v3080 = vadd.f32 %v2990, %v3076
        %s3081 = scalar_lea.vmem %s3, 144
        %v3082 = vld [vmem:[%s3081] sm:$0xff]
        %v3083 = vld [vmem:[%s3081 + $0x8] sm:$0xff]
        %3084 = vrot.lane.b32.xlu0 %v2271, 112
        %v3085 = vpop.permute.xlu0 %3084
        %v3087 = vsel %vm2283, %v3082, 0
        %v3090 = vsel %vm2283, %v3083, 0
        %v3092 = vsel %vm2290, %v3085, 0
        %3094 = vmatprep.subr.mxu0 0.0
        %3095 = vmatpush1.msra.mxu0 0.0
        %3096 = vmatprep.subr.mxu0 0.0
        %3097 = vmatpush1.msra.mxu0 0.0
        %3098 = vmatprep.subr.mxu0 0.0
        %3099 = vmatpush1.msra.mxu0 0.0
        %3100 = vmatprep.subr.mxu0 0.0
        %3101 = vmatpush1.msra.mxu0 0.0
        %3102 = vmatprep.subr.mxu0 0.0
        %3103 = vmatpush1.msra.mxu0 0.0
        %3104 = vmatprep.subr.mxu0 0.0
        %3105 = vmatpush1.msra.mxu0 0.0
        %3106 = vmatprep.subr.mxu0 0.0
        %3107 = vmatpush1.msra.mxu0 0.0
        %3108 = vmatprep.subr.mxu0 0.0
        %3109 = vmatpush1.msra.mxu0 0.0
        %3110 = vmatprep.subr.mxu0 0.0
        %3111 = vmatpush1.msra.mxu0 0.0
        %3112 = vmatprep.subr.mxu0 0.0
        %3113 = vmatpush1.msra.mxu0 0.0
        %3114 = vmatprep.subr.mxu0 0.0
        %3115 = vmatpush1.msra.mxu0 0.0
        %3116 = vmatprep.subr.mxu0 0.0
        %3117 = vmatpush1.msra.mxu0 0.0
        %3118 = vmatprep.subr.mxu0 0.0
        %3119 = vmatpush1.msra.mxu0 0.0
        %3120 = vmatprep.subr.mxu0 0.0
        %3121 = vmatpush1.msra.mxu0 0.0
        %3122 = vmatprep.subr.mxu0 0.0
        %3123 = vmatpush1.msra.mxu0 0.0
        %3124 = vmatprep.subr.mxu0 0.0
        %3125 = vmatpush1.msra.mxu0 %v3092
        %3126 = vmatprep.subr.mxu0 0.0
        %3127 = vmatpush2.msra.mxu0 0.0
        %3128 = vmatprep.subr.mxu0 0.0
        %3129 = vmatpush2.msra.mxu0 0.0
        %3130 = vmatprep.subr.mxu0 0.0
        %3131 = vmatpush2.msra.mxu0 0.0
        %3132 = vmatprep.subr.mxu0 0.0
        %3133 = vmatpush2.msra.mxu0 0.0
        %3134 = vmatprep.subr.mxu0 0.0
        %3135 = vmatpush2.msra.mxu0 0.0
        %3136 = vmatprep.subr.mxu0 0.0
        %3137 = vmatpush2.msra.mxu0 0.0
        %3138 = vmatprep.subr.mxu0 0.0
        %3139 = vmatpush2.msra.mxu0 0.0
        %3140 = vmatprep.subr.mxu0 0.0
        %3141 = vmatpush2.msra.mxu0 0.0
        %3142 = vmatprep.subr.mxu0 0.0
        %3143 = vmatpush2.msra.mxu0 0.0
        %3144 = vmatprep.subr.mxu0 0.0
        %3145 = vmatpush2.msra.mxu0 0.0
        %3146 = vmatprep.subr.mxu0 0.0
        %3147 = vmatpush2.msra.mxu0 0.0
        %3148 = vmatprep.subr.mxu0 0.0
        %3149 = vmatpush2.msra.mxu0 0.0
        %3150 = vmatprep.subr.mxu0 0.0
        %3151 = vmatpush2.msra.mxu0 0.0
        %3152 = vmatprep.subr.mxu0 0.0
        %3153 = vmatpush2.msra.mxu0 0.0
        %3154 = vmatprep.subr.mxu0 0.0
        %3155 = vmatpush2.msra.mxu0 0.0
        %3156 = vmatprep.subr.mxu0 0.0
        %3157 = vmatpush2.msra.mxu0 0.0
        %3158 = vmatprep.mubr.f32.mxu0 0.0
        %3159 = vmatmul.mubr.f32.gmra.mxu0 %v3087
        %v3160 = vpop.f32.mrf.mxu0
        %v3161 = vadd.f32 0.0, %v3160
        %v3162 = vpop.f32.mrf.mxu0
        %3163 = vmatprep.mubr.f32.mxu0 0.0
        %3164 = vmatmul.mubr.f32.gmra.mxu0 %v3090
        %v3165 = vpop.f32.mrf.mxu0
        %v3166 = vadd.f32 0.0, %v3165
        %v3167 = vpop.f32.mrf.mxu0
        %3168 = vdwg.mxu0
        %v3169 = vadd.f32 %v3079, %v3161
        %v3170 = vadd.f32 %v3080, %v3166
        %s3171 = scalar_lea.vmem %s3, 160
        %v3172 = vld [vmem:[%s3171] sm:$0xff]
        %v3173 = vld [vmem:[%s3171 + $0x8] sm:$0xff]
        %3174 = vrot.lane.b32.xlu0 %v2271, 104
        %v3175 = vpop.permute.xlu0 %3174
        %v3177 = vsel %vm2283, %v3172, 0
        %v3180 = vsel %vm2283, %v3173, 0
        %v3182 = vsel %vm2290, %v3175, 0
        %3184 = vmatprep.subr.mxu0 0.0
        %3185 = vmatpush1.msra.mxu0 0.0
        %3186 = vmatprep.subr.mxu0 0.0
        %3187 = vmatpush1.msra.mxu0 0.0
        %3188 = vmatprep.subr.mxu0 0.0
        %3189 = vmatpush1.msra.mxu0 0.0
        %3190 = vmatprep.subr.mxu0 0.0
        %3191 = vmatpush1.msra.mxu0 0.0
        %3192 = vmatprep.subr.mxu0 0.0
        %3193 = vmatpush1.msra.mxu0 0.0
        %3194 = vmatprep.subr.mxu0 0.0
        %3195 = vmatpush1.msra.mxu0 0.0
        %3196 = vmatprep.subr.mxu0 0.0
        %3197 = vmatpush1.msra.mxu0 0.0
        %3198 = vmatprep.subr.mxu0 0.0
        %3199 = vmatpush1.msra.mxu0 0.0
        %3200 = vmatprep.subr.mxu0 0.0
        %3201 = vmatpush1.msra.mxu0 0.0
        %3202 = vmatprep.subr.mxu0 0.0
        %3203 = vmatpush1.msra.mxu0 0.0
        %3204 = vmatprep.subr.mxu0 0.0
        %3205 = vmatpush1.msra.mxu0 0.0
        %3206 = vmatprep.subr.mxu0 0.0
        %3207 = vmatpush1.msra.mxu0 0.0
        %3208 = vmatprep.subr.mxu0 0.0
        %3209 = vmatpush1.msra.mxu0 0.0
        %3210 = vmatprep.subr.mxu0 0.0
        %3211 = vmatpush1.msra.mxu0 0.0
        %3212 = vmatprep.subr.mxu0 0.0
        %3213 = vmatpush1.msra.mxu0 0.0
        %3214 = vmatprep.subr.mxu0 0.0
        %3215 = vmatpush1.msra.mxu0 %v3182
        %3216 = vmatprep.subr.mxu0 0.0
        %3217 = vmatpush2.msra.mxu0 0.0
        %3218 = vmatprep.subr.mxu0 0.0
        %3219 = vmatpush2.msra.mxu0 0.0
        %3220 = vmatprep.subr.mxu0 0.0
        %3221 = vmatpush2.msra.mxu0 0.0
        %3222 = vmatprep.subr.mxu0 0.0
        %3223 = vmatpush2.msra.mxu0 0.0
        %3224 = vmatprep.subr.mxu0 0.0
        %3225 = vmatpush2.msra.mxu0 0.0
        %3226 = vmatprep.subr.mxu0 0.0
        %3227 = vmatpush2.msra.mxu0 0.0
        %3228 = vmatprep.subr.mxu0 0.0
        %3229 = vmatpush2.msra.mxu0 0.0
        %3230 = vmatprep.subr.mxu0 0.0
        %3231 = vmatpush2.msra.mxu0 0.0
        %3232 = vmatprep.subr.mxu0 0.0
        %3233 = vmatpush2.msra.mxu0 0.0
        %3234 = vmatprep.subr.mxu0 0.0
        %3235 = vmatpush2.msra.mxu0 0.0
        %3236 = vmatprep.subr.mxu0 0.0
        %3237 = vmatpush2.msra.mxu0 0.0
        %3238 = vmatprep.subr.mxu0 0.0
        %3239 = vmatpush2.msra.mxu0 0.0
        %3240 = vmatprep.subr.mxu0 0.0
        %3241 = vmatpush2.msra.mxu0 0.0
        %3242 = vmatprep.subr.mxu0 0.0
        %3243 = vmatpush2.msra.mxu0 0.0
        %3244 = vmatprep.subr.mxu0 0.0
        %3245 = vmatpush2.msra.mxu0 0.0
        %3246 = vmatprep.subr.mxu0 0.0
        %3247 = vmatpush2.msra.mxu0 0.0
        %3248 = vmatprep.mubr.f32.mxu0 0.0
        %3249 = vmatmul.mubr.f32.gmra.mxu0 %v3177
        %v3250 = vpop.f32.mrf.mxu0
        %v3251 = vadd.f32 0.0, %v3250
        %v3252 = vpop.f32.mrf.mxu0
        %3253 = vmatprep.mubr.f32.mxu0 0.0
        %3254 = vmatmul.mubr.f32.gmra.mxu0 %v3180
        %v3255 = vpop.f32.mrf.mxu0
        %v3256 = vadd.f32 0.0, %v3255
        %v3257 = vpop.f32.mrf.mxu0
        %3258 = vdwg.mxu0
        %v3259 = vadd.f32 %v3169, %v3251
        %v3260 = vadd.f32 %v3170, %v3256
        %s3261 = scalar_lea.vmem %s3, 176
        %v3262 = vld [vmem:[%s3261] sm:$0xff]
        %v3263 = vld [vmem:[%s3261 + $0x8] sm:$0xff]
        %3264 = vrot.lane.b32.xlu0 %v2271, 103
        %v3265 = vpop.permute.xlu0 %3264
        %v3267 = vsel %vm2283, %v3262, 0
        %v3270 = vsel %vm2283, %v3263, 0
        %v3272 = vsel %vm2290, %v3265, 0
        %3274 = vmatprep.subr.mxu0 0.0
        %3275 = vmatpush1.msra.mxu0 0.0
        %3276 = vmatprep.subr.mxu0 0.0
        %3277 = vmatpush1.msra.mxu0 0.0
        %3278 = vmatprep.subr.mxu0 0.0
        %3279 = vmatpush1.msra.mxu0 0.0
        %3280 = vmatprep.subr.mxu0 0.0
        %3281 = vmatpush1.msra.mxu0 0.0
        %3282 = vmatprep.subr.mxu0 0.0
        %3283 = vmatpush1.msra.mxu0 0.0
        %3284 = vmatprep.subr.mxu0 0.0
        %3285 = vmatpush1.msra.mxu0 0.0
        %3286 = vmatprep.subr.mxu0 0.0
        %3287 = vmatpush1.msra.mxu0 0.0
        %3288 = vmatprep.subr.mxu0 0.0
        %3289 = vmatpush1.msra.mxu0 0.0
        %3290 = vmatprep.subr.mxu0 0.0
        %3291 = vmatpush1.msra.mxu0 0.0
        %3292 = vmatprep.subr.mxu0 0.0
        %3293 = vmatpush1.msra.mxu0 0.0
        %3294 = vmatprep.subr.mxu0 0.0
        %3295 = vmatpush1.msra.mxu0 0.0
        %3296 = vmatprep.subr.mxu0 0.0
        %3297 = vmatpush1.msra.mxu0 0.0
        %3298 = vmatprep.subr.mxu0 0.0
        %3299 = vmatpush1.msra.mxu0 0.0
        %3300 = vmatprep.subr.mxu0 0.0
        %3301 = vmatpush1.msra.mxu0 0.0
        %3302 = vmatprep.subr.mxu0 0.0
        %3303 = vmatpush1.msra.mxu0 0.0
        %3304 = vmatprep.subr.mxu0 0.0
        %3305 = vmatpush1.msra.mxu0 %v3272
        %3306 = vmatprep.subr.mxu0 0.0
        %3307 = vmatpush2.msra.mxu0 0.0
        %3308 = vmatprep.subr.mxu0 0.0
        %3309 = vmatpush2.msra.mxu0 0.0
        %3310 = vmatprep.subr.mxu0 0.0
        %3311 = vmatpush2.msra.mxu0 0.0
        %3312 = vmatprep.subr.mxu0 0.0
        %3313 = vmatpush2.msra.mxu0 0.0
        %3314 = vmatprep.subr.mxu0 0.0
        %3315 = vmatpush2.msra.mxu0 0.0
        %3316 = vmatprep.subr.mxu0 0.0
        %3317 = vmatpush2.msra.mxu0 0.0
        %3318 = vmatprep.subr.mxu0 0.0
        %3319 = vmatpush2.msra.mxu0 0.0
        %3320 = vmatprep.subr.mxu0 0.0
        %3321 = vmatpush2.msra.mxu0 0.0
        %3322 = vmatprep.subr.mxu0 0.0
        %3323 = vmatpush2.msra.mxu0 0.0
        %3324 = vmatprep.subr.mxu0 0.0
        %3325 = vmatpush2.msra.mxu0 0.0
        %3326 = vmatprep.subr.mxu0 0.0
        %3327 = vmatpush2.msra.mxu0 0.0
        %3328 = vmatprep.subr.mxu0 0.0
        %3329 = vmatpush2.msra.mxu0 0.0
        %3330 = vmatprep.subr.mxu0 0.0
        %3331 = vmatpush2.msra.mxu0 0.0
        %3332 = vmatprep.subr.mxu0 0.0
        %3333 = vmatpush2.msra.mxu0 0.0
        %3334 = vmatprep.subr.mxu0 0.0
        %3335 = vmatpush2.msra.mxu0 0.0
        %3336 = vmatprep.subr.mxu0 0.0
        %3337 = vmatpush2.msra.mxu0 0.0
        %3338 = vmatprep.mubr.f32.mxu0 0.0
        %3339 = vmatmul.mubr.f32.gmra.mxu0 %v3267
        %v3340 = vpop.f32.mrf.mxu0
        %v3341 = vadd.f32 0.0, %v3340
        %v3342 = vpop.f32.mrf.mxu0
        %3343 = vmatprep.mubr.f32.mxu0 0.0
        %3344 = vmatmul.mubr.f32.gmra.mxu0 %v3270
        %v3345 = vpop.f32.mrf.mxu0
        %v3346 = vadd.f32 0.0, %v3345
        %v3347 = vpop.f32.mrf.mxu0
        %3348 = vdwg.mxu0
        %v3349 = vadd.f32 %v3259, %v3341
        %v3350 = vadd.f32 %v3260, %v3346
        %s3351 = scalar_lea.vmem %s3, 192
        %v3352 = vld [vmem:[%s3351] sm:$0xff]
        %v3353 = vld [vmem:[%s3351 + $0x8] sm:$0xff]
        %3354 = vrot.lane.b32.xlu0 %v2271, 102
        %v3355 = vpop.permute.xlu0 %3354
        %v3357 = vsel %vm2283, %v3352, 0
        %v3360 = vsel %vm2283, %v3353, 0
        %v3362 = vsel %vm2290, %v3355, 0
        %3364 = vmatprep.subr.mxu0 0.0
        %3365 = vmatpush1.msra.mxu0 0.0
        %3366 = vmatprep.subr.mxu0 0.0
        %3367 = vmatpush1.msra.mxu0 0.0
        %3368 = vmatprep.subr.mxu0 0.0
        %3369 = vmatpush1.msra.mxu0 0.0
        %3370 = vmatprep.subr.mxu0 0.0
        %3371 = vmatpush1.msra.mxu0 0.0
        %3372 = vmatprep.subr.mxu0 0.0
        %3373 = vmatpush1.msra.mxu0 0.0
        %3374 = vmatprep.subr.mxu0 0.0
        %3375 = vmatpush1.msra.mxu0 0.0
        %3376 = vmatprep.subr.mxu0 0.0
        %3377 = vmatpush1.msra.mxu0 0.0
        %3378 = vmatprep.subr.mxu0 0.0
        %3379 = vmatpush1.msra.mxu0 0.0
        %3380 = vmatprep.subr.mxu0 0.0
        %3381 = vmatpush1.msra.mxu0 0.0
        %3382 = vmatprep.subr.mxu0 0.0
        %3383 = vmatpush1.msra.mxu0 0.0
        %3384 = vmatprep.subr.mxu0 0.0
        %3385 = vmatpush1.msra.mxu0 0.0
        %3386 = vmatprep.subr.mxu0 0.0
        %3387 = vmatpush1.msra.mxu0 0.0
        %3388 = vmatprep.subr.mxu0 0.0
        %3389 = vmatpush1.msra.mxu0 0.0
        %3390 = vmatprep.subr.mxu0 0.0
        %3391 = vmatpush1.msra.mxu0 0.0
        %3392 = vmatprep.subr.mxu0 0.0
        %3393 = vmatpush1.msra.mxu0 0.0
        %3394 = vmatprep.subr.mxu0 0.0
        %3395 = vmatpush1.msra.mxu0 %v3362
        %3396 = vmatprep.subr.mxu0 0.0
        %3397 = vmatpush2.msra.mxu0 0.0
        %3398 = vmatprep.subr.mxu0 0.0
        %3399 = vmatpush2.msra.mxu0 0.0
        %3400 = vmatprep.subr.mxu0 0.0
        %3401 = vmatpush2.msra.mxu0 0.0
        %3402 = vmatprep.subr.mxu0 0.0
        %3403 = vmatpush2.msra.mxu0 0.0
        %3404 = vmatprep.subr.mxu0 0.0
        %3405 = vmatpush2.msra.mxu0 0.0
        %3406 = vmatprep.subr.mxu0 0.0
        %3407 = vmatpush2.msra.mxu0 0.0
        %3408 = vmatprep.subr.mxu0 0.0
        %3409 = vmatpush2.msra.mxu0 0.0
        %3410 = vmatprep.subr.mxu0 0.0
        %3411 = vmatpush2.msra.mxu0 0.0
        %3412 = vmatprep.subr.mxu0 0.0
        %3413 = vmatpush2.msra.mxu0 0.0
        %3414 = vmatprep.subr.mxu0 0.0
        %3415 = vmatpush2.msra.mxu0 0.0
        %3416 = vmatprep.subr.mxu0 0.0
        %3417 = vmatpush2.msra.mxu0 0.0
        %3418 = vmatprep.subr.mxu0 0.0
        %3419 = vmatpush2.msra.mxu0 0.0
        %3420 = vmatprep.subr.mxu0 0.0
        %3421 = vmatpush2.msra.mxu0 0.0
        %3422 = vmatprep.subr.mxu0 0.0
        %3423 = vmatpush2.msra.mxu0 0.0
        %3424 = vmatprep.subr.mxu0 0.0
        %3425 = vmatpush2.msra.mxu0 0.0
        %3426 = vmatprep.subr.mxu0 0.0
        %3427 = vmatpush2.msra.mxu0 0.0
        %3428 = vmatprep.mubr.f32.mxu0 0.0
        %3429 = vmatmul.mubr.f32.gmra.mxu0 %v3357
        %v3430 = vpop.f32.mrf.mxu0
        %v3431 = vadd.f32 0.0, %v3430
        %v3432 = vpop.f32.mrf.mxu0
        %3433 = vmatprep.mubr.f32.mxu0 0.0
        %3434 = vmatmul.mubr.f32.gmra.mxu0 %v3360
        %v3435 = vpop.f32.mrf.mxu0
        %v3436 = vadd.f32 0.0, %v3435
        %v3437 = vpop.f32.mrf.mxu0
        %3438 = vdwg.mxu0
        %v3439 = vadd.f32 %v3349, %v3431
        %v3440 = vadd.f32 %v3350, %v3436
        %s3441 = scalar_lea.vmem %s3, 208
        %v3442 = vld [vmem:[%s3441] sm:$0xff]
        %v3443 = vld [vmem:[%s3441 + $0x8] sm:$0xff]
        %3444 = vrot.lane.b32.xlu0 %v2271, 101
        %v3445 = vpop.permute.xlu0 %3444
        %v3447 = vsel %vm2283, %v3442, 0
        %v3450 = vsel %vm2283, %v3443, 0
        %v3452 = vsel %vm2290, %v3445, 0
        %3454 = vmatprep.subr.mxu0 0.0
        %3455 = vmatpush1.msra.mxu0 0.0
        %3456 = vmatprep.subr.mxu0 0.0
        %3457 = vmatpush1.msra.mxu0 0.0
        %3458 = vmatprep.subr.mxu0 0.0
        %3459 = vmatpush1.msra.mxu0 0.0
        %3460 = vmatprep.subr.mxu0 0.0
        %3461 = vmatpush1.msra.mxu0 0.0
        %3462 = vmatprep.subr.mxu0 0.0
        %3463 = vmatpush1.msra.mxu0 0.0
        %3464 = vmatprep.subr.mxu0 0.0
        %3465 = vmatpush1.msra.mxu0 0.0
        %3466 = vmatprep.subr.mxu0 0.0
        %3467 = vmatpush1.msra.mxu0 0.0
        %3468 = vmatprep.subr.mxu0 0.0
        %3469 = vmatpush1.msra.mxu0 0.0
        %3470 = vmatprep.subr.mxu0 0.0
        %3471 = vmatpush1.msra.mxu0 0.0
        %3472 = vmatprep.subr.mxu0 0.0
        %3473 = vmatpush1.msra.mxu0 0.0
        %3474 = vmatprep.subr.mxu0 0.0
        %3475 = vmatpush1.msra.mxu0 0.0
        %3476 = vmatprep.subr.mxu0 0.0
        %3477 = vmatpush1.msra.mxu0 0.0
        %3478 = vmatprep.subr.mxu0 0.0
        %3479 = vmatpush1.msra.mxu0 0.0
        %3480 = vmatprep.subr.mxu0 0.0
        %3481 = vmatpush1.msra.mxu0 0.0
        %3482 = vmatprep.subr.mxu0 0.0
        %3483 = vmatpush1.msra.mxu0 0.0
        %3484 = vmatprep.subr.mxu0 0.0
        %3485 = vmatpush1.msra.mxu0 %v3452
        %3486 = vmatprep.subr.mxu0 0.0
        %3487 = vmatpush2.msra.mxu0 0.0
        %3488 = vmatprep.subr.mxu0 0.0
        %3489 = vmatpush2.msra.mxu0 0.0
        %3490 = vmatprep.subr.mxu0 0.0
        %3491 = vmatpush2.msra.mxu0 0.0
        %3492 = vmatprep.subr.mxu0 0.0
        %3493 = vmatpush2.msra.mxu0 0.0
        %3494 = vmatprep.subr.mxu0 0.0
        %3495 = vmatpush2.msra.mxu0 0.0
        %3496 = vmatprep.subr.mxu0 0.0
        %3497 = vmatpush2.msra.mxu0 0.0
        %3498 = vmatprep.subr.mxu0 0.0
        %3499 = vmatpush2.msra.mxu0 0.0
        %3500 = vmatprep.subr.mxu0 0.0
        %3501 = vmatpush2.msra.mxu0 0.0
        %3502 = vmatprep.subr.mxu0 0.0
        %3503 = vmatpush2.msra.mxu0 0.0
        %3504 = vmatprep.subr.mxu0 0.0
        %3505 = vmatpush2.msra.mxu0 0.0
        %3506 = vmatprep.subr.mxu0 0.0
        %3507 = vmatpush2.msra.mxu0 0.0
        %3508 = vmatprep.subr.mxu0 0.0
        %3509 = vmatpush2.msra.mxu0 0.0
        %3510 = vmatprep.subr.mxu0 0.0
        %3511 = vmatpush2.msra.mxu0 0.0
        %3512 = vmatprep.subr.mxu0 0.0
        %3513 = vmatpush2.msra.mxu0 0.0
        %3514 = vmatprep.subr.mxu0 0.0
        %3515 = vmatpush2.msra.mxu0 0.0
        %3516 = vmatprep.subr.mxu0 0.0
        %3517 = vmatpush2.msra.mxu0 0.0
        %3518 = vmatprep.mubr.f32.mxu0 0.0
        %3519 = vmatmul.mubr.f32.gmra.mxu0 %v3447
        %v3520 = vpop.f32.mrf.mxu0
        %v3521 = vadd.f32 0.0, %v3520
        %v3522 = vpop.f32.mrf.mxu0
        %3523 = vmatprep.mubr.f32.mxu0 0.0
        %3524 = vmatmul.mubr.f32.gmra.mxu0 %v3450
        %v3525 = vpop.f32.mrf.mxu0
        %v3526 = vadd.f32 0.0, %v3525
        %v3527 = vpop.f32.mrf.mxu0
        %3528 = vdwg.mxu0
        %v3529 = vadd.f32 %v3439, %v3521
        %v3530 = vadd.f32 %v3440, %v3526
        %s3531 = scalar_lea.vmem %s3, 224
        %v3532 = vld [vmem:[%s3531] sm:$0xff]
        %v3533 = vld [vmem:[%s3531 + $0x8] sm:$0xff]
        %3534 = vrot.lane.b32.xlu0 %v2271, 100
        %v3535 = vpop.permute.xlu0 %3534
        %v3537 = vsel %vm2283, %v3532, 0
        %v3540 = vsel %vm2283, %v3533, 0
        %v3542 = vsel %vm2290, %v3535, 0
        %3544 = vmatprep.subr.mxu0 0.0
        %3545 = vmatpush1.msra.mxu0 0.0
        %3546 = vmatprep.subr.mxu0 0.0
        %3547 = vmatpush1.msra.mxu0 0.0
        %3548 = vmatprep.subr.mxu0 0.0
        %3549 = vmatpush1.msra.mxu0 0.0
        %3550 = vmatprep.subr.mxu0 0.0
        %3551 = vmatpush1.msra.mxu0 0.0
        %3552 = vmatprep.subr.mxu0 0.0
        %3553 = vmatpush1.msra.mxu0 0.0
        %3554 = vmatprep.subr.mxu0 0.0
        %3555 = vmatpush1.msra.mxu0 0.0
        %3556 = vmatprep.subr.mxu0 0.0
        %3557 = vmatpush1.msra.mxu0 0.0
        %3558 = vmatprep.subr.mxu0 0.0
        %3559 = vmatpush1.msra.mxu0 0.0
        %3560 = vmatprep.subr.mxu0 0.0
        %3561 = vmatpush1.msra.mxu0 0.0
        %3562 = vmatprep.subr.mxu0 0.0
        %3563 = vmatpush1.msra.mxu0 0.0
        %3564 = vmatprep.subr.mxu0 0.0
        %3565 = vmatpush1.msra.mxu0 0.0
        %3566 = vmatprep.subr.mxu0 0.0
        %3567 = vmatpush1.msra.mxu0 0.0
        %3568 = vmatprep.subr.mxu0 0.0
        %3569 = vmatpush1.msra.mxu0 0.0
        %3570 = vmatprep.subr.mxu0 0.0
        %3571 = vmatpush1.msra.mxu0 0.0
        %3572 = vmatprep.subr.mxu0 0.0
        %3573 = vmatpush1.msra.mxu0 0.0
        %3574 = vmatprep.subr.mxu0 0.0
        %3575 = vmatpush1.msra.mxu0 %v3542
        %3576 = vmatprep.subr.mxu0 0.0
        %3577 = vmatpush2.msra.mxu0 0.0
        %3578 = vmatprep.subr.mxu0 0.0
        %3579 = vmatpush2.msra.mxu0 0.0
        %3580 = vmatprep.subr.mxu0 0.0
        %3581 = vmatpush2.msra.mxu0 0.0
        %3582 = vmatprep.subr.mxu0 0.0
        %3583 = vmatpush2.msra.mxu0 0.0
        %3584 = vmatprep.subr.mxu0 0.0
        %3585 = vmatpush2.msra.mxu0 0.0
        %3586 = vmatprep.subr.mxu0 0.0
        %3587 = vmatpush2.msra.mxu0 0.0
        %3588 = vmatprep.subr.mxu0 0.0
        %3589 = vmatpush2.msra.mxu0 0.0
        %3590 = vmatprep.subr.mxu0 0.0
        %3591 = vmatpush2.msra.mxu0 0.0
        %3592 = vmatprep.subr.mxu0 0.0
        %3593 = vmatpush2.msra.mxu0 0.0
        %3594 = vmatprep.subr.mxu0 0.0
        %3595 = vmatpush2.msra.mxu0 0.0
        %3596 = vmatprep.subr.mxu0 0.0
        %3597 = vmatpush2.msra.mxu0 0.0
        %3598 = vmatprep.subr.mxu0 0.0
        %3599 = vmatpush2.msra.mxu0 0.0
        %3600 = vmatprep.subr.mxu0 0.0
        %3601 = vmatpush2.msra.mxu0 0.0
        %3602 = vmatprep.subr.mxu0 0.0
        %3603 = vmatpush2.msra.mxu0 0.0
        %3604 = vmatprep.subr.mxu0 0.0
        %3605 = vmatpush2.msra.mxu0 0.0
        %3606 = vmatprep.subr.mxu0 0.0
        %3607 = vmatpush2.msra.mxu0 0.0
        %3608 = vmatprep.mubr.f32.mxu0 0.0
        %3609 = vmatmul.mubr.f32.gmra.mxu0 %v3537
        %v3610 = vpop.f32.mrf.mxu0
        %v3611 = vadd.f32 0.0, %v3610
        %v3612 = vpop.f32.mrf.mxu0
        %3613 = vmatprep.mubr.f32.mxu0 0.0
        %3614 = vmatmul.mubr.f32.gmra.mxu0 %v3540
        %v3615 = vpop.f32.mrf.mxu0
        %v3616 = vadd.f32 0.0, %v3615
        %v3617 = vpop.f32.mrf.mxu0
        %3618 = vdwg.mxu0
        %v3619 = vadd.f32 %v3529, %v3611
        %v3620 = vadd.f32 %v3530, %v3616
        %s3621 = scalar_lea.vmem %s3, 240
        %v3622 = vld [vmem:[%s3621] sm:$0xff]
        %v3623 = vld [vmem:[%s3621 + $0x8] sm:$0xff]
        %3624 = vrot.lane.b32.xlu0 %v2271, 92
        %v3625 = vpop.permute.xlu0 %3624
        %v3627 = vsel %vm2283, %v3622, 0
        %v3630 = vsel %vm2283, %v3623, 0
        %v3632 = vsel %vm2290, %v3625, 0
        %3634 = vmatprep.subr.mxu0 0.0
        %3635 = vmatpush1.msra.mxu0 0.0
        %3636 = vmatprep.subr.mxu0 0.0
        %3637 = vmatpush1.msra.mxu0 0.0
        %3638 = vmatprep.subr.mxu0 0.0
        %3639 = vmatpush1.msra.mxu0 0.0
        %3640 = vmatprep.subr.mxu0 0.0
        %3641 = vmatpush1.msra.mxu0 0.0
        %3642 = vmatprep.subr.mxu0 0.0
        %3643 = vmatpush1.msra.mxu0 0.0
        %3644 = vmatprep.subr.mxu0 0.0
        %3645 = vmatpush1.msra.mxu0 0.0
        %3646 = vmatprep.subr.mxu0 0.0
        %3647 = vmatpush1.msra.mxu0 0.0
        %3648 = vmatprep.subr.mxu0 0.0
        %3649 = vmatpush1.msra.mxu0 0.0
        %3650 = vmatprep.subr.mxu0 0.0
        %3651 = vmatpush1.msra.mxu0 0.0
        %3652 = vmatprep.subr.mxu0 0.0
        %3653 = vmatpush1.msra.mxu0 0.0
        %3654 = vmatprep.subr.mxu0 0.0
        %3655 = vmatpush1.msra.mxu0 0.0
        %3656 = vmatprep.subr.mxu0 0.0
        %3657 = vmatpush1.msra.mxu0 0.0
        %3658 = vmatprep.subr.mxu0 0.0
        %3659 = vmatpush1.msra.mxu0 0.0
        %3660 = vmatprep.subr.mxu0 0.0
        %3661 = vmatpush1.msra.mxu0 0.0
        %3662 = vmatprep.subr.mxu0 0.0
        %3663 = vmatpush1.msra.mxu0 0.0
        %3664 = vmatprep.subr.mxu0 0.0
        %3665 = vmatpush1.msra.mxu0 %v3632
        %3666 = vmatprep.subr.mxu0 0.0
        %3667 = vmatpush2.msra.mxu0 0.0
        %3668 = vmatprep.subr.mxu0 0.0
        %3669 = vmatpush2.msra.mxu0 0.0
        %3670 = vmatprep.subr.mxu0 0.0
        %3671 = vmatpush2.msra.mxu0 0.0
        %3672 = vmatprep.subr.mxu0 0.0
        %3673 = vmatpush2.msra.mxu0 0.0
        %3674 = vmatprep.subr.mxu0 0.0
        %3675 = vmatpush2.msra.mxu0 0.0
        %3676 = vmatprep.subr.mxu0 0.0
        %3677 = vmatpush2.msra.mxu0 0.0
        %3678 = vmatprep.subr.mxu0 0.0
        %3679 = vmatpush2.msra.mxu0 0.0
        %3680 = vmatprep.subr.mxu0 0.0
        %3681 = vmatpush2.msra.mxu0 0.0
        %3682 = vmatprep.subr.mxu0 0.0
        %3683 = vmatpush2.msra.mxu0 0.0
        %3684 = vmatprep.subr.mxu0 0.0
        %3685 = vmatpush2.msra.mxu0 0.0
        %3686 = vmatprep.subr.mxu0 0.0
        %3687 = vmatpush2.msra.mxu0 0.0
        %3688 = vmatprep.subr.mxu0 0.0
        %3689 = vmatpush2.msra.mxu0 0.0
        %3690 = vmatprep.subr.mxu0 0.0
        %3691 = vmatpush2.msra.mxu0 0.0
        %3692 = vmatprep.subr.mxu0 0.0
        %3693 = vmatpush2.msra.mxu0 0.0
        %3694 = vmatprep.subr.mxu0 0.0
        %3695 = vmatpush2.msra.mxu0 0.0
        %3696 = vmatprep.subr.mxu0 0.0
        %3697 = vmatpush2.msra.mxu0 0.0
        %3698 = vmatprep.mubr.f32.mxu0 0.0
        %3699 = vmatmul.mubr.f32.gmra.mxu0 %v3627
        %v3700 = vpop.f32.mrf.mxu0
        %v3701 = vadd.f32 0.0, %v3700
        %v3702 = vpop.f32.mrf.mxu0
        %3703 = vmatprep.mubr.f32.mxu0 0.0
        %3704 = vmatmul.mubr.f32.gmra.mxu0 %v3630
        %v3705 = vpop.f32.mrf.mxu0
        %v3706 = vadd.f32 0.0, %v3705
        %v3707 = vpop.f32.mrf.mxu0
        %3708 = vdwg.mxu0
        %v3709 = vadd.f32 %v3619, %v3701
        %v3710 = vadd.f32 %v3620, %v3706
        %s3711 = scalar_lea.vmem %s3, 256
        %v3712 = vld [vmem:[%s3711] sm:$0xff]
        %v3713 = vld [vmem:[%s3711 + $0x8] sm:$0xff]
        %3715 = vrot.lane.b32.xlu0 %v2271, 91
        %v3716 = vpop.permute.xlu0 %3715
        %3717 = vrot.lane.b32.xlu0 %v2273, 91
        %v3718 = vpop.permute.xlu0 %3717
        %vm3719 = vcmask 744448
        %v3720 = vsel %vm3719, %v3716, %v3718
        %v3722 = vsel %vm2283, %v3712, 0
        %v3725 = vsel %vm2283, %v3713, 0
        %v3727 = vsel %vm2290, %v3720, 0
        %3729 = vmatprep.subr.mxu0 0.0
        %3730 = vmatpush1.msra.mxu0 0.0
        %3731 = vmatprep.subr.mxu0 0.0
        %3732 = vmatpush1.msra.mxu0 0.0
        %3733 = vmatprep.subr.mxu0 0.0
        %3734 = vmatpush1.msra.mxu0 0.0
        %3735 = vmatprep.subr.mxu0 0.0
        %3736 = vmatpush1.msra.mxu0 0.0
        %3737 = vmatprep.subr.mxu0 0.0
        %3738 = vmatpush1.msra.mxu0 0.0
        %3739 = vmatprep.subr.mxu0 0.0
        %3740 = vmatpush1.msra.mxu0 0.0
        %3741 = vmatprep.subr.mxu0 0.0
        %3742 = vmatpush1.msra.mxu0 0.0
        %3743 = vmatprep.subr.mxu0 0.0
        %3744 = vmatpush1.msra.mxu0 0.0
        %3745 = vmatprep.subr.mxu0 0.0
        %3746 = vmatpush1.msra.mxu0 0.0
        %3747 = vmatprep.subr.mxu0 0.0
        %3748 = vmatpush1.msra.mxu0 0.0
        %3749 = vmatprep.subr.mxu0 0.0
        %3750 = vmatpush1.msra.mxu0 0.0
        %3751 = vmatprep.subr.mxu0 0.0
        %3752 = vmatpush1.msra.mxu0 0.0
        %3753 = vmatprep.subr.mxu0 0.0
        %3754 = vmatpush1.msra.mxu0 0.0
        %3755 = vmatprep.subr.mxu0 0.0
        %3756 = vmatpush1.msra.mxu0 0.0
        %3757 = vmatprep.subr.mxu0 0.0
        %3758 = vmatpush1.msra.mxu0 0.0
        %3759 = vmatprep.subr.mxu0 0.0
        %3760 = vmatpush1.msra.mxu0 %v3727
        %3761 = vmatprep.subr.mxu0 0.0
        %3762 = vmatpush2.msra.mxu0 0.0
        %3763 = vmatprep.subr.mxu0 0.0
        %3764 = vmatpush2.msra.mxu0 0.0
        %3765 = vmatprep.subr.mxu0 0.0
        %3766 = vmatpush2.msra.mxu0 0.0
        %3767 = vmatprep.subr.mxu0 0.0
        %3768 = vmatpush2.msra.mxu0 0.0
        %3769 = vmatprep.subr.mxu0 0.0
        %3770 = vmatpush2.msra.mxu0 0.0
        %3771 = vmatprep.subr.mxu0 0.0
        %3772 = vmatpush2.msra.mxu0 0.0
        %3773 = vmatprep.subr.mxu0 0.0
        %3774 = vmatpush2.msra.mxu0 0.0
        %3775 = vmatprep.subr.mxu0 0.0
        %3776 = vmatpush2.msra.mxu0 0.0
        %3777 = vmatprep.subr.mxu0 0.0
        %3778 = vmatpush2.msra.mxu0 0.0
        %3779 = vmatprep.subr.mxu0 0.0
        %3780 = vmatpush2.msra.mxu0 0.0
        %3781 = vmatprep.subr.mxu0 0.0
        %3782 = vmatpush2.msra.mxu0 0.0
        %3783 = vmatprep.subr.mxu0 0.0
        %3784 = vmatpush2.msra.mxu0 0.0
        %3785 = vmatprep.subr.mxu0 0.0
        %3786 = vmatpush2.msra.mxu0 0.0
        %3787 = vmatprep.subr.mxu0 0.0
        %3788 = vmatpush2.msra.mxu0 0.0
        %3789 = vmatprep.subr.mxu0 0.0
        %3790 = vmatpush2.msra.mxu0 0.0
        %3791 = vmatprep.subr.mxu0 0.0
        %3792 = vmatpush2.msra.mxu0 0.0
        %3793 = vmatprep.mubr.f32.mxu0 0.0
        %3794 = vmatmul.mubr.f32.gmra.mxu0 %v3722
        %v3795 = vpop.f32.mrf.mxu0
        %v3796 = vadd.f32 0.0, %v3795
        %v3797 = vpop.f32.mrf.mxu0
        %3798 = vmatprep.mubr.f32.mxu0 0.0
        %3799 = vmatmul.mubr.f32.gmra.mxu0 %v3725
        %v3800 = vpop.f32.mrf.mxu0
        %v3801 = vadd.f32 0.0, %v3800
        %v3802 = vpop.f32.mrf.mxu0
        %3803 = vdwg.mxu0
        %v3804 = vadd.f32 %v3709, %v3796
        %v3805 = vadd.f32 %v3710, %v3801
        %s3806 = scalar_lea.vmem %s3, 272
        %v3807 = vld [vmem:[%s3806] sm:$0xff]
        %v3808 = vld [vmem:[%s3806 + $0x8] sm:$0xff]
        %3809 = vrot.lane.b32.xlu0 %v2271, 90
        %v3810 = vpop.permute.xlu0 %3809
        %3811 = vrot.lane.b32.xlu0 %v2273, 90
        %v3812 = vpop.permute.xlu0 %3811
        %vm3813 = vcmask 736256
        %v3814 = vsel %vm3813, %v3810, %v3812
        %v3816 = vsel %vm2283, %v3807, 0
        %v3819 = vsel %vm2283, %v3808, 0
        %v3821 = vsel %vm2290, %v3814, 0
        %3823 = vmatprep.subr.mxu0 0.0
        %3824 = vmatpush1.msra.mxu0 0.0
        %3825 = vmatprep.subr.mxu0 0.0
        %3826 = vmatpush1.msra.mxu0 0.0
        %3827 = vmatprep.subr.mxu0 0.0
        %3828 = vmatpush1.msra.mxu0 0.0
        %3829 = vmatprep.subr.mxu0 0.0
        %3830 = vmatpush1.msra.mxu0 0.0
        %3831 = vmatprep.subr.mxu0 0.0
        %3832 = vmatpush1.msra.mxu0 0.0
        %3833 = vmatprep.subr.mxu0 0.0
        %3834 = vmatpush1.msra.mxu0 0.0
        %3835 = vmatprep.subr.mxu0 0.0
        %3836 = vmatpush1.msra.mxu0 0.0
        %3837 = vmatprep.subr.mxu0 0.0
        %3838 = vmatpush1.msra.mxu0 0.0
        %3839 = vmatprep.subr.mxu0 0.0
        %3840 = vmatpush1.msra.mxu0 0.0
        %3841 = vmatprep.subr.mxu0 0.0
        %3842 = vmatpush1.msra.mxu0 0.0
        %3843 = vmatprep.subr.mxu0 0.0
        %3844 = vmatpush1.msra.mxu0 0.0
        %3845 = vmatprep.subr.mxu0 0.0
        %3846 = vmatpush1.msra.mxu0 0.0
        %3847 = vmatprep.subr.mxu0 0.0
        %3848 = vmatpush1.msra.mxu0 0.0
        %3849 = vmatprep.subr.mxu0 0.0
        %3850 = vmatpush1.msra.mxu0 0.0
        %3851 = vmatprep.subr.mxu0 0.0
        %3852 = vmatpush1.msra.mxu0 0.0
        %3853 = vmatprep.subr.mxu0 0.0
        %3854 = vmatpush1.msra.mxu0 %v3821
        %3855 = vmatprep.subr.mxu0 0.0
        %3856 = vmatpush2.msra.mxu0 0.0
        %3857 = vmatprep.subr.mxu0 0.0
        %3858 = vmatpush2.msra.mxu0 0.0
        %3859 = vmatprep.subr.mxu0 0.0
        %3860 = vmatpush2.msra.mxu0 0.0
        %3861 = vmatprep.subr.mxu0 0.0
        %3862 = vmatpush2.msra.mxu0 0.0
        %3863 = vmatprep.subr.mxu0 0.0
        %3864 = vmatpush2.msra.mxu0 0.0
        %3865 = vmatprep.subr.mxu0 0.0
        %3866 = vmatpush2.msra.mxu0 0.0
        %3867 = vmatprep.subr.mxu0 0.0
        %3868 = vmatpush2.msra.mxu0 0.0
        %3869 = vmatprep.subr.mxu0 0.0
        %3870 = vmatpush2.msra.mxu0 0.0
        %3871 = vmatprep.subr.mxu0 0.0
        %3872 = vmatpush2.msra.mxu0 0.0
        %3873 = vmatprep.subr.mxu0 0.0
        %3874 = vmatpush2.msra.mxu0 0.0
        %3875 = vmatprep.subr.mxu0 0.0
        %3876 = vmatpush2.msra.mxu0 0.0
        %3877 = vmatprep.subr.mxu0 0.0
        %3878 = vmatpush2.msra.mxu0 0.0
        %3879 = vmatprep.subr.mxu0 0.0
        %3880 = vmatpush2.msra.mxu0 0.0
        %3881 = vmatprep.subr.mxu0 0.0
        %3882 = vmatpush2.msra.mxu0 0.0
        %3883 = vmatprep.subr.mxu0 0.0
        %3884 = vmatpush2.msra.mxu0 0.0
        %3885 = vmatprep.subr.mxu0 0.0
        %3886 = vmatpush2.msra.mxu0 0.0
        %3887 = vmatprep.mubr.f32.mxu0 0.0
        %3888 = vmatmul.mubr.f32.gmra.mxu0 %v3816
        %v3889 = vpop.f32.mrf.mxu0
        %v3890 = vadd.f32 0.0, %v3889
        %v3891 = vpop.f32.mrf.mxu0
        %3892 = vmatprep.mubr.f32.mxu0 0.0
        %3893 = vmatmul.mubr.f32.gmra.mxu0 %v3819
        %v3894 = vpop.f32.mrf.mxu0
        %v3895 = vadd.f32 0.0, %v3894
        %v3896 = vpop.f32.mrf.mxu0
        %3897 = vdwg.mxu0
        %v3898 = vadd.f32 %v3804, %v3890
        %v3899 = vadd.f32 %v3805, %v3895
        %s3900 = scalar_lea.vmem %s3, 288
        %v3901 = vld [vmem:[%s3900] sm:$0xff]
        %v3902 = vld [vmem:[%s3900 + $0x8] sm:$0xff]
        %3903 = vrot.lane.b32.xlu0 %v2271, 89
        %v3904 = vpop.permute.xlu0 %3903
        %3905 = vrot.lane.b32.xlu0 %v2273, 89
        %v3906 = vpop.permute.xlu0 %3905
        %vm3907 = vcmask 728064
        %v3908 = vsel %vm3907, %v3904, %v3906
        %v3910 = vsel %vm2283, %v3901, 0
        %v3913 = vsel %vm2283, %v3902, 0
        %v3915 = vsel %vm2290, %v3908, 0
        %3917 = vmatprep.subr.mxu0 0.0
        %3918 = vmatpush1.msra.mxu0 0.0
        %3919 = vmatprep.subr.mxu0 0.0
        %3920 = vmatpush1.msra.mxu0 0.0
        %3921 = vmatprep.subr.mxu0 0.0
        %3922 = vmatpush1.msra.mxu0 0.0
        %3923 = vmatprep.subr.mxu0 0.0
        %3924 = vmatpush1.msra.mxu0 0.0
        %3925 = vmatprep.subr.mxu0 0.0
        %3926 = vmatpush1.msra.mxu0 0.0
        %3927 = vmatprep.subr.mxu0 0.0
        %3928 = vmatpush1.msra.mxu0 0.0
        %3929 = vmatprep.subr.mxu0 0.0
        %3930 = vmatpush1.msra.mxu0 0.0
        %3931 = vmatprep.subr.mxu0 0.0
        %3932 = vmatpush1.msra.mxu0 0.0
        %3933 = vmatprep.subr.mxu0 0.0
        %3934 = vmatpush1.msra.mxu0 0.0
        %3935 = vmatprep.subr.mxu0 0.0
        %3936 = vmatpush1.msra.mxu0 0.0
        %3937 = vmatprep.subr.mxu0 0.0
        %3938 = vmatpush1.msra.mxu0 0.0
        %3939 = vmatprep.subr.mxu0 0.0
        %3940 = vmatpush1.msra.mxu0 0.0
        %3941 = vmatprep.subr.mxu0 0.0
        %3942 = vmatpush1.msra.mxu0 0.0
        %3943 = vmatprep.subr.mxu0 0.0
        %3944 = vmatpush1.msra.mxu0 0.0
        %3945 = vmatprep.subr.mxu0 0.0
        %3946 = vmatpush1.msra.mxu0 0.0
        %3947 = vmatprep.subr.mxu0 0.0
        %3948 = vmatpush1.msra.mxu0 %v3915
        %3949 = vmatprep.subr.mxu0 0.0
        %3950 = vmatpush2.msra.mxu0 0.0
        %3951 = vmatprep.subr.mxu0 0.0
        %3952 = vmatpush2.msra.mxu0 0.0
        %3953 = vmatprep.subr.mxu0 0.0
        %3954 = vmatpush2.msra.mxu0 0.0
        %3955 = vmatprep.subr.mxu0 0.0
        %3956 = vmatpush2.msra.mxu0 0.0
        %3957 = vmatprep.subr.mxu0 0.0
        %3958 = vmatpush2.msra.mxu0 0.0
        %3959 = vmatprep.subr.mxu0 0.0
        %3960 = vmatpush2.msra.mxu0 0.0
        %3961 = vmatprep.subr.mxu0 0.0
        %3962 = vmatpush2.msra.mxu0 0.0
        %3963 = vmatprep.subr.mxu0 0.0
        %3964 = vmatpush2.msra.mxu0 0.0
        %3965 = vmatprep.subr.mxu0 0.0
        %3966 = vmatpush2.msra.mxu0 0.0
        %3967 = vmatprep.subr.mxu0 0.0
        %3968 = vmatpush2.msra.mxu0 0.0
        %3969 = vmatprep.subr.mxu0 0.0
        %3970 = vmatpush2.msra.mxu0 0.0
        %3971 = vmatprep.subr.mxu0 0.0
        %3972 = vmatpush2.msra.mxu0 0.0
        %3973 = vmatprep.subr.mxu0 0.0
        %3974 = vmatpush2.msra.mxu0 0.0
        %3975 = vmatprep.subr.mxu0 0.0
        %3976 = vmatpush2.msra.mxu0 0.0
        %3977 = vmatprep.subr.mxu0 0.0
        %3978 = vmatpush2.msra.mxu0 0.0
        %3979 = vmatprep.subr.mxu0 0.0
        %3980 = vmatpush2.msra.mxu0 0.0
        %3981 = vmatprep.mubr.f32.mxu0 0.0
        %3982 = vmatmul.mubr.f32.gmra.mxu0 %v3910
        %v3983 = vpop.f32.mrf.mxu0
        %v3984 = vadd.f32 0.0, %v3983
        %v3985 = vpop.f32.mrf.mxu0
        %3986 = vmatprep.mubr.f32.mxu0 0.0
        %3987 = vmatmul.mubr.f32.gmra.mxu0 %v3913
        %v3988 = vpop.f32.mrf.mxu0
        %v3989 = vadd.f32 0.0, %v3988
        %v3990 = vpop.f32.mrf.mxu0
        %3991 = vdwg.mxu0
        %v3992 = vadd.f32 %v3898, %v3984
        %v3993 = vadd.f32 %v3899, %v3989
        %s3994 = scalar_lea.vmem %s3, 304
        %v3995 = vld [vmem:[%s3994] sm:$0xff]
        %v3996 = vld [vmem:[%s3994 + $0x8] sm:$0xff]
        %3997 = vrot.lane.b32.xlu0 %v2271, 88
        %v3998 = vpop.permute.xlu0 %3997
        %3999 = vrot.lane.b32.xlu0 %v2273, 88
        %v4000 = vpop.permute.xlu0 %3999
        %vm4001 = vcmask 719872
        %v4002 = vsel %vm4001, %v3998, %v4000
        %v4004 = vsel %vm2283, %v3995, 0
        %v4007 = vsel %vm2283, %v3996, 0
        %v4009 = vsel %vm2290, %v4002, 0
        %4011 = vmatprep.subr.mxu0 0.0
        %4012 = vmatpush1.msra.mxu0 0.0
        %4013 = vmatprep.subr.mxu0 0.0
        %4014 = vmatpush1.msra.mxu0 0.0
        %4015 = vmatprep.subr.mxu0 0.0
        %4016 = vmatpush1.msra.mxu0 0.0
        %4017 = vmatprep.subr.mxu0 0.0
        %4018 = vmatpush1.msra.mxu0 0.0
        %4019 = vmatprep.subr.mxu0 0.0
        %4020 = vmatpush1.msra.mxu0 0.0
        %4021 = vmatprep.subr.mxu0 0.0
        %4022 = vmatpush1.msra.mxu0 0.0
        %4023 = vmatprep.subr.mxu0 0.0
        %4024 = vmatpush1.msra.mxu0 0.0
        %4025 = vmatprep.subr.mxu0 0.0
        %4026 = vmatpush1.msra.mxu0 0.0
        %4027 = vmatprep.subr.mxu0 0.0
        %4028 = vmatpush1.msra.mxu0 0.0
        %4029 = vmatprep.subr.mxu0 0.0
        %4030 = vmatpush1.msra.mxu0 0.0
        %4031 = vmatprep.subr.mxu0 0.0
        %4032 = vmatpush1.msra.mxu0 0.0
        %4033 = vmatprep.subr.mxu0 0.0
        %4034 = vmatpush1.msra.mxu0 0.0
        %4035 = vmatprep.subr.mxu0 0.0
        %4036 = vmatpush1.msra.mxu0 0.0
        %4037 = vmatprep.subr.mxu0 0.0
        %4038 = vmatpush1.msra.mxu0 0.0
        %4039 = vmatprep.subr.mxu0 0.0
        %4040 = vmatpush1.msra.mxu0 0.0
        %4041 = vmatprep.subr.mxu0 0.0
        %4042 = vmatpush1.msra.mxu0 %v4009
        %4043 = vmatprep.subr.mxu0 0.0
        %4044 = vmatpush2.msra.mxu0 0.0
        %4045 = vmatprep.subr.mxu0 0.0
        %4046 = vmatpush2.msra.mxu0 0.0
        %4047 = vmatprep.subr.mxu0 0.0
        %4048 = vmatpush2.msra.mxu0 0.0
        %4049 = vmatprep.subr.mxu0 0.0
        %4050 = vmatpush2.msra.mxu0 0.0
        %4051 = vmatprep.subr.mxu0 0.0
        %4052 = vmatpush2.msra.mxu0 0.0
        %4053 = vmatprep.subr.mxu0 0.0
        %4054 = vmatpush2.msra.mxu0 0.0
        %4055 = vmatprep.subr.mxu0 0.0
        %4056 = vmatpush2.msra.mxu0 0.0
        %4057 = vmatprep.subr.mxu0 0.0
        %4058 = vmatpush2.msra.mxu0 0.0
        %4059 = vmatprep.subr.mxu0 0.0
        %4060 = vmatpush2.msra.mxu0 0.0
        %4061 = vmatprep.subr.mxu0 0.0
        %4062 = vmatpush2.msra.mxu0 0.0
        %4063 = vmatprep.subr.mxu0 0.0
        %4064 = vmatpush2.msra.mxu0 0.0
        %4065 = vmatprep.subr.mxu0 0.0
        %4066 = vmatpush2.msra.mxu0 0.0
        %4067 = vmatprep.subr.mxu0 0.0
        %4068 = vmatpush2.msra.mxu0 0.0
        %4069 = vmatprep.subr.mxu0 0.0
        %4070 = vmatpush2.msra.mxu0 0.0
        %4071 = vmatprep.subr.mxu0 0.0
        %4072 = vmatpush2.msra.mxu0 0.0
        %4073 = vmatprep.subr.mxu0 0.0
        %4074 = vmatpush2.msra.mxu0 0.0
        %4075 = vmatprep.mubr.f32.mxu0 0.0
        %4076 = vmatmul.mubr.f32.gmra.mxu0 %v4004
        %v4077 = vpop.f32.mrf.mxu0
        %v4078 = vadd.f32 0.0, %v4077
        %v4079 = vpop.f32.mrf.mxu0
        %4080 = vmatprep.mubr.f32.mxu0 0.0
        %4081 = vmatmul.mubr.f32.gmra.mxu0 %v4007
        %v4082 = vpop.f32.mrf.mxu0
        %v4083 = vadd.f32 0.0, %v4082
        %v4084 = vpop.f32.mrf.mxu0
        %4085 = vdwg.mxu0
        %v4086 = vadd.f32 %v3992, %v4078
        %v4087 = vadd.f32 %v3993, %v4083
        %s4088 = scalar_lea.vmem %s3, 320
        %v4089 = vld [vmem:[%s4088] sm:$0xff]
        %v4090 = vld [vmem:[%s4088 + $0x8] sm:$0xff]
        %4091 = vrot.lane.b32.xlu0 %v2271, 80
        %v4092 = vpop.permute.xlu0 %4091
        %4093 = vrot.lane.b32.xlu0 %v2273, 80
        %v4094 = vpop.permute.xlu0 %4093
        %vm4095 = vcmask 654336
        %v4096 = vsel %vm4095, %v4092, %v4094
        %v4098 = vsel %vm2283, %v4089, 0
        %v4101 = vsel %vm2283, %v4090, 0
        %v4103 = vsel %vm2290, %v4096, 0
        %4105 = vmatprep.subr.mxu0 0.0
        %4106 = vmatpush1.msra.mxu0 0.0
        %4107 = vmatprep.subr.mxu0 0.0
        %4108 = vmatpush1.msra.mxu0 0.0
        %4109 = vmatprep.subr.mxu0 0.0
        %4110 = vmatpush1.msra.mxu0 0.0
        %4111 = vmatprep.subr.mxu0 0.0
        %4112 = vmatpush1.msra.mxu0 0.0
        %4113 = vmatprep.subr.mxu0 0.0
        %4114 = vmatpush1.msra.mxu0 0.0
        %4115 = vmatprep.subr.mxu0 0.0
        %4116 = vmatpush1.msra.mxu0 0.0
        %4117 = vmatprep.subr.mxu0 0.0
        %4118 = vmatpush1.msra.mxu0 0.0
        %4119 = vmatprep.subr.mxu0 0.0
        %4120 = vmatpush1.msra.mxu0 0.0
        %4121 = vmatprep.subr.mxu0 0.0
        %4122 = vmatpush1.msra.mxu0 0.0
        %4123 = vmatprep.subr.mxu0 0.0
        %4124 = vmatpush1.msra.mxu0 0.0
        %4125 = vmatprep.subr.mxu0 0.0
        %4126 = vmatpush1.msra.mxu0 0.0
        %4127 = vmatprep.subr.mxu0 0.0
        %4128 = vmatpush1.msra.mxu0 0.0
        %4129 = vmatprep.subr.mxu0 0.0
        %4130 = vmatpush1.msra.mxu0 0.0
        %4131 = vmatprep.subr.mxu0 0.0
        %4132 = vmatpush1.msra.mxu0 0.0
        %4133 = vmatprep.subr.mxu0 0.0
        %4134 = vmatpush1.msra.mxu0 0.0
        %4135 = vmatprep.subr.mxu0 0.0
        %4136 = vmatpush1.msra.mxu0 %v4103
        %4137 = vmatprep.subr.mxu0 0.0
        %4138 = vmatpush2.msra.mxu0 0.0
        %4139 = vmatprep.subr.mxu0 0.0
        %4140 = vmatpush2.msra.mxu0 0.0
        %4141 = vmatprep.subr.mxu0 0.0
        %4142 = vmatpush2.msra.mxu0 0.0
        %4143 = vmatprep.subr.mxu0 0.0
        %4144 = vmatpush2.msra.mxu0 0.0
        %4145 = vmatprep.subr.mxu0 0.0
        %4146 = vmatpush2.msra.mxu0 0.0
        %4147 = vmatprep.subr.mxu0 0.0
        %4148 = vmatpush2.msra.mxu0 0.0
        %4149 = vmatprep.subr.mxu0 0.0
        %4150 = vmatpush2.msra.mxu0 0.0
        %4151 = vmatprep.subr.mxu0 0.0
        %4152 = vmatpush2.msra.mxu0 0.0
        %4153 = vmatprep.subr.mxu0 0.0
        %4154 = vmatpush2.msra.mxu0 0.0
        %4155 = vmatprep.subr.mxu0 0.0
        %4156 = vmatpush2.msra.mxu0 0.0
        %4157 = vmatprep.subr.mxu0 0.0
        %4158 = vmatpush2.msra.mxu0 0.0
        %4159 = vmatprep.subr.mxu0 0.0
        %4160 = vmatpush2.msra.mxu0 0.0
        %4161 = vmatprep.subr.mxu0 0.0
        %4162 = vmatpush2.msra.mxu0 0.0
        %4163 = vmatprep.subr.mxu0 0.0
        %4164 = vmatpush2.msra.mxu0 0.0
        %4165 = vmatprep.subr.mxu0 0.0
        %4166 = vmatpush2.msra.mxu0 0.0
        %4167 = vmatprep.subr.mxu0 0.0
        %4168 = vmatpush2.msra.mxu0 0.0
        %4169 = vmatprep.mubr.f32.mxu0 0.0
        %4170 = vmatmul.mubr.f32.gmra.mxu0 %v4098
        %v4171 = vpop.f32.mrf.mxu0
        %v4172 = vadd.f32 0.0, %v4171
        %v4173 = vpop.f32.mrf.mxu0
        %4174 = vmatprep.mubr.f32.mxu0 0.0
        %4175 = vmatmul.mubr.f32.gmra.mxu0 %v4101
        %v4176 = vpop.f32.mrf.mxu0
        %v4177 = vadd.f32 0.0, %v4176
        %v4178 = vpop.f32.mrf.mxu0
        %4179 = vdwg.mxu0
        %v4180 = vadd.f32 %v4086, %v4172
        %v4181 = vadd.f32 %v4087, %v4177
        %s4182 = scalar_lea.vmem %s3, 336
        %v4183 = vld [vmem:[%s4182] sm:$0xff]
        %v4184 = vld [vmem:[%s4182 + $0x8] sm:$0xff]
        %4185 = vrot.lane.b32.xlu0 %v2271, 79
        %v4186 = vpop.permute.xlu0 %4185
        %4187 = vrot.lane.b32.xlu0 %v2273, 79
        %v4188 = vpop.permute.xlu0 %4187
        %vm4189 = vcmask 646144
        %v4190 = vsel %vm4189, %v4186, %v4188
        %v4192 = vsel %vm2283, %v4183, 0
        %v4195 = vsel %vm2283, %v4184, 0
        %v4197 = vsel %vm2290, %v4190, 0
        %4199 = vmatprep.subr.mxu0 0.0
        %4200 = vmatpush1.msra.mxu0 0.0
        %4201 = vmatprep.subr.mxu0 0.0
        %4202 = vmatpush1.msra.mxu0 0.0
        %4203 = vmatprep.subr.mxu0 0.0
        %4204 = vmatpush1.msra.mxu0 0.0
        %4205 = vmatprep.subr.mxu0 0.0
        %4206 = vmatpush1.msra.mxu0 0.0
        %4207 = vmatprep.subr.mxu0 0.0
        %4208 = vmatpush1.msra.mxu0 0.0
        %4209 = vmatprep.subr.mxu0 0.0
        %4210 = vmatpush1.msra.mxu0 0.0
        %4211 = vmatprep.subr.mxu0 0.0
        %4212 = vmatpush1.msra.mxu0 0.0
        %4213 = vmatprep.subr.mxu0 0.0
        %4214 = vmatpush1.msra.mxu0 0.0
        %4215 = vmatprep.subr.mxu0 0.0
        %4216 = vmatpush1.msra.mxu0 0.0
        %4217 = vmatprep.subr.mxu0 0.0
        %4218 = vmatpush1.msra.mxu0 0.0
        %4219 = vmatprep.subr.mxu0 0.0
        %4220 = vmatpush1.msra.mxu0 0.0
        %4221 = vmatprep.subr.mxu0 0.0
        %4222 = vmatpush1.msra.mxu0 0.0
        %4223 = vmatprep.subr.mxu0 0.0
        %4224 = vmatpush1.msra.mxu0 0.0
        %4225 = vmatprep.subr.mxu0 0.0
        %4226 = vmatpush1.msra.mxu0 0.0
        %4227 = vmatprep.subr.mxu0 0.0
        %4228 = vmatpush1.msra.mxu0 0.0
        %4229 = vmatprep.subr.mxu0 0.0
        %4230 = vmatpush1.msra.mxu0 %v4197
        %4231 = vmatprep.subr.mxu0 0.0
        %4232 = vmatpush2.msra.mxu0 0.0
        %4233 = vmatprep.subr.mxu0 0.0
        %4234 = vmatpush2.msra.mxu0 0.0
        %4235 = vmatprep.subr.mxu0 0.0
        %4236 = vmatpush2.msra.mxu0 0.0
        %4237 = vmatprep.subr.mxu0 0.0
        %4238 = vmatpush2.msra.mxu0 0.0
        %4239 = vmatprep.subr.mxu0 0.0
        %4240 = vmatpush2.msra.mxu0 0.0
        %4241 = vmatprep.subr.mxu0 0.0
        %4242 = vmatpush2.msra.mxu0 0.0
        %4243 = vmatprep.subr.mxu0 0.0
        %4244 = vmatpush2.msra.mxu0 0.0
        %4245 = vmatprep.subr.mxu0 0.0
        %4246 = vmatpush2.msra.mxu0 0.0
        %4247 = vmatprep.subr.mxu0 0.0
        %4248 = vmatpush2.msra.mxu0 0.0
        %4249 = vmatprep.subr.mxu0 0.0
        %4250 = vmatpush2.msra.mxu0 0.0
        %4251 = vmatprep.subr.mxu0 0.0
        %4252 = vmatpush2.msra.mxu0 0.0
        %4253 = vmatprep.subr.mxu0 0.0
        %4254 = vmatpush2.msra.mxu0 0.0
        %4255 = vmatprep.subr.mxu0 0.0
        %4256 = vmatpush2.msra.mxu0 0.0
        %4257 = vmatprep.subr.mxu0 0.0
        %4258 = vmatpush2.msra.mxu0 0.0
        %4259 = vmatprep.subr.mxu0 0.0
        %4260 = vmatpush2.msra.mxu0 0.0
        %4261 = vmatprep.subr.mxu0 0.0
        %4262 = vmatpush2.msra.mxu0 0.0
        %4263 = vmatprep.mubr.f32.mxu0 0.0
        %4264 = vmatmul.mubr.f32.gmra.mxu0 %v4192
        %v4265 = vpop.f32.mrf.mxu0
        %v4266 = vadd.f32 0.0, %v4265
        %v4267 = vpop.f32.mrf.mxu0
        %4268 = vmatprep.mubr.f32.mxu0 0.0
        %4269 = vmatmul.mubr.f32.gmra.mxu0 %v4195
        %v4270 = vpop.f32.mrf.mxu0
        %v4271 = vadd.f32 0.0, %v4270
        %v4272 = vpop.f32.mrf.mxu0
        %4273 = vdwg.mxu0
        %v4274 = vadd.f32 %v4180, %v4266
        %v4275 = vadd.f32 %v4181, %v4271
        %s4276 = scalar_lea.vmem %s3, 352
        %v4277 = vld [vmem:[%s4276] sm:$0xff]
        %v4278 = vld [vmem:[%s4276 + $0x8] sm:$0xff]
        %4279 = vrot.lane.b32.xlu0 %v2271, 78
        %v4280 = vpop.permute.xlu0 %4279
        %4281 = vrot.lane.b32.xlu0 %v2273, 78
        %v4282 = vpop.permute.xlu0 %4281
        %vm4283 = vcmask 637952
        %v4284 = vsel %vm4283, %v4280, %v4282
        %v4286 = vsel %vm2283, %v4277, 0
        %v4289 = vsel %vm2283, %v4278, 0
        %v4291 = vsel %vm2290, %v4284, 0
        %4293 = vmatprep.subr.mxu0 0.0
        %4294 = vmatpush1.msra.mxu0 0.0
        %4295 = vmatprep.subr.mxu0 0.0
        %4296 = vmatpush1.msra.mxu0 0.0
        %4297 = vmatprep.subr.mxu0 0.0
        %4298 = vmatpush1.msra.mxu0 0.0
        %4299 = vmatprep.subr.mxu0 0.0
        %4300 = vmatpush1.msra.mxu0 0.0
        %4301 = vmatprep.subr.mxu0 0.0
        %4302 = vmatpush1.msra.mxu0 0.0
        %4303 = vmatprep.subr.mxu0 0.0
        %4304 = vmatpush1.msra.mxu0 0.0
        %4305 = vmatprep.subr.mxu0 0.0
        %4306 = vmatpush1.msra.mxu0 0.0
        %4307 = vmatprep.subr.mxu0 0.0
        %4308 = vmatpush1.msra.mxu0 0.0
        %4309 = vmatprep.subr.mxu0 0.0
        %4310 = vmatpush1.msra.mxu0 0.0
        %4311 = vmatprep.subr.mxu0 0.0
        %4312 = vmatpush1.msra.mxu0 0.0
        %4313 = vmatprep.subr.mxu0 0.0
        %4314 = vmatpush1.msra.mxu0 0.0
        %4315 = vmatprep.subr.mxu0 0.0
        %4316 = vmatpush1.msra.mxu0 0.0
        %4317 = vmatprep.subr.mxu0 0.0
        %4318 = vmatpush1.msra.mxu0 0.0
        %4319 = vmatprep.subr.mxu0 0.0
        %4320 = vmatpush1.msra.mxu0 0.0
        %4321 = vmatprep.subr.mxu0 0.0
        %4322 = vmatpush1.msra.mxu0 0.0
        %4323 = vmatprep.subr.mxu0 0.0
        %4324 = vmatpush1.msra.mxu0 %v4291
        %4325 = vmatprep.subr.mxu0 0.0
        %4326 = vmatpush2.msra.mxu0 0.0
        %4327 = vmatprep.subr.mxu0 0.0
        %4328 = vmatpush2.msra.mxu0 0.0
        %4329 = vmatprep.subr.mxu0 0.0
        %4330 = vmatpush2.msra.mxu0 0.0
        %4331 = vmatprep.subr.mxu0 0.0
        %4332 = vmatpush2.msra.mxu0 0.0
        %4333 = vmatprep.subr.mxu0 0.0
        %4334 = vmatpush2.msra.mxu0 0.0
        %4335 = vmatprep.subr.mxu0 0.0
        %4336 = vmatpush2.msra.mxu0 0.0
        %4337 = vmatprep.subr.mxu0 0.0
        %4338 = vmatpush2.msra.mxu0 0.0
        %4339 = vmatprep.subr.mxu0 0.0
        %4340 = vmatpush2.msra.mxu0 0.0
        %4341 = vmatprep.subr.mxu0 0.0
        %4342 = vmatpush2.msra.mxu0 0.0
        %4343 = vmatprep.subr.mxu0 0.0
        %4344 = vmatpush2.msra.mxu0 0.0
        %4345 = vmatprep.subr.mxu0 0.0
        %4346 = vmatpush2.msra.mxu0 0.0
        %4347 = vmatprep.subr.mxu0 0.0
        %4348 = vmatpush2.msra.mxu0 0.0
        %4349 = vmatprep.subr.mxu0 0.0
        %4350 = vmatpush2.msra.mxu0 0.0
        %4351 = vmatprep.subr.mxu0 0.0
        %4352 = vmatpush2.msra.mxu0 0.0
        %4353 = vmatprep.subr.mxu0 0.0
        %4354 = vmatpush2.msra.mxu0 0.0
        %4355 = vmatprep.subr.mxu0 0.0
        %4356 = vmatpush2.msra.mxu0 0.0
        %4357 = vmatprep.mubr.f32.mxu0 0.0
        %4358 = vmatmul.mubr.f32.gmra.mxu0 %v4286
        %v4359 = vpop.f32.mrf.mxu0
        %v4360 = vadd.f32 0.0, %v4359
        %v4361 = vpop.f32.mrf.mxu0
        %4362 = vmatprep.mubr.f32.mxu0 0.0
        %4363 = vmatmul.mubr.f32.gmra.mxu0 %v4289
        %v4364 = vpop.f32.mrf.mxu0
        %v4365 = vadd.f32 0.0, %v4364
        %v4366 = vpop.f32.mrf.mxu0
        %4367 = vdwg.mxu0
        %v4368 = vadd.f32 %v4274, %v4360
        %v4369 = vadd.f32 %v4275, %v4365
        %s4370 = scalar_lea.vmem %s3, 368
        %v4371 = vld [vmem:[%s4370] sm:$0xff]
        %v4372 = vld [vmem:[%s4370 + $0x8] sm:$0xff]
        %4373 = vrot.lane.b32.xlu0 %v2271, 77
        %v4374 = vpop.permute.xlu0 %4373
        %4375 = vrot.lane.b32.xlu0 %v2273, 77
        %v4376 = vpop.permute.xlu0 %4375
        %vm4377 = vcmask 629760
        %v4378 = vsel %vm4377, %v4374, %v4376
        %v4380 = vsel %vm2283, %v4371, 0
        %v4383 = vsel %vm2283, %v4372, 0
        %v4385 = vsel %vm2290, %v4378, 0
        %4387 = vmatprep.subr.mxu0 0.0
        %4388 = vmatpush1.msra.mxu0 0.0
        %4389 = vmatprep.subr.mxu0 0.0
        %4390 = vmatpush1.msra.mxu0 0.0
        %4391 = vmatprep.subr.mxu0 0.0
        %4392 = vmatpush1.msra.mxu0 0.0
        %4393 = vmatprep.subr.mxu0 0.0
        %4394 = vmatpush1.msra.mxu0 0.0
        %4395 = vmatprep.subr.mxu0 0.0
        %4396 = vmatpush1.msra.mxu0 0.0
        %4397 = vmatprep.subr.mxu0 0.0
        %4398 = vmatpush1.msra.mxu0 0.0
        %4399 = vmatprep.subr.mxu0 0.0
        %4400 = vmatpush1.msra.mxu0 0.0
        %4401 = vmatprep.subr.mxu0 0.0
        %4402 = vmatpush1.msra.mxu0 0.0
        %4403 = vmatprep.subr.mxu0 0.0
        %4404 = vmatpush1.msra.mxu0 0.0
        %4405 = vmatprep.subr.mxu0 0.0
        %4406 = vmatpush1.msra.mxu0 0.0
        %4407 = vmatprep.subr.mxu0 0.0
        %4408 = vmatpush1.msra.mxu0 0.0
        %4409 = vmatprep.subr.mxu0 0.0
        %4410 = vmatpush1.msra.mxu0 0.0
        %4411 = vmatprep.subr.mxu0 0.0
        %4412 = vmatpush1.msra.mxu0 0.0
        %4413 = vmatprep.subr.mxu0 0.0
        %4414 = vmatpush1.msra.mxu0 0.0
        %4415 = vmatprep.subr.mxu0 0.0
        %4416 = vmatpush1.msra.mxu0 0.0
        %4417 = vmatprep.subr.mxu0 0.0
        %4418 = vmatpush1.msra.mxu0 %v4385
        %4419 = vmatprep.subr.mxu0 0.0
        %4420 = vmatpush2.msra.mxu0 0.0
        %4421 = vmatprep.subr.mxu0 0.0
        %4422 = vmatpush2.msra.mxu0 0.0
        %4423 = vmatprep.subr.mxu0 0.0
        %4424 = vmatpush2.msra.mxu0 0.0
        %4425 = vmatprep.subr.mxu0 0.0
        %4426 = vmatpush2.msra.mxu0 0.0
        %4427 = vmatprep.subr.mxu0 0.0
        %4428 = vmatpush2.msra.mxu0 0.0
        %4429 = vmatprep.subr.mxu0 0.0
        %4430 = vmatpush2.msra.mxu0 0.0
        %4431 = vmatprep.subr.mxu0 0.0
        %4432 = vmatpush2.msra.mxu0 0.0
        %4433 = vmatprep.subr.mxu0 0.0
        %4434 = vmatpush2.msra.mxu0 0.0
        %4435 = vmatprep.subr.mxu0 0.0
        %4436 = vmatpush2.msra.mxu0 0.0
        %4437 = vmatprep.subr.mxu0 0.0
        %4438 = vmatpush2.msra.mxu0 0.0
        %4439 = vmatprep.subr.mxu0 0.0
        %4440 = vmatpush2.msra.mxu0 0.0
        %4441 = vmatprep.subr.mxu0 0.0
        %4442 = vmatpush2.msra.mxu0 0.0
        %4443 = vmatprep.subr.mxu0 0.0
        %4444 = vmatpush2.msra.mxu0 0.0
        %4445 = vmatprep.subr.mxu0 0.0
        %4446 = vmatpush2.msra.mxu0 0.0
        %4447 = vmatprep.subr.mxu0 0.0
        %4448 = vmatpush2.msra.mxu0 0.0
        %4449 = vmatprep.subr.mxu0 0.0
        %4450 = vmatpush2.msra.mxu0 0.0
        %4451 = vmatprep.mubr.f32.mxu0 0.0
        %4452 = vmatmul.mubr.f32.gmra.mxu0 %v4380
        %v4453 = vpop.f32.mrf.mxu0
        %v4454 = vadd.f32 0.0, %v4453
        %v4455 = vpop.f32.mrf.mxu0
        %4456 = vmatprep.mubr.f32.mxu0 0.0
        %4457 = vmatmul.mubr.f32.gmra.mxu0 %v4383
        %v4458 = vpop.f32.mrf.mxu0
        %v4459 = vadd.f32 0.0, %v4458
        %v4460 = vpop.f32.mrf.mxu0
        %4461 = vdwg.mxu0
        %v4462 = vadd.f32 %v4368, %v4454
        %v4463 = vadd.f32 %v4369, %v4459
        %s4464 = scalar_lea.vmem %s3, 384
        %v4465 = vld [vmem:[%s4464] sm:$0xff]
        %v4466 = vld [vmem:[%s4464 + $0x8] sm:$0xff]
        %4467 = vrot.lane.b32.xlu0 %v2271, 76
        %v4468 = vpop.permute.xlu0 %4467
        %4469 = vrot.lane.b32.xlu0 %v2273, 76
        %v4470 = vpop.permute.xlu0 %4469
        %vm4471 = vcmask 621568
        %v4472 = vsel %vm4471, %v4468, %v4470
        %v4474 = vsel %vm2283, %v4465, 0
        %v4477 = vsel %vm2283, %v4466, 0
        %v4479 = vsel %vm2290, %v4472, 0
        %4481 = vmatprep.subr.mxu0 0.0
        %4482 = vmatpush1.msra.mxu0 0.0
        %4483 = vmatprep.subr.mxu0 0.0
        %4484 = vmatpush1.msra.mxu0 0.0
        %4485 = vmatprep.subr.mxu0 0.0
        %4486 = vmatpush1.msra.mxu0 0.0
        %4487 = vmatprep.subr.mxu0 0.0
        %4488 = vmatpush1.msra.mxu0 0.0
        %4489 = vmatprep.subr.mxu0 0.0
        %4490 = vmatpush1.msra.mxu0 0.0
        %4491 = vmatprep.subr.mxu0 0.0
        %4492 = vmatpush1.msra.mxu0 0.0
        %4493 = vmatprep.subr.mxu0 0.0
        %4494 = vmatpush1.msra.mxu0 0.0
        %4495 = vmatprep.subr.mxu0 0.0
        %4496 = vmatpush1.msra.mxu0 0.0
        %4497 = vmatprep.subr.mxu0 0.0
        %4498 = vmatpush1.msra.mxu0 0.0
        %4499 = vmatprep.subr.mxu0 0.0
        %4500 = vmatpush1.msra.mxu0 0.0
        %4501 = vmatprep.subr.mxu0 0.0
        %4502 = vmatpush1.msra.mxu0 0.0
        %4503 = vmatprep.subr.mxu0 0.0
        %4504 = vmatpush1.msra.mxu0 0.0
        %4505 = vmatprep.subr.mxu0 0.0
        %4506 = vmatpush1.msra.mxu0 0.0
        %4507 = vmatprep.subr.mxu0 0.0
        %4508 = vmatpush1.msra.mxu0 0.0
        %4509 = vmatprep.subr.mxu0 0.0
        %4510 = vmatpush1.msra.mxu0 0.0
        %4511 = vmatprep.subr.mxu0 0.0
        %4512 = vmatpush1.msra.mxu0 %v4479
        %4513 = vmatprep.subr.mxu0 0.0
        %4514 = vmatpush2.msra.mxu0 0.0
        %4515 = vmatprep.subr.mxu0 0.0
        %4516 = vmatpush2.msra.mxu0 0.0
        %4517 = vmatprep.subr.mxu0 0.0
        %4518 = vmatpush2.msra.mxu0 0.0
        %4519 = vmatprep.subr.mxu0 0.0
        %4520 = vmatpush2.msra.mxu0 0.0
        %4521 = vmatprep.subr.mxu0 0.0
        %4522 = vmatpush2.msra.mxu0 0.0
        %4523 = vmatprep.subr.mxu0 0.0
        %4524 = vmatpush2.msra.mxu0 0.0
        %4525 = vmatprep.subr.mxu0 0.0
        %4526 = vmatpush2.msra.mxu0 0.0
        %4527 = vmatprep.subr.mxu0 0.0
        %4528 = vmatpush2.msra.mxu0 0.0
        %4529 = vmatprep.subr.mxu0 0.0
        %4530 = vmatpush2.msra.mxu0 0.0
        %4531 = vmatprep.subr.mxu0 0.0
        %4532 = vmatpush2.msra.mxu0 0.0
        %4533 = vmatprep.subr.mxu0 0.0
        %4534 = vmatpush2.msra.mxu0 0.0
        %4535 = vmatprep.subr.mxu0 0.0
        %4536 = vmatpush2.msra.mxu0 0.0
        %4537 = vmatprep.subr.mxu0 0.0
        %4538 = vmatpush2.msra.mxu0 0.0
        %4539 = vmatprep.subr.mxu0 0.0
        %4540 = vmatpush2.msra.mxu0 0.0
        %4541 = vmatprep.subr.mxu0 0.0
        %4542 = vmatpush2.msra.mxu0 0.0
        %4543 = vmatprep.subr.mxu0 0.0
        %4544 = vmatpush2.msra.mxu0 0.0
        %4545 = vmatprep.mubr.f32.mxu0 0.0
        %4546 = vmatmul.mubr.f32.gmra.mxu0 %v4474
        %v4547 = vpop.f32.mrf.mxu0
        %v4548 = vadd.f32 0.0, %v4547
        %v4549 = vpop.f32.mrf.mxu0
        %4550 = vmatprep.mubr.f32.mxu0 0.0
        %4551 = vmatmul.mubr.f32.gmra.mxu0 %v4477
        %v4552 = vpop.f32.mrf.mxu0
        %v4553 = vadd.f32 0.0, %v4552
        %v4554 = vpop.f32.mrf.mxu0
        %4555 = vdwg.mxu0
        %v4556 = vadd.f32 %v4462, %v4548
        %v4557 = vadd.f32 %v4463, %v4553
        %v4558 = vld [vmem:[%s4] sm:$0xff]
        %v4559 = vld [vmem:[%s4 + $0x8] sm:$0xff]
        %4561 = vset.pattern.permute.xlu0 0
        %4562 = vperm.xlu0 %4561, %v4558
        %v4563 = vpop.permute.xlu0 %4562
        %4566 = vset.pattern.permute.xlu0 0
        %4567 = vperm.xlu0 %4566, %v4559
        %v4568 = vpop.permute.xlu0 %4567
        %v4570 = vadd.f32 %v4556, %v4563
        %v4571 = vadd.f32 %v4557, %v4568
        %v4572 = vsub.f32 0.0, %v4570
        %v4573 = vsub.f32 0.0, %v4571
        %v4574 = vmul.f32 %v4572, 1.442695
        %v4575 = vpow.pop %v4574
        %v4576 = vmul.f32 %v4573, 1.442695
        %v4577 = vpow.pop %v4576
        %v4578 = vadd.f32 %v4575, 1.0
        %v4579 = vadd.f32 %v4577, 1.0
        %v4580 = vrcp.pop %v4578
        %v4581 = vmul.f32 1.0, %v4580
        %v4582 = vrcp.pop %v4579
        %v4583 = vmul.f32 1.0, %v4582
        %4586 = vrot.lane.b32.xlu0 %v4581, 127
        %v4587 = vpop.permute.xlu0 %4586
        %4588 = vrot.lane.b32.xlu0 %v4583, 127
        %v4589 = vpop.permute.xlu0 %4588
        %v4592 = vmax.f32 %v4581, %v4587
        %v4593 = vmax.f32 %v4583, %v4589
        %4596 = vrot.lane.b32.xlu0 %v4592, 116
        %v4597 = vpop.permute.xlu0 %4596
        %4598 = vrot.lane.b32.xlu0 %v4593, 116
        %v4599 = vpop.permute.xlu0 %4598
        %v4602 = vmax.f32 %v4592, %v4597
        %v4603 = vmax.f32 %v4593, %v4599
        %v4604 = vld [vmem:[%s6] sm:$0xff]
        %v4605 = vld [vmem:[%s6 + $0x8] sm:$0xff]
        %v4606 = vld [vmem:[%s6 + $0x10] sm:$0xff]
        %v4607 = vld [vmem:[%s6 + $0x18] sm:$0xff]
        %v4608 = vld [vmem:[%s6 + $0x20] sm:$0xff]
        %v4609 = vld [vmem:[%s6 + $0x28] sm:$0xff]
        %v4610 = vld [vmem:[%s6 + $0x30] sm:$0xff]
        %v4611 = vld [vmem:[%s6 + $0x38] sm:$0xff]
        %v4612 = vld [vmem:[%s6 + $0x40] sm:$0xff]
        %v4613 = vld [vmem:[%s6 + $0x48] sm:$0x7f]
        %v4615 = vsel %vm4189, %v4602, 0
        %v4618 = vsel %vm4189, %v4603, 0
        %vm4620 = vcmask 1046528
        %v4622 = vsel %vm4620, %v4613, 0
        %4624 = vmatprep.subr.mxu0 0.0
        %4625 = vmatpush1.msra.mxu0 0.0
        %4626 = vmatprep.subr.mxu0 0.0
        %4627 = vmatpush1.msra.mxu0 0.0
        %4628 = vmatprep.subr.mxu0 0.0
        %4629 = vmatpush1.msra.mxu0 0.0
        %4630 = vmatprep.subr.mxu0 0.0
        %4631 = vmatpush1.msra.mxu0 0.0
        %4632 = vmatprep.subr.mxu0 0.0
        %4633 = vmatpush1.msra.mxu0 0.0
        %4634 = vmatprep.subr.mxu0 0.0
        %4635 = vmatpush1.msra.mxu0 0.0
        %4636 = vmatprep.subr.mxu0 0.0
        %4637 = vmatpush1.msra.mxu0 %v4622
        %4638 = vmatprep.subr.mxu0 0.0
        %4639 = vmatpush1.msra.mxu0 %v4612
        %4640 = vmatprep.subr.mxu0 0.0
        %4641 = vmatpush1.msra.mxu0 %v4611
        %4642 = vmatprep.subr.mxu0 0.0
        %4643 = vmatpush1.msra.mxu0 %v4610
        %4644 = vmatprep.subr.mxu0 0.0
        %4645 = vmatpush1.msra.mxu0 %v4609
        %4646 = vmatprep.subr.mxu0 0.0
        %4647 = vmatpush1.msra.mxu0 %v4608
        %4648 = vmatprep.subr.mxu0 0.0
        %4649 = vmatpush1.msra.mxu0 %v4607
        %4650 = vmatprep.subr.mxu0 0.0
        %4651 = vmatpush1.msra.mxu0 %v4606
        %4652 = vmatprep.subr.mxu0 0.0
        %4653 = vmatpush1.msra.mxu0 %v4605
        %4654 = vmatprep.subr.mxu0 0.0
        %4655 = vmatpush1.msra.mxu0 %v4604
        %4656 = vmatprep.subr.mxu0 0.0
        %4657 = vmatpush2.msra.mxu0 0.0
        %4658 = vmatprep.subr.mxu0 0.0
        %4659 = vmatpush2.msra.mxu0 0.0
        %4660 = vmatprep.subr.mxu0 0.0
        %4661 = vmatpush2.msra.mxu0 0.0
        %4662 = vmatprep.subr.mxu0 0.0
        %4663 = vmatpush2.msra.mxu0 0.0
        %4664 = vmatprep.subr.mxu0 0.0
        %4665 = vmatpush2.msra.mxu0 0.0
        %4666 = vmatprep.subr.mxu0 0.0
        %4667 = vmatpush2.msra.mxu0 0.0
        %4668 = vmatprep.subr.mxu0 0.0
        %4669 = vmatpush2.msra.mxu0 0.0
        %4670 = vmatprep.subr.mxu0 0.0
        %4671 = vmatpush2.msra.mxu0 0.0
        %4672 = vmatprep.subr.mxu0 0.0
        %4673 = vmatpush2.msra.mxu0 0.0
        %4674 = vmatprep.subr.mxu0 0.0
        %4675 = vmatpush2.msra.mxu0 0.0
        %4676 = vmatprep.subr.mxu0 0.0
        %4677 = vmatpush2.msra.mxu0 0.0
        %4678 = vmatprep.subr.mxu0 0.0
        %4679 = vmatpush2.msra.mxu0 0.0
        %4680 = vmatprep.subr.mxu0 0.0
        %4681 = vmatpush2.msra.mxu0 0.0
        %4682 = vmatprep.subr.mxu0 0.0
        %4683 = vmatpush2.msra.mxu0 0.0
        %4684 = vmatprep.subr.mxu0 0.0
        %4685 = vmatpush2.msra.mxu0 0.0
        %4686 = vmatprep.subr.mxu0 0.0
        %4687 = vmatpush2.msra.mxu0 0.0
        %4688 = vmatprep.mubr.f32.mxu0 0.0
        %4689 = vmatmul.mubr.f32.gmra.mxu0 %v4615
        %v4690 = vpop.f32.mrf.mxu0
        %v4691 = vadd.f32 0.0, %v4690
        %v4692 = vpop.f32.mrf.mxu0
        %4693 = vmatprep.mubr.f32.mxu0 0.0
        %4694 = vmatmul.mubr.f32.gmra.mxu0 %v4618
        %v4695 = vpop.f32.mrf.mxu0
        %v4696 = vadd.f32 0.0, %v4695
        %v4697 = vpop.f32.mrf.mxu0
        %4698 = vdwg.mxu0
        %v4699 = vld [vmem:[%s8] sm:$0x1]
        %v4700 = vld [vmem:[%s7] sm:$0xff]
        %v4701 = vld [vmem:[%s7 + $0x8] sm:$0xff]
        %v4703 = vsel %vm1551, %v4691, 0
        %4705 = vmatprep.subr.mxu0 0.0
        %4706 = vmatpush1.msra.mxu0 0.0
        %4707 = vmatprep.subr.mxu0 0.0
        %4708 = vmatpush1.msra.mxu0 0.0
        %4709 = vmatprep.subr.mxu0 0.0
        %4710 = vmatpush1.msra.mxu0 0.0
        %4711 = vmatprep.subr.mxu0 0.0
        %4712 = vmatpush1.msra.mxu0 0.0
        %4713 = vmatprep.subr.mxu0 0.0
        %4714 = vmatpush1.msra.mxu0 0.0
        %4715 = vmatprep.subr.mxu0 0.0
        %4716 = vmatpush1.msra.mxu0 0.0
        %4717 = vmatprep.subr.mxu0 0.0
        %4718 = vmatpush1.msra.mxu0 0.0
        %4719 = vmatprep.subr.mxu0 0.0
        %4720 = vmatpush1.msra.mxu0 0.0
        %4721 = vmatprep.subr.mxu0 0.0
        %4722 = vmatpush1.msra.mxu0 0.0
        %4723 = vmatprep.subr.mxu0 0.0
        %4724 = vmatpush1.msra.mxu0 0.0
        %4725 = vmatprep.subr.mxu0 0.0
        %4726 = vmatpush1.msra.mxu0 0.0
        %4727 = vmatprep.subr.mxu0 0.0
        %4728 = vmatpush1.msra.mxu0 0.0
        %4729 = vmatprep.subr.mxu0 0.0
        %4730 = vmatpush1.msra.mxu0 0.0
        %4731 = vmatprep.subr.mxu0 0.0
        %4732 = vmatpush1.msra.mxu0 0.0
        %4733 = vmatprep.subr.mxu0 0.0
        %4734 = vmatpush1.msra.mxu0 %v4701
        %4735 = vmatprep.subr.mxu0 0.0
        %4736 = vmatpush1.msra.mxu0 %v4700
        %4737 = vmatprep.subr.mxu0 0.0
        %4738 = vmatpush2.msra.mxu0 0.0
        %4739 = vmatprep.subr.mxu0 0.0
        %4740 = vmatpush2.msra.mxu0 0.0
        %4741 = vmatprep.subr.mxu0 0.0
        %4742 = vmatpush2.msra.mxu0 0.0
        %4743 = vmatprep.subr.mxu0 0.0
        %4744 = vmatpush2.msra.mxu0 0.0
        %4745 = vmatprep.subr.mxu0 0.0
        %4746 = vmatpush2.msra.mxu0 0.0
        %4747 = vmatprep.subr.mxu0 0.0
        %4748 = vmatpush2.msra.mxu0 0.0
        %4749 = vmatprep.subr.mxu0 0.0
        %4750 = vmatpush2.msra.mxu0 0.0
        %4751 = vmatprep.subr.mxu0 0.0
        %4752 = vmatpush2.msra.mxu0 0.0
        %4753 = vmatprep.subr.mxu0 0.0
        %4754 = vmatpush2.msra.mxu0 0.0
        %4755 = vmatprep.subr.mxu0 0.0
        %4756 = vmatpush2.msra.mxu0 0.0
        %4757 = vmatprep.subr.mxu0 0.0
        %4758 = vmatpush2.msra.mxu0 0.0
        %4759 = vmatprep.subr.mxu0 0.0
        %4760 = vmatpush2.msra.mxu0 0.0
        %4761 = vmatprep.subr.mxu0 0.0
        %4762 = vmatpush2.msra.mxu0 0.0
        %4763 = vmatprep.subr.mxu0 0.0
        %4764 = vmatpush2.msra.mxu0 0.0
        %4765 = vmatprep.subr.mxu0 0.0
        %4766 = vmatpush2.msra.mxu0 0.0
        %4767 = vmatprep.subr.mxu0 0.0
        %4768 = vmatpush2.msra.mxu0 0.0
        %4769 = vmatprep.mubr.f32.mxu0 0.0
        %4770 = vmatmul.mubr.f32.gmra.mxu0 %v4703
        %v4771 = vpop.f32.mrf.mxu0
        %v4772 = vadd.f32 0.0, %v4771
        %v4773 = vpop.f32.mrf.mxu0
        %4774 = vdwg.mxu0
        %v4775 = vadd.f32 %v4699, %v4772
        %s4776 = scalar_lea.vmem %s7, 16
        %v4777 = vld [vmem:[%s4776] sm:$0xff]
        %v4778 = vld [vmem:[%s4776 + $0x8] sm:$0xff]
        %v4779 = vrot.slane %v4691, 1
        %v4780 = vsel %vm1551, %v4779, 0
        %4782 = vmatprep.subr.mxu0 0.0
        %4783 = vmatpush1.msra.mxu0 0.0
        %4784 = vmatprep.subr.mxu0 0.0
        %4785 = vmatpush1.msra.mxu0 0.0
        %4786 = vmatprep.subr.mxu0 0.0
        %4787 = vmatpush1.msra.mxu0 0.0
        %4788 = vmatprep.subr.mxu0 0.0
        %4789 = vmatpush1.msra.mxu0 0.0
        %4790 = vmatprep.subr.mxu0 0.0
        %4791 = vmatpush1.msra.mxu0 0.0
        %4792 = vmatprep.subr.mxu0 0.0
        %4793 = vmatpush1.msra.mxu0 0.0
        %4794 = vmatprep.subr.mxu0 0.0
        %4795 = vmatpush1.msra.mxu0 0.0
        %4796 = vmatprep.subr.mxu0 0.0
        %4797 = vmatpush1.msra.mxu0 0.0
        %4798 = vmatprep.subr.mxu0 0.0
        %4799 = vmatpush1.msra.mxu0 0.0
        %4800 = vmatprep.subr.mxu0 0.0
        %4801 = vmatpush1.msra.mxu0 0.0
        %4802 = vmatprep.subr.mxu0 0.0
        %4803 = vmatpush1.msra.mxu0 0.0
        %4804 = vmatprep.subr.mxu0 0.0
        %4805 = vmatpush1.msra.mxu0 0.0
        %4806 = vmatprep.subr.mxu0 0.0
        %4807 = vmatpush1.msra.mxu0 0.0
        %4808 = vmatprep.subr.mxu0 0.0
        %4809 = vmatpush1.msra.mxu0 0.0
        %4810 = vmatprep.subr.mxu0 0.0
        %4811 = vmatpush1.msra.mxu0 %v4778
        %4812 = vmatprep.subr.mxu0 0.0
        %4813 = vmatpush1.msra.mxu0 %v4777
        %4814 = vmatprep.subr.mxu0 0.0
        %4815 = vmatpush2.msra.mxu0 0.0
        %4816 = vmatprep.subr.mxu0 0.0
        %4817 = vmatpush2.msra.mxu0 0.0
        %4818 = vmatprep.subr.mxu0 0.0
        %4819 = vmatpush2.msra.mxu0 0.0
        %4820 = vmatprep.subr.mxu0 0.0
        %4821 = vmatpush2.msra.mxu0 0.0
        %4822 = vmatprep.subr.mxu0 0.0
        %4823 = vmatpush2.msra.mxu0 0.0
        %4824 = vmatprep.subr.mxu0 0.0
        %4825 = vmatpush2.msra.mxu0 0.0
        %4826 = vmatprep.subr.mxu0 0.0
        %4827 = vmatpush2.msra.mxu0 0.0
        %4828 = vmatprep.subr.mxu0 0.0
        %4829 = vmatpush2.msra.mxu0 0.0
        %4830 = vmatprep.subr.mxu0 0.0
        %4831 = vmatpush2.msra.mxu0 0.0
        %4832 = vmatprep.subr.mxu0 0.0
        %4833 = vmatpush2.msra.mxu0 0.0
        %4834 = vmatprep.subr.mxu0 0.0
        %4835 = vmatpush2.msra.mxu0 0.0
        %4836 = vmatprep.subr.mxu0 0.0
        %4837 = vmatpush2.msra.mxu0 0.0
        %4838 = vmatprep.subr.mxu0 0.0
        %4839 = vmatpush2.msra.mxu0 0.0
        %4840 = vmatprep.subr.mxu0 0.0
        %4841 = vmatpush2.msra.mxu0 0.0
        %4842 = vmatprep.subr.mxu0 0.0
        %4843 = vmatpush2.msra.mxu0 0.0
        %4844 = vmatprep.subr.mxu0 0.0
        %4845 = vmatpush2.msra.mxu0 0.0
        %4846 = vmatprep.mubr.f32.mxu0 0.0
        %4847 = vmatmul.mubr.f32.gmra.mxu0 %v4780
        %v4848 = vpop.f32.mrf.mxu0
        %v4849 = vadd.f32 0.0, %v4848
        %v4850 = vpop.f32.mrf.mxu0
        %4851 = vdwg.mxu0
        %v4852 = vadd.f32 %v4775, %v4849
        %s4853 = scalar_lea.vmem %s7, 32
        %v4854 = vld [vmem:[%s4853] sm:$0xff]
        %v4855 = vld [vmem:[%s4853 + $0x8] sm:$0xff]
        %v4856 = vrot.slane %v4691, 2
        %v4857 = vsel %vm1551, %v4856, 0
        %4859 = vmatprep.subr.mxu0 0.0
        %4860 = vmatpush1.msra.mxu0 0.0
        %4861 = vmatprep.subr.mxu0 0.0
        %4862 = vmatpush1.msra.mxu0 0.0
        %4863 = vmatprep.subr.mxu0 0.0
        %4864 = vmatpush1.msra.mxu0 0.0
        %4865 = vmatprep.subr.mxu0 0.0
        %4866 = vmatpush1.msra.mxu0 0.0
        %4867 = vmatprep.subr.mxu0 0.0
        %4868 = vmatpush1.msra.mxu0 0.0
        %4869 = vmatprep.subr.mxu0 0.0
        %4870 = vmatpush1.msra.mxu0 0.0
        %4871 = vmatprep.subr.mxu0 0.0
        %4872 = vmatpush1.msra.mxu0 0.0
        %4873 = vmatprep.subr.mxu0 0.0
        %4874 = vmatpush1.msra.mxu0 0.0
        %4875 = vmatprep.subr.mxu0 0.0
        %4876 = vmatpush1.msra.mxu0 0.0
        %4877 = vmatprep.subr.mxu0 0.0
        %4878 = vmatpush1.msra.mxu0 0.0
        %4879 = vmatprep.subr.mxu0 0.0
        %4880 = vmatpush1.msra.mxu0 0.0
        %4881 = vmatprep.subr.mxu0 0.0
        %4882 = vmatpush1.msra.mxu0 0.0
        %4883 = vmatprep.subr.mxu0 0.0
        %4884 = vmatpush1.msra.mxu0 0.0
        %4885 = vmatprep.subr.mxu0 0.0
        %4886 = vmatpush1.msra.mxu0 0.0
        %4887 = vmatprep.subr.mxu0 0.0
        %4888 = vmatpush1.msra.mxu0 %v4855
        %4889 = vmatprep.subr.mxu0 0.0
        %4890 = vmatpush1.msra.mxu0 %v4854
        %4891 = vmatprep.subr.mxu0 0.0
        %4892 = vmatpush2.msra.mxu0 0.0
        %4893 = vmatprep.subr.mxu0 0.0
        %4894 = vmatpush2.msra.mxu0 0.0
        %4895 = vmatprep.subr.mxu0 0.0
        %4896 = vmatpush2.msra.mxu0 0.0
        %4897 = vmatprep.subr.mxu0 0.0
        %4898 = vmatpush2.msra.mxu0 0.0
        %4899 = vmatprep.subr.mxu0 0.0
        %4900 = vmatpush2.msra.mxu0 0.0
        %4901 = vmatprep.subr.mxu0 0.0
        %4902 = vmatpush2.msra.mxu0 0.0
        %4903 = vmatprep.subr.mxu0 0.0
        %4904 = vmatpush2.msra.mxu0 0.0
        %4905 = vmatprep.subr.mxu0 0.0
        %4906 = vmatpush2.msra.mxu0 0.0
        %4907 = vmatprep.subr.mxu0 0.0
        %4908 = vmatpush2.msra.mxu0 0.0
        %4909 = vmatprep.subr.mxu0 0.0
        %4910 = vmatpush2.msra.mxu0 0.0
        %4911 = vmatprep.subr.mxu0 0.0
        %4912 = vmatpush2.msra.mxu0 0.0
        %4913 = vmatprep.subr.mxu0 0.0
        %4914 = vmatpush2.msra.mxu0 0.0
        %4915 = vmatprep.subr.mxu0 0.0
        %4916 = vmatpush2.msra.mxu0 0.0
        %4917 = vmatprep.subr.mxu0 0.0
        %4918 = vmatpush2.msra.mxu0 0.0
        %4919 = vmatprep.subr.mxu0 0.0
        %4920 = vmatpush2.msra.mxu0 0.0
        %4921 = vmatprep.subr.mxu0 0.0
        %4922 = vmatpush2.msra.mxu0 0.0
        %4923 = vmatprep.mubr.f32.mxu0 0.0
        %4924 = vmatmul.mubr.f32.gmra.mxu0 %v4857
        %v4925 = vpop.f32.mrf.mxu0
        %v4926 = vadd.f32 0.0, %v4925
        %v4927 = vpop.f32.mrf.mxu0
        %4928 = vdwg.mxu0
        %v4929 = vadd.f32 %v4852, %v4926
        %s4930 = scalar_lea.vmem %s7, 48
        %v4931 = vld [vmem:[%s4930] sm:$0xff]
        %v4932 = vld [vmem:[%s4930 + $0x8] sm:$0xff]
        %v4933 = vrot.slane %v4691, 3
        %v4934 = vsel %vm1551, %v4933, 0
        %4936 = vmatprep.subr.mxu0 0.0
        %4937 = vmatpush1.msra.mxu0 0.0
        %4938 = vmatprep.subr.mxu0 0.0
        %4939 = vmatpush1.msra.mxu0 0.0
        %4940 = vmatprep.subr.mxu0 0.0
        %4941 = vmatpush1.msra.mxu0 0.0
        %4942 = vmatprep.subr.mxu0 0.0
        %4943 = vmatpush1.msra.mxu0 0.0
        %4944 = vmatprep.subr.mxu0 0.0
        %4945 = vmatpush1.msra.mxu0 0.0
        %4946 = vmatprep.subr.mxu0 0.0
        %4947 = vmatpush1.msra.mxu0 0.0
        %4948 = vmatprep.subr.mxu0 0.0
        %4949 = vmatpush1.msra.mxu0 0.0
        %4950 = vmatprep.subr.mxu0 0.0
        %4951 = vmatpush1.msra.mxu0 0.0
        %4952 = vmatprep.subr.mxu0 0.0
        %4953 = vmatpush1.msra.mxu0 0.0
        %4954 = vmatprep.subr.mxu0 0.0
        %4955 = vmatpush1.msra.mxu0 0.0
        %4956 = vmatprep.subr.mxu0 0.0
        %4957 = vmatpush1.msra.mxu0 0.0
        %4958 = vmatprep.subr.mxu0 0.0
        %4959 = vmatpush1.msra.mxu0 0.0
        %4960 = vmatprep.subr.mxu0 0.0
        %4961 = vmatpush1.msra.mxu0 0.0
        %4962 = vmatprep.subr.mxu0 0.0
        %4963 = vmatpush1.msra.mxu0 0.0
        %4964 = vmatprep.subr.mxu0 0.0
        %4965 = vmatpush1.msra.mxu0 %v4932
        %4966 = vmatprep.subr.mxu0 0.0
        %4967 = vmatpush1.msra.mxu0 %v4931
        %4968 = vmatprep.subr.mxu0 0.0
        %4969 = vmatpush2.msra.mxu0 0.0
        %4970 = vmatprep.subr.mxu0 0.0
        %4971 = vmatpush2.msra.mxu0 0.0
        %4972 = vmatprep.subr.mxu0 0.0
        %4973 = vmatpush2.msra.mxu0 0.0
        %4974 = vmatprep.subr.mxu0 0.0
        %4975 = vmatpush2.msra.mxu0 0.0
        %4976 = vmatprep.subr.mxu0 0.0
        %4977 = vmatpush2.msra.mxu0 0.0
        %4978 = vmatprep.subr.mxu0 0.0
        %4979 = vmatpush2.msra.mxu0 0.0
        %4980 = vmatprep.subr.mxu0 0.0
        %4981 = vmatpush2.msra.mxu0 0.0
        %4982 = vmatprep.subr.mxu0 0.0
        %4983 = vmatpush2.msra.mxu0 0.0
        %4984 = vmatprep.subr.mxu0 0.0
        %4985 = vmatpush2.msra.mxu0 0.0
        %4986 = vmatprep.subr.mxu0 0.0
        %4987 = vmatpush2.msra.mxu0 0.0
        %4988 = vmatprep.subr.mxu0 0.0
        %4989 = vmatpush2.msra.mxu0 0.0
        %4990 = vmatprep.subr.mxu0 0.0
        %4991 = vmatpush2.msra.mxu0 0.0
        %4992 = vmatprep.subr.mxu0 0.0
        %4993 = vmatpush2.msra.mxu0 0.0
        %4994 = vmatprep.subr.mxu0 0.0
        %4995 = vmatpush2.msra.mxu0 0.0
        %4996 = vmatprep.subr.mxu0 0.0
        %4997 = vmatpush2.msra.mxu0 0.0
        %4998 = vmatprep.subr.mxu0 0.0
        %4999 = vmatpush2.msra.mxu0 0.0
        %5000 = vmatprep.mubr.f32.mxu0 0.0
        %5001 = vmatmul.mubr.f32.gmra.mxu0 %v4934
        %v5002 = vpop.f32.mrf.mxu0
        %v5003 = vadd.f32 0.0, %v5002
        %v5004 = vpop.f32.mrf.mxu0
        %5005 = vdwg.mxu0
        %v5006 = vadd.f32 %v4929, %v5003
        %s5007 = scalar_lea.vmem %s7, 64
        %v5008 = vld [vmem:[%s5007] sm:$0xff]
        %v5009 = vld [vmem:[%s5007 + $0x8] sm:$0xff]
        %v5010 = vrot.slane %v4691, 4
        %v5011 = vsel %vm1551, %v5010, 0
        %5013 = vmatprep.subr.mxu0 0.0
        %5014 = vmatpush1.msra.mxu0 0.0
        %5015 = vmatprep.subr.mxu0 0.0
        %5016 = vmatpush1.msra.mxu0 0.0
        %5017 = vmatprep.subr.mxu0 0.0
        %5018 = vmatpush1.msra.mxu0 0.0
        %5019 = vmatprep.subr.mxu0 0.0
        %5020 = vmatpush1.msra.mxu0 0.0
        %5021 = vmatprep.subr.mxu0 0.0
        %5022 = vmatpush1.msra.mxu0 0.0
        %5023 = vmatprep.subr.mxu0 0.0
        %5024 = vmatpush1.msra.mxu0 0.0
        %5025 = vmatprep.subr.mxu0 0.0
        %5026 = vmatpush1.msra.mxu0 0.0
        %5027 = vmatprep.subr.mxu0 0.0
        %5028 = vmatpush1.msra.mxu0 0.0
        %5029 = vmatprep.subr.mxu0 0.0
        %5030 = vmatpush1.msra.mxu0 0.0
        %5031 = vmatprep.subr.mxu0 0.0
        %5032 = vmatpush1.msra.mxu0 0.0
        %5033 = vmatprep.subr.mxu0 0.0
        %5034 = vmatpush1.msra.mxu0 0.0
        %5035 = vmatprep.subr.mxu0 0.0
        %5036 = vmatpush1.msra.mxu0 0.0
        %5037 = vmatprep.subr.mxu0 0.0
        %5038 = vmatpush1.msra.mxu0 0.0
        %5039 = vmatprep.subr.mxu0 0.0
        %5040 = vmatpush1.msra.mxu0 0.0
        %5041 = vmatprep.subr.mxu0 0.0
        %5042 = vmatpush1.msra.mxu0 %v5009
        %5043 = vmatprep.subr.mxu0 0.0
        %5044 = vmatpush1.msra.mxu0 %v5008
        %5045 = vmatprep.subr.mxu0 0.0
        %5046 = vmatpush2.msra.mxu0 0.0
        %5047 = vmatprep.subr.mxu0 0.0
        %5048 = vmatpush2.msra.mxu0 0.0
        %5049 = vmatprep.subr.mxu0 0.0
        %5050 = vmatpush2.msra.mxu0 0.0
        %5051 = vmatprep.subr.mxu0 0.0
        %5052 = vmatpush2.msra.mxu0 0.0
        %5053 = vmatprep.subr.mxu0 0.0
        %5054 = vmatpush2.msra.mxu0 0.0
        %5055 = vmatprep.subr.mxu0 0.0
        %5056 = vmatpush2.msra.mxu0 0.0
        %5057 = vmatprep.subr.mxu0 0.0
        %5058 = vmatpush2.msra.mxu0 0.0
        %5059 = vmatprep.subr.mxu0 0.0
        %5060 = vmatpush2.msra.mxu0 0.0
        %5061 = vmatprep.subr.mxu0 0.0
        %5062 = vmatpush2.msra.mxu0 0.0
        %5063 = vmatprep.subr.mxu0 0.0
        %5064 = vmatpush2.msra.mxu0 0.0
        %5065 = vmatprep.subr.mxu0 0.0
        %5066 = vmatpush2.msra.mxu0 0.0
        %5067 = vmatprep.subr.mxu0 0.0
        %5068 = vmatpush2.msra.mxu0 0.0
        %5069 = vmatprep.subr.mxu0 0.0
        %5070 = vmatpush2.msra.mxu0 0.0
        %5071 = vmatprep.subr.mxu0 0.0
        %5072 = vmatpush2.msra.mxu0 0.0
        %5073 = vmatprep.subr.mxu0 0.0
        %5074 = vmatpush2.msra.mxu0 0.0
        %5075 = vmatprep.subr.mxu0 0.0
        %5076 = vmatpush2.msra.mxu0 0.0
        %5077 = vmatprep.mubr.f32.mxu0 0.0
        %5078 = vmatmul.mubr.f32.gmra.mxu0 %v5011
        %v5079 = vpop.f32.mrf.mxu0
        %v5080 = vadd.f32 0.0, %v5079
        %v5081 = vpop.f32.mrf.mxu0
        %5082 = vdwg.mxu0
        %v5083 = vadd.f32 %v5006, %v5080
        %s5084 = scalar_lea.vmem %s7, 80
        %v5085 = vld [vmem:[%s5084] sm:$0xff]
        %v5086 = vld [vmem:[%s5084 + $0x8] sm:$0xff]
        %v5087 = vrot.slane %v4691, 5
        %v5088 = vsel %vm1551, %v5087, 0
        %5090 = vmatprep.subr.mxu0 0.0
        %5091 = vmatpush1.msra.mxu0 0.0
        %5092 = vmatprep.subr.mxu0 0.0
        %5093 = vmatpush1.msra.mxu0 0.0
        %5094 = vmatprep.subr.mxu0 0.0
        %5095 = vmatpush1.msra.mxu0 0.0
        %5096 = vmatprep.subr.mxu0 0.0
        %5097 = vmatpush1.msra.mxu0 0.0
        %5098 = vmatprep.subr.mxu0 0.0
        %5099 = vmatpush1.msra.mxu0 0.0
        %5100 = vmatprep.subr.mxu0 0.0
        %5101 = vmatpush1.msra.mxu0 0.0
        %5102 = vmatprep.subr.mxu0 0.0
        %5103 = vmatpush1.msra.mxu0 0.0
        %5104 = vmatprep.subr.mxu0 0.0
        %5105 = vmatpush1.msra.mxu0 0.0
        %5106 = vmatprep.subr.mxu0 0.0
        %5107 = vmatpush1.msra.mxu0 0.0
        %5108 = vmatprep.subr.mxu0 0.0
        %5109 = vmatpush1.msra.mxu0 0.0
        %5110 = vmatprep.subr.mxu0 0.0
        %5111 = vmatpush1.msra.mxu0 0.0
        %5112 = vmatprep.subr.mxu0 0.0
        %5113 = vmatpush1.msra.mxu0 0.0
        %5114 = vmatprep.subr.mxu0 0.0
        %5115 = vmatpush1.msra.mxu0 0.0
        %5116 = vmatprep.subr.mxu0 0.0
        %5117 = vmatpush1.msra.mxu0 0.0
        %5118 = vmatprep.subr.mxu0 0.0
        %5119 = vmatpush1.msra.mxu0 %v5086
        %5120 = vmatprep.subr.mxu0 0.0
        %5121 = vmatpush1.msra.mxu0 %v5085
        %5122 = vmatprep.subr.mxu0 0.0
        %5123 = vmatpush2.msra.mxu0 0.0
        %5124 = vmatprep.subr.mxu0 0.0
        %5125 = vmatpush2.msra.mxu0 0.0
        %5126 = vmatprep.subr.mxu0 0.0
        %5127 = vmatpush2.msra.mxu0 0.0
        %5128 = vmatprep.subr.mxu0 0.0
        %5129 = vmatpush2.msra.mxu0 0.0
        %5130 = vmatprep.subr.mxu0 0.0
        %5131 = vmatpush2.msra.mxu0 0.0
        %5132 = vmatprep.subr.mxu0 0.0
        %5133 = vmatpush2.msra.mxu0 0.0
        %5134 = vmatprep.subr.mxu0 0.0
        %5135 = vmatpush2.msra.mxu0 0.0
        %5136 = vmatprep.subr.mxu0 0.0
        %5137 = vmatpush2.msra.mxu0 0.0
        %5138 = vmatprep.subr.mxu0 0.0
        %5139 = vmatpush2.msra.mxu0 0.0
        %5140 = vmatprep.subr.mxu0 0.0
        %5141 = vmatpush2.msra.mxu0 0.0
        %5142 = vmatprep.subr.mxu0 0.0
        %5143 = vmatpush2.msra.mxu0 0.0
        %5144 = vmatprep.subr.mxu0 0.0
        %5145 = vmatpush2.msra.mxu0 0.0
        %5146 = vmatprep.subr.mxu0 0.0
        %5147 = vmatpush2.msra.mxu0 0.0
        %5148 = vmatprep.subr.mxu0 0.0
        %5149 = vmatpush2.msra.mxu0 0.0
        %5150 = vmatprep.subr.mxu0 0.0
        %5151 = vmatpush2.msra.mxu0 0.0
        %5152 = vmatprep.subr.mxu0 0.0
        %5153 = vmatpush2.msra.mxu0 0.0
        %5154 = vmatprep.mubr.f32.mxu0 0.0
        %5155 = vmatmul.mubr.f32.gmra.mxu0 %v5088
        %v5156 = vpop.f32.mrf.mxu0
        %v5157 = vadd.f32 0.0, %v5156
        %v5158 = vpop.f32.mrf.mxu0
        %5159 = vdwg.mxu0
        %v5160 = vadd.f32 %v5083, %v5157
        %s5161 = scalar_lea.vmem %s7, 96
        %v5162 = vld [vmem:[%s5161] sm:$0xff]
        %v5163 = vld [vmem:[%s5161 + $0x8] sm:$0xff]
        %v5164 = vrot.slane %v4691, 6
        %v5165 = vsel %vm1551, %v5164, 0
        %5167 = vmatprep.subr.mxu0 0.0
        %5168 = vmatpush1.msra.mxu0 0.0
        %5169 = vmatprep.subr.mxu0 0.0
        %5170 = vmatpush1.msra.mxu0 0.0
        %5171 = vmatprep.subr.mxu0 0.0
        %5172 = vmatpush1.msra.mxu0 0.0
        %5173 = vmatprep.subr.mxu0 0.0
        %5174 = vmatpush1.msra.mxu0 0.0
        %5175 = vmatprep.subr.mxu0 0.0
        %5176 = vmatpush1.msra.mxu0 0.0
        %5177 = vmatprep.subr.mxu0 0.0
        %5178 = vmatpush1.msra.mxu0 0.0
        %5179 = vmatprep.subr.mxu0 0.0
        %5180 = vmatpush1.msra.mxu0 0.0
        %5181 = vmatprep.subr.mxu0 0.0
        %5182 = vmatpush1.msra.mxu0 0.0
        %5183 = vmatprep.subr.mxu0 0.0
        %5184 = vmatpush1.msra.mxu0 0.0
        %5185 = vmatprep.subr.mxu0 0.0
        %5186 = vmatpush1.msra.mxu0 0.0
        %5187 = vmatprep.subr.mxu0 0.0
        %5188 = vmatpush1.msra.mxu0 0.0
        %5189 = vmatprep.subr.mxu0 0.0
        %5190 = vmatpush1.msra.mxu0 0.0
        %5191 = vmatprep.subr.mxu0 0.0
        %5192 = vmatpush1.msra.mxu0 0.0
        %5193 = vmatprep.subr.mxu0 0.0
        %5194 = vmatpush1.msra.mxu0 0.0
        %5195 = vmatprep.subr.mxu0 0.0
        %5196 = vmatpush1.msra.mxu0 %v5163
        %5197 = vmatprep.subr.mxu0 0.0
        %5198 = vmatpush1.msra.mxu0 %v5162
        %5199 = vmatprep.subr.mxu0 0.0
        %5200 = vmatpush2.msra.mxu0 0.0
        %5201 = vmatprep.subr.mxu0 0.0
        %5202 = vmatpush2.msra.mxu0 0.0
        %5203 = vmatprep.subr.mxu0 0.0
        %5204 = vmatpush2.msra.mxu0 0.0
        %5205 = vmatprep.subr.mxu0 0.0
        %5206 = vmatpush2.msra.mxu0 0.0
        %5207 = vmatprep.subr.mxu0 0.0
        %5208 = vmatpush2.msra.mxu0 0.0
        %5209 = vmatprep.subr.mxu0 0.0
        %5210 = vmatpush2.msra.mxu0 0.0
        %5211 = vmatprep.subr.mxu0 0.0
        %5212 = vmatpush2.msra.mxu0 0.0
        %5213 = vmatprep.subr.mxu0 0.0
        %5214 = vmatpush2.msra.mxu0 0.0
        %5215 = vmatprep.subr.mxu0 0.0
        %5216 = vmatpush2.msra.mxu0 0.0
        %5217 = vmatprep.subr.mxu0 0.0
        %5218 = vmatpush2.msra.mxu0 0.0
        %5219 = vmatprep.subr.mxu0 0.0
        %5220 = vmatpush2.msra.mxu0 0.0
        %5221 = vmatprep.subr.mxu0 0.0
        %5222 = vmatpush2.msra.mxu0 0.0
        %5223 = vmatprep.subr.mxu0 0.0
        %5224 = vmatpush2.msra.mxu0 0.0
        %5225 = vmatprep.subr.mxu0 0.0
        %5226 = vmatpush2.msra.mxu0 0.0
        %5227 = vmatprep.subr.mxu0 0.0
        %5228 = vmatpush2.msra.mxu0 0.0
        %5229 = vmatprep.subr.mxu0 0.0
        %5230 = vmatpush2.msra.mxu0 0.0
        %5231 = vmatprep.mubr.f32.mxu0 0.0
        %5232 = vmatmul.mubr.f32.gmra.mxu0 %v5165
        %v5233 = vpop.f32.mrf.mxu0
        %v5234 = vadd.f32 0.0, %v5233
        %v5235 = vpop.f32.mrf.mxu0
        %5236 = vdwg.mxu0
        %v5237 = vadd.f32 %v5160, %v5234
        %s5238 = scalar_lea.vmem %s7, 112
        %v5239 = vld [vmem:[%s5238] sm:$0xff]
        %v5240 = vld [vmem:[%s5238 + $0x8] sm:$0xff]
        %v5241 = vrot.slane %v4691, 7
        %v5242 = vsel %vm1551, %v5241, 0
        %5244 = vmatprep.subr.mxu0 0.0
        %5245 = vmatpush1.msra.mxu0 0.0
        %5246 = vmatprep.subr.mxu0 0.0
        %5247 = vmatpush1.msra.mxu0 0.0
        %5248 = vmatprep.subr.mxu0 0.0
        %5249 = vmatpush1.msra.mxu0 0.0
        %5250 = vmatprep.subr.mxu0 0.0
        %5251 = vmatpush1.msra.mxu0 0.0
        %5252 = vmatprep.subr.mxu0 0.0
        %5253 = vmatpush1.msra.mxu0 0.0
        %5254 = vmatprep.subr.mxu0 0.0
        %5255 = vmatpush1.msra.mxu0 0.0
        %5256 = vmatprep.subr.mxu0 0.0
        %5257 = vmatpush1.msra.mxu0 0.0
        %5258 = vmatprep.subr.mxu0 0.0
        %5259 = vmatpush1.msra.mxu0 0.0
        %5260 = vmatprep.subr.mxu0 0.0
        %5261 = vmatpush1.msra.mxu0 0.0
        %5262 = vmatprep.subr.mxu0 0.0
        %5263 = vmatpush1.msra.mxu0 0.0
        %5264 = vmatprep.subr.mxu0 0.0
        %5265 = vmatpush1.msra.mxu0 0.0
        %5266 = vmatprep.subr.mxu0 0.0
        %5267 = vmatpush1.msra.mxu0 0.0
        %5268 = vmatprep.subr.mxu0 0.0
        %5269 = vmatpush1.msra.mxu0 0.0
        %5270 = vmatprep.subr.mxu0 0.0
        %5271 = vmatpush1.msra.mxu0 0.0
        %5272 = vmatprep.subr.mxu0 0.0
        %5273 = vmatpush1.msra.mxu0 %v5240
        %5274 = vmatprep.subr.mxu0 0.0
        %5275 = vmatpush1.msra.mxu0 %v5239
        %5276 = vmatprep.subr.mxu0 0.0
        %5277 = vmatpush2.msra.mxu0 0.0
        %5278 = vmatprep.subr.mxu0 0.0
        %5279 = vmatpush2.msra.mxu0 0.0
        %5280 = vmatprep.subr.mxu0 0.0
        %5281 = vmatpush2.msra.mxu0 0.0
        %5282 = vmatprep.subr.mxu0 0.0
        %5283 = vmatpush2.msra.mxu0 0.0
        %5284 = vmatprep.subr.mxu0 0.0
        %5285 = vmatpush2.msra.mxu0 0.0
        %5286 = vmatprep.subr.mxu0 0.0
        %5287 = vmatpush2.msra.mxu0 0.0
        %5288 = vmatprep.subr.mxu0 0.0
        %5289 = vmatpush2.msra.mxu0 0.0
        %5290 = vmatprep.subr.mxu0 0.0
        %5291 = vmatpush2.msra.mxu0 0.0
        %5292 = vmatprep.subr.mxu0 0.0
        %5293 = vmatpush2.msra.mxu0 0.0
        %5294 = vmatprep.subr.mxu0 0.0
        %5295 = vmatpush2.msra.mxu0 0.0
        %5296 = vmatprep.subr.mxu0 0.0
        %5297 = vmatpush2.msra.mxu0 0.0
        %5298 = vmatprep.subr.mxu0 0.0
        %5299 = vmatpush2.msra.mxu0 0.0
        %5300 = vmatprep.subr.mxu0 0.0
        %5301 = vmatpush2.msra.mxu0 0.0
        %5302 = vmatprep.subr.mxu0 0.0
        %5303 = vmatpush2.msra.mxu0 0.0
        %5304 = vmatprep.subr.mxu0 0.0
        %5305 = vmatpush2.msra.mxu0 0.0
        %5306 = vmatprep.subr.mxu0 0.0
        %5307 = vmatpush2.msra.mxu0 0.0
        %5308 = vmatprep.mubr.f32.mxu0 0.0
        %5309 = vmatmul.mubr.f32.gmra.mxu0 %v5242
        %v5310 = vpop.f32.mrf.mxu0
        %v5311 = vadd.f32 0.0, %v5310
        %v5312 = vpop.f32.mrf.mxu0
        %5313 = vdwg.mxu0
        %v5314 = vadd.f32 %v5237, %v5311
        %s5315 = scalar_lea.vmem %s7, 128
        %v5316 = vld [vmem:[%s5315] sm:$0xff]
        %v5317 = vld [vmem:[%s5315 + $0x8] sm:$0xff]
        %v5319 = vsel %vm1551, %v4696, 0
        %5321 = vmatprep.subr.mxu0 0.0
        %5322 = vmatpush1.msra.mxu0 0.0
        %5323 = vmatprep.subr.mxu0 0.0
        %5324 = vmatpush1.msra.mxu0 0.0
        %5325 = vmatprep.subr.mxu0 0.0
        %5326 = vmatpush1.msra.mxu0 0.0
        %5327 = vmatprep.subr.mxu0 0.0
        %5328 = vmatpush1.msra.mxu0 0.0
        %5329 = vmatprep.subr.mxu0 0.0
        %5330 = vmatpush1.msra.mxu0 0.0
        %5331 = vmatprep.subr.mxu0 0.0
        %5332 = vmatpush1.msra.mxu0 0.0
        %5333 = vmatprep.subr.mxu0 0.0
        %5334 = vmatpush1.msra.mxu0 0.0
        %5335 = vmatprep.subr.mxu0 0.0
        %5336 = vmatpush1.msra.mxu0 0.0
        %5337 = vmatprep.subr.mxu0 0.0
        %5338 = vmatpush1.msra.mxu0 0.0
        %5339 = vmatprep.subr.mxu0 0.0
        %5340 = vmatpush1.msra.mxu0 0.0
        %5341 = vmatprep.subr.mxu0 0.0
        %5342 = vmatpush1.msra.mxu0 0.0
        %5343 = vmatprep.subr.mxu0 0.0
        %5344 = vmatpush1.msra.mxu0 0.0
        %5345 = vmatprep.subr.mxu0 0.0
        %5346 = vmatpush1.msra.mxu0 0.0
        %5347 = vmatprep.subr.mxu0 0.0
        %5348 = vmatpush1.msra.mxu0 0.0
        %5349 = vmatprep.subr.mxu0 0.0
        %5350 = vmatpush1.msra.mxu0 %v5317
        %5351 = vmatprep.subr.mxu0 0.0
        %5352 = vmatpush1.msra.mxu0 %v5316
        %5353 = vmatprep.subr.mxu0 0.0
        %5354 = vmatpush2.msra.mxu0 0.0
        %5355 = vmatprep.subr.mxu0 0.0
        %5356 = vmatpush2.msra.mxu0 0.0
        %5357 = vmatprep.subr.mxu0 0.0
        %5358 = vmatpush2.msra.mxu0 0.0
        %5359 = vmatprep.subr.mxu0 0.0
        %5360 = vmatpush2.msra.mxu0 0.0
        %5361 = vmatprep.subr.mxu0 0.0
        %5362 = vmatpush2.msra.mxu0 0.0
        %5363 = vmatprep.subr.mxu0 0.0
        %5364 = vmatpush2.msra.mxu0 0.0
        %5365 = vmatprep.subr.mxu0 0.0
        %5366 = vmatpush2.msra.mxu0 0.0
        %5367 = vmatprep.subr.mxu0 0.0
        %5368 = vmatpush2.msra.mxu0 0.0
        %5369 = vmatprep.subr.mxu0 0.0
        %5370 = vmatpush2.msra.mxu0 0.0
        %5371 = vmatprep.subr.mxu0 0.0
        %5372 = vmatpush2.msra.mxu0 0.0
        %5373 = vmatprep.subr.mxu0 0.0
        %5374 = vmatpush2.msra.mxu0 0.0
        %5375 = vmatprep.subr.mxu0 0.0
        %5376 = vmatpush2.msra.mxu0 0.0
        %5377 = vmatprep.subr.mxu0 0.0
        %5378 = vmatpush2.msra.mxu0 0.0
        %5379 = vmatprep.subr.mxu0 0.0
        %5380 = vmatpush2.msra.mxu0 0.0
        %5381 = vmatprep.subr.mxu0 0.0
        %5382 = vmatpush2.msra.mxu0 0.0
        %5383 = vmatprep.subr.mxu0 0.0
        %5384 = vmatpush2.msra.mxu0 0.0
        %5385 = vmatprep.mubr.f32.mxu0 0.0
        %5386 = vmatmul.mubr.f32.gmra.mxu0 %v5319
        %v5387 = vpop.f32.mrf.mxu0
        %v5388 = vadd.f32 0.0, %v5387
        %v5389 = vpop.f32.mrf.mxu0
        %5390 = vdwg.mxu0
        %v5391 = vadd.f32 %v5314, %v5388
        %s5392 = scalar_lea.vmem %s7, 144
        %v5393 = vld [vmem:[%s5392] sm:$0xff]
        %v5394 = vld [vmem:[%s5392 + $0x8] sm:$0xff]
        %v5395 = vrot.slane %v4696, 1
        %v5396 = vsel %vm1551, %v5395, 0
        %5398 = vmatprep.subr.mxu0 0.0
        %5399 = vmatpush1.msra.mxu0 0.0
        %5400 = vmatprep.subr.mxu0 0.0
        %5401 = vmatpush1.msra.mxu0 0.0
        %5402 = vmatprep.subr.mxu0 0.0
        %5403 = vmatpush1.msra.mxu0 0.0
        %5404 = vmatprep.subr.mxu0 0.0
        %5405 = vmatpush1.msra.mxu0 0.0
        %5406 = vmatprep.subr.mxu0 0.0
        %5407 = vmatpush1.msra.mxu0 0.0
        %5408 = vmatprep.subr.mxu0 0.0
        %5409 = vmatpush1.msra.mxu0 0.0
        %5410 = vmatprep.subr.mxu0 0.0
        %5411 = vmatpush1.msra.mxu0 0.0
        %5412 = vmatprep.subr.mxu0 0.0
        %5413 = vmatpush1.msra.mxu0 0.0
        %5414 = vmatprep.subr.mxu0 0.0
        %5415 = vmatpush1.msra.mxu0 0.0
        %5416 = vmatprep.subr.mxu0 0.0
        %5417 = vmatpush1.msra.mxu0 0.0
        %5418 = vmatprep.subr.mxu0 0.0
        %5419 = vmatpush1.msra.mxu0 0.0
        %5420 = vmatprep.subr.mxu0 0.0
        %5421 = vmatpush1.msra.mxu0 0.0
        %5422 = vmatprep.subr.mxu0 0.0
        %5423 = vmatpush1.msra.mxu0 0.0
        %5424 = vmatprep.subr.mxu0 0.0
        %5425 = vmatpush1.msra.mxu0 0.0
        %5426 = vmatprep.subr.mxu0 0.0
        %5427 = vmatpush1.msra.mxu0 %v5394
        %5428 = vmatprep.subr.mxu0 0.0
        %5429 = vmatpush1.msra.mxu0 %v5393
        %5430 = vmatprep.subr.mxu0 0.0
        %5431 = vmatpush2.msra.mxu0 0.0
        %5432 = vmatprep.subr.mxu0 0.0
        %5433 = vmatpush2.msra.mxu0 0.0
        %5434 = vmatprep.subr.mxu0 0.0
        %5435 = vmatpush2.msra.mxu0 0.0
        %5436 = vmatprep.subr.mxu0 0.0
        %5437 = vmatpush2.msra.mxu0 0.0
        %5438 = vmatprep.subr.mxu0 0.0
        %5439 = vmatpush2.msra.mxu0 0.0
        %5440 = vmatprep.subr.mxu0 0.0
        %5441 = vmatpush2.msra.mxu0 0.0
        %5442 = vmatprep.subr.mxu0 0.0
        %5443 = vmatpush2.msra.mxu0 0.0
        %5444 = vmatprep.subr.mxu0 0.0
        %5445 = vmatpush2.msra.mxu0 0.0
        %5446 = vmatprep.subr.mxu0 0.0
        %5447 = vmatpush2.msra.mxu0 0.0
        %5448 = vmatprep.subr.mxu0 0.0
        %5449 = vmatpush2.msra.mxu0 0.0
        %5450 = vmatprep.subr.mxu0 0.0
        %5451 = vmatpush2.msra.mxu0 0.0
        %5452 = vmatprep.subr.mxu0 0.0
        %5453 = vmatpush2.msra.mxu0 0.0
        %5454 = vmatprep.subr.mxu0 0.0
        %5455 = vmatpush2.msra.mxu0 0.0
        %5456 = vmatprep.subr.mxu0 0.0
        %5457 = vmatpush2.msra.mxu0 0.0
        %5458 = vmatprep.subr.mxu0 0.0
        %5459 = vmatpush2.msra.mxu0 0.0
        %5460 = vmatprep.subr.mxu0 0.0
        %5461 = vmatpush2.msra.mxu0 0.0
        %5462 = vmatprep.mubr.f32.mxu0 0.0
        %5463 = vmatmul.mubr.f32.gmra.mxu0 %v5396
        %v5464 = vpop.f32.mrf.mxu0
        %v5465 = vadd.f32 0.0, %v5464
        %v5466 = vpop.f32.mrf.mxu0
        %5467 = vdwg.mxu0
        %v5468 = vadd.f32 %v5391, %v5465
        %s5469 = scalar_lea.vmem %s7, 160
        %v5470 = vld [vmem:[%s5469] sm:$0xff]
        %v5471 = vld [vmem:[%s5469 + $0x8] sm:$0xff]
        %v5472 = vrot.slane %v4696, 2
        %v5473 = vsel %vm1551, %v5472, 0
        %5475 = vmatprep.subr.mxu0 0.0
        %5476 = vmatpush1.msra.mxu0 0.0
        %5477 = vmatprep.subr.mxu0 0.0
        %5478 = vmatpush1.msra.mxu0 0.0
        %5479 = vmatprep.subr.mxu0 0.0
        %5480 = vmatpush1.msra.mxu0 0.0
        %5481 = vmatprep.subr.mxu0 0.0
        %5482 = vmatpush1.msra.mxu0 0.0
        %5483 = vmatprep.subr.mxu0 0.0
        %5484 = vmatpush1.msra.mxu0 0.0
        %5485 = vmatprep.subr.mxu0 0.0
        %5486 = vmatpush1.msra.mxu0 0.0
        %5487 = vmatprep.subr.mxu0 0.0
        %5488 = vmatpush1.msra.mxu0 0.0
        %5489 = vmatprep.subr.mxu0 0.0
        %5490 = vmatpush1.msra.mxu0 0.0
        %5491 = vmatprep.subr.mxu0 0.0
        %5492 = vmatpush1.msra.mxu0 0.0
        %5493 = vmatprep.subr.mxu0 0.0
        %5494 = vmatpush1.msra.mxu0 0.0
        %5495 = vmatprep.subr.mxu0 0.0
        %5496 = vmatpush1.msra.mxu0 0.0
        %5497 = vmatprep.subr.mxu0 0.0
        %5498 = vmatpush1.msra.mxu0 0.0
        %5499 = vmatprep.subr.mxu0 0.0
        %5500 = vmatpush1.msra.mxu0 0.0
        %5501 = vmatprep.subr.mxu0 0.0
        %5502 = vmatpush1.msra.mxu0 0.0
        %5503 = vmatprep.subr.mxu0 0.0
        %5504 = vmatpush1.msra.mxu0 %v5471
        %5505 = vmatprep.subr.mxu0 0.0
        %5506 = vmatpush1.msra.mxu0 %v5470
        %5507 = vmatprep.subr.mxu0 0.0
        %5508 = vmatpush2.msra.mxu0 0.0
        %5509 = vmatprep.subr.mxu0 0.0
        %5510 = vmatpush2.msra.mxu0 0.0
        %5511 = vmatprep.subr.mxu0 0.0
        %5512 = vmatpush2.msra.mxu0 0.0
        %5513 = vmatprep.subr.mxu0 0.0
        %5514 = vmatpush2.msra.mxu0 0.0
        %5515 = vmatprep.subr.mxu0 0.0
        %5516 = vmatpush2.msra.mxu0 0.0
        %5517 = vmatprep.subr.mxu0 0.0
        %5518 = vmatpush2.msra.mxu0 0.0
        %5519 = vmatprep.subr.mxu0 0.0
        %5520 = vmatpush2.msra.mxu0 0.0
        %5521 = vmatprep.subr.mxu0 0.0
        %5522 = vmatpush2.msra.mxu0 0.0
        %5523 = vmatprep.subr.mxu0 0.0
        %5524 = vmatpush2.msra.mxu0 0.0
        %5525 = vmatprep.subr.mxu0 0.0
        %5526 = vmatpush2.msra.mxu0 0.0
        %5527 = vmatprep.subr.mxu0 0.0
        %5528 = vmatpush2.msra.mxu0 0.0
        %5529 = vmatprep.subr.mxu0 0.0
        %5530 = vmatpush2.msra.mxu0 0.0
        %5531 = vmatprep.subr.mxu0 0.0
        %5532 = vmatpush2.msra.mxu0 0.0
        %5533 = vmatprep.subr.mxu0 0.0
        %5534 = vmatpush2.msra.mxu0 0.0
        %5535 = vmatprep.subr.mxu0 0.0
        %5536 = vmatpush2.msra.mxu0 0.0
        %5537 = vmatprep.subr.mxu0 0.0
        %5538 = vmatpush2.msra.mxu0 0.0
        %5539 = vmatprep.mubr.f32.mxu0 0.0
        %5540 = vmatmul.mubr.f32.gmra.mxu0 %v5473
        %v5541 = vpop.f32.mrf.mxu0
        %v5542 = vadd.f32 0.0, %v5541
        %v5543 = vpop.f32.mrf.mxu0
        %5544 = vdwg.mxu0
        %v5545 = vadd.f32 %v5468, %v5542
        %s5546 = scalar_lea.vmem %s7, 176
        %v5547 = vld [vmem:[%s5546] sm:$0xff]
        %v5548 = vld [vmem:[%s5546 + $0x8] sm:$0xff]
        %v5549 = vrot.slane %v4696, 3
        %v5550 = vsel %vm1551, %v5549, 0
        %5552 = vmatprep.subr.mxu0 0.0
        %5553 = vmatpush1.msra.mxu0 0.0
        %5554 = vmatprep.subr.mxu0 0.0
        %5555 = vmatpush1.msra.mxu0 0.0
        %5556 = vmatprep.subr.mxu0 0.0
        %5557 = vmatpush1.msra.mxu0 0.0
        %5558 = vmatprep.subr.mxu0 0.0
        %5559 = vmatpush1.msra.mxu0 0.0
        %5560 = vmatprep.subr.mxu0 0.0
        %5561 = vmatpush1.msra.mxu0 0.0
        %5562 = vmatprep.subr.mxu0 0.0
        %5563 = vmatpush1.msra.mxu0 0.0
        %5564 = vmatprep.subr.mxu0 0.0
        %5565 = vmatpush1.msra.mxu0 0.0
        %5566 = vmatprep.subr.mxu0 0.0
        %5567 = vmatpush1.msra.mxu0 0.0
        %5568 = vmatprep.subr.mxu0 0.0
        %5569 = vmatpush1.msra.mxu0 0.0
        %5570 = vmatprep.subr.mxu0 0.0
        %5571 = vmatpush1.msra.mxu0 0.0
        %5572 = vmatprep.subr.mxu0 0.0
        %5573 = vmatpush1.msra.mxu0 0.0
        %5574 = vmatprep.subr.mxu0 0.0
        %5575 = vmatpush1.msra.mxu0 0.0
        %5576 = vmatprep.subr.mxu0 0.0
        %5577 = vmatpush1.msra.mxu0 0.0
        %5578 = vmatprep.subr.mxu0 0.0
        %5579 = vmatpush1.msra.mxu0 0.0
        %5580 = vmatprep.subr.mxu0 0.0
        %5581 = vmatpush1.msra.mxu0 %v5548
        %5582 = vmatprep.subr.mxu0 0.0
        %5583 = vmatpush1.msra.mxu0 %v5547
        %5584 = vmatprep.subr.mxu0 0.0
        %5585 = vmatpush2.msra.mxu0 0.0
        %5586 = vmatprep.subr.mxu0 0.0
        %5587 = vmatpush2.msra.mxu0 0.0
        %5588 = vmatprep.subr.mxu0 0.0
        %5589 = vmatpush2.msra.mxu0 0.0
        %5590 = vmatprep.subr.mxu0 0.0
        %5591 = vmatpush2.msra.mxu0 0.0
        %5592 = vmatprep.subr.mxu0 0.0
        %5593 = vmatpush2.msra.mxu0 0.0
        %5594 = vmatprep.subr.mxu0 0.0
        %5595 = vmatpush2.msra.mxu0 0.0
        %5596 = vmatprep.subr.mxu0 0.0
        %5597 = vmatpush2.msra.mxu0 0.0
        %5598 = vmatprep.subr.mxu0 0.0
        %5599 = vmatpush2.msra.mxu0 0.0
        %5600 = vmatprep.subr.mxu0 0.0
        %5601 = vmatpush2.msra.mxu0 0.0
        %5602 = vmatprep.subr.mxu0 0.0
        %5603 = vmatpush2.msra.mxu0 0.0
        %5604 = vmatprep.subr.mxu0 0.0
        %5605 = vmatpush2.msra.mxu0 0.0
        %5606 = vmatprep.subr.mxu0 0.0
        %5607 = vmatpush2.msra.mxu0 0.0
        %5608 = vmatprep.subr.mxu0 0.0
        %5609 = vmatpush2.msra.mxu0 0.0
        %5610 = vmatprep.subr.mxu0 0.0
        %5611 = vmatpush2.msra.mxu0 0.0
        %5612 = vmatprep.subr.mxu0 0.0
        %5613 = vmatpush2.msra.mxu0 0.0
        %5614 = vmatprep.subr.mxu0 0.0
        %5615 = vmatpush2.msra.mxu0 0.0
        %5616 = vmatprep.mubr.f32.mxu0 0.0
        %5617 = vmatmul.mubr.f32.gmra.mxu0 %v5550
        %v5618 = vpop.f32.mrf.mxu0
        %v5619 = vadd.f32 0.0, %v5618
        %v5620 = vpop.f32.mrf.mxu0
        %5621 = vdwg.mxu0
        %v5622 = vadd.f32 %v5545, %v5619
        %s5623 = scalar_lea.vmem %s7, 192
        %v5624 = vld [vmem:[%s5623] sm:$0xff]
        %v5625 = vld [vmem:[%s5623 + $0x8] sm:$0xff]
        %v5626 = vrot.slane %v4696, 4
        %v5627 = vsel %vm1551, %v5626, 0
        %5629 = vmatprep.subr.mxu0 0.0
        %5630 = vmatpush1.msra.mxu0 0.0
        %5631 = vmatprep.subr.mxu0 0.0
        %5632 = vmatpush1.msra.mxu0 0.0
        %5633 = vmatprep.subr.mxu0 0.0
        %5634 = vmatpush1.msra.mxu0 0.0
        %5635 = vmatprep.subr.mxu0 0.0
        %5636 = vmatpush1.msra.mxu0 0.0
        %5637 = vmatprep.subr.mxu0 0.0
        %5638 = vmatpush1.msra.mxu0 0.0
        %5639 = vmatprep.subr.mxu0 0.0
        %5640 = vmatpush1.msra.mxu0 0.0
        %5641 = vmatprep.subr.mxu0 0.0
        %5642 = vmatpush1.msra.mxu0 0.0
        %5643 = vmatprep.subr.mxu0 0.0
        %5644 = vmatpush1.msra.mxu0 0.0
        %5645 = vmatprep.subr.mxu0 0.0
        %5646 = vmatpush1.msra.mxu0 0.0
        %5647 = vmatprep.subr.mxu0 0.0
        %5648 = vmatpush1.msra.mxu0 0.0
        %5649 = vmatprep.subr.mxu0 0.0
        %5650 = vmatpush1.msra.mxu0 0.0
        %5651 = vmatprep.subr.mxu0 0.0
        %5652 = vmatpush1.msra.mxu0 0.0
        %5653 = vmatprep.subr.mxu0 0.0
        %5654 = vmatpush1.msra.mxu0 0.0
        %5655 = vmatprep.subr.mxu0 0.0
        %5656 = vmatpush1.msra.mxu0 0.0
        %5657 = vmatprep.subr.mxu0 0.0
        %5658 = vmatpush1.msra.mxu0 %v5625
        %5659 = vmatprep.subr.mxu0 0.0
        %5660 = vmatpush1.msra.mxu0 %v5624
        %5661 = vmatprep.subr.mxu0 0.0
        %5662 = vmatpush2.msra.mxu0 0.0
        %5663 = vmatprep.subr.mxu0 0.0
        %5664 = vmatpush2.msra.mxu0 0.0
        %5665 = vmatprep.subr.mxu0 0.0
        %5666 = vmatpush2.msra.mxu0 0.0
        %5667 = vmatprep.subr.mxu0 0.0
        %5668 = vmatpush2.msra.mxu0 0.0
        %5669 = vmatprep.subr.mxu0 0.0
        %5670 = vmatpush2.msra.mxu0 0.0
        %5671 = vmatprep.subr.mxu0 0.0
        %5672 = vmatpush2.msra.mxu0 0.0
        %5673 = vmatprep.subr.mxu0 0.0
        %5674 = vmatpush2.msra.mxu0 0.0
        %5675 = vmatprep.subr.mxu0 0.0
        %5676 = vmatpush2.msra.mxu0 0.0
        %5677 = vmatprep.subr.mxu0 0.0
        %5678 = vmatpush2.msra.mxu0 0.0
        %5679 = vmatprep.subr.mxu0 0.0
        %5680 = vmatpush2.msra.mxu0 0.0
        %5681 = vmatprep.subr.mxu0 0.0
        %5682 = vmatpush2.msra.mxu0 0.0
        %5683 = vmatprep.subr.mxu0 0.0
        %5684 = vmatpush2.msra.mxu0 0.0
        %5685 = vmatprep.subr.mxu0 0.0
        %5686 = vmatpush2.msra.mxu0 0.0
        %5687 = vmatprep.subr.mxu0 0.0
        %5688 = vmatpush2.msra.mxu0 0.0
        %5689 = vmatprep.subr.mxu0 0.0
        %5690 = vmatpush2.msra.mxu0 0.0
        %5691 = vmatprep.subr.mxu0 0.0
        %5692 = vmatpush2.msra.mxu0 0.0
        %5693 = vmatprep.mubr.f32.mxu0 0.0
        %5694 = vmatmul.mubr.f32.gmra.mxu0 %v5627
        %v5695 = vpop.f32.mrf.mxu0
        %v5696 = vadd.f32 0.0, %v5695
        %v5697 = vpop.f32.mrf.mxu0
        %5698 = vdwg.mxu0
        %v5699 = vadd.f32 %v5622, %v5696
        %s5700 = scalar_lea.vmem %s7, 208
        %v5701 = vld [vmem:[%s5700] sm:$0xff]
        %v5702 = vld [vmem:[%s5700 + $0x8] sm:$0xff]
        %v5703 = vrot.slane %v4696, 5
        %v5704 = vsel %vm1551, %v5703, 0
        %5706 = vmatprep.subr.mxu0 0.0
        %5707 = vmatpush1.msra.mxu0 0.0
        %5708 = vmatprep.subr.mxu0 0.0
        %5709 = vmatpush1.msra.mxu0 0.0
        %5710 = vmatprep.subr.mxu0 0.0
        %5711 = vmatpush1.msra.mxu0 0.0
        %5712 = vmatprep.subr.mxu0 0.0
        %5713 = vmatpush1.msra.mxu0 0.0
        %5714 = vmatprep.subr.mxu0 0.0
        %5715 = vmatpush1.msra.mxu0 0.0
        %5716 = vmatprep.subr.mxu0 0.0
        %5717 = vmatpush1.msra.mxu0 0.0
        %5718 = vmatprep.subr.mxu0 0.0
        %5719 = vmatpush1.msra.mxu0 0.0
        %5720 = vmatprep.subr.mxu0 0.0
        %5721 = vmatpush1.msra.mxu0 0.0
        %5722 = vmatprep.subr.mxu0 0.0
        %5723 = vmatpush1.msra.mxu0 0.0
        %5724 = vmatprep.subr.mxu0 0.0
        %5725 = vmatpush1.msra.mxu0 0.0
        %5726 = vmatprep.subr.mxu0 0.0
        %5727 = vmatpush1.msra.mxu0 0.0
        %5728 = vmatprep.subr.mxu0 0.0
        %5729 = vmatpush1.msra.mxu0 0.0
        %5730 = vmatprep.subr.mxu0 0.0
        %5731 = vmatpush1.msra.mxu0 0.0
        %5732 = vmatprep.subr.mxu0 0.0
        %5733 = vmatpush1.msra.mxu0 0.0
        %5734 = vmatprep.subr.mxu0 0.0
        %5735 = vmatpush1.msra.mxu0 %v5702
        %5736 = vmatprep.subr.mxu0 0.0
        %5737 = vmatpush1.msra.mxu0 %v5701
        %5738 = vmatprep.subr.mxu0 0.0
        %5739 = vmatpush2.msra.mxu0 0.0
        %5740 = vmatprep.subr.mxu0 0.0
        %5741 = vmatpush2.msra.mxu0 0.0
        %5742 = vmatprep.subr.mxu0 0.0
        %5743 = vmatpush2.msra.mxu0 0.0
        %5744 = vmatprep.subr.mxu0 0.0
        %5745 = vmatpush2.msra.mxu0 0.0
        %5746 = vmatprep.subr.mxu0 0.0
        %5747 = vmatpush2.msra.mxu0 0.0
        %5748 = vmatprep.subr.mxu0 0.0
        %5749 = vmatpush2.msra.mxu0 0.0
        %5750 = vmatprep.subr.mxu0 0.0
        %5751 = vmatpush2.msra.mxu0 0.0
        %5752 = vmatprep.subr.mxu0 0.0
        %5753 = vmatpush2.msra.mxu0 0.0
        %5754 = vmatprep.subr.mxu0 0.0
        %5755 = vmatpush2.msra.mxu0 0.0
        %5756 = vmatprep.subr.mxu0 0.0
        %5757 = vmatpush2.msra.mxu0 0.0
        %5758 = vmatprep.subr.mxu0 0.0
        %5759 = vmatpush2.msra.mxu0 0.0
        %5760 = vmatprep.subr.mxu0 0.0
        %5761 = vmatpush2.msra.mxu0 0.0
        %5762 = vmatprep.subr.mxu0 0.0
        %5763 = vmatpush2.msra.mxu0 0.0
        %5764 = vmatprep.subr.mxu0 0.0
        %5765 = vmatpush2.msra.mxu0 0.0
        %5766 = vmatprep.subr.mxu0 0.0
        %5767 = vmatpush2.msra.mxu0 0.0
        %5768 = vmatprep.subr.mxu0 0.0
        %5769 = vmatpush2.msra.mxu0 0.0
        %5770 = vmatprep.mubr.f32.mxu0 0.0
        %5771 = vmatmul.mubr.f32.gmra.mxu0 %v5704
        %v5772 = vpop.f32.mrf.mxu0
        %v5773 = vadd.f32 0.0, %v5772
        %v5774 = vpop.f32.mrf.mxu0
        %5775 = vdwg.mxu0
        %v5776 = vadd.f32 %v5699, %v5773
        %s5777 = scalar_lea.vmem %s7, 224
        %v5778 = vld [vmem:[%s5777] sm:$0xff]
        %v5779 = vld [vmem:[%s5777 + $0x8] sm:$0xff]
        %v5780 = vrot.slane %v4696, 6
        %v5781 = vsel %vm1551, %v5780, 0
        %5783 = vmatprep.subr.mxu0 0.0
        %5784 = vmatpush1.msra.mxu0 0.0
        %5785 = vmatprep.subr.mxu0 0.0
        %5786 = vmatpush1.msra.mxu0 0.0
        %5787 = vmatprep.subr.mxu0 0.0
        %5788 = vmatpush1.msra.mxu0 0.0
        %5789 = vmatprep.subr.mxu0 0.0
        %5790 = vmatpush1.msra.mxu0 0.0
        %5791 = vmatprep.subr.mxu0 0.0
        %5792 = vmatpush1.msra.mxu0 0.0
        %5793 = vmatprep.subr.mxu0 0.0
        %5794 = vmatpush1.msra.mxu0 0.0
        %5795 = vmatprep.subr.mxu0 0.0
        %5796 = vmatpush1.msra.mxu0 0.0
        %5797 = vmatprep.subr.mxu0 0.0
        %5798 = vmatpush1.msra.mxu0 0.0
        %5799 = vmatprep.subr.mxu0 0.0
        %5800 = vmatpush1.msra.mxu0 0.0
        %5801 = vmatprep.subr.mxu0 0.0
        %5802 = vmatpush1.msra.mxu0 0.0
        %5803 = vmatprep.subr.mxu0 0.0
        %5804 = vmatpush1.msra.mxu0 0.0
        %5805 = vmatprep.subr.mxu0 0.0
        %5806 = vmatpush1.msra.mxu0 0.0
        %5807 = vmatprep.subr.mxu0 0.0
        %5808 = vmatpush1.msra.mxu0 0.0
        %5809 = vmatprep.subr.mxu0 0.0
        %5810 = vmatpush1.msra.mxu0 0.0
        %5811 = vmatprep.subr.mxu0 0.0
        %5812 = vmatpush1.msra.mxu0 %v5779
        %5813 = vmatprep.subr.mxu0 0.0
        %5814 = vmatpush1.msra.mxu0 %v5778
        %5815 = vmatprep.subr.mxu0 0.0
        %5816 = vmatpush2.msra.mxu0 0.0
        %5817 = vmatprep.subr.mxu0 0.0
        %5818 = vmatpush2.msra.mxu0 0.0
        %5819 = vmatprep.subr.mxu0 0.0
        %5820 = vmatpush2.msra.mxu0 0.0
        %5821 = vmatprep.subr.mxu0 0.0
        %5822 = vmatpush2.msra.mxu0 0.0
        %5823 = vmatprep.subr.mxu0 0.0
        %5824 = vmatpush2.msra.mxu0 0.0
        %5825 = vmatprep.subr.mxu0 0.0
        %5826 = vmatpush2.msra.mxu0 0.0
        %5827 = vmatprep.subr.mxu0 0.0
        %5828 = vmatpush2.msra.mxu0 0.0
        %5829 = vmatprep.subr.mxu0 0.0
        %5830 = vmatpush2.msra.mxu0 0.0
        %5831 = vmatprep.subr.mxu0 0.0
        %5832 = vmatpush2.msra.mxu0 0.0
        %5833 = vmatprep.subr.mxu0 0.0
        %5834 = vmatpush2.msra.mxu0 0.0
        %5835 = vmatprep.subr.mxu0 0.0
        %5836 = vmatpush2.msra.mxu0 0.0
        %5837 = vmatprep.subr.mxu0 0.0
        %5838 = vmatpush2.msra.mxu0 0.0
        %5839 = vmatprep.subr.mxu0 0.0
        %5840 = vmatpush2.msra.mxu0 0.0
        %5841 = vmatprep.subr.mxu0 0.0
        %5842 = vmatpush2.msra.mxu0 0.0
        %5843 = vmatprep.subr.mxu0 0.0
        %5844 = vmatpush2.msra.mxu0 0.0
        %5845 = vmatprep.subr.mxu0 0.0
        %5846 = vmatpush2.msra.mxu0 0.0
        %5847 = vmatprep.mubr.f32.mxu0 0.0
        %5848 = vmatmul.mubr.f32.gmra.mxu0 %v5781
        %v5849 = vpop.f32.mrf.mxu0
        %v5850 = vadd.f32 0.0, %v5849
        %v5851 = vpop.f32.mrf.mxu0
        %5852 = vdwg.mxu0
        %v5853 = vadd.f32 %v5776, %v5850
        %s5854 = scalar_lea.vmem %s7, 240
        %v5855 = vld [vmem:[%s5854] sm:$0xff]
        %v5856 = vld [vmem:[%s5854 + $0x8] sm:$0xff]
        %v5857 = vrot.slane %v4696, 7
        %v5858 = vsel %vm1551, %v5857, 0
        %5860 = vmatprep.subr.mxu0 0.0
        %5861 = vmatpush1.msra.mxu0 0.0
        %5862 = vmatprep.subr.mxu0 0.0
        %5863 = vmatpush1.msra.mxu0 0.0
        %5864 = vmatprep.subr.mxu0 0.0
        %5865 = vmatpush1.msra.mxu0 0.0
        %5866 = vmatprep.subr.mxu0 0.0
        %5867 = vmatpush1.msra.mxu0 0.0
        %5868 = vmatprep.subr.mxu0 0.0
        %5869 = vmatpush1.msra.mxu0 0.0
        %5870 = vmatprep.subr.mxu0 0.0
        %5871 = vmatpush1.msra.mxu0 0.0
        %5872 = vmatprep.subr.mxu0 0.0
        %5873 = vmatpush1.msra.mxu0 0.0
        %5874 = vmatprep.subr.mxu0 0.0
        %5875 = vmatpush1.msra.mxu0 0.0
        %5876 = vmatprep.subr.mxu0 0.0
        %5877 = vmatpush1.msra.mxu0 0.0
        %5878 = vmatprep.subr.mxu0 0.0
        %5879 = vmatpush1.msra.mxu0 0.0
        %5880 = vmatprep.subr.mxu0 0.0
        %5881 = vmatpush1.msra.mxu0 0.0
        %5882 = vmatprep.subr.mxu0 0.0
        %5883 = vmatpush1.msra.mxu0 0.0
        %5884 = vmatprep.subr.mxu0 0.0
        %5885 = vmatpush1.msra.mxu0 0.0
        %5886 = vmatprep.subr.mxu0 0.0
        %5887 = vmatpush1.msra.mxu0 0.0
        %5888 = vmatprep.subr.mxu0 0.0
        %5889 = vmatpush1.msra.mxu0 %v5856
        %5890 = vmatprep.subr.mxu0 0.0
        %5891 = vmatpush1.msra.mxu0 %v5855
        %5892 = vmatprep.subr.mxu0 0.0
        %5893 = vmatpush2.msra.mxu0 0.0
        %5894 = vmatprep.subr.mxu0 0.0
        %5895 = vmatpush2.msra.mxu0 0.0
        %5896 = vmatprep.subr.mxu0 0.0
        %5897 = vmatpush2.msra.mxu0 0.0
        %5898 = vmatprep.subr.mxu0 0.0
        %5899 = vmatpush2.msra.mxu0 0.0
        %5900 = vmatprep.subr.mxu0 0.0
        %5901 = vmatpush2.msra.mxu0 0.0
        %5902 = vmatprep.subr.mxu0 0.0
        %5903 = vmatpush2.msra.mxu0 0.0
        %5904 = vmatprep.subr.mxu0 0.0
        %5905 = vmatpush2.msra.mxu0 0.0
        %5906 = vmatprep.subr.mxu0 0.0
        %5907 = vmatpush2.msra.mxu0 0.0
        %5908 = vmatprep.subr.mxu0 0.0
        %5909 = vmatpush2.msra.mxu0 0.0
        %5910 = vmatprep.subr.mxu0 0.0
        %5911 = vmatpush2.msra.mxu0 0.0
        %5912 = vmatprep.subr.mxu0 0.0
        %5913 = vmatpush2.msra.mxu0 0.0
        %5914 = vmatprep.subr.mxu0 0.0
        %5915 = vmatpush2.msra.mxu0 0.0
        %5916 = vmatprep.subr.mxu0 0.0
        %5917 = vmatpush2.msra.mxu0 0.0
        %5918 = vmatprep.subr.mxu0 0.0
        %5919 = vmatpush2.msra.mxu0 0.0
        %5920 = vmatprep.subr.mxu0 0.0
        %5921 = vmatpush2.msra.mxu0 0.0
        %5922 = vmatprep.subr.mxu0 0.0
        %5923 = vmatpush2.msra.mxu0 0.0
        %5924 = vmatprep.mubr.f32.mxu0 0.0
        %5925 = vmatmul.mubr.f32.gmra.mxu0 %v5858
        %v5926 = vpop.f32.mrf.mxu0
        %v5927 = vadd.f32 0.0, %v5926
        %v5928 = vpop.f32.mrf.mxu0
        %5929 = vdwg.mxu0
        %v5930 = vadd.f32 %v5853, %v5927
        %v5931 = vsub.f32 0.0, %v5930
        %v5932 = vmul.f32 %v5931, 1.442695
        %v5933 = vpow.pop %v5932
        %v5934 = vadd.f32 %v5933, 1.0
        %v5935 = vrcp.pop %v5934
        %v5936 = vmul.f32 1.0, %v5935
        %v5937 = vld [vmem:[%s9] sm:$0xff]
        %v5938 = vld [vmem:[%s9 + $0x8] sm:$0xff]
        %v5939 = vld [vmem:[%s9 + $0x10] sm:$0xff]
        %v5940 = vld [vmem:[%s9 + $0x18] sm:$0xff]
        %v5941 = vld [vmem:[%s9 + $0x20] sm:$0xff]
        %v5942 = vld [vmem:[%s9 + $0x28] sm:$0xff]
        %v5943 = vld [vmem:[%s9 + $0x30] sm:$0xff]
        %v5944 = vld [vmem:[%s9 + $0x38] sm:$0xff]
        %v5945 = vld [vmem:[%s9 + $0x40] sm:$0xff]
        %v5946 = vld [vmem:[%s9 + $0x48] sm:$0xff]
        %v5947 = vld [vmem:[%s9 + $0x50] sm:$0xff]
        %v5948 = vld [vmem:[%s9 + $0x58] sm:$0xff]
        %v5949 = vld [vmem:[%s9 + $0x60] sm:$0xff]
        %v5950 = vld [vmem:[%s9 + $0x68] sm:$0xff]
        %v5951 = vld [vmem:[%s9 + $0x70] sm:$0xff]
        %v5952 = vld [vmem:[%s10] sm:$0x1]
        %vm5953 = vcmask 982016
        %v5955 = vsel %vm5953, %v5936, 0
        %5957 = vmatprep.subr.mxu0 0.0
        %5958 = vmatpush1.msra.mxu0 0.0
        %5959 = vmatprep.subr.mxu0 0.0
        %5960 = vmatpush1.msra.mxu0 %v5951
        %5961 = vmatprep.subr.mxu0 0.0
        %5962 = vmatpush1.msra.mxu0 %v5950
        %5963 = vmatprep.subr.mxu0 0.0
        %5964 = vmatpush1.msra.mxu0 %v5949
        %5965 = vmatprep.subr.mxu0 0.0
        %5966 = vmatpush1.msra.mxu0 %v5948
        %5967 = vmatprep.subr.mxu0 0.0
        %5968 = vmatpush1.msra.mxu0 %v5947
        %5969 = vmatprep.subr.mxu0 0.0
        %5970 = vmatpush1.msra.mxu0 %v5946
        %5971 = vmatprep.subr.mxu0 0.0
        %5972 = vmatpush1.msra.mxu0 %v5945
        %5973 = vmatprep.subr.mxu0 0.0
        %5974 = vmatpush1.msra.mxu0 %v5944
        %5975 = vmatprep.subr.mxu0 0.0
        %5976 = vmatpush1.msra.mxu0 %v5943
        %5977 = vmatprep.subr.mxu0 0.0
        %5978 = vmatpush1.msra.mxu0 %v5942
        %5979 = vmatprep.subr.mxu0 0.0
        %5980 = vmatpush1.msra.mxu0 %v5941
        %5981 = vmatprep.subr.mxu0 0.0
        %5982 = vmatpush1.msra.mxu0 %v5940
        %5983 = vmatprep.subr.mxu0 0.0
        %5984 = vmatpush1.msra.mxu0 %v5939
        %5985 = vmatprep.subr.mxu0 0.0
        %5986 = vmatpush1.msra.mxu0 %v5938
        %5987 = vmatprep.subr.mxu0 0.0
        %5988 = vmatpush1.msra.mxu0 %v5937
        %5989 = vmatprep.subr.mxu0 0.0
        %5990 = vmatpush2.msra.mxu0 0.0
        %5991 = vmatprep.subr.mxu0 0.0
        %5992 = vmatpush2.msra.mxu0 0.0
        %5993 = vmatprep.subr.mxu0 0.0
        %5994 = vmatpush2.msra.mxu0 0.0
        %5995 = vmatprep.subr.mxu0 0.0
        %5996 = vmatpush2.msra.mxu0 0.0
        %5997 = vmatprep.subr.mxu0 0.0
        %5998 = vmatpush2.msra.mxu0 0.0
        %5999 = vmatprep.subr.mxu0 0.0
        %6000 = vmatpush2.msra.mxu0 0.0
        %6001 = vmatprep.subr.mxu0 0.0
        %6002 = vmatpush2.msra.mxu0 0.0
        %6003 = vmatprep.subr.mxu0 0.0
        %6004 = vmatpush2.msra.mxu0 0.0
        %6005 = vmatprep.subr.mxu0 0.0
        %6006 = vmatpush2.msra.mxu0 0.0
        %6007 = vmatprep.subr.mxu0 0.0
        %6008 = vmatpush2.msra.mxu0 0.0
        %6009 = vmatprep.subr.mxu0 0.0
        %6010 = vmatpush2.msra.mxu0 0.0
        %6011 = vmatprep.subr.mxu0 0.0
        %6012 = vmatpush2.msra.mxu0 0.0
        %6013 = vmatprep.subr.mxu0 0.0
        %6014 = vmatpush2.msra.mxu0 0.0
        %6015 = vmatprep.subr.mxu0 0.0
        %6016 = vmatpush2.msra.mxu0 0.0
        %6017 = vmatprep.subr.mxu0 0.0
        %6018 = vmatpush2.msra.mxu0 0.0
        %6019 = vmatprep.subr.mxu0 0.0
        %6020 = vmatpush2.msra.mxu0 0.0
        %6021 = vmatprep.mubr.f32.mxu0 0.0
        %6022 = vmatmul.mubr.f32.gmra.mxu0 %v5955
        %v6023 = vpop.f32.mrf.mxu0
        %v6024 = vadd.f32 %v5952, %v6023
        %v6025 = vpop.f32.mrf.mxu0
        %6026 = vdwg.mxu0
        %v6027 = vsub.f32 0.0, %v6024
        %v6028 = vmul.f32 %v6027, 1.442695
        %v6029 = vpow.pop %v6028
        %v6030 = vadd.f32 %v6029, 1.0
        %v6031 = vrcp.pop %v6030
        %v6032 = vmul.f32 1.0, %v6031
        %v6033 = vld [vmem:[%s11] sm:$0xff]
        %v6034 = vld [vmem:[%s11 + $0x8] sm:$0xff]
        %v6035 = vld [vmem:[%s11 + $0x10] sm:$0xff]
        %v6036 = vld [vmem:[%s11 + $0x18] sm:$0xff]
        %v6037 = vld [vmem:[%s11 + $0x20] sm:$0xff]
        %v6038 = vld [vmem:[%s11 + $0x28] sm:$0xff]
        %v6039 = vld [vmem:[%s11 + $0x30] sm:$0xff]
        %v6040 = vld [vmem:[%s11 + $0x38] sm:$0xff]
        %v6041 = vld [vmem:[%s11 + $0x40] sm:$0xff]
        %v6042 = vld [vmem:[%s11 + $0x48] sm:$0xff]
        %v6043 = vld [vmem:[%s11 + $0x50] sm:$0xf]
        %v6044 = vld [vmem:[%s12] sm:$0x1]
        %vm6045 = vcmask 687104
        %v6047 = vsel %vm6045, %v6032, 0
        %vm6049 = vcmask 1043456
        %v6051 = vsel %vm6049, %v6043, 0
        %6053 = vmatprep.subr.mxu0 0.0
        %6054 = vmatpush1.msra.mxu0 0.0
        %6055 = vmatprep.subr.mxu0 0.0
        %6056 = vmatpush1.msra.mxu0 0.0
        %6057 = vmatprep.subr.mxu0 0.0
        %6058 = vmatpush1.msra.mxu0 0.0
        %6059 = vmatprep.subr.mxu0 0.0
        %6060 = vmatpush1.msra.mxu0 0.0
        %6061 = vmatprep.subr.mxu0 0.0
        %6062 = vmatpush1.msra.mxu0 0.0
        %6063 = vmatprep.subr.mxu0 0.0
        %6064 = vmatpush1.msra.mxu0 %v6051
        %6065 = vmatprep.subr.mxu0 0.0
        %6066 = vmatpush1.msra.mxu0 %v6042
        %6067 = vmatprep.subr.mxu0 0.0
        %6068 = vmatpush1.msra.mxu0 %v6041
        %6069 = vmatprep.subr.mxu0 0.0
        %6070 = vmatpush1.msra.mxu0 %v6040
        %6071 = vmatprep.subr.mxu0 0.0
        %6072 = vmatpush1.msra.mxu0 %v6039
        %6073 = vmatprep.subr.mxu0 0.0
        %6074 = vmatpush1.msra.mxu0 %v6038
        %6075 = vmatprep.subr.mxu0 0.0
        %6076 = vmatpush1.msra.mxu0 %v6037
        %6077 = vmatprep.subr.mxu0 0.0
        %6078 = vmatpush1.msra.mxu0 %v6036
        %6079 = vmatprep.subr.mxu0 0.0
        %6080 = vmatpush1.msra.mxu0 %v6035
        %6081 = vmatprep.subr.mxu0 0.0
        %6082 = vmatpush1.msra.mxu0 %v6034
        %6083 = vmatprep.subr.mxu0 0.0
        %6084 = vmatpush1.msra.mxu0 %v6033
        %6085 = vmatprep.subr.mxu0 0.0
        %6086 = vmatpush2.msra.mxu0 0.0
        %6087 = vmatprep.subr.mxu0 0.0
        %6088 = vmatpush2.msra.mxu0 0.0
        %6089 = vmatprep.subr.mxu0 0.0
        %6090 = vmatpush2.msra.mxu0 0.0
        %6091 = vmatprep.subr.mxu0 0.0
        %6092 = vmatpush2.msra.mxu0 0.0
        %6093 = vmatprep.subr.mxu0 0.0
        %6094 = vmatpush2.msra.mxu0 0.0
        %6095 = vmatprep.subr.mxu0 0.0
        %6096 = vmatpush2.msra.mxu0 0.0
        %6097 = vmatprep.subr.mxu0 0.0
        %6098 = vmatpush2.msra.mxu0 0.0
        %6099 = vmatprep.subr.mxu0 0.0
        %6100 = vmatpush2.msra.mxu0 0.0
        %6101 = vmatprep.subr.mxu0 0.0
        %6102 = vmatpush2.msra.mxu0 0.0
        %6103 = vmatprep.subr.mxu0 0.0
        %6104 = vmatpush2.msra.mxu0 0.0
        %6105 = vmatprep.subr.mxu0 0.0
        %6106 = vmatpush2.msra.mxu0 0.0
        %6107 = vmatprep.subr.mxu0 0.0
        %6108 = vmatpush2.msra.mxu0 0.0
        %6109 = vmatprep.subr.mxu0 0.0
        %6110 = vmatpush2.msra.mxu0 0.0
        %6111 = vmatprep.subr.mxu0 0.0
        %6112 = vmatpush2.msra.mxu0 0.0
        %6113 = vmatprep.subr.mxu0 0.0
        %6114 = vmatpush2.msra.mxu0 0.0
        %6115 = vmatprep.subr.mxu0 0.0
        %6116 = vmatpush2.msra.mxu0 0.0
        %6117 = vmatprep.mubr.f32.mxu0 0.0
        %6118 = vmatmul.mubr.f32.gmra.mxu0 %v6047
        %v6119 = vpop.f32.mrf.mxu0
        %v6120 = vadd.f32 %v6044, %v6119
        %v6121 = vpop.f32.mrf.mxu0
        %6122 = vdwg.mxu0
        %vm6123 = vcmask 73728
        %6124 = vst.msk [vmem:[%s430] sm:$0x1] %vm6123, %v6120
        %s6125 = sand.u32 %s313, 1
        %s6126 = scalar_lea.sflag [#allocation3], %s6125
        %s6127 = sand.u32 %s313, 1
        %s6128 = scalar_lea.vmem [#allocation2], %s6127
        // Predicated region
        $region73: #{lenet_forward.1} parent=71 // pred_check
          %p6129 = pneg %p323
        $region74: #{lenet_forward.1} parent=71 // pred_check_branch
          %6131 = sbr.rel (%p6129) target = $region76
        $region75: #{lenet_forward.1} parent=71 // pred_region
          %s6133 = ssub.s32 16, 16
          %6134 = vsyncadd %s6126, %s6133
          %s6135 = smul.addr %s27, 16
          %s6136 = scalar_lea.hbm %s13, %s6135
          %s6138 = sshll.u32 %s6128, 4
          %s6139 = int_to_ptr.vmem [resolvable:$true] %s6138
          %6141 = dma.vmem_to_hbm [thread:$0]  %s6139, 16, %s6136, %s6126
        $region76: #{lenet_forward.1} parent=71 // pred_fallthru
          _
      $region72: #{lenet_forward.1} parent=5 // pred_fallthru
        _
      %p6142 = scmp.le.s32.totalorder 2, %s22
      // Predicated region
      $region77: #{lenet_forward.1} parent=5 // pred_check
        %p6143 = pneg %p6142
      $region78: #{lenet_forward.1} parent=5 // pred_check_branch
        %6145 = sbr.rel (%p6143) target = $region80
      $region79: #{lenet_forward.1} parent=5 // pred_region
        %s6146 = ssub.s32 %s22, 2
        // Predicated region
        $region81: #{lenet_forward.1} parent=79 // pred_check
          %p6147 = pneg %p329
        $region82: #{lenet_forward.1} parent=79 // pred_check_branch
          %6149 = sbr.rel (%p6147) target = $region84
        $region83: #{lenet_forward.1} parent=79 // pred_region
          %s6150 = sand.u32 %s314, 1
          %s6151 = scalar_lea.sflag [#allocation3], %s6150
          %s6152 = sand.u32 %s314, 1
          %s6153 = scalar_lea.vmem [#allocation2], %s6152
          %6154 = dma.done %s6151, 16
        $region84: #{lenet_forward.1} parent=79 // pred_fallthru
          _
      $region80: #{lenet_forward.1} parent=5 // pred_fallthru
        _
    $region6: #{lenet_forward.1} parent=1 // loop_footer
      %s26 = sadd.s32 1, %s22
    $region7: #{lenet_forward.1} parent=1 // loop_footer_branch
      %21 = sbr.rel target = $region3
    $region8: #{lenet_forward.1} parent=1 // loop_exit
      _
    %6155 = vsyncpa [#allocation3], 1
    %s6156 = scalar_lea.sflag [#allocation3], 1
    %6157 = vsyncpa %s6156, 1

</llo_original>
